<compile_context>
chip_gen: v6e
topology: v6e:2x2x1
jax: 0.10.0
libtpu: 0.0.40
codegen_flags: <defaults>
</compile_context>

<pallas_src>
import functools

import jax
import jax.numpy as jnp
from jax.experimental import pallas as pl
from jax.experimental.pallas import tpu as pltpu


def _round_up(a, m):
    return (a + m - 1) // m * m


# ---------------------------------------------------------------------------
# Pallas kernel 1: tiled matmul (+ optional bias) for the 1x1 qkv conv and the
# final Linear projection.  bf16 operands, f32 MXU accumulation.  M tiled; K, N
# kept whole (they are small: C / 3C).
# ---------------------------------------------------------------------------
def _matmul_kernel(x_ref, w_ref, o_ref):
    o_ref[...] = jnp.dot(x_ref[...], w_ref[...],
                         preferred_element_type=jnp.float32).astype(o_ref.dtype)


def _matmul_bias_kernel(x_ref, w_ref, b_ref, o_ref):
    acc = jnp.dot(x_ref[...], w_ref[...], preferred_element_type=jnp.float32)
    o_ref[...] = (acc + b_ref[...].astype(jnp.float32)).astype(o_ref.dtype)


def matmul(x, w, b=None, *, tm=1024, out_dtype=None):
    """x: (M, K) @ w: (K, N) [+ b: (N,)] -> (M, N)."""
    M, K = x.shape
    Kw, N = w.shape
    assert K == Kw
    out_dtype = x.dtype if out_dtype is None else out_dtype
    xb = jnp.dtype(x.dtype).itemsize
    wb = jnp.dtype(w.dtype).itemsize
    ob = jnp.dtype(out_dtype).itemsize

    tm = min(tm, _round_up(M, 128))

    def footprint(t):  # double-buffered block footprint in bytes
        f = 2 * (t * K * xb + K * N * wb + t * N * ob)
        if b is not None:
            f += 2 * N * 4
        return f

    # Keep blocks within ~24 MiB so the 32 MiB scoped-VMEM limit below has headroom
    # on every generation (v7x's 64 MiB physical VMEM included).
    while tm > 128 and footprint(tm) > 24 * 1024 * 1024:
        tm = max(128, tm - 128)

    m_pad = _round_up(M, tm)
    if m_pad != M:                      # pad M instead of collapsing to one giant block
        x = jnp.pad(x, ((0, m_pad - M), (0, 0)))
    grid = (m_pad // tm,)
    cparams = pltpu.CompilerParams(dimension_semantics=("parallel",),
                                   vmem_limit_bytes=32 * 1024 * 1024)
    if b is None:
        out = pl.pallas_call(
            _matmul_kernel,
            out_shape=jax.ShapeDtypeStruct((m_pad, N), out_dtype),
            grid=grid,
            in_specs=[pl.BlockSpec((tm, K), lambda i: (i, 0)),
                      pl.BlockSpec((K, N), lambda i: (0, 0))],
            out_specs=pl.BlockSpec((tm, N), lambda i: (i, 0)),
            compiler_params=cparams,
        )(x, w)
    else:
        out = pl.pallas_call(
            _matmul_bias_kernel,
            out_shape=jax.ShapeDtypeStruct((m_pad, N), out_dtype),
            grid=grid,
            in_specs=[pl.BlockSpec((tm, K), lambda i: (i, 0)),
                      pl.BlockSpec((K, N), lambda i: (0, 0)),
                      pl.BlockSpec((1, N), lambda i: (0, 0))],
            out_specs=pl.BlockSpec((tm, N), lambda i: (i, 0)),
            compiler_params=cparams,
        )(x, w, b.reshape(1, N))
    return out[:M] if m_pad != M else out


# ---------------------------------------------------------------------------
# Pallas kernel 2: dilated local attention, one batch element per grid step.
#   q_ref/o_ref   : (nh, hd, Lq)  with Lq = H*Wp  (q right-padded to row stride Wp)
#   k_ref/v_ref   : (nh, hd, Lk)  with Lk = (Hp+1)*Wp  (zero-padded, flattened)
#   logits_ref    : VMEM scratch (ks*ks, nh, 1, Lq) f32
# Neighbour (ki, kj) of flat pixel g is the static shift g + ki*dil*Wp + kj*dil,
# so the ks*ks gather is ks*ks static lane-dim slices of the padded VMEM map.
# Softmax scale is pre-folded into q (via the qkv weight).
# ---------------------------------------------------------------------------
def _dilate_attn_kernel(q_ref, k_ref, v_ref, o_ref, logits_ref, *, ks, dil, wp, lq):
    f32 = jnp.float32
    q = q_ref[...].astype(f32)                               # (nh, hd, lq)
    offs = [(ki * dil) * wp + kj * dil for ki in range(ks) for kj in range(ks)]

    # Pass 1: per-neighbour logits (stored to a small VMEM scratch) + running max.
    m = None
    for j, off in enumerate(offs):
        k_nb = k_ref[:, :, off:off + lq].astype(f32)         # (nh, hd, lq)
        l = jnp.sum(q * k_nb, axis=1, keepdims=True)         # (nh, 1, lq)
        logits_ref[j] = l
        m = l if m is None else jnp.maximum(m, l)

    # Pass 2: fused exp / denominator / weighted sum (small live set: m, s, acc).
    s = jnp.zeros_like(m)
    acc = jnp.zeros_like(q)
    for j, off in enumerate(offs):
        e = jnp.exp(logits_ref[j] - m)                       # (nh, 1, lq)
        s = s + e
        v_nb = v_ref[:, :, off:off + lq].astype(f32)
        acc = acc + e * v_nb
    # TODO(synk): on v6e/v7x the q*k / e*v multiplies could stay in packed bf16 if
    # still VALU-bound; kept in f32 here for accuracy and v5e portability.
    o_ref[...] = (acc * pl.reciprocal(s, approx=True)).astype(o_ref.dtype)


def dilate_attention(q, k, v, *, kernel_size, dilation):
    """q, k, v: (B, H, W, nh, hd) -> (B, nh, hd, H, W).  Static dilation per call."""
    B, H, W, nh, hd = q.shape
    ks, dil = kernel_size, dilation
    pad = dil * (ks - 1) // 2
    wp = W + 2 * pad
    hp = H + 2 * pad
    lq = H * wp
    lk = (hp + 1) * wp        # one extra zero row keeps every shifted slice in-bounds

    # Channel-major, lane-dense layouts.  The pads are fused by XLA into the layout
    # transpose that is needed anyway (no separate halo/unfold materialization).
    def prep_q(t):
        t = jnp.transpose(t, (0, 3, 4, 1, 2))                          # (B,nh,hd,H,W)
        t = jnp.pad(t, ((0, 0),) * 4 + ((0, 2 * pad),))                # row stride wp
        return t.reshape(B, nh, hd, lq)

    def prep_kv(t):
        t = jnp.transpose(t, (0, 3, 4, 1, 2))
        t = jnp.pad(t, ((0, 0), (0, 0), (0, 0), (pad, pad + 1), (pad, pad)))
        return t.reshape(B, nh, hd, lk)

    qf, kf, vf = prep_q(q), prep_kv(k), prep_kv(v)

    kernel = functools.partial(_dilate_attn_kernel, ks=ks, dil=dil, wp=wp, lq=lq)
    of = pl.pallas_call(
        kernel,
        out_shape=jax.ShapeDtypeStruct((B, nh, hd, lq), q.dtype),
        grid=(B,),
        in_specs=[pl.BlockSpec((None, nh, hd, lq), lambda b: (b, 0, 0, 0)),
                  pl.BlockSpec((None, nh, hd, lk), lambda b: (b, 0, 0, 0)),
                  pl.BlockSpec((None, nh, hd, lk), lambda b: (b, 0, 0, 0))],
        out_specs=pl.BlockSpec((None, nh, hd, lq), lambda b: (b, 0, 0, 0)),
        scratch_shapes=[pltpu.VMEM((ks * ks, nh, 1, lq), jnp.float32)],
        compiler_params=pltpu.CompilerParams(dimension_semantics=("parallel",)),
    )(qf, kf, vf)

    # Drop the junk pad columns; valid pixels are at flat index y*wp + x, x < W.
    return of.reshape(B, nh, hd, H, wp)[..., :W]


# ---------------------------------------------------------------------------
# Full forward pass (mirrors MultiDilatelocalAttention.forward)
# ---------------------------------------------------------------------------
def multi_dilate_local_attention(x, params, *, num_heads, kernel_size, dilation,
                                 compute_dtype=jnp.bfloat16):
    B, H, W, C = x.shape
    D = len(dilation)
    head_dim = C // num_heads
    nh = num_heads // D                 # heads per dilation
    N = B * H * W
    scale = head_dim ** (-0.5)
    cd = compute_dtype

    w_qkv, w_proj, b_proj = params["w_qkv"], params["w_proj"], params["b_proj"]

    # Fold the softmax scale into the q rows of the qkv weight (tiny (C, C) op,
    # removes a per-pixel multiply from the attention kernel).
    w_qkv = jnp.concatenate([w_qkv[:C] * scale, w_qkv[C:]], axis=0)

    # --- qkv 1x1 conv (no bias) as Pallas matmul, bf16 in / bf16 out ---------------
    x_flat = x.reshape(N, C).astype(cd)
    qkv_flat = matmul(x_flat, w_qkv.T.astype(cd), out_dtype=cd)          # (N, 3C)
    # conv output channel: oc = s*C + i*d_per + h*head_dim + d
    qkv = qkv_flat.reshape(B, H, W, 3, D, nh, head_dim)

    outs = []
    for i, dil in enumerate(dilation):
        outs.append(dilate_attention(qkv[:, :, :, 0, i], qkv[:, :, :, 1, i],
                                     qkv[:, :, :, 2, i],
                                     kernel_size=kernel_size, dilation=dil))

    # --- reassemble channels: c = i*d_per + h*head_dim + d --------------------------
    out = jnp.stack(outs, axis=1)                            # (B, D, nh, hd, H, W)
    out = jnp.transpose(out, (0, 4, 5, 1, 2, 3)).reshape(N, C)
    # TODO(synk): the remaining layout transposes around the attention kernel are XLA
    # copies; indexing the 7-D qkv tensor directly from the attention pallas_call via
    # BlockSpec/index_map would remove them entirely.

    # --- final Linear proj as Pallas matmul (bf16 in, f32 out) ----------------------
    y = matmul(out, w_proj.T.astype(cd), b=b_proj.astype(jnp.float32),
               out_dtype=jnp.float32)
    # TODO(synk): attn_drop / proj_drop are nn.Dropout with p=0 (identity in eval) — omitted.
    return y.reshape(B, H, W, C).astype(x.dtype)


# ---------------------------------------------------------------------------
# Pure-JAX f32 reference mirroring the PyTorch forward (for correctness check)
# ---------------------------------------------------------------------------
def reference(x, w_qkv, w_proj, b_proj, num_heads, kernel_size, dilation):
    B, H, W, C = x.shape
    D = len(dilation)
    head_dim = C // num_heads
    nh = num_heads // D
    d_per = C // D
    ks = kernel_size
    scale = head_dim ** (-0.5)
    hp = jax.lax.Precision.HIGHEST

    x_nchw = jnp.transpose(x, (0, 3, 1, 2))
    qkv = jnp.einsum("oc,bchw->bohw", w_qkv, x_nchw, precision=hp)
    qkv = qkv.reshape(B, 3, D, d_per, H, W).transpose(2, 1, 0, 3, 4, 5)

    outs = []
    for i in range(D):
        dil = dilation[i]
        pad = dil * (ks - 1) // 2
        q, kk_, v = qkv[i, 0], qkv[i, 1], qkv[i, 2]      # (B, d_per, H, W)

        def unfold(t):
            tp = jnp.pad(t, ((0, 0), (0, 0), (pad, pad), (pad, pad)))
            pats = [tp[:, :, ki * dil:ki * dil + H, kj * dil:kj * dil + W]
                    for ki in range(ks) for kj in range(ks)]
            return jnp.stack(pats, axis=2)               # (B, d_per, ks*ks, H, W)

        q_r = q.reshape(B, nh, head_dim, H * W)
        k_u = unfold(kk_).reshape(B, nh, head_dim, ks * ks, H * W)
        v_u = unfold(v).reshape(B, nh, head_dim, ks * ks, H * W)
        logits = jnp.einsum("bhdn,bhdkn->bhkn", q_r, k_u, precision=hp) * scale
        attn = jax.nn.softmax(logits, axis=2)
        o = jnp.einsum("bhkn,bhdkn->bhdn", attn, v_u, precision=hp)
        o = o.reshape(B, nh * head_dim, H, W).transpose(0, 2, 3, 1)
        outs.append(o)
    y = jnp.stack(outs, axis=3).reshape(B, H, W, C)
    y = jnp.einsum("bhwc,oc->bhwo", y, w_proj, precision=hp) + b_proj
    return y


if __name__ == "__main__":
    B, H, W = 2, 16, 16
    dim, num_heads, kernel_size = 32, 8, 3
    dilation = (2, 3)

    keys = jax.random.split(jax.random.PRNGKey(0), 4)
    x = jax.random.normal(keys[0], (B, H, W, dim), dtype=jnp.float32)
    params = {
        "w_qkv": 0.1 * jax.random.normal(keys[1], (3 * dim, dim), dtype=jnp.float32),
        "w_proj": 0.1 * jax.random.normal(keys[2], (dim, dim), dtype=jnp.float32),
        "b_proj": 0.02 * jax.random.normal(keys[3], (dim,), dtype=jnp.float32),
    }

    fwd = jax.jit(functools.partial(
        multi_dilate_local_attention,
        num_heads=num_heads, kernel_size=kernel_size, dilation=dilation))
    y = fwd(x, params)
    jax.block_until_ready(y)

    y_ref = reference(x, params["w_qkv"], params["w_proj"], params["b_proj"],
                      num_heads, kernel_size, dilation)
    assert y.shape == (B, H, W, dim)
    # bf16 storage in the Pallas path vs f32 HIGHEST reference -> loose tolerance.
    assert jnp.allclose(y, y_ref, atol=5e-2, rtol=5e-2)
    print("KERNEL_OK")
</pallas_src>

<mosaic_0001>
module attributes {stable_mosaic.version = 11 : i64} {
  func.func @_matmul_kernel(%arg0: i32, %arg1: memref<512x32xbf16, #tpu.memory_space<vmem>>, %arg2: memref<32x96xbf16, #tpu.memory_space<vmem>>, %arg3: memref<512x96xbf16, #tpu.memory_space<vmem>>) attributes {dimension_semantics = [#tpu.dimension_semantics<parallel>], iteration_bounds = array<i64: 1>, scalar_prefetch = 0 : i64, scratch_operands = 0 : i64, tpu.core_type = #tpu.core_type<tc>, window_params = [{transform_indices = @transform_0, window_bounds = array<i64: 512, 32>}, {pipeline_mode = #tpu.pipeline_mode<synchronous>, transform_indices = @transform_1, window_bounds = array<i64: 32, 96>}, {transform_indices = @transform_2, window_bounds = array<i64: 512, 96>}]} {
    %c0 = arith.constant 0 : index
    %c0_0 = arith.constant 0 : index
    %0 = vector.load %arg1[%c0, %c0_0] : memref<512x32xbf16, #tpu.memory_space<vmem>>, vector<512x32xbf16>
    %c0_1 = arith.constant 0 : index
    %c0_2 = arith.constant 0 : index
    %1 = vector.load %arg2[%c0_1, %c0_2] : memref<32x96xbf16, #tpu.memory_space<vmem>>, vector<32x96xbf16>
    %cst = arith.constant dense<0.000000e+00> : vector<512x96xf32>
    %2 = tpu.matmul %0, %1, %cst {dimension_numbers = #tpu.dot_dimension_numbers<[1], [0], [0], [1], [0, 0, 1, 1], [], []>} : vector<512x32xbf16>, vector<32x96xbf16>, vector<512x96xf32> -> vector<512x96xf32>
    %3 = arith.truncf %2 : vector<512x96xf32> to vector<512x96xbf16>
    %c0_3 = arith.constant 0 : index
    %c0_4 = arith.constant 0 : index
    %4 = vector.load %arg3[%c0_3, %c0_4] : memref<512x96xbf16, #tpu.memory_space<vmem>>, vector<512x96xbf16>
    tpu.vector_store %arg3[%c0_3, %c0_4], %3 {strides = array<i32>} : memref<512x96xbf16, #tpu.memory_space<vmem>>, vector<512x96xbf16>,
    return
  }
  func.func @transform_0(%arg0: i32) -> (i32, i32) {
    %c0_i32 = arith.constant 0 : i32
    %c0_i32_0 = arith.constant 0 : i32
    return %arg0, %c0_i32 : i32, i32
  }
  func.func @transform_1(%arg0: i32) -> (i32, i32) {
    %c0_i32 = arith.constant 0 : i32
    %c0_i32_0 = arith.constant 0 : i32
    %c0_i32_1 = arith.constant 0 : i32
    return %c0_i32, %c0_i32_0 : i32, i32
  }
  func.func @transform_2(%arg0: i32) -> (i32, i32) {
    %c0_i32 = arith.constant 0 : i32
    %c0_i32_0 = arith.constant 0 : i32
    return %arg0, %c0_i32 : i32, i32
  }
}

module attributes {stable_mosaic.version = 11 : i64} {
  func.func @_dilate_attn_kernel(%arg0: i32, %arg1: memref<1x4x4x352xbf16, #tpu.memory_space<vmem>>, %arg2: memref<1x4x4x506xbf16, #tpu.memory_space<vmem>>, %arg3: memref<1x4x4x506xbf16, #tpu.memory_space<vmem>>, %arg4: memref<1x4x4x352xbf16, #tpu.memory_space<vmem>>, %arg5: memref<9x4x1x352xf32, #tpu.memory_space<vmem>>) attributes {dimension_semantics = [#tpu.dimension_semantics<parallel>], iteration_bounds = array<i64: 2>, scalar_prefetch = 0 : i64, scratch_operands = 1 : i64, tpu.core_type = #tpu.core_type<tc>, window_params = [{transform_indices = @transform_0, window_bounds = array<i64: 1, 4, 4, 352>}, {transform_indices = @transform_1, window_bounds = array<i64: 1, 4, 4, 506>}, {transform_indices = @transform_2, window_bounds = array<i64: 1, 4, 4, 506>}, {transform_indices = @transform_3, window_bounds = array<i64: 1, 4, 4, 352>}]} {
    %c0 = arith.constant 0 : index
    %c0_0 = arith.constant 0 : index
    %c0_1 = arith.constant 0 : index
    %c0_2 = arith.constant 0 : index
    %0 = vector.load %arg1[%c0, %c0_0, %c0_1, %c0_2] : memref<1x4x4x352xbf16, #tpu.memory_space<vmem>>, vector<1x4x4x352xbf16>
    %1 = vector.shape_cast %0 : vector<1x4x4x352xbf16> to vector<4x4x352xbf16>
    %2 = arith.extf %1 : vector<4x4x352xbf16> to vector<4x4x352xf32>
    %c0_3 = arith.constant 0 : index
    %c0_4 = arith.constant 0 : index
    %c0_5 = arith.constant 0 : index
    %c0_6 = arith.constant 0 : index
    %3 = vector.load %arg2[%c0_3, %c0_4, %c0_5, %c0_6] : memref<1x4x4x506xbf16, #tpu.memory_space<vmem>>, vector<1x4x4x352xbf16>
    %4 = vector.shape_cast %3 : vector<1x4x4x352xbf16> to vector<4x4x352xbf16>
    %5 = arith.extf %4 : vector<4x4x352xbf16> to vector<4x4x352xf32>
    %6 = arith.mulf %2, %5 : vector<4x4x352xf32>
    %cst = arith.constant dense<0.000000e+00> : vector<4x352xf32>
    %7 = vector.multi_reduction <add>, %6, %cst [1] : vector<4x4x352xf32> to vector<4x352xf32>
    %8 = vector.shape_cast %7 : vector<4x352xf32> to vector<4x1x352xf32>
    %c0_7 = arith.constant 0 : index
    %c0_8 = arith.constant 0 : index
    %c0_9 = arith.constant 0 : index
    %c0_10 = arith.constant 0 : index
    %9 = vector.load %arg5[%c0_7, %c0_8, %c0_9, %c0_10] : memref<9x4x1x352xf32, #tpu.memory_space<vmem>>, vector<1x4x1x352xf32>
    %10 = vector.shape_cast %9 : vector<1x4x1x352xf32> to vector<4x1x352xf32>
    %11 = vector.shape_cast %8 : vector<4x1x352xf32> to vector<1x4x1x352xf32>
    tpu.vector_store %arg5[%c0_7, %c0_8, %c0_9, %c0_10], %11 {strides = array<i32>} : memref<9x4x1x352xf32, #tpu.memory_space<vmem>>, vector<1x4x1x352xf32>,
    %c0_11 = arith.constant 0 : index
    %c0_12 = arith.constant 0 : index
    %c0_13 = arith.constant 0 : index
    %c3 = arith.constant 3 : index
    %12 = vector.load %arg2[%c0_11, %c0_12, %c0_13, %c3] : memref<1x4x4x506xbf16, #tpu.memory_space<vmem>>, vector<1x4x4x352xbf16>
    %13 = vector.shape_cast %12 : vector<1x4x4x352xbf16> to vector<4x4x352xbf16>
    %14 = arith.extf %13 : vector<4x4x352xbf16> to vector<4x4x352xf32>
    %15 = arith.mulf %2, %14 : vector<4x4x352xf32>
    %cst_14 = arith.constant dense<0.000000e+00> : vector<4x352xf32>
    %16 = vector.multi_reduction <add>, %15, %cst_14 [1] : vector<4x4x352xf32> to vector<4x352xf32>
    %17 = vector.shape_cast %16 : vector<4x352xf32> to vector<4x1x352xf32>
    %c1 = arith.constant 1 : index
    %c0_15 = arith.constant 0 : index
    %c0_16 = arith.constant 0 : index
    %c0_17 = arith.constant 0 : index
    %18 = vector.load %arg5[%c1, %c0_15, %c0_16, %c0_17] : memref<9x4x1x352xf32, #tpu.memory_space<vmem>>, vector<1x4x1x352xf32>
    %19 = vector.shape_cast %18 : vector<1x4x1x352xf32> to vector<4x1x352xf32>
    %20 = vector.shape_cast %17 : vector<4x1x352xf32> to vector<1x4x1x352xf32>
    tpu.vector_store %arg5[%c1, %c0_15, %c0_16, %c0_17], %20 {strides = array<i32>} : memref<9x4x1x352xf32, #tpu.memory_space<vmem>>, vector<1x4x1x352xf32>,
    %21 = arith.maximumf %8, %17 : vector<4x1x352xf32>
    %c0_18 = arith.constant 0 : index
    %c0_19 = arith.constant 0 : index
    %c0_20 = arith.constant 0 : index
    %c6 = arith.constant 6 : index
    %22 = vector.load %arg2[%c0_18, %c0_19, %c0_20, %c6] : memref<1x4x4x506xbf16, #tpu.memory_space<vmem>>, vector<1x4x4x352xbf16>
    %23 = vector.shape_cast %22 : vector<1x4x4x352xbf16> to vector<4x4x352xbf16>
    %24 = arith.extf %23 : vector<4x4x352xbf16> to vector<4x4x352xf32>
    %25 = arith.mulf %2, %24 : vector<4x4x352xf32>
    %cst_21 = arith.constant dense<0.000000e+00> : vector<4x352xf32>
    %26 = vector.multi_reduction <add>, %25, %cst_21 [1] : vector<4x4x352xf32> to vector<4x352xf32>
    %27 = vector.shape_cast %26 : vector<4x352xf32> to vector<4x1x352xf32>
    %c2 = arith.constant 2 : index
    %c0_22 = arith.constant 0 : index
    %c0_23 = arith.constant 0 : index
    %c0_24 = arith.constant 0 : index
    %28 = vector.load %arg5[%c2, %c0_22, %c0_23, %c0_24] : memref<9x4x1x352xf32, #tpu.memory_space<vmem>>, vector<1x4x1x352xf32>
    %29 = vector.shape_cast %28 : vector<1x4x1x352xf32> to vector<4x1x352xf32>
    %30 = vector.shape_cast %27 : vector<4x1x352xf32> to vector<1x4x1x352xf32>
    tpu.vector_store %arg5[%c2, %c0_22, %c0_23, %c0_24], %30 {strides = array<i32>} : memref<9x4x1x352xf32, #tpu.memory_space<vmem>>, vector<1x4x1x352xf32>,
    %31 = arith.maximumf %21, %27 : vector<4x1x352xf32>
    %c0_25 = arith.constant 0 : index
    %c0_26 = arith.constant 0 : index
    %c0_27 = arith.constant 0 : index
    %c66 = arith.constant 66 : index
    %32 = vector.load %arg2[%c0_25, %c0_26, %c0_27, %c66] : memref<1x4x4x506xbf16, #tpu.memory_space<vmem>>, vector<1x4x4x352xbf16>
    %33 = vector.shape_cast %32 : vector<1x4x4x352xbf16> to vector<4x4x352xbf16>
    %34 = arith.extf %33 : vector<4x4x352xbf16> to vector<4x4x352xf32>
    %35 = arith.mulf %2, %34 : vector<4x4x352xf32>
    %cst_28 = arith.constant dense<0.000000e+00> : vector<4x352xf32>
    %36 = vector.multi_reduction <add>, %35, %cst_28 [1] : vector<4x4x352xf32> to vector<4x352xf32>
    %37 = vector.shape_cast %36 : vector<4x352xf32> to vector<4x1x352xf32>
    %c3_29 = arith.constant 3 : index
    %c0_30 = arith.constant 0 : index
    %c0_31 = arith.constant 0 : index
    %c0_32 = arith.constant 0 : index
    %38 = vector.load %arg5[%c3_29, %c0_30, %c0_31, %c0_32] : memref<9x4x1x352xf32, #tpu.memory_space<vmem>>, vector<1x4x1x352xf32>
    %39 = vector.shape_cast %38 : vector<1x4x1x352xf32> to vector<4x1x352xf32>
    %40 = vector.shape_cast %37 : vector<4x1x352xf32> to vector<1x4x1x352xf32>
    tpu.vector_store %arg5[%c3_29, %c0_30, %c0_31, %c0_32], %40 {strides = array<i32>} : memref<9x4x1x352xf32, #tpu.memory_space<vmem>>, vector<1x4x1x352xf32>,
    %41 = arith.maximumf %31, %37 : vector<4x1x352xf32>
    %c0_33 = arith.constant 0 : index
    %c0_34 = arith.constant 0 : index
    %c0_35 = arith.constant 0 : index
    %c69 = arith.constant 69 : index
    %42 = vector.load %arg2[%c0_33, %c0_34, %c0_35, %c69] : memref<1x4x4x506xbf16, #tpu.memory_space<vmem>>, vector<1x4x4x352xbf16>
    %43 = vector.shape_cast %42 : vector<1x4x4x352xbf16> to vector<4x4x352xbf16>
    %44 = arith.extf %43 : vector<4x4x352xbf16> to vector<4x4x352xf32>
    %45 = arith.mulf %2, %44 : vector<4x4x352xf32>
    %cst_36 = arith.constant dense<0.000000e+00> : vector<4x352xf32>
    %46 = vector.multi_reduction <add>, %45, %cst_36 [1] : vector<4x4x352xf32> to vector<4x352xf32>
    %47 = vector.shape_cast %46 : vector<4x352xf32> to vector<4x1x352xf32>
    %c4 = arith.constant 4 : index
    %c0_37 = arith.constant 0 : index
    %c0_38 = arith.constant 0 : index
    %c0_39 = arith.constant 0 : index
    %48 = vector.load %arg5[%c4, %c0_37, %c0_38, %c0_39] : memref<9x4x1x352xf32, #tpu.memory_space<vmem>>, vector<1x4x1x352xf32>
    %49 = vector.shape_cast %48 : vector<1x4x1x352xf32> to vector<4x1x352xf32>
    %50 = vector.shape_cast %47 : vector<4x1x352xf32> to vector<1x4x1x352xf32>
    tpu.vector_store %arg5[%c4, %c0_37, %c0_38, %c0_39], %50 {strides = array<i32>} : memref<9x4x1x352xf32, #tpu.memory_space<vmem>>, vector<1x4x1x352xf32>,
    %51 = arith.maximumf %41, %47 : vector<4x1x352xf32>
    %c0_40 = arith.constant 0 : index
    %c0_41 = arith.constant 0 : index
    %c0_42 = arith.constant 0 : index
    %c72 = arith.constant 72 : index
    %52 = vector.load %arg2[%c0_40, %c0_41, %c0_42, %c72] : memref<1x4x4x506xbf16, #tpu.memory_space<vmem>>, vector<1x4x4x352xbf16>
    %53 = vector.shape_cast %52 : vector<1x4x4x352xbf16> to vector<4x4x352xbf16>
    %54 = arith.extf %53 : vector<4x4x352xbf16> to vector<4x4x352xf32>
    %55 = arith.mulf %2, %54 : vector<4x4x352xf32>
    %cst_43 = arith.constant dense<0.000000e+00> : vector<4x352xf32>
    %56 = vector.multi_reduction <add>, %55, %cst_43 [1] : vector<4x4x352xf32> to vector<4x352xf32>
    %57 = vector.shape_cast %56 : vector<4x352xf32> to vector<4x1x352xf32>
    %c5 = arith.constant 5 : index
    %c0_44 = arith.constant 0 : index
    %c0_45 = arith.constant 0 : index
    %c0_46 = arith.constant 0 : index
    %58 = vector.load %arg5[%c5, %c0_44, %c0_45, %c0_46] : memref<9x4x1x352xf32, #tpu.memory_space<vmem>>, vector<1x4x1x352xf32>
    %59 = vector.shape_cast %58 : vector<1x4x1x352xf32> to vector<4x1x352xf32>
    %60 = vector.shape_cast %57 : vector<4x1x352xf32> to vector<1x4x1x352xf32>
    tpu.vector_store %arg5[%c5, %c0_44, %c0_45, %c0_46], %60 {strides = array<i32>} : memref<9x4x1x352xf32, #tpu.memory_space<vmem>>, vector<1x4x1x352xf32>,
    %61 = arith.maximumf %51, %57 : vector<4x1x352xf32>
    %c0_47 = arith.constant 0 : index
    %c0_48 = arith.constant 0 : index
    %c0_49 = arith.constant 0 : index
    %c132 = arith.constant 132 : index
    %62 = vector.load %arg2[%c0_47, %c0_48, %c0_49, %c132] : memref<1x4x4x506xbf16, #tpu.memory_space<vmem>>, vector<1x4x4x352xbf16>
    %63 = vector.shape_cast %62 : vector<1x4x4x352xbf16> to vector<4x4x352xbf16>
    %64 = arith.extf %63 : vector<4x4x352xbf16> to vector<4x4x352xf32>
    %65 = arith.mulf %2, %64 : vector<4x4x352xf32>
    %cst_50 = arith.constant dense<0.000000e+00> : vector<4x352xf32>
    %66 = vector.multi_reduction <add>, %65, %cst_50 [1] : vector<4x4x352xf32> to vector<4x352xf32>
    %67 = vector.shape_cast %66 : vector<4x352xf32> to vector<4x1x352xf32>
    %c6_51 = arith.constant 6 : index
    %c0_52 = arith.constant 0 : index
    %c0_53 = arith.constant 0 : index
    %c0_54 = arith.constant 0 : index
    %68 = vector.load %arg5[%c6_51, %c0_52, %c0_53, %c0_54] : memref<9x4x1x352xf32, #tpu.memory_space<vmem>>, vector<1x4x1x352xf32>
    %69 = vector.shape_cast %68 : vector<1x4x1x352xf32> to vector<4x1x352xf32>
    %70 = vector.shape_cast %67 : vector<4x1x352xf32> to vector<1x4x1x352xf32>
    tpu.vector_store %arg5[%c6_51, %c0_52, %c0_53, %c0_54], %70 {strides = array<i32>} : memref<9x4x1x352xf32, #tpu.memory_space<vmem>>, vector<1x4x1x352xf32>,
    %71 = arith.maximumf %61, %67 : vector<4x1x352xf32>
    %c0_55 = arith.constant 0 : index
    %c0_56 = arith.constant 0 : index
    %c0_57 = arith.constant 0 : index
    %c135 = arith.constant 135 : index
    %72 = vector.load %arg2[%c0_55, %c0_56, %c0_57, %c135] : memref<1x4x4x506xbf16, #tpu.memory_space<vmem>>, vector<1x4x4x352xbf16>
    %73 = vector.shape_cast %72 : vector<1x4x4x352xbf16> to vector<4x4x352xbf16>
    %74 = arith.extf %73 : vector<4x4x352xbf16> to vector<4x4x352xf32>
    %75 = arith.mulf %2, %74 : vector<4x4x352xf32>
    %cst_58 = arith.constant dense<0.000000e+00> : vector<4x352xf32>
    %76 = vector.multi_reduction <add>, %75, %cst_58 [1] : vector<4x4x352xf32> to vector<4x352xf32>
    %77 = vector.shape_cast %76 : vector<4x352xf32> to vector<4x1x352xf32>
    %c7 = arith.constant 7 : index
    %c0_59 = arith.constant 0 : index
    %c0_60 = arith.constant 0 : index
    %c0_61 = arith.constant 0 : index
    %78 = vector.load %arg5[%c7, %c0_59, %c0_60, %c0_61] : memref<9x4x1x352xf32, #tpu.memory_space<vmem>>, vector<1x4x1x352xf32>
    %79 = vector.shape_cast %78 : vector<1x4x1x352xf32> to vector<4x1x352xf32>
    %80 = vector.shape_cast %77 : vector<4x1x352xf32> to vector<1x4x1x352xf32>
    tpu.vector_store %arg5[%c7, %c0_59, %c0_60, %c0_61], %80 {strides = array<i32>} : memref<9x4x1x352xf32, #tpu.memory_space<vmem>>, vector<1x4x1x352xf32>,
    %81 = arith.maximumf %71, %77 : vector<4x1x352xf32>
    %c0_62 = arith.constant 0 : index
    %c0_63 = arith.constant 0 : index
    %c0_64 = arith.constant 0 : index
    %c138 = arith.constant 138 : index
    %82 = vector.load %arg2[%c0_62, %c0_63, %c0_64, %c138] : memref<1x4x4x506xbf16, #tpu.memory_space<vmem>>, vector<1x4x4x352xbf16>
    %83 = vector.shape_cast %82 : vector<1x4x4x352xbf16> to vector<4x4x352xbf16>
    %84 = arith.extf %83 : vector<4x4x352xbf16> to vector<4x4x352xf32>
    %85 = arith.mulf %2, %84 : vector<4x4x352xf32>
    %cst_65 = arith.constant dense<0.000000e+00> : vector<4x352xf32>
    %86 = vector.multi_reduction <add>, %85, %cst_65 [1] : vector<4x4x352xf32> to vector<4x352xf32>
    %87 = vector.shape_cast %86 : vector<4x352xf32> to vector<4x1x352xf32>
    %c8 = arith.constant 8 : index
    %c0_66 = arith.constant 0 : index
    %c0_67 = arith.constant 0 : index
    %c0_68 = arith.constant 0 : index
    %88 = vector.load %arg5[%c8, %c0_66, %c0_67, %c0_68] : memref<9x4x1x352xf32, #tpu.memory_space<vmem>>, vector<1x4x1x352xf32>
    %89 = vector.shape_cast %88 : vector<1x4x1x352xf32> to vector<4x1x352xf32>
    %90 = vector.shape_cast %87 : vector<4x1x352xf32> to vector<1x4x1x352xf32>
    tpu.vector_store %arg5[%c8, %c0_66, %c0_67, %c0_68], %90 {strides = array<i32>} : memref<9x4x1x352xf32, #tpu.memory_space<vmem>>, vector<1x4x1x352xf32>,
    %91 = arith.maximumf %81, %87 : vector<4x1x352xf32>
    %cst_69 = arith.constant 0.000000e+00 : f32
    %92 = vector.broadcast %cst_69 : f32 to vector<4x1x352xf32>
    %cst_70 = arith.constant 0.000000e+00 : f32
    %93 = vector.broadcast %cst_70 : f32 to vector<4x4x352xf32>
    %c0_71 = arith.constant 0 : index
    %c0_72 = arith.constant 0 : index
    %c0_73 = arith.constant 0 : index
    %c0_74 = arith.constant 0 : index
    %94 = vector.load %arg5[%c0_71, %c0_72, %c0_73, %c0_74] : memref<9x4x1x352xf32, #tpu.memory_space<vmem>>, vector<1x4x1x352xf32>
    %95 = vector.shape_cast %94 : vector<1x4x1x352xf32> to vector<4x1x352xf32>
    %96 = arith.subf %95, %91 : vector<4x1x352xf32>
    %97 = math.exp %96 : vector<4x1x352xf32>
    %98 = arith.addf %92, %97 : vector<4x1x352xf32>
    %c0_75 = arith.constant 0 : index
    %c0_76 = arith.constant 0 : index
    %c0_77 = arith.constant 0 : index
    %c0_78 = arith.constant 0 : index
    %99 = vector.load %arg3[%c0_75, %c0_76, %c0_77, %c0_78] : memref<1x4x4x506xbf16, #tpu.memory_space<vmem>>, vector<1x4x4x352xbf16>
    %100 = vector.shape_cast %99 : vector<1x4x4x352xbf16> to vector<4x4x352xbf16>
    %101 = arith.extf %100 : vector<4x4x352xbf16> to vector<4x4x352xf32>
    %102 = vector.broadcast %97 : vector<4x1x352xf32> to vector<4x4x352xf32>
    %103 = arith.mulf %102, %101 : vector<4x4x352xf32>
    %104 = arith.addf %93, %103 : vector<4x4x352xf32>
    %c1_79 = arith.constant 1 : index
    %c0_80 = arith.constant 0 : index
    %c0_81 = arith.constant 0 : index
    %c0_82 = arith.constant 0 : index
    %105 = vector.load %arg5[%c1_79, %c0_80, %c0_81, %c0_82] : memref<9x4x1x352xf32, #tpu.memory_space<vmem>>, vector<1x4x1x352xf32>
    %106 = vector.shape_cast %105 : vector<1x4x1x352xf32> to vector<4x1x352xf32>
    %107 = arith.subf %106, %91 : vector<4x1x352xf32>
    %108 = math.exp %107 : vector<4x1x352xf32>
    %109 = arith.addf %98, %108 : vector<4x1x352xf32>
    %c0_83 = arith.constant 0 : index
    %c0_84 = arith.constant 0 : index
    %c0_85 = arith.constant 0 : index
    %c3_86 = arith.constant 3 : index
    %110 = vector.load %arg3[%c0_83, %c0_84, %c0_85, %c3_86] : memref<1x4x4x506xbf16, #tpu.memory_space<vmem>>, vector<1x4x4x352xbf16>
    %111 = vector.shape_cast %110 : vector<1x4x4x352xbf16> to vector<4x4x352xbf16>
    %112 = arith.extf %111 : vector<4x4x352xbf16> to vector<4x4x352xf32>
    %113 = vector.broadcast %108 : vector<4x1x352xf32> to vector<4x4x352xf32>
    %114 = arith.mulf %113, %112 : vector<4x4x352xf32>
    %115 = arith.addf %104, %114 : vector<4x4x352xf32>
    %c2_87 = arith.constant 2 : index
    %c0_88 = arith.constant 0 : index
    %c0_89 = arith.constant 0 : index
    %c0_90 = arith.constant 0 : index
    %116 = vector.load %arg5[%c2_87, %c0_88, %c0_89, %c0_90] : memref<9x4x1x352xf32, #tpu.memory_space<vmem>>, vector<1x4x1x352xf32>
    %117 = vector.shape_cast %116 : vector<1x4x1x352xf32> to vector<4x1x352xf32>
    %118 = arith.subf %117, %91 : vector<4x1x352xf32>
    %119 = math.exp %118 : vector<4x1x352xf32>
    %120 = arith.addf %109, %119 : vector<4x1x352xf32>
    %c0_91 = arith.constant 0 : index
    %c0_92 = arith.constant 0 : index
    %c0_93 = arith.constant 0 : index
    %c6_94 = arith.constant 6 : index
    %121 = vector.load %arg3[%c0_91, %c0_92, %c0_93, %c6_94] : memref<1x4x4x506xbf16, #tpu.memory_space<vmem>>, vector<1x4x4x352xbf16>
    %122 = vector.shape_cast %121 : vector<1x4x4x352xbf16> to vector<4x4x352xbf16>
    %123 = arith.extf %122 : vector<4x4x352xbf16> to vector<4x4x352xf32>
    %124 = vector.broadcast %119 : vector<4x1x352xf32> to vector<4x4x352xf32>
    %125 = arith.mulf %124, %123 : vector<4x4x352xf32>
    %126 = arith.addf %115, %125 : vector<4x4x352xf32>
    %c3_95 = arith.constant 3 : index
    %c0_96 = arith.constant 0 : index
    %c0_97 = arith.constant 0 : index
    %c0_98 = arith.constant 0 : index
    %127 = vector.load %arg5[%c3_95, %c0_96, %c0_97, %c0_98] : memref<9x4x1x352xf32, #tpu.memory_space<vmem>>, vector<1x4x1x352xf32>
    %128 = vector.shape_cast %127 : vector<1x4x1x352xf32> to vector<4x1x352xf32>
    %129 = arith.subf %128, %91 : vector<4x1x352xf32>
    %130 = math.exp %129 : vector<4x1x352xf32>
    %131 = arith.addf %120, %130 : vector<4x1x352xf32>
    %c0_99 = arith.constant 0 : index
    %c0_100 = arith.constant 0 : index
    %c0_101 = arith.constant 0 : index
    %c66_102 = arith.constant 66 : index
    %132 = vector.load %arg3[%c0_99, %c0_100, %c0_101, %c66_102] : memref<1x4x4x506xbf16, #tpu.memory_space<vmem>>, vector<1x4x4x352xbf16>
    %133 = vector.shape_cast %132 : vector<1x4x4x352xbf16> to vector<4x4x352xbf16>
    %134 = arith.extf %133 : vector<4x4x352xbf16> to vector<4x4x352xf32>
    %135 = vector.broadcast %130 : vector<4x1x352xf32> to vector<4x4x352xf32>
    %136 = arith.mulf %135, %134 : vector<4x4x352xf32>
    %137 = arith.addf %126, %136 : vector<4x4x352xf32>
    %c4_103 = arith.constant 4 : index
    %c0_104 = arith.constant 0 : index
    %c0_105 = arith.constant 0 : index
    %c0_106 = arith.constant 0 : index
    %138 = vector.load %arg5[%c4_103, %c0_104, %c0_105, %c0_106] : memref<9x4x1x352xf32, #tpu.memory_space<vmem>>, vector<1x4x1x352xf32>
    %139 = vector.shape_cast %138 : vector<1x4x1x352xf32> to vector<4x1x352xf32>
    %140 = arith.subf %139, %91 : vector<4x1x352xf32>
    %141 = math.exp %140 : vector<4x1x352xf32>
    %142 = arith.addf %131, %141 : vector<4x1x352xf32>
    %c0_107 = arith.constant 0 : index
    %c0_108 = arith.constant 0 : index
    %c0_109 = arith.constant 0 : index
    %c69_110 = arith.constant 69 : index
    %143 = vector.load %arg3[%c0_107, %c0_108, %c0_109, %c69_110] : memref<1x4x4x506xbf16, #tpu.memory_space<vmem>>, vector<1x4x4x352xbf16>
    %144 = vector.shape_cast %143 : vector<1x4x4x352xbf16> to vector<4x4x352xbf16>
    %145 = arith.extf %144 : vector<4x4x352xbf16> to vector<4x4x352xf32>
    %146 = vector.broadcast %141 : vector<4x1x352xf32> to vector<4x4x352xf32>
    %147 = arith.mulf %146, %145 : vector<4x4x352xf32>
    %148 = arith.addf %137, %147 : vector<4x4x352xf32>
    %c5_111 = arith.constant 5 : index
    %c0_112 = arith.constant 0 : index
    %c0_113 = arith.constant 0 : index
    %c0_114 = arith.constant 0 : index
    %149 = vector.load %arg5[%c5_111, %c0_112, %c0_113, %c0_114] : memref<9x4x1x352xf32, #tpu.memory_space<vmem>>, vector<1x4x1x352xf32>
    %150 = vector.shape_cast %149 : vector<1x4x1x352xf32> to vector<4x1x352xf32>
    %151 = arith.subf %150, %91 : vector<4x1x352xf32>
    %152 = math.exp %151 : vector<4x1x352xf32>
    %153 = arith.addf %142, %152 : vector<4x1x352xf32>
    %c0_115 = arith.constant 0 : index
    %c0_116 = arith.constant 0 : index
    %c0_117 = arith.constant 0 : index
    %c72_118 = arith.constant 72 : index
    %154 = vector.load %arg3[%c0_115, %c0_116, %c0_117, %c72_118] : memref<1x4x4x506xbf16, #tpu.memory_space<vmem>>, vector<1x4x4x352xbf16>
    %155 = vector.shape_cast %154 : vector<1x4x4x352xbf16> to vector<4x4x352xbf16>
    %156 = arith.extf %155 : vector<4x4x352xbf16> to vector<4x4x352xf32>
    %157 = vector.broadcast %152 : vector<4x1x352xf32> to vector<4x4x352xf32>
    %158 = arith.mulf %157, %156 : vector<4x4x352xf32>
    %159 = arith.addf %148, %158 : vector<4x4x352xf32>
    %c6_119 = arith.constant 6 : index
    %c0_120 = arith.constant 0 : index
    %c0_121 = arith.constant 0 : index
    %c0_122 = arith.constant 0 : index
    %160 = vector.load %arg5[%c6_119, %c0_120, %c0_121, %c0_122] : memref<9x4x1x352xf32, #tpu.memory_space<vmem>>, vector<1x4x1x352xf32>
    %161 = vector.shape_cast %160 : vector<1x4x1x352xf32> to vector<4x1x352xf32>
    %162 = arith.subf %161, %91 : vector<4x1x352xf32>
    %163 = math.exp %162 : vector<4x1x352xf32>
    %164 = arith.addf %153, %163 : vector<4x1x352xf32>
    %c0_123 = arith.constant 0 : index
    %c0_124 = arith.constant 0 : index
    %c0_125 = arith.constant 0 : index
    %c132_126 = arith.constant 132 : index
    %165 = vector.load %arg3[%c0_123, %c0_124, %c0_125, %c132_126] : memref<1x4x4x506xbf16, #tpu.memory_space<vmem>>, vector<1x4x4x352xbf16>
    %166 = vector.shape_cast %165 : vector<1x4x4x352xbf16> to vector<4x4x352xbf16>
    %167 = arith.extf %166 : vector<4x4x352xbf16> to vector<4x4x352xf32>
    %168 = vector.broadcast %163 : vector<4x1x352xf32> to vector<4x4x352xf32>
    %169 = arith.mulf %168, %167 : vector<4x4x352xf32>
    %170 = arith.addf %159, %169 : vector<4x4x352xf32>
    %c7_127 = arith.constant 7 : index
    %c0_128 = arith.constant 0 : index
    %c0_129 = arith.constant 0 : index
    %c0_130 = arith.constant 0 : index
    %171 = vector.load %arg5[%c7_127, %c0_128, %c0_129, %c0_130] : memref<9x4x1x352xf32, #tpu.memory_space<vmem>>, vector<1x4x1x352xf32>
    %172 = vector.shape_cast %171 : vector<1x4x1x352xf32> to vector<4x1x352xf32>
    %173 = arith.subf %172, %91 : vector<4x1x352xf32>
    %174 = math.exp %173 : vector<4x1x352xf32>
    %175 = arith.addf %164, %174 : vector<4x1x352xf32>
    %c0_131 = arith.constant 0 : index
    %c0_132 = arith.constant 0 : index
    %c0_133 = arith.constant 0 : index
    %c135_134 = arith.constant 135 : index
    %176 = vector.load %arg3[%c0_131, %c0_132, %c0_133, %c135_134] : memref<1x4x4x506xbf16, #tpu.memory_space<vmem>>, vector<1x4x4x352xbf16>
    %177 = vector.shape_cast %176 : vector<1x4x4x352xbf16> to vector<4x4x352xbf16>
    %178 = arith.extf %177 : vector<4x4x352xbf16> to vector<4x4x352xf32>
    %179 = vector.broadcast %174 : vector<4x1x352xf32> to vector<4x4x352xf32>
    %180 = arith.mulf %179, %178 : vector<4x4x352xf32>
    %181 = arith.addf %170, %180 : vector<4x4x352xf32>
    %c8_135 = arith.constant 8 : index
    %c0_136 = arith.constant 0 : index
    %c0_137 = arith.constant 0 : index
    %c0_138 = arith.constant 0 : index
    %182 = vector.load %arg5[%c8_135, %c0_136, %c0_137, %c0_138] : memref<9x4x1x352xf32, #tpu.memory_space<vmem>>, vector<1x4x1x352xf32>
    %183 = vector.shape_cast %182 : vector<1x4x1x352xf32> to vector<4x1x352xf32>
    %184 = arith.subf %183, %91 : vector<4x1x352xf32>
    %185 = math.exp %184 : vector<4x1x352xf32>
    %186 = arith.addf %175, %185 : vector<4x1x352xf32>
    %c0_139 = arith.constant 0 : index
    %c0_140 = arith.constant 0 : index
    %c0_141 = arith.constant 0 : index
    %c138_142 = arith.constant 138 : index
    %187 = vector.load %arg3[%c0_139, %c0_140, %c0_141, %c138_142] : memref<1x4x4x506xbf16, #tpu.memory_space<vmem>>, vector<1x4x4x352xbf16>
    %188 = vector.shape_cast %187 : vector<1x4x4x352xbf16> to vector<4x4x352xbf16>
    %189 = arith.extf %188 : vector<4x4x352xbf16> to vector<4x4x352xf32>
    %190 = vector.broadcast %185 : vector<4x1x352xf32> to vector<4x4x352xf32>
    %191 = arith.mulf %190, %189 : vector<4x4x352xf32>
    %192 = arith.addf %181, %191 : vector<4x4x352xf32>
    %193 = tpu.reciprocal %186 {approx = true} : vector<4x1x352xf32> -> vector<4x1x352xf32>
    %194 = vector.broadcast %193 : vector<4x1x352xf32> to vector<4x4x352xf32>
    %195 = arith.mulf %192, %194 : vector<4x4x352xf32>
    %196 = arith.truncf %195 : vector<4x4x352xf32> to vector<4x4x352xbf16>
    %c0_143 = arith.constant 0 : index
    %c0_144 = arith.constant 0 : index
    %c0_145 = arith.constant 0 : index
    %c0_146 = arith.constant 0 : index
    %197 = vector.load %arg4[%c0_143, %c0_144, %c0_145, %c0_146] : memref<1x4x4x352xbf16, #tpu.memory_space<vmem>>, vector<1x4x4x352xbf16>
    %198 = vector.shape_cast %197 : vector<1x4x4x352xbf16> to vector<4x4x352xbf16>
    %199 = vector.shape_cast %196 : vector<4x4x352xbf16> to vector<1x4x4x352xbf16>
    tpu.vector_store %arg4[%c0_143, %c0_144, %c0_145, %c0_146], %199 {strides = array<i32>} : memref<1x4x4x352xbf16, #tpu.memory_space<vmem>>, vector<1x4x4x352xbf16>,
    return
  }
  func.func @transform_0(%arg0: i32) -> (i32, i32, i32, i32) {
    %c0_i32 = arith.constant 0 : i32
    %c0_i32_0 = arith.constant 0 : i32
    %c0_i32_1 = arith.constant 0 : i32
    %c0_i32_2 = arith.constant 0 : i32
    return %arg0, %c0_i32, %c0_i32_0, %c0_i32_1 : i32, i32, i32, i32
  }
  func.func @transform_1(%arg0: i32) -> (i32, i32, i32, i32) {
    %c0_i32 = arith.constant 0 : i32
    %c0_i32_0 = arith.constant 0 : i32
    %c0_i32_1 = arith.constant 0 : i32
    %c0_i32_2 = arith.constant 0 : i32
    return %arg0, %c0_i32, %c0_i32_0, %c0_i32_1 : i32, i32, i32, i32
  }
  func.func @transform_2(%arg0: i32) -> (i32, i32, i32, i32) {
    %c0_i32 = arith.constant 0 : i32
    %c0_i32_0 = arith.constant 0 : i32
    %c0_i32_1 = arith.constant 0 : i32
    %c0_i32_2 = arith.constant 0 : i32
    return %arg0, %c0_i32, %c0_i32_0, %c0_i32_1 : i32, i32, i32, i32
  }
  func.func @transform_3(%arg0: i32) -> (i32, i32, i32, i32) {
    %c0_i32 = arith.constant 0 : i32
    %c0_i32_0 = arith.constant 0 : i32
    %c0_i32_1 = arith.constant 0 : i32
    %c0_i32_2 = arith.constant 0 : i32
    return %arg0, %c0_i32, %c0_i32_0, %c0_i32_1 : i32, i32, i32, i32
  }
}

module attributes {stable_mosaic.version = 11 : i64} {
  func.func @_dilate_attn_kernel(%arg0: i32, %arg1: memref<1x4x4x320xbf16, #tpu.memory_space<vmem>>, %arg2: memref<1x4x4x420xbf16, #tpu.memory_space<vmem>>, %arg3: memref<1x4x4x420xbf16, #tpu.memory_space<vmem>>, %arg4: memref<1x4x4x320xbf16, #tpu.memory_space<vmem>>, %arg5: memref<9x4x1x320xf32, #tpu.memory_space<vmem>>) attributes {dimension_semantics = [#tpu.dimension_semantics<parallel>], iteration_bounds = array<i64: 2>, scalar_prefetch = 0 : i64, scratch_operands = 1 : i64, tpu.core_type = #tpu.core_type<tc>, window_params = [{transform_indices = @transform_0, window_bounds = array<i64: 1, 4, 4, 320>}, {transform_indices = @transform_1, window_bounds = array<i64: 1, 4, 4, 420>}, {transform_indices = @transform_2, window_bounds = array<i64: 1, 4, 4, 420>}, {transform_indices = @transform_3, window_bounds = array<i64: 1, 4, 4, 320>}]} {
    %c0 = arith.constant 0 : index
    %c0_0 = arith.constant 0 : index
    %c0_1 = arith.constant 0 : index
    %c0_2 = arith.constant 0 : index
    %0 = vector.load %arg1[%c0, %c0_0, %c0_1, %c0_2] : memref<1x4x4x320xbf16, #tpu.memory_space<vmem>>, vector<1x4x4x320xbf16>
    %1 = vector.shape_cast %0 : vector<1x4x4x320xbf16> to vector<4x4x320xbf16>
    %2 = arith.extf %1 : vector<4x4x320xbf16> to vector<4x4x320xf32>
    %c0_3 = arith.constant 0 : index
    %c0_4 = arith.constant 0 : index
    %c0_5 = arith.constant 0 : index
    %c0_6 = arith.constant 0 : index
    %3 = vector.load %arg2[%c0_3, %c0_4, %c0_5, %c0_6] : memref<1x4x4x420xbf16, #tpu.memory_space<vmem>>, vector<1x4x4x320xbf16>
    %4 = vector.shape_cast %3 : vector<1x4x4x320xbf16> to vector<4x4x320xbf16>
    %5 = arith.extf %4 : vector<4x4x320xbf16> to vector<4x4x320xf32>
    %6 = arith.mulf %2, %5 : vector<4x4x320xf32>
    %cst = arith.constant dense<0.000000e+00> : vector<4x320xf32>
    %7 = vector.multi_reduction <add>, %6, %cst [1] : vector<4x4x320xf32> to vector<4x320xf32>
    %8 = vector.shape_cast %7 : vector<4x320xf32> to vector<4x1x320xf32>
    %c0_7 = arith.constant 0 : index
    %c0_8 = arith.constant 0 : index
    %c0_9 = arith.constant 0 : index
    %c0_10 = arith.constant 0 : index
    %9 = vector.load %arg5[%c0_7, %c0_8, %c0_9, %c0_10] : memref<9x4x1x320xf32, #tpu.memory_space<vmem>>, vector<1x4x1x320xf32>
    %10 = vector.shape_cast %9 : vector<1x4x1x320xf32> to vector<4x1x320xf32>
    %11 = vector.shape_cast %8 : vector<4x1x320xf32> to vector<1x4x1x320xf32>
    tpu.vector_store %arg5[%c0_7, %c0_8, %c0_9, %c0_10], %11 {strides = array<i32>} : memref<9x4x1x320xf32, #tpu.memory_space<vmem>>, vector<1x4x1x320xf32>,
    %c0_11 = arith.constant 0 : index
    %c0_12 = arith.constant 0 : index
    %c0_13 = arith.constant 0 : index
    %c2 = arith.constant 2 : index
    %12 = vector.load %arg2[%c0_11, %c0_12, %c0_13, %c2] : memref<1x4x4x420xbf16, #tpu.memory_space<vmem>>, vector<1x4x4x320xbf16>
    %13 = vector.shape_cast %12 : vector<1x4x4x320xbf16> to vector<4x4x320xbf16>
    %14 = arith.extf %13 : vector<4x4x320xbf16> to vector<4x4x320xf32>
    %15 = arith.mulf %2, %14 : vector<4x4x320xf32>
    %cst_14 = arith.constant dense<0.000000e+00> : vector<4x320xf32>
    %16 = vector.multi_reduction <add>, %15, %cst_14 [1] : vector<4x4x320xf32> to vector<4x320xf32>
    %17 = vector.shape_cast %16 : vector<4x320xf32> to vector<4x1x320xf32>
    %c1 = arith.constant 1 : index
    %c0_15 = arith.constant 0 : index
    %c0_16 = arith.constant 0 : index
    %c0_17 = arith.constant 0 : index
    %18 = vector.load %arg5[%c1, %c0_15, %c0_16, %c0_17] : memref<9x4x1x320xf32, #tpu.memory_space<vmem>>, vector<1x4x1x320xf32>
    %19 = vector.shape_cast %18 : vector<1x4x1x320xf32> to vector<4x1x320xf32>
    %20 = vector.shape_cast %17 : vector<4x1x320xf32> to vector<1x4x1x320xf32>
    tpu.vector_store %arg5[%c1, %c0_15, %c0_16, %c0_17], %20 {strides = array<i32>} : memref<9x4x1x320xf32, #tpu.memory_space<vmem>>, vector<1x4x1x320xf32>,
    %21 = arith.maximumf %8, %17 : vector<4x1x320xf32>
    %c0_18 = arith.constant 0 : index
    %c0_19 = arith.constant 0 : index
    %c0_20 = arith.constant 0 : index
    %c4 = arith.constant 4 : index
    %22 = vector.load %arg2[%c0_18, %c0_19, %c0_20, %c4] : memref<1x4x4x420xbf16, #tpu.memory_space<vmem>>, vector<1x4x4x320xbf16>
    %23 = vector.shape_cast %22 : vector<1x4x4x320xbf16> to vector<4x4x320xbf16>
    %24 = arith.extf %23 : vector<4x4x320xbf16> to vector<4x4x320xf32>
    %25 = arith.mulf %2, %24 : vector<4x4x320xf32>
    %cst_21 = arith.constant dense<0.000000e+00> : vector<4x320xf32>
    %26 = vector.multi_reduction <add>, %25, %cst_21 [1] : vector<4x4x320xf32> to vector<4x320xf32>
    %27 = vector.shape_cast %26 : vector<4x320xf32> to vector<4x1x320xf32>
    %c2_22 = arith.constant 2 : index
    %c0_23 = arith.constant 0 : index
    %c0_24 = arith.constant 0 : index
    %c0_25 = arith.constant 0 : index
    %28 = vector.load %arg5[%c2_22, %c0_23, %c0_24, %c0_25] : memref<9x4x1x320xf32, #tpu.memory_space<vmem>>, vector<1x4x1x320xf32>
    %29 = vector.shape_cast %28 : vector<1x4x1x320xf32> to vector<4x1x320xf32>
    %30 = vector.shape_cast %27 : vector<4x1x320xf32> to vector<1x4x1x320xf32>
    tpu.vector_store %arg5[%c2_22, %c0_23, %c0_24, %c0_25], %30 {strides = array<i32>} : memref<9x4x1x320xf32, #tpu.memory_space<vmem>>, vector<1x4x1x320xf32>,
    %31 = arith.maximumf %21, %27 : vector<4x1x320xf32>
    %c0_26 = arith.constant 0 : index
    %c0_27 = arith.constant 0 : index
    %c0_28 = arith.constant 0 : index
    %c40 = arith.constant 40 : index
    %32 = vector.load %arg2[%c0_26, %c0_27, %c0_28, %c40] : memref<1x4x4x420xbf16, #tpu.memory_space<vmem>>, vector<1x4x4x320xbf16>
    %33 = vector.shape_cast %32 : vector<1x4x4x320xbf16> to vector<4x4x320xbf16>
    %34 = arith.extf %33 : vector<4x4x320xbf16> to vector<4x4x320xf32>
    %35 = arith.mulf %2, %34 : vector<4x4x320xf32>
    %cst_29 = arith.constant dense<0.000000e+00> : vector<4x320xf32>
    %36 = vector.multi_reduction <add>, %35, %cst_29 [1] : vector<4x4x320xf32> to vector<4x320xf32>
    %37 = vector.shape_cast %36 : vector<4x320xf32> to vector<4x1x320xf32>
    %c3 = arith.constant 3 : index
    %c0_30 = arith.constant 0 : index
    %c0_31 = arith.constant 0 : index
    %c0_32 = arith.constant 0 : index
    %38 = vector.load %arg5[%c3, %c0_30, %c0_31, %c0_32] : memref<9x4x1x320xf32, #tpu.memory_space<vmem>>, vector<1x4x1x320xf32>
    %39 = vector.shape_cast %38 : vector<1x4x1x320xf32> to vector<4x1x320xf32>
    %40 = vector.shape_cast %37 : vector<4x1x320xf32> to vector<1x4x1x320xf32>
    tpu.vector_store %arg5[%c3, %c0_30, %c0_31, %c0_32], %40 {strides = array<i32>} : memref<9x4x1x320xf32, #tpu.memory_space<vmem>>, vector<1x4x1x320xf32>,
    %41 = arith.maximumf %31, %37 : vector<4x1x320xf32>
    %c0_33 = arith.constant 0 : index
    %c0_34 = arith.constant 0 : index
    %c0_35 = arith.constant 0 : index
    %c42 = arith.constant 42 : index
    %42 = vector.load %arg2[%c0_33, %c0_34, %c0_35, %c42] : memref<1x4x4x420xbf16, #tpu.memory_space<vmem>>, vector<1x4x4x320xbf16>
    %43 = vector.shape_cast %42 : vector<1x4x4x320xbf16> to vector<4x4x320xbf16>
    %44 = arith.extf %43 : vector<4x4x320xbf16> to vector<4x4x320xf32>
    %45 = arith.mulf %2, %44 : vector<4x4x320xf32>
    %cst_36 = arith.constant dense<0.000000e+00> : vector<4x320xf32>
    %46 = vector.multi_reduction <add>, %45, %cst_36 [1] : vector<4x4x320xf32> to vector<4x320xf32>
    %47 = vector.shape_cast %46 : vector<4x320xf32> to vector<4x1x320xf32>
    %c4_37 = arith.constant 4 : index
    %c0_38 = arith.constant 0 : index
    %c0_39 = arith.constant 0 : index
    %c0_40 = arith.constant 0 : index
    %48 = vector.load %arg5[%c4_37, %c0_38, %c0_39, %c0_40] : memref<9x4x1x320xf32, #tpu.memory_space<vmem>>, vector<1x4x1x320xf32>
    %49 = vector.shape_cast %48 : vector<1x4x1x320xf32> to vector<4x1x320xf32>
    %50 = vector.shape_cast %47 : vector<4x1x320xf32> to vector<1x4x1x320xf32>
    tpu.vector_store %arg5[%c4_37, %c0_38, %c0_39, %c0_40], %50 {strides = array<i32>} : memref<9x4x1x320xf32, #tpu.memory_space<vmem>>, vector<1x4x1x320xf32>,
    %51 = arith.maximumf %41, %47 : vector<4x1x320xf32>
    %c0_41 = arith.constant 0 : index
    %c0_42 = arith.constant 0 : index
    %c0_43 = arith.constant 0 : index
    %c44 = arith.constant 44 : index
    %52 = vector.load %arg2[%c0_41, %c0_42, %c0_43, %c44] : memref<1x4x4x420xbf16, #tpu.memory_space<vmem>>, vector<1x4x4x320xbf16>
    %53 = vector.shape_cast %52 : vector<1x4x4x320xbf16> to vector<4x4x320xbf16>
    %54 = arith.extf %53 : vector<4x4x320xbf16> to vector<4x4x320xf32>
    %55 = arith.mulf %2, %54 : vector<4x4x320xf32>
    %cst_44 = arith.constant dense<0.000000e+00> : vector<4x320xf32>
    %56 = vector.multi_reduction <add>, %55, %cst_44 [1] : vector<4x4x320xf32> to vector<4x320xf32>
    %57 = vector.shape_cast %56 : vector<4x320xf32> to vector<4x1x320xf32>
    %c5 = arith.constant 5 : index
    %c0_45 = arith.constant 0 : index
    %c0_46 = arith.constant 0 : index
    %c0_47 = arith.constant 0 : index
    %58 = vector.load %arg5[%c5, %c0_45, %c0_46, %c0_47] : memref<9x4x1x320xf32, #tpu.memory_space<vmem>>, vector<1x4x1x320xf32>
    %59 = vector.shape_cast %58 : vector<1x4x1x320xf32> to vector<4x1x320xf32>
    %60 = vector.shape_cast %57 : vector<4x1x320xf32> to vector<1x4x1x320xf32>
    tpu.vector_store %arg5[%c5, %c0_45, %c0_46, %c0_47], %60 {strides = array<i32>} : memref<9x4x1x320xf32, #tpu.memory_space<vmem>>, vector<1x4x1x320xf32>,
    %61 = arith.maximumf %51, %57 : vector<4x1x320xf32>
    %c0_48 = arith.constant 0 : index
    %c0_49 = arith.constant 0 : index
    %c0_50 = arith.constant 0 : index
    %c80 = arith.constant 80 : index
    %62 = vector.load %arg2[%c0_48, %c0_49, %c0_50, %c80] : memref<1x4x4x420xbf16, #tpu.memory_space<vmem>>, vector<1x4x4x320xbf16>
    %63 = vector.shape_cast %62 : vector<1x4x4x320xbf16> to vector<4x4x320xbf16>
    %64 = arith.extf %63 : vector<4x4x320xbf16> to vector<4x4x320xf32>
    %65 = arith.mulf %2, %64 : vector<4x4x320xf32>
    %cst_51 = arith.constant dense<0.000000e+00> : vector<4x320xf32>
    %66 = vector.multi_reduction <add>, %65, %cst_51 [1] : vector<4x4x320xf32> to vector<4x320xf32>
    %67 = vector.shape_cast %66 : vector<4x320xf32> to vector<4x1x320xf32>
    %c6 = arith.constant 6 : index
    %c0_52 = arith.constant 0 : index
    %c0_53 = arith.constant 0 : index
    %c0_54 = arith.constant 0 : index
    %68 = vector.load %arg5[%c6, %c0_52, %c0_53, %c0_54] : memref<9x4x1x320xf32, #tpu.memory_space<vmem>>, vector<1x4x1x320xf32>
    %69 = vector.shape_cast %68 : vector<1x4x1x320xf32> to vector<4x1x320xf32>
    %70 = vector.shape_cast %67 : vector<4x1x320xf32> to vector<1x4x1x320xf32>
    tpu.vector_store %arg5[%c6, %c0_52, %c0_53, %c0_54], %70 {strides = array<i32>} : memref<9x4x1x320xf32, #tpu.memory_space<vmem>>, vector<1x4x1x320xf32>,
    %71 = arith.maximumf %61, %67 : vector<4x1x320xf32>
    %c0_55 = arith.constant 0 : index
    %c0_56 = arith.constant 0 : index
    %c0_57 = arith.constant 0 : index
    %c82 = arith.constant 82 : index
    %72 = vector.load %arg2[%c0_55, %c0_56, %c0_57, %c82] : memref<1x4x4x420xbf16, #tpu.memory_space<vmem>>, vector<1x4x4x320xbf16>
    %73 = vector.shape_cast %72 : vector<1x4x4x320xbf16> to vector<4x4x320xbf16>
    %74 = arith.extf %73 : vector<4x4x320xbf16> to vector<4x4x320xf32>
    %75 = arith.mulf %2, %74 : vector<4x4x320xf32>
    %cst_58 = arith.constant dense<0.000000e+00> : vector<4x320xf32>
    %76 = vector.multi_reduction <add>, %75, %cst_58 [1] : vector<4x4x320xf32> to vector<4x320xf32>
    %77 = vector.shape_cast %76 : vector<4x320xf32> to vector<4x1x320xf32>
    %c7 = arith.constant 7 : index
    %c0_59 = arith.constant 0 : index
    %c0_60 = arith.constant 0 : index
    %c0_61 = arith.constant 0 : index
    %78 = vector.load %arg5[%c7, %c0_59, %c0_60, %c0_61] : memref<9x4x1x320xf32, #tpu.memory_space<vmem>>, vector<1x4x1x320xf32>
    %79 = vector.shape_cast %78 : vector<1x4x1x320xf32> to vector<4x1x320xf32>
    %80 = vector.shape_cast %77 : vector<4x1x320xf32> to vector<1x4x1x320xf32>
    tpu.vector_store %arg5[%c7, %c0_59, %c0_60, %c0_61], %80 {strides = array<i32>} : memref<9x4x1x320xf32, #tpu.memory_space<vmem>>, vector<1x4x1x320xf32>,
    %81 = arith.maximumf %71, %77 : vector<4x1x320xf32>
    %c0_62 = arith.constant 0 : index
    %c0_63 = arith.constant 0 : index
    %c0_64 = arith.constant 0 : index
    %c84 = arith.constant 84 : index
    %82 = vector.load %arg2[%c0_62, %c0_63, %c0_64, %c84] : memref<1x4x4x420xbf16, #tpu.memory_space<vmem>>, vector<1x4x4x320xbf16>
    %83 = vector.shape_cast %82 : vector<1x4x4x320xbf16> to vector<4x4x320xbf16>
    %84 = arith.extf %83 : vector<4x4x320xbf16> to vector<4x4x320xf32>
    %85 = arith.mulf %2, %84 : vector<4x4x320xf32>
    %cst_65 = arith.constant dense<0.000000e+00> : vector<4x320xf32>
    %86 = vector.multi_reduction <add>, %85, %cst_65 [1] : vector<4x4x320xf32> to vector<4x320xf32>
    %87 = vector.shape_cast %86 : vector<4x320xf32> to vector<4x1x320xf32>
    %c8 = arith.constant 8 : index
    %c0_66 = arith.constant 0 : index
    %c0_67 = arith.constant 0 : index
    %c0_68 = arith.constant 0 : index
    %88 = vector.load %arg5[%c8, %c0_66, %c0_67, %c0_68] : memref<9x4x1x320xf32, #tpu.memory_space<vmem>>, vector<1x4x1x320xf32>
    %89 = vector.shape_cast %88 : vector<1x4x1x320xf32> to vector<4x1x320xf32>
    %90 = vector.shape_cast %87 : vector<4x1x320xf32> to vector<1x4x1x320xf32>
    tpu.vector_store %arg5[%c8, %c0_66, %c0_67, %c0_68], %90 {strides = array<i32>} : memref<9x4x1x320xf32, #tpu.memory_space<vmem>>, vector<1x4x1x320xf32>,
    %91 = arith.maximumf %81, %87 : vector<4x1x320xf32>
    %cst_69 = arith.constant 0.000000e+00 : f32
    %92 = vector.broadcast %cst_69 : f32 to vector<4x1x320xf32>
    %cst_70 = arith.constant 0.000000e+00 : f32
    %93 = vector.broadcast %cst_70 : f32 to vector<4x4x320xf32>
    %c0_71 = arith.constant 0 : index
    %c0_72 = arith.constant 0 : index
    %c0_73 = arith.constant 0 : index
    %c0_74 = arith.constant 0 : index
    %94 = vector.load %arg5[%c0_71, %c0_72, %c0_73, %c0_74] : memref<9x4x1x320xf32, #tpu.memory_space<vmem>>, vector<1x4x1x320xf32>
    %95 = vector.shape_cast %94 : vector<1x4x1x320xf32> to vector<4x1x320xf32>
    %96 = arith.subf %95, %91 : vector<4x1x320xf32>
    %97 = math.exp %96 : vector<4x1x320xf32>
    %98 = arith.addf %92, %97 : vector<4x1x320xf32>
    %c0_75 = arith.constant 0 : index
    %c0_76 = arith.constant 0 : index
    %c0_77 = arith.constant 0 : index
    %c0_78 = arith.constant 0 : index
    %99 = vector.load %arg3[%c0_75, %c0_76, %c0_77, %c0_78] : memref<1x4x4x420xbf16, #tpu.memory_space<vmem>>, vector<1x4x4x320xbf16>
    %100 = vector.shape_cast %99 : vector<1x4x4x320xbf16> to vector<4x4x320xbf16>
    %101 = arith.extf %100 : vector<4x4x320xbf16> to vector<4x4x320xf32>
    %102 = vector.broadcast %97 : vector<4x1x320xf32> to vector<4x4x320xf32>
    %103 = arith.mulf %102, %101 : vector<4x4x320xf32>
    %104 = arith.addf %93, %103 : vector<4x4x320xf32>
    %c1_79 = arith.constant 1 : index
    %c0_80 = arith.constant 0 : index
    %c0_81 = arith.constant 0 : index
    %c0_82 = arith.constant 0 : index
    %105 = vector.load %arg5[%c1_79, %c0_80, %c0_81, %c0_82] : memref<9x4x1x320xf32, #tpu.memory_space<vmem>>, vector<1x4x1x320xf32>
    %106 = vector.shape_cast %105 : vector<1x4x1x320xf32> to vector<4x1x320xf32>
    %107 = arith.subf %106, %91 : vector<4x1x320xf32>
    %108 = math.exp %107 : vector<4x1x320xf32>
    %109 = arith.addf %98, %108 : vector<4x1x320xf32>
    %c0_83 = arith.constant 0 : index
    %c0_84 = arith.constant 0 : index
    %c0_85 = arith.constant 0 : index
    %c2_86 = arith.constant 2 : index
    %110 = vector.load %arg3[%c0_83, %c0_84, %c0_85, %c2_86] : memref<1x4x4x420xbf16, #tpu.memory_space<vmem>>, vector<1x4x4x320xbf16>
    %111 = vector.shape_cast %110 : vector<1x4x4x320xbf16> to vector<4x4x320xbf16>
    %112 = arith.extf %111 : vector<4x4x320xbf16> to vector<4x4x320xf32>
    %113 = vector.broadcast %108 : vector<4x1x320xf32> to vector<4x4x320xf32>
    %114 = arith.mulf %113, %112 : vector<4x4x320xf32>
    %115 = arith.addf %104, %114 : vector<4x4x320xf32>
    %c2_87 = arith.constant 2 : index
    %c0_88 = arith.constant 0 : index
    %c0_89 = arith.constant 0 : index
    %c0_90 = arith.constant 0 : index
    %116 = vector.load %arg5[%c2_87, %c0_88, %c0_89, %c0_90] : memref<9x4x1x320xf32, #tpu.memory_space<vmem>>, vector<1x4x1x320xf32>
    %117 = vector.shape_cast %116 : vector<1x4x1x320xf32> to vector<4x1x320xf32>
    %118 = arith.subf %117, %91 : vector<4x1x320xf32>
    %119 = math.exp %118 : vector<4x1x320xf32>
    %120 = arith.addf %109, %119 : vector<4x1x320xf32>
    %c0_91 = arith.constant 0 : index
    %c0_92 = arith.constant 0 : index
    %c0_93 = arith.constant 0 : index
    %c4_94 = arith.constant 4 : index
    %121 = vector.load %arg3[%c0_91, %c0_92, %c0_93, %c4_94] : memref<1x4x4x420xbf16, #tpu.memory_space<vmem>>, vector<1x4x4x320xbf16>
    %122 = vector.shape_cast %121 : vector<1x4x4x320xbf16> to vector<4x4x320xbf16>
    %123 = arith.extf %122 : vector<4x4x320xbf16> to vector<4x4x320xf32>
    %124 = vector.broadcast %119 : vector<4x1x320xf32> to vector<4x4x320xf32>
    %125 = arith.mulf %124, %123 : vector<4x4x320xf32>
    %126 = arith.addf %115, %125 : vector<4x4x320xf32>
    %c3_95 = arith.constant 3 : index
    %c0_96 = arith.constant 0 : index
    %c0_97 = arith.constant 0 : index
    %c0_98 = arith.constant 0 : index
    %127 = vector.load %arg5[%c3_95, %c0_96, %c0_97, %c0_98] : memref<9x4x1x320xf32, #tpu.memory_space<vmem>>, vector<1x4x1x320xf32>
    %128 = vector.shape_cast %127 : vector<1x4x1x320xf32> to vector<4x1x320xf32>
    %129 = arith.subf %128, %91 : vector<4x1x320xf32>
    %130 = math.exp %129 : vector<4x1x320xf32>
    %131 = arith.addf %120, %130 : vector<4x1x320xf32>
    %c0_99 = arith.constant 0 : index
    %c0_100 = arith.constant 0 : index
    %c0_101 = arith.constant 0 : index
    %c40_102 = arith.constant 40 : index
    %132 = vector.load %arg3[%c0_99, %c0_100, %c0_101, %c40_102] : memref<1x4x4x420xbf16, #tpu.memory_space<vmem>>, vector<1x4x4x320xbf16>
    %133 = vector.shape_cast %132 : vector<1x4x4x320xbf16> to vector<4x4x320xbf16>
    %134 = arith.extf %133 : vector<4x4x320xbf16> to vector<4x4x320xf32>
    %135 = vector.broadcast %130 : vector<4x1x320xf32> to vector<4x4x320xf32>
    %136 = arith.mulf %135, %134 : vector<4x4x320xf32>
    %137 = arith.addf %126, %136 : vector<4x4x320xf32>
    %c4_103 = arith.constant 4 : index
    %c0_104 = arith.constant 0 : index
    %c0_105 = arith.constant 0 : index
    %c0_106 = arith.constant 0 : index
    %138 = vector.load %arg5[%c4_103, %c0_104, %c0_105, %c0_106] : memref<9x4x1x320xf32, #tpu.memory_space<vmem>>, vector<1x4x1x320xf32>
    %139 = vector.shape_cast %138 : vector<1x4x1x320xf32> to vector<4x1x320xf32>
    %140 = arith.subf %139, %91 : vector<4x1x320xf32>
    %141 = math.exp %140 : vector<4x1x320xf32>
    %142 = arith.addf %131, %141 : vector<4x1x320xf32>
    %c0_107 = arith.constant 0 : index
    %c0_108 = arith.constant 0 : index
    %c0_109 = arith.constant 0 : index
    %c42_110 = arith.constant 42 : index
    %143 = vector.load %arg3[%c0_107, %c0_108, %c0_109, %c42_110] : memref<1x4x4x420xbf16, #tpu.memory_space<vmem>>, vector<1x4x4x320xbf16>
    %144 = vector.shape_cast %143 : vector<1x4x4x320xbf16> to vector<4x4x320xbf16>
    %145 = arith.extf %144 : vector<4x4x320xbf16> to vector<4x4x320xf32>
    %146 = vector.broadcast %141 : vector<4x1x320xf32> to vector<4x4x320xf32>
    %147 = arith.mulf %146, %145 : vector<4x4x320xf32>
    %148 = arith.addf %137, %147 : vector<4x4x320xf32>
    %c5_111 = arith.constant 5 : index
    %c0_112 = arith.constant 0 : index
    %c0_113 = arith.constant 0 : index
    %c0_114 = arith.constant 0 : index
    %149 = vector.load %arg5[%c5_111, %c0_112, %c0_113, %c0_114] : memref<9x4x1x320xf32, #tpu.memory_space<vmem>>, vector<1x4x1x320xf32>
    %150 = vector.shape_cast %149 : vector<1x4x1x320xf32> to vector<4x1x320xf32>
    %151 = arith.subf %150, %91 : vector<4x1x320xf32>
    %152 = math.exp %151 : vector<4x1x320xf32>
    %153 = arith.addf %142, %152 : vector<4x1x320xf32>
    %c0_115 = arith.constant 0 : index
    %c0_116 = arith.constant 0 : index
    %c0_117 = arith.constant 0 : index
    %c44_118 = arith.constant 44 : index
    %154 = vector.load %arg3[%c0_115, %c0_116, %c0_117, %c44_118] : memref<1x4x4x420xbf16, #tpu.memory_space<vmem>>, vector<1x4x4x320xbf16>
    %155 = vector.shape_cast %154 : vector<1x4x4x320xbf16> to vector<4x4x320xbf16>
    %156 = arith.extf %155 : vector<4x4x320xbf16> to vector<4x4x320xf32>
    %157 = vector.broadcast %152 : vector<4x1x320xf32> to vector<4x4x320xf32>
    %158 = arith.mulf %157, %156 : vector<4x4x320xf32>
    %159 = arith.addf %148, %158 : vector<4x4x320xf32>
    %c6_119 = arith.constant 6 : index
    %c0_120 = arith.constant 0 : index
    %c0_121 = arith.constant 0 : index
    %c0_122 = arith.constant 0 : index
    %160 = vector.load %arg5[%c6_119, %c0_120, %c0_121, %c0_122] : memref<9x4x1x320xf32, #tpu.memory_space<vmem>>, vector<1x4x1x320xf32>
    %161 = vector.shape_cast %160 : vector<1x4x1x320xf32> to vector<4x1x320xf32>
    %162 = arith.subf %161, %91 : vector<4x1x320xf32>
    %163 = math.exp %162 : vector<4x1x320xf32>
    %164 = arith.addf %153, %163 : vector<4x1x320xf32>
    %c0_123 = arith.constant 0 : index
    %c0_124 = arith.constant 0 : index
    %c0_125 = arith.constant 0 : index
    %c80_126 = arith.constant 80 : index
    %165 = vector.load %arg3[%c0_123, %c0_124, %c0_125, %c80_126] : memref<1x4x4x420xbf16, #tpu.memory_space<vmem>>, vector<1x4x4x320xbf16>
    %166 = vector.shape_cast %165 : vector<1x4x4x320xbf16> to vector<4x4x320xbf16>
    %167 = arith.extf %166 : vector<4x4x320xbf16> to vector<4x4x320xf32>
    %168 = vector.broadcast %163 : vector<4x1x320xf32> to vector<4x4x320xf32>
    %169 = arith.mulf %168, %167 : vector<4x4x320xf32>
    %170 = arith.addf %159, %169 : vector<4x4x320xf32>
    %c7_127 = arith.constant 7 : index
    %c0_128 = arith.constant 0 : index
    %c0_129 = arith.constant 0 : index
    %c0_130 = arith.constant 0 : index
    %171 = vector.load %arg5[%c7_127, %c0_128, %c0_129, %c0_130] : memref<9x4x1x320xf32, #tpu.memory_space<vmem>>, vector<1x4x1x320xf32>
    %172 = vector.shape_cast %171 : vector<1x4x1x320xf32> to vector<4x1x320xf32>
    %173 = arith.subf %172, %91 : vector<4x1x320xf32>
    %174 = math.exp %173 : vector<4x1x320xf32>
    %175 = arith.addf %164, %174 : vector<4x1x320xf32>
    %c0_131 = arith.constant 0 : index
    %c0_132 = arith.constant 0 : index
    %c0_133 = arith.constant 0 : index
    %c82_134 = arith.constant 82 : index
    %176 = vector.load %arg3[%c0_131, %c0_132, %c0_133, %c82_134] : memref<1x4x4x420xbf16, #tpu.memory_space<vmem>>, vector<1x4x4x320xbf16>
    %177 = vector.shape_cast %176 : vector<1x4x4x320xbf16> to vector<4x4x320xbf16>
    %178 = arith.extf %177 : vector<4x4x320xbf16> to vector<4x4x320xf32>
    %179 = vector.broadcast %174 : vector<4x1x320xf32> to vector<4x4x320xf32>
    %180 = arith.mulf %179, %178 : vector<4x4x320xf32>
    %181 = arith.addf %170, %180 : vector<4x4x320xf32>
    %c8_135 = arith.constant 8 : index
    %c0_136 = arith.constant 0 : index
    %c0_137 = arith.constant 0 : index
    %c0_138 = arith.constant 0 : index
    %182 = vector.load %arg5[%c8_135, %c0_136, %c0_137, %c0_138] : memref<9x4x1x320xf32, #tpu.memory_space<vmem>>, vector<1x4x1x320xf32>
    %183 = vector.shape_cast %182 : vector<1x4x1x320xf32> to vector<4x1x320xf32>
    %184 = arith.subf %183, %91 : vector<4x1x320xf32>
    %185 = math.exp %184 : vector<4x1x320xf32>
    %186 = arith.addf %175, %185 : vector<4x1x320xf32>
    %c0_139 = arith.constant 0 : index
    %c0_140 = arith.constant 0 : index
    %c0_141 = arith.constant 0 : index
    %c84_142 = arith.constant 84 : index
    %187 = vector.load %arg3[%c0_139, %c0_140, %c0_141, %c84_142] : memref<1x4x4x420xbf16, #tpu.memory_space<vmem>>, vector<1x4x4x320xbf16>
    %188 = vector.shape_cast %187 : vector<1x4x4x320xbf16> to vector<4x4x320xbf16>
    %189 = arith.extf %188 : vector<4x4x320xbf16> to vector<4x4x320xf32>
    %190 = vector.broadcast %185 : vector<4x1x320xf32> to vector<4x4x320xf32>
    %191 = arith.mulf %190, %189 : vector<4x4x320xf32>
    %192 = arith.addf %181, %191 : vector<4x4x320xf32>
    %193 = tpu.reciprocal %186 {approx = true} : vector<4x1x320xf32> -> vector<4x1x320xf32>
    %194 = vector.broadcast %193 : vector<4x1x320xf32> to vector<4x4x320xf32>
    %195 = arith.mulf %192, %194 : vector<4x4x320xf32>
    %196 = arith.truncf %195 : vector<4x4x320xf32> to vector<4x4x320xbf16>
    %c0_143 = arith.constant 0 : index
    %c0_144 = arith.constant 0 : index
    %c0_145 = arith.constant 0 : index
    %c0_146 = arith.constant 0 : index
    %197 = vector.load %arg4[%c0_143, %c0_144, %c0_145, %c0_146] : memref<1x4x4x320xbf16, #tpu.memory_space<vmem>>, vector<1x4x4x320xbf16>
    %198 = vector.shape_cast %197 : vector<1x4x4x320xbf16> to vector<4x4x320xbf16>
    %199 = vector.shape_cast %196 : vector<4x4x320xbf16> to vector<1x4x4x320xbf16>
    tpu.vector_store %arg4[%c0_143, %c0_144, %c0_145, %c0_146], %199 {strides = array<i32>} : memref<1x4x4x320xbf16, #tpu.memory_space<vmem>>, vector<1x4x4x320xbf16>,
    return
  }
  func.func @transform_0(%arg0: i32) -> (i32, i32, i32, i32) {
    %c0_i32 = arith.constant 0 : i32
    %c0_i32_0 = arith.constant 0 : i32
    %c0_i32_1 = arith.constant 0 : i32
    %c0_i32_2 = arith.constant 0 : i32
    return %arg0, %c0_i32, %c0_i32_0, %c0_i32_1 : i32, i32, i32, i32
  }
  func.func @transform_1(%arg0: i32) -> (i32, i32, i32, i32) {
    %c0_i32 = arith.constant 0 : i32
    %c0_i32_0 = arith.constant 0 : i32
    %c0_i32_1 = arith.constant 0 : i32
    %c0_i32_2 = arith.constant 0 : i32
    return %arg0, %c0_i32, %c0_i32_0, %c0_i32_1 : i32, i32, i32, i32
  }
  func.func @transform_2(%arg0: i32) -> (i32, i32, i32, i32) {
    %c0_i32 = arith.constant 0 : i32
    %c0_i32_0 = arith.constant 0 : i32
    %c0_i32_1 = arith.constant 0 : i32
    %c0_i32_2 = arith.constant 0 : i32
    return %arg0, %c0_i32, %c0_i32_0, %c0_i32_1 : i32, i32, i32, i32
  }
  func.func @transform_3(%arg0: i32) -> (i32, i32, i32, i32) {
    %c0_i32 = arith.constant 0 : i32
    %c0_i32_0 = arith.constant 0 : i32
    %c0_i32_1 = arith.constant 0 : i32
    %c0_i32_2 = arith.constant 0 : i32
    return %arg0, %c0_i32, %c0_i32_0, %c0_i32_1 : i32, i32, i32, i32
  }
}

module attributes {stable_mosaic.version = 11 : i64} {
  func.func @_matmul_bias_kernel(%arg0: i32, %arg1: memref<512x32xbf16, #tpu.memory_space<vmem>>, %arg2: memref<32x32xbf16, #tpu.memory_space<vmem>>, %arg3: memref<1x32xf32, #tpu.memory_space<vmem>>, %arg4: memref<512x32xf32, #tpu.memory_space<vmem>>) attributes {dimension_semantics = [#tpu.dimension_semantics<parallel>], iteration_bounds = array<i64: 1>, scalar_prefetch = 0 : i64, scratch_operands = 0 : i64, tpu.core_type = #tpu.core_type<tc>, window_params = [{transform_indices = @transform_0, window_bounds = array<i64: 512, 32>}, {pipeline_mode = #tpu.pipeline_mode<synchronous>, transform_indices = @transform_1, window_bounds = array<i64: 32, 32>}, {pipeline_mode = #tpu.pipeline_mode<synchronous>, transform_indices = @transform_2, window_bounds = array<i64: 1, 32>}, {transform_indices = @transform_3, window_bounds = array<i64: 512, 32>}]} {
    %c0 = arith.constant 0 : index
    %c0_0 = arith.constant 0 : index
    %0 = vector.load %arg1[%c0, %c0_0] : memref<512x32xbf16, #tpu.memory_space<vmem>>, vector<512x32xbf16>
    %c0_1 = arith.constant 0 : index
    %c0_2 = arith.constant 0 : index
    %1 = vector.load %arg2[%c0_1, %c0_2] : memref<32x32xbf16, #tpu.memory_space<vmem>>, vector<32x32xbf16>
    %cst = arith.constant dense<0.000000e+00> : vector<512x32xf32>
    %2 = tpu.matmul %0, %1, %cst {dimension_numbers = #tpu.dot_dimension_numbers<[1], [0], [0], [1], [0, 0, 1, 1], [], []>} : vector<512x32xbf16>, vector<32x32xbf16>, vector<512x32xf32> -> vector<512x32xf32>
    %c0_3 = arith.constant 0 : index
    %c0_4 = arith.constant 0 : index
    %3 = vector.load %arg3[%c0_3, %c0_4] : memref<1x32xf32, #tpu.memory_space<vmem>>, vector<1x32xf32>
    %4 = vector.broadcast %3 : vector<1x32xf32> to vector<512x32xf32>
    %5 = arith.addf %2, %4 : vector<512x32xf32>
    %c0_5 = arith.constant 0 : index
    %c0_6 = arith.constant 0 : index
    %6 = vector.load %arg4[%c0_5, %c0_6] : memref<512x32xf32, #tpu.memory_space<vmem>>, vector<512x32xf32>
    tpu.vector_store %arg4[%c0_5, %c0_6], %5 {strides = array<i32>} : memref<512x32xf32, #tpu.memory_space<vmem>>, vector<512x32xf32>,
    return
  }
  func.func @transform_0(%arg0: i32) -> (i32, i32) {
    %c0_i32 = arith.constant 0 : i32
    %c0_i32_0 = arith.constant 0 : i32
    return %arg0, %c0_i32 : i32, i32
  }
  func.func @transform_1(%arg0: i32) -> (i32, i32) {
    %c0_i32 = arith.constant 0 : i32
    %c0_i32_0 = arith.constant 0 : i32
    %c0_i32_1 = arith.constant 0 : i32
    return %c0_i32, %c0_i32_0 : i32, i32
  }
  func.func @transform_2(%arg0: i32) -> (i32, i32) {
    %c0_i32 = arith.constant 0 : i32
    %c0_i32_0 = arith.constant 0 : i32
    %c0_i32_1 = arith.constant 0 : i32
    return %c0_i32, %c0_i32_0 : i32, i32
  }
  func.func @transform_3(%arg0: i32) -> (i32, i32) {
    %c0_i32 = arith.constant 0 : i32
    %c0_i32_0 = arith.constant 0 : i32
    return %arg0, %c0_i32 : i32, i32
  }
}

</mosaic_0001>

<llo_original>
// kernel: multi_dilate_local_attention.4
$region0: #{multi_dilate_local_attention.4}
  #allocation0 [shape = 'u32[]', space=smem, size = 0x4, offset = 0x4, fixed_abs, tag = 'smem constant byte address 0x4 - core index']
  #allocation1 [shape = 'u32[144,128]{1,0:T(1,128)}', space=vmem, size = 0x12000, scoped, tag = 'internal scratch']
  %s0 = inlined_call_operand.vmem [shape: bf16[512,32], index: 0, kind: input, shape index: {}]
  %s1 = inlined_call_operand.vmem [shape: bf16[32,96], index: 1, kind: input, shape index: {}]
  %s2 = inlined_call_operand.vmem [shape: bf16[512,96], index: 2, kind: output, shape index: {}]
  %s3 = sld [smem:[#allocation0]]
  $region18: #{multi_dilate_local_attention.4} parent=0
    _
  %s5 = ssub.s32 1, %s3
  %s6 = scalar_select 0, %s5, %s3
  // Predicated region
  $region2: #{multi_dilate_local_attention.4} parent=0 // pred_check
    _
  $region3: #{multi_dilate_local_attention.4} parent=0 // pred_check_branch
    %8 = sbr.rel (0) target = $region5
  $region4: #{multi_dilate_local_attention.4} parent=0 // pred_region
    _
  $region5: #{multi_dilate_local_attention.4} parent=0 // pred_fallthru
    _
  // Predicated region
  $region6: #{multi_dilate_local_attention.4} parent=0 // pred_check
    _
  $region7: #{multi_dilate_local_attention.4} parent=0 // pred_check_branch
    %10 = sbr.rel (0) target = $region9
  $region8: #{multi_dilate_local_attention.4} parent=0 // pred_region
    _
  $region9: #{multi_dilate_local_attention.4} parent=0 // pred_fallthru
    _
  %v12 = vld [vmem:[%s0] sm:$0xf]
  %v13 = vld [vmem:[%s0 + $0x4] sm:$0xf]
  %v14 = vld [vmem:[%s0 + $0x8] sm:$0xf]
  %v15 = vld [vmem:[%s0 + $0xc] sm:$0xf]
  %v16 = vld [vmem:[%s0 + $0x10] sm:$0xf]
  %v17 = vld [vmem:[%s0 + $0x14] sm:$0xf]
  %v18 = vld [vmem:[%s0 + $0x18] sm:$0xf]
  %v19 = vld [vmem:[%s0 + $0x1c] sm:$0xf]
  %v20 = vld [vmem:[%s0 + $0x20] sm:$0xf]
  %v21 = vld [vmem:[%s0 + $0x24] sm:$0xf]
  %v22 = vld [vmem:[%s0 + $0x28] sm:$0xf]
  %v23 = vld [vmem:[%s0 + $0x2c] sm:$0xf]
  %v24 = vld [vmem:[%s0 + $0x30] sm:$0xf]
  %v25 = vld [vmem:[%s0 + $0x34] sm:$0xf]
  %v26 = vld [vmem:[%s0 + $0x38] sm:$0xf]
  %v27 = vld [vmem:[%s0 + $0x3c] sm:$0xf]
  %v28 = vld [vmem:[%s0 + $0x40] sm:$0xf]
  %v29 = vld [vmem:[%s0 + $0x44] sm:$0xf]
  %v30 = vld [vmem:[%s0 + $0x48] sm:$0xf]
  %v31 = vld [vmem:[%s0 + $0x4c] sm:$0xf]
  %v32 = vld [vmem:[%s0 + $0x50] sm:$0xf]
  %v33 = vld [vmem:[%s0 + $0x54] sm:$0xf]
  %v34 = vld [vmem:[%s0 + $0x58] sm:$0xf]
  %v35 = vld [vmem:[%s0 + $0x5c] sm:$0xf]
  %v36 = vld [vmem:[%s0 + $0x60] sm:$0xf]
  %v37 = vld [vmem:[%s0 + $0x64] sm:$0xf]
  %v38 = vld [vmem:[%s0 + $0x68] sm:$0xf]
  %v39 = vld [vmem:[%s0 + $0x6c] sm:$0xf]
  %v40 = vld [vmem:[%s0 + $0x70] sm:$0xf]
  %v41 = vld [vmem:[%s0 + $0x74] sm:$0xf]
  %v42 = vld [vmem:[%s0 + $0x78] sm:$0xf]
  %v43 = vld [vmem:[%s0 + $0x7c] sm:$0xf]
  %v44 = vld [vmem:[%s0 + $0x80] sm:$0xf]
  %v45 = vld [vmem:[%s0 + $0x84] sm:$0xf]
  %v46 = vld [vmem:[%s0 + $0x88] sm:$0xf]
  %v47 = vld [vmem:[%s0 + $0x8c] sm:$0xf]
  %v48 = vld [vmem:[%s0 + $0x90] sm:$0xf]
  %v49 = vld [vmem:[%s0 + $0x94] sm:$0xf]
  %v50 = vld [vmem:[%s0 + $0x98] sm:$0xf]
  %v51 = vld [vmem:[%s0 + $0x9c] sm:$0xf]
  %v52 = vld [vmem:[%s0 + $0xa0] sm:$0xf]
  %v53 = vld [vmem:[%s0 + $0xa4] sm:$0xf]
  %v54 = vld [vmem:[%s0 + $0xa8] sm:$0xf]
  %v55 = vld [vmem:[%s0 + $0xac] sm:$0xf]
  %v56 = vld [vmem:[%s0 + $0xb0] sm:$0xf]
  %v57 = vld [vmem:[%s0 + $0xb4] sm:$0xf]
  %v58 = vld [vmem:[%s0 + $0xb8] sm:$0xf]
  %v59 = vld [vmem:[%s0 + $0xbc] sm:$0xf]
  %v60 = vld [vmem:[%s0 + $0xc0] sm:$0xf]
  %v61 = vld [vmem:[%s0 + $0xc4] sm:$0xf]
  %v62 = vld [vmem:[%s0 + $0xc8] sm:$0xf]
  %v63 = vld [vmem:[%s0 + $0xcc] sm:$0xf]
  %v64 = vld [vmem:[%s0 + $0xd0] sm:$0xf]
  %v65 = vld [vmem:[%s0 + $0xd4] sm:$0xf]
  %v66 = vld [vmem:[%s0 + $0xd8] sm:$0xf]
  %v67 = vld [vmem:[%s0 + $0xdc] sm:$0xf]
  %v68 = vld [vmem:[%s0 + $0xe0] sm:$0xf]
  %v69 = vld [vmem:[%s0 + $0xe4] sm:$0xf]
  %v70 = vld [vmem:[%s0 + $0xe8] sm:$0xf]
  %v71 = vld [vmem:[%s0 + $0xec] sm:$0xf]
  %v72 = vld [vmem:[%s0 + $0xf0] sm:$0xf]
  %v73 = vld [vmem:[%s0 + $0xf4] sm:$0xf]
  %v74 = vld [vmem:[%s0 + $0xf8] sm:$0xf]
  %v75 = vld [vmem:[%s0 + $0xfc] sm:$0xf]
  %v76 = vld [vmem:[%s1] sm:$0xf]
  %v77 = vld [vmem:[%s1 + $0x4] sm:$0xf]
  %v78 = vld [vmem:[%s1 + $0x8] sm:$0xf]
  %v79 = vld [vmem:[%s1 + $0xc] sm:$0xf]
  %v144 = vunpack.c.l.b16 %v12
  %v145 = vunpack.c.l.b16 %v13
  %v146 = vunpack.c.l.b16 %v14
  %v147 = vunpack.c.l.b16 %v15
  %v148 = vunpack.c.l.b16 %v16
  %v149 = vunpack.c.l.b16 %v17
  %v150 = vunpack.c.l.b16 %v18
  %v151 = vunpack.c.l.b16 %v19
  %v152 = vunpack.c.l.b16 %v20
  %v153 = vunpack.c.l.b16 %v21
  %v154 = vunpack.c.l.b16 %v22
  %v155 = vunpack.c.l.b16 %v23
  %v156 = vunpack.c.l.b16 %v24
  %v157 = vunpack.c.l.b16 %v25
  %v158 = vunpack.c.l.b16 %v26
  %v159 = vunpack.c.l.b16 %v27
  %v160 = vunpack.c.l.b16 %v28
  %v161 = vunpack.c.l.b16 %v29
  %v162 = vunpack.c.l.b16 %v30
  %v163 = vunpack.c.l.b16 %v31
  %v164 = vunpack.c.l.b16 %v32
  %v165 = vunpack.c.l.b16 %v33
  %v166 = vunpack.c.l.b16 %v34
  %v167 = vunpack.c.l.b16 %v35
  %v168 = vunpack.c.l.b16 %v36
  %v169 = vunpack.c.l.b16 %v37
  %v170 = vunpack.c.l.b16 %v38
  %v171 = vunpack.c.l.b16 %v39
  %v172 = vunpack.c.l.b16 %v40
  %v173 = vunpack.c.l.b16 %v41
  %v174 = vunpack.c.l.b16 %v42
  %v175 = vunpack.c.l.b16 %v43
  %v176 = vunpack.c.l.b16 %v44
  %v177 = vunpack.c.l.b16 %v45
  %v178 = vunpack.c.l.b16 %v46
  %v179 = vunpack.c.l.b16 %v47
  %v180 = vunpack.c.l.b16 %v48
  %v181 = vunpack.c.l.b16 %v49
  %v182 = vunpack.c.l.b16 %v50
  %v183 = vunpack.c.l.b16 %v51
  %v184 = vunpack.c.l.b16 %v52
  %v185 = vunpack.c.l.b16 %v53
  %v186 = vunpack.c.l.b16 %v54
  %v187 = vunpack.c.l.b16 %v55
  %v188 = vunpack.c.l.b16 %v56
  %v189 = vunpack.c.l.b16 %v57
  %v190 = vunpack.c.l.b16 %v58
  %v191 = vunpack.c.l.b16 %v59
  %v192 = vunpack.c.l.b16 %v60
  %v193 = vunpack.c.l.b16 %v61
  %v194 = vunpack.c.l.b16 %v62
  %v195 = vunpack.c.l.b16 %v63
  %v196 = vunpack.c.l.b16 %v64
  %v197 = vunpack.c.l.b16 %v65
  %v198 = vunpack.c.l.b16 %v66
  %v199 = vunpack.c.l.b16 %v67
  %v200 = vunpack.c.l.b16 %v68
  %v201 = vunpack.c.l.b16 %v69
  %v202 = vunpack.c.l.b16 %v70
  %v203 = vunpack.c.l.b16 %v71
  %v204 = vunpack.c.l.b16 %v72
  %v205 = vunpack.c.l.b16 %v73
  %v206 = vunpack.c.l.b16 %v74
  %v207 = vunpack.c.l.b16 %v75
  %v208 = vpack.c.b16 %v145, %v144
  %v209 = vpack.c.b16 %v147, %v146
  %v210 = vpack.c.b16 %v149, %v148
  %v211 = vpack.c.b16 %v151, %v150
  %v212 = vpack.c.b16 %v153, %v152
  %v213 = vpack.c.b16 %v155, %v154
  %v214 = vpack.c.b16 %v157, %v156
  %v215 = vpack.c.b16 %v159, %v158
  %v216 = vpack.c.b16 %v161, %v160
  %v217 = vpack.c.b16 %v163, %v162
  %v218 = vpack.c.b16 %v165, %v164
  %v219 = vpack.c.b16 %v167, %v166
  %v220 = vpack.c.b16 %v169, %v168
  %v221 = vpack.c.b16 %v171, %v170
  %v222 = vpack.c.b16 %v173, %v172
  %v223 = vpack.c.b16 %v175, %v174
  %v224 = vpack.c.b16 %v177, %v176
  %v225 = vpack.c.b16 %v179, %v178
  %v226 = vpack.c.b16 %v181, %v180
  %v227 = vpack.c.b16 %v183, %v182
  %v228 = vpack.c.b16 %v185, %v184
  %v229 = vpack.c.b16 %v187, %v186
  %v230 = vpack.c.b16 %v189, %v188
  %v231 = vpack.c.b16 %v191, %v190
  %v232 = vpack.c.b16 %v193, %v192
  %v233 = vpack.c.b16 %v195, %v194
  %v234 = vpack.c.b16 %v197, %v196
  %v235 = vpack.c.b16 %v199, %v198
  %v236 = vpack.c.b16 %v201, %v200
  %v237 = vpack.c.b16 %v203, %v202
  %v238 = vpack.c.b16 %v205, %v204
  %v239 = vpack.c.b16 %v207, %v206
  %v244 = vunpack.c.l.b16 %v76
  %v245 = vunpack.c.l.b16 %v77
  %v246 = vunpack.c.l.b16 %v78
  %v247 = vunpack.c.l.b16 %v79
  %v248 = vpack.c.b16 %v245, %v244
  %v249 = vpack.c.b16 %v247, %v246
  %vm252 = vcmask 261120
  %v254 = vsel %vm252, %v208, 0
  %v257 = vsel %vm252, %v209, 0
  %v260 = vsel %vm252, %v210, 0
  %v263 = vsel %vm252, %v211, 0
  %v266 = vsel %vm252, %v212, 0
  %v269 = vsel %vm252, %v213, 0
  %v272 = vsel %vm252, %v214, 0
  %v275 = vsel %vm252, %v215, 0
  %v278 = vsel %vm252, %v216, 0
  %v281 = vsel %vm252, %v217, 0
  %v284 = vsel %vm252, %v218, 0
  %v287 = vsel %vm252, %v219, 0
  %v290 = vsel %vm252, %v220, 0
  %v293 = vsel %vm252, %v221, 0
  %v296 = vsel %vm252, %v222, 0
  %v299 = vsel %vm252, %v223, 0
  %v302 = vsel %vm252, %v224, 0
  %v305 = vsel %vm252, %v225, 0
  %v308 = vsel %vm252, %v226, 0
  %v311 = vsel %vm252, %v227, 0
  %v314 = vsel %vm252, %v228, 0
  %v317 = vsel %vm252, %v229, 0
  %v320 = vsel %vm252, %v230, 0
  %v323 = vsel %vm252, %v231, 0
  %v326 = vsel %vm252, %v232, 0
  %v329 = vsel %vm252, %v233, 0
  %v332 = vsel %vm252, %v234, 0
  %v335 = vsel %vm252, %v235, 0
  %v338 = vsel %vm252, %v236, 0
  %v341 = vsel %vm252, %v237, 0
  %v344 = vsel %vm252, %v238, 0
  %v347 = vsel %vm252, %v239, 0
  %349 = vmatprep.subr.bf16.mxu0 0
  %350 = vmatpush1.bf16.msra.mxu0 0
  %351 = vmatprep.subr.bf16.mxu0 0
  %352 = vmatpush1.bf16.msra.mxu0 0
  %353 = vmatprep.subr.bf16.mxu0 0
  %354 = vmatpush1.bf16.msra.mxu0 0
  %355 = vmatprep.subr.bf16.mxu0 0
  %356 = vmatpush1.bf16.msra.mxu0 0
  %357 = vmatprep.subr.bf16.mxu0 0
  %358 = vmatpush1.bf16.msra.mxu0 0
  %359 = vmatprep.subr.bf16.mxu0 0
  %360 = vmatpush1.bf16.msra.mxu0 0
  %361 = vmatprep.subr.bf16.mxu0 0
  %362 = vmatpush1.bf16.msra.mxu0 %v249
  %363 = vmatprep.subr.bf16.mxu0 0
  %364 = vmatpush1.bf16.msra.mxu0 %v248
  %365 = vmatprep.subr.bf16.mxu0 0
  %366 = vmatpush2.bf16.msra.mxu0 0
  %367 = vmatprep.subr.bf16.mxu0 0
  %368 = vmatpush2.bf16.msra.mxu0 0
  %369 = vmatprep.subr.bf16.mxu0 0
  %370 = vmatpush2.bf16.msra.mxu0 0
  %371 = vmatprep.subr.bf16.mxu0 0
  %372 = vmatpush2.bf16.msra.mxu0 0
  %373 = vmatprep.subr.bf16.mxu0 0
  %374 = vmatpush2.bf16.msra.mxu0 0
  %375 = vmatprep.subr.bf16.mxu0 0
  %376 = vmatpush2.bf16.msra.mxu0 0
  %377 = vmatprep.subr.bf16.mxu0 0
  %378 = vmatpush2.bf16.msra.mxu0 0
  %379 = vmatprep.subr.bf16.mxu0 0
  %380 = vmatpush2.bf16.msra.mxu0 0
  %381 = vmatprep.mubr.bf16.mxu0 0
  %382 = vmatmul.mubr.bf16.gmra.mxu0 %v254
  %v383 = vpop.f32.mrf.mxu0
  %v384 = vadd.f32 0.0, %v383
  %v385 = vpop.f32.mrf.mxu0
  %v386 = vpop.f32.mrf.mxu0
  %v387 = vadd.f32 0.0, %v386
  %v388 = vpop.f32.mrf.mxu0
  %389 = vmatprep.mubr.bf16.mxu0 0
  %390 = vmatmul.mubr.bf16.gmra.mxu0 %v257
  %v391 = vpop.f32.mrf.mxu0
  %v392 = vadd.f32 0.0, %v391
  %v393 = vpop.f32.mrf.mxu0
  %v394 = vpop.f32.mrf.mxu0
  %v395 = vadd.f32 0.0, %v394
  %v396 = vpop.f32.mrf.mxu0
  %397 = vmatprep.mubr.bf16.mxu0 0
  %398 = vmatmul.mubr.bf16.gmra.mxu0 %v260
  %v399 = vpop.f32.mrf.mxu0
  %v400 = vadd.f32 0.0, %v399
  %v401 = vpop.f32.mrf.mxu0
  %v402 = vpop.f32.mrf.mxu0
  %v403 = vadd.f32 0.0, %v402
  %v404 = vpop.f32.mrf.mxu0
  %405 = vmatprep.mubr.bf16.mxu0 0
  %406 = vmatmul.mubr.bf16.gmra.mxu0 %v263
  %v407 = vpop.f32.mrf.mxu0
  %v408 = vadd.f32 0.0, %v407
  %v409 = vpop.f32.mrf.mxu0
  %v410 = vpop.f32.mrf.mxu0
  %v411 = vadd.f32 0.0, %v410
  %v412 = vpop.f32.mrf.mxu0
  %413 = vmatprep.mubr.bf16.mxu0 0
  %414 = vmatmul.mubr.bf16.gmra.mxu0 %v266
  %v415 = vpop.f32.mrf.mxu0
  %v416 = vadd.f32 0.0, %v415
  %v417 = vpop.f32.mrf.mxu0
  %v418 = vpop.f32.mrf.mxu0
  %v419 = vadd.f32 0.0, %v418
  %v420 = vpop.f32.mrf.mxu0
  %421 = vmatprep.mubr.bf16.mxu0 0
  %422 = vmatmul.mubr.bf16.gmra.mxu0 %v269
  %v423 = vpop.f32.mrf.mxu0
  %v424 = vadd.f32 0.0, %v423
  %v425 = vpop.f32.mrf.mxu0
  %v426 = vpop.f32.mrf.mxu0
  %v427 = vadd.f32 0.0, %v426
  %v428 = vpop.f32.mrf.mxu0
  %429 = vmatprep.mubr.bf16.mxu0 0
  %430 = vmatmul.mubr.bf16.gmra.mxu0 %v272
  %v431 = vpop.f32.mrf.mxu0
  %v432 = vadd.f32 0.0, %v431
  %v433 = vpop.f32.mrf.mxu0
  %v434 = vpop.f32.mrf.mxu0
  %v435 = vadd.f32 0.0, %v434
  %v436 = vpop.f32.mrf.mxu0
  %437 = vmatprep.mubr.bf16.mxu0 0
  %438 = vmatmul.mubr.bf16.gmra.mxu0 %v275
  %v439 = vpop.f32.mrf.mxu0
  %v440 = vadd.f32 0.0, %v439
  %v441 = vpop.f32.mrf.mxu0
  %v442 = vpop.f32.mrf.mxu0
  %v443 = vadd.f32 0.0, %v442
  %v444 = vpop.f32.mrf.mxu0
  %445 = vmatprep.mubr.bf16.mxu0 0
  %446 = vmatmul.mubr.bf16.gmra.mxu0 %v278
  %v447 = vpop.f32.mrf.mxu0
  %v448 = vadd.f32 0.0, %v447
  %v449 = vpop.f32.mrf.mxu0
  %v450 = vpop.f32.mrf.mxu0
  %v451 = vadd.f32 0.0, %v450
  %v452 = vpop.f32.mrf.mxu0
  %453 = vmatprep.mubr.bf16.mxu0 0
  %454 = vmatmul.mubr.bf16.gmra.mxu0 %v281
  %v455 = vpop.f32.mrf.mxu0
  %v456 = vadd.f32 0.0, %v455
  %v457 = vpop.f32.mrf.mxu0
  %v458 = vpop.f32.mrf.mxu0
  %v459 = vadd.f32 0.0, %v458
  %v460 = vpop.f32.mrf.mxu0
  %461 = vmatprep.mubr.bf16.mxu0 0
  %462 = vmatmul.mubr.bf16.gmra.mxu0 %v284
  %v463 = vpop.f32.mrf.mxu0
  %v464 = vadd.f32 0.0, %v463
  %v465 = vpop.f32.mrf.mxu0
  %v466 = vpop.f32.mrf.mxu0
  %v467 = vadd.f32 0.0, %v466
  %v468 = vpop.f32.mrf.mxu0
  %469 = vmatprep.mubr.bf16.mxu0 0
  %470 = vmatmul.mubr.bf16.gmra.mxu0 %v287
  %v471 = vpop.f32.mrf.mxu0
  %v472 = vadd.f32 0.0, %v471
  %v473 = vpop.f32.mrf.mxu0
  %v474 = vpop.f32.mrf.mxu0
  %v475 = vadd.f32 0.0, %v474
  %v476 = vpop.f32.mrf.mxu0
  %477 = vmatprep.mubr.bf16.mxu0 0
  %478 = vmatmul.mubr.bf16.gmra.mxu0 %v290
  %v479 = vpop.f32.mrf.mxu0
  %v480 = vadd.f32 0.0, %v479
  %v481 = vpop.f32.mrf.mxu0
  %v482 = vpop.f32.mrf.mxu0
  %v483 = vadd.f32 0.0, %v482
  %v484 = vpop.f32.mrf.mxu0
  %485 = vmatprep.mubr.bf16.mxu0 0
  %486 = vmatmul.mubr.bf16.gmra.mxu0 %v293
  %v487 = vpop.f32.mrf.mxu0
  %v488 = vadd.f32 0.0, %v487
  %v489 = vpop.f32.mrf.mxu0
  %v490 = vpop.f32.mrf.mxu0
  %v491 = vadd.f32 0.0, %v490
  %v492 = vpop.f32.mrf.mxu0
  %493 = vmatprep.mubr.bf16.mxu0 0
  %494 = vmatmul.mubr.bf16.gmra.mxu0 %v296
  %v495 = vpop.f32.mrf.mxu0
  %v496 = vadd.f32 0.0, %v495
  %v497 = vpop.f32.mrf.mxu0
  %v498 = vpop.f32.mrf.mxu0
  %v499 = vadd.f32 0.0, %v498
  %v500 = vpop.f32.mrf.mxu0
  %501 = vmatprep.mubr.bf16.mxu0 0
  %502 = vmatmul.mubr.bf16.gmra.mxu0 %v299
  %v503 = vpop.f32.mrf.mxu0
  %v504 = vadd.f32 0.0, %v503
  %v505 = vpop.f32.mrf.mxu0
  %v506 = vpop.f32.mrf.mxu0
  %v507 = vadd.f32 0.0, %v506
  %v508 = vpop.f32.mrf.mxu0
  %509 = vmatprep.mubr.bf16.mxu0 0
  %510 = vmatmul.mubr.bf16.gmra.mxu0 %v302
  %v511 = vpop.f32.mrf.mxu0
  %v512 = vadd.f32 0.0, %v511
  %v513 = vpop.f32.mrf.mxu0
  %v514 = vpop.f32.mrf.mxu0
  %v515 = vadd.f32 0.0, %v514
  %v516 = vpop.f32.mrf.mxu0
  %517 = vmatprep.mubr.bf16.mxu0 0
  %518 = vmatmul.mubr.bf16.gmra.mxu0 %v305
  %v519 = vpop.f32.mrf.mxu0
  %v520 = vadd.f32 0.0, %v519
  %v521 = vpop.f32.mrf.mxu0
  %v522 = vpop.f32.mrf.mxu0
  %v523 = vadd.f32 0.0, %v522
  %v524 = vpop.f32.mrf.mxu0
  %525 = vmatprep.mubr.bf16.mxu0 0
  %526 = vmatmul.mubr.bf16.gmra.mxu0 %v308
  %v527 = vpop.f32.mrf.mxu0
  %v528 = vadd.f32 0.0, %v527
  %v529 = vpop.f32.mrf.mxu0
  %v530 = vpop.f32.mrf.mxu0
  %v531 = vadd.f32 0.0, %v530
  %v532 = vpop.f32.mrf.mxu0
  %533 = vmatprep.mubr.bf16.mxu0 0
  %534 = vmatmul.mubr.bf16.gmra.mxu0 %v311
  %v535 = vpop.f32.mrf.mxu0
  %v536 = vadd.f32 0.0, %v535
  %v537 = vpop.f32.mrf.mxu0
  %v538 = vpop.f32.mrf.mxu0
  %v539 = vadd.f32 0.0, %v538
  %v540 = vpop.f32.mrf.mxu0
  %541 = vmatprep.mubr.bf16.mxu0 0
  %542 = vmatmul.mubr.bf16.gmra.mxu0 %v314
  %v543 = vpop.f32.mrf.mxu0
  %v544 = vadd.f32 0.0, %v543
  %v545 = vpop.f32.mrf.mxu0
  %v546 = vpop.f32.mrf.mxu0
  %v547 = vadd.f32 0.0, %v546
  %v548 = vpop.f32.mrf.mxu0
  %549 = vmatprep.mubr.bf16.mxu0 0
  %550 = vmatmul.mubr.bf16.gmra.mxu0 %v317
  %v551 = vpop.f32.mrf.mxu0
  %v552 = vadd.f32 0.0, %v551
  %v553 = vpop.f32.mrf.mxu0
  %v554 = vpop.f32.mrf.mxu0
  %v555 = vadd.f32 0.0, %v554
  %v556 = vpop.f32.mrf.mxu0
  %557 = vmatprep.mubr.bf16.mxu0 0
  %558 = vmatmul.mubr.bf16.gmra.mxu0 %v320
  %v559 = vpop.f32.mrf.mxu0
  %v560 = vadd.f32 0.0, %v559
  %v561 = vpop.f32.mrf.mxu0
  %v562 = vpop.f32.mrf.mxu0
  %v563 = vadd.f32 0.0, %v562
  %v564 = vpop.f32.mrf.mxu0
  %565 = vmatprep.mubr.bf16.mxu0 0
  %566 = vmatmul.mubr.bf16.gmra.mxu0 %v323
  %v567 = vpop.f32.mrf.mxu0
  %v568 = vadd.f32 0.0, %v567
  %v569 = vpop.f32.mrf.mxu0
  %v570 = vpop.f32.mrf.mxu0
  %v571 = vadd.f32 0.0, %v570
  %v572 = vpop.f32.mrf.mxu0
  %573 = vmatprep.mubr.bf16.mxu0 0
  %574 = vmatmul.mubr.bf16.gmra.mxu0 %v326
  %v575 = vpop.f32.mrf.mxu0
  %v576 = vadd.f32 0.0, %v575
  %v577 = vpop.f32.mrf.mxu0
  %v578 = vpop.f32.mrf.mxu0
  %v579 = vadd.f32 0.0, %v578
  %v580 = vpop.f32.mrf.mxu0
  %581 = vmatprep.mubr.bf16.mxu0 0
  %582 = vmatmul.mubr.bf16.gmra.mxu0 %v329
  %v583 = vpop.f32.mrf.mxu0
  %v584 = vadd.f32 0.0, %v583
  %v585 = vpop.f32.mrf.mxu0
  %v586 = vpop.f32.mrf.mxu0
  %v587 = vadd.f32 0.0, %v586
  %v588 = vpop.f32.mrf.mxu0
  %589 = vmatprep.mubr.bf16.mxu0 0
  %590 = vmatmul.mubr.bf16.gmra.mxu0 %v332
  %v591 = vpop.f32.mrf.mxu0
  %v592 = vadd.f32 0.0, %v591
  %v593 = vpop.f32.mrf.mxu0
  %v594 = vpop.f32.mrf.mxu0
  %v595 = vadd.f32 0.0, %v594
  %v596 = vpop.f32.mrf.mxu0
  %597 = vmatprep.mubr.bf16.mxu0 0
  %598 = vmatmul.mubr.bf16.gmra.mxu0 %v335
  %v599 = vpop.f32.mrf.mxu0
  %v600 = vadd.f32 0.0, %v599
  %v601 = vpop.f32.mrf.mxu0
  %v602 = vpop.f32.mrf.mxu0
  %v603 = vadd.f32 0.0, %v602
  %v604 = vpop.f32.mrf.mxu0
  %605 = vmatprep.mubr.bf16.mxu0 0
  %606 = vmatmul.mubr.bf16.gmra.mxu0 %v338
  %v607 = vpop.f32.mrf.mxu0
  %v608 = vadd.f32 0.0, %v607
  %v609 = vpop.f32.mrf.mxu0
  %v610 = vpop.f32.mrf.mxu0
  %v611 = vadd.f32 0.0, %v610
  %v612 = vpop.f32.mrf.mxu0
  %613 = vmatprep.mubr.bf16.mxu0 0
  %614 = vmatmul.mubr.bf16.gmra.mxu0 %v341
  %v615 = vpop.f32.mrf.mxu0
  %v616 = vadd.f32 0.0, %v615
  %v617 = vpop.f32.mrf.mxu0
  %v618 = vpop.f32.mrf.mxu0
  %v619 = vadd.f32 0.0, %v618
  %v620 = vpop.f32.mrf.mxu0
  %621 = vmatprep.mubr.bf16.mxu0 0
  %622 = vmatmul.mubr.bf16.gmra.mxu0 %v344
  %v623 = vpop.f32.mrf.mxu0
  %v624 = vadd.f32 0.0, %v623
  %v625 = vpop.f32.mrf.mxu0
  %v626 = vpop.f32.mrf.mxu0
  %v627 = vadd.f32 0.0, %v626
  %v628 = vpop.f32.mrf.mxu0
  %629 = vmatprep.mubr.bf16.mxu0 0
  %630 = vmatmul.mubr.bf16.gmra.mxu0 %v347
  %v631 = vpop.f32.mrf.mxu0
  %v632 = vadd.f32 0.0, %v631
  %v633 = vpop.f32.mrf.mxu0
  %v634 = vpop.f32.mrf.mxu0
  %v635 = vadd.f32 0.0, %v634
  %v636 = vpop.f32.mrf.mxu0
  %637 = vdwg.mxu0
  %v638 = vpack.c.bf16 %v387, %v384
  %v639 = vpack.c.bf16 %v395, %v392
  %v640 = vpack.c.bf16 %v403, %v400
  %v641 = vpack.c.bf16 %v411, %v408
  %v642 = vpack.c.bf16 %v419, %v416
  %v643 = vpack.c.bf16 %v427, %v424
  %v644 = vpack.c.bf16 %v435, %v432
  %v645 = vpack.c.bf16 %v443, %v440
  %v646 = vpack.c.bf16 %v451, %v448
  %v647 = vpack.c.bf16 %v459, %v456
  %v648 = vpack.c.bf16 %v467, %v464
  %v649 = vpack.c.bf16 %v475, %v472
  %v650 = vpack.c.bf16 %v483, %v480
  %v651 = vpack.c.bf16 %v491, %v488
  %v652 = vpack.c.bf16 %v499, %v496
  %v653 = vpack.c.bf16 %v507, %v504
  %v654 = vpack.c.bf16 %v515, %v512
  %v655 = vpack.c.bf16 %v523, %v520
  %v656 = vpack.c.bf16 %v531, %v528
  %v657 = vpack.c.bf16 %v539, %v536
  %v658 = vpack.c.bf16 %v547, %v544
  %v659 = vpack.c.bf16 %v555, %v552
  %v660 = vpack.c.bf16 %v563, %v560
  %v661 = vpack.c.bf16 %v571, %v568
  %v662 = vpack.c.bf16 %v579, %v576
  %v663 = vpack.c.bf16 %v587, %v584
  %v664 = vpack.c.bf16 %v595, %v592
  %v665 = vpack.c.bf16 %v603, %v600
  %v666 = vpack.c.bf16 %v611, %v608
  %v667 = vpack.c.bf16 %v619, %v616
  %v668 = vpack.c.bf16 %v627, %v624
  %v669 = vpack.c.bf16 %v635, %v632
  %v702 = vunpack.c.l.b16 %v638
  %v703 = vunpack.c.h.b16 %v638
  %v704 = vunpack.c.l.b16 %v639
  %v705 = vunpack.c.h.b16 %v639
  %v706 = vunpack.c.l.b16 %v640
  %v707 = vunpack.c.h.b16 %v640
  %v708 = vunpack.c.l.b16 %v641
  %v709 = vunpack.c.h.b16 %v641
  %v710 = vunpack.c.l.b16 %v642
  %v711 = vunpack.c.h.b16 %v642
  %v712 = vunpack.c.l.b16 %v643
  %v713 = vunpack.c.h.b16 %v643
  %v714 = vunpack.c.l.b16 %v644
  %v715 = vunpack.c.h.b16 %v644
  %v716 = vunpack.c.l.b16 %v645
  %v717 = vunpack.c.h.b16 %v645
  %v718 = vunpack.c.l.b16 %v646
  %v719 = vunpack.c.h.b16 %v646
  %v720 = vunpack.c.l.b16 %v647
  %v721 = vunpack.c.h.b16 %v647
  %v722 = vunpack.c.l.b16 %v648
  %v723 = vunpack.c.h.b16 %v648
  %v724 = vunpack.c.l.b16 %v649
  %v725 = vunpack.c.h.b16 %v649
  %v726 = vunpack.c.l.b16 %v650
  %v727 = vunpack.c.h.b16 %v650
  %v728 = vunpack.c.l.b16 %v651
  %v729 = vunpack.c.h.b16 %v651
  %v730 = vunpack.c.l.b16 %v652
  %v731 = vunpack.c.h.b16 %v652
  %v732 = vunpack.c.l.b16 %v653
  %v733 = vunpack.c.h.b16 %v653
  %v734 = vunpack.c.l.b16 %v654
  %v735 = vunpack.c.h.b16 %v654
  %v736 = vunpack.c.l.b16 %v655
  %v737 = vunpack.c.h.b16 %v655
  %v738 = vunpack.c.l.b16 %v656
  %v739 = vunpack.c.h.b16 %v656
  %v740 = vunpack.c.l.b16 %v657
  %v741 = vunpack.c.h.b16 %v657
  %v742 = vunpack.c.l.b16 %v658
  %v743 = vunpack.c.h.b16 %v658
  %v744 = vunpack.c.l.b16 %v659
  %v745 = vunpack.c.h.b16 %v659
  %v746 = vunpack.c.l.b16 %v660
  %v747 = vunpack.c.h.b16 %v660
  %v748 = vunpack.c.l.b16 %v661
  %v749 = vunpack.c.h.b16 %v661
  %v750 = vunpack.c.l.b16 %v662
  %v751 = vunpack.c.h.b16 %v662
  %v752 = vunpack.c.l.b16 %v663
  %v753 = vunpack.c.h.b16 %v663
  %v754 = vunpack.c.l.b16 %v664
  %v755 = vunpack.c.h.b16 %v664
  %v756 = vunpack.c.l.b16 %v665
  %v757 = vunpack.c.h.b16 %v665
  %v758 = vunpack.c.l.b16 %v666
  %v759 = vunpack.c.h.b16 %v666
  %v760 = vunpack.c.l.b16 %v667
  %v761 = vunpack.c.h.b16 %v667
  %v762 = vunpack.c.l.b16 %v668
  %v763 = vunpack.c.h.b16 %v668
  %v764 = vunpack.c.l.b16 %v669
  %v765 = vunpack.c.h.b16 %v669
  %v766 = vpack.c.b16 %v702, %v702
  %v767 = vpack.c.b16 %v703, %v703
  %v768 = vpack.c.b16 %v704, %v704
  %v769 = vpack.c.b16 %v705, %v705
  %v770 = vpack.c.b16 %v706, %v706
  %v771 = vpack.c.b16 %v707, %v707
  %v772 = vpack.c.b16 %v708, %v708
  %v773 = vpack.c.b16 %v709, %v709
  %v774 = vpack.c.b16 %v710, %v710
  %v775 = vpack.c.b16 %v711, %v711
  %v776 = vpack.c.b16 %v712, %v712
  %v777 = vpack.c.b16 %v713, %v713
  %v778 = vpack.c.b16 %v714, %v714
  %v779 = vpack.c.b16 %v715, %v715
  %v780 = vpack.c.b16 %v716, %v716
  %v781 = vpack.c.b16 %v717, %v717
  %v782 = vpack.c.b16 %v718, %v718
  %v783 = vpack.c.b16 %v719, %v719
  %v784 = vpack.c.b16 %v720, %v720
  %v785 = vpack.c.b16 %v721, %v721
  %v786 = vpack.c.b16 %v722, %v722
  %v787 = vpack.c.b16 %v723, %v723
  %v788 = vpack.c.b16 %v724, %v724
  %v789 = vpack.c.b16 %v725, %v725
  %v790 = vpack.c.b16 %v726, %v726
  %v791 = vpack.c.b16 %v727, %v727
  %v792 = vpack.c.b16 %v728, %v728
  %v793 = vpack.c.b16 %v729, %v729
  %v794 = vpack.c.b16 %v730, %v730
  %v795 = vpack.c.b16 %v731, %v731
  %v796 = vpack.c.b16 %v732, %v732
  %v797 = vpack.c.b16 %v733, %v733
  %v798 = vpack.c.b16 %v734, %v734
  %v799 = vpack.c.b16 %v735, %v735
  %v800 = vpack.c.b16 %v736, %v736
  %v801 = vpack.c.b16 %v737, %v737
  %v802 = vpack.c.b16 %v738, %v738
  %v803 = vpack.c.b16 %v739, %v739
  %v804 = vpack.c.b16 %v740, %v740
  %v805 = vpack.c.b16 %v741, %v741
  %v806 = vpack.c.b16 %v742, %v742
  %v807 = vpack.c.b16 %v743, %v743
  %v808 = vpack.c.b16 %v744, %v744
  %v809 = vpack.c.b16 %v745, %v745
  %v810 = vpack.c.b16 %v746, %v746
  %v811 = vpack.c.b16 %v747, %v747
  %v812 = vpack.c.b16 %v748, %v748
  %v813 = vpack.c.b16 %v749, %v749
  %v814 = vpack.c.b16 %v750, %v750
  %v815 = vpack.c.b16 %v751, %v751
  %v816 = vpack.c.b16 %v752, %v752
  %v817 = vpack.c.b16 %v753, %v753
  %v818 = vpack.c.b16 %v754, %v754
  %v819 = vpack.c.b16 %v755, %v755
  %v820 = vpack.c.b16 %v756, %v756
  %v821 = vpack.c.b16 %v757, %v757
  %v822 = vpack.c.b16 %v758, %v758
  %v823 = vpack.c.b16 %v759, %v759
  %v824 = vpack.c.b16 %v760, %v760
  %v825 = vpack.c.b16 %v761, %v761
  %v826 = vpack.c.b16 %v762, %v762
  %v827 = vpack.c.b16 %v763, %v763
  %v828 = vpack.c.b16 %v764, %v764
  %v829 = vpack.c.b16 %v765, %v765
  %vm894 = vcmask 781312
  %895 = vst.msk [vmem:[%s2] sm:$0xf] %vm894, %v766
  %896 = vst.msk [vmem:[%s2 + $0x4] sm:$0xf] %vm894, %v767
  %897 = vst.msk [vmem:[%s2 + $0x8] sm:$0xf] %vm894, %v768
  %898 = vst.msk [vmem:[%s2 + $0xc] sm:$0xf] %vm894, %v769
  %899 = vst.msk [vmem:[%s2 + $0x10] sm:$0xf] %vm894, %v770
  %900 = vst.msk [vmem:[%s2 + $0x14] sm:$0xf] %vm894, %v771
  %901 = vst.msk [vmem:[%s2 + $0x18] sm:$0xf] %vm894, %v772
  %902 = vst.msk [vmem:[%s2 + $0x1c] sm:$0xf] %vm894, %v773
  %903 = vst.msk [vmem:[%s2 + $0x20] sm:$0xf] %vm894, %v774
  %904 = vst.msk [vmem:[%s2 + $0x24] sm:$0xf] %vm894, %v775
  %905 = vst.msk [vmem:[%s2 + $0x28] sm:$0xf] %vm894, %v776
  %906 = vst.msk [vmem:[%s2 + $0x2c] sm:$0xf] %vm894, %v777
  %907 = vst.msk [vmem:[%s2 + $0x30] sm:$0xf] %vm894, %v778
  %908 = vst.msk [vmem:[%s2 + $0x34] sm:$0xf] %vm894, %v779
  %909 = vst.msk [vmem:[%s2 + $0x38] sm:$0xf] %vm894, %v780
  %910 = vst.msk [vmem:[%s2 + $0x3c] sm:$0xf] %vm894, %v781
  %911 = vst.msk [vmem:[%s2 + $0x40] sm:$0xf] %vm894, %v782
  %912 = vst.msk [vmem:[%s2 + $0x44] sm:$0xf] %vm894, %v783
  %913 = vst.msk [vmem:[%s2 + $0x48] sm:$0xf] %vm894, %v784
  %914 = vst.msk [vmem:[%s2 + $0x4c] sm:$0xf] %vm894, %v785
  %915 = vst.msk [vmem:[%s2 + $0x50] sm:$0xf] %vm894, %v786
  %916 = vst.msk [vmem:[%s2 + $0x54] sm:$0xf] %vm894, %v787
  %917 = vst.msk [vmem:[%s2 + $0x58] sm:$0xf] %vm894, %v788
  %918 = vst.msk [vmem:[%s2 + $0x5c] sm:$0xf] %vm894, %v789
  %919 = vst.msk [vmem:[%s2 + $0x60] sm:$0xf] %vm894, %v790
  %920 = vst.msk [vmem:[%s2 + $0x64] sm:$0xf] %vm894, %v791
  %921 = vst.msk [vmem:[%s2 + $0x68] sm:$0xf] %vm894, %v792
  %922 = vst.msk [vmem:[%s2 + $0x6c] sm:$0xf] %vm894, %v793
  %923 = vst.msk [vmem:[%s2 + $0x70] sm:$0xf] %vm894, %v794
  %924 = vst.msk [vmem:[%s2 + $0x74] sm:$0xf] %vm894, %v795
  %925 = vst.msk [vmem:[%s2 + $0x78] sm:$0xf] %vm894, %v796
  %926 = vst.msk [vmem:[%s2 + $0x7c] sm:$0xf] %vm894, %v797
  %927 = vst.msk [vmem:[%s2 + $0x80] sm:$0xf] %vm894, %v798
  %928 = vst.msk [vmem:[%s2 + $0x84] sm:$0xf] %vm894, %v799
  %929 = vst.msk [vmem:[%s2 + $0x88] sm:$0xf] %vm894, %v800
  %930 = vst.msk [vmem:[%s2 + $0x8c] sm:$0xf] %vm894, %v801
  %931 = vst.msk [vmem:[%s2 + $0x90] sm:$0xf] %vm894, %v802
  %932 = vst.msk [vmem:[%s2 + $0x94] sm:$0xf] %vm894, %v803
  %933 = vst.msk [vmem:[%s2 + $0x98] sm:$0xf] %vm894, %v804
  %934 = vst.msk [vmem:[%s2 + $0x9c] sm:$0xf] %vm894, %v805
  %935 = vst.msk [vmem:[%s2 + $0xa0] sm:$0xf] %vm894, %v806
  %936 = vst.msk [vmem:[%s2 + $0xa4] sm:$0xf] %vm894, %v807
  %937 = vst.msk [vmem:[%s2 + $0xa8] sm:$0xf] %vm894, %v808
  %938 = vst.msk [vmem:[%s2 + $0xac] sm:$0xf] %vm894, %v809
  %939 = vst.msk [vmem:[%s2 + $0xb0] sm:$0xf] %vm894, %v810
  %940 = vst.msk [vmem:[%s2 + $0xb4] sm:$0xf] %vm894, %v811
  %941 = vst.msk [vmem:[%s2 + $0xb8] sm:$0xf] %vm894, %v812
  %942 = vst.msk [vmem:[%s2 + $0xbc] sm:$0xf] %vm894, %v813
  %943 = vst.msk [vmem:[%s2 + $0xc0] sm:$0xf] %vm894, %v814
  %944 = vst.msk [vmem:[%s2 + $0xc4] sm:$0xf] %vm894, %v815
  %945 = vst.msk [vmem:[%s2 + $0xc8] sm:$0xf] %vm894, %v816
  %946 = vst.msk [vmem:[%s2 + $0xcc] sm:$0xf] %vm894, %v817
  %947 = vst.msk [vmem:[%s2 + $0xd0] sm:$0xf] %vm894, %v818
  %948 = vst.msk [vmem:[%s2 + $0xd4] sm:$0xf] %vm894, %v819
  %949 = vst.msk [vmem:[%s2 + $0xd8] sm:$0xf] %vm894, %v820
  %950 = vst.msk [vmem:[%s2 + $0xdc] sm:$0xf] %vm894, %v821
  %951 = vst.msk [vmem:[%s2 + $0xe0] sm:$0xf] %vm894, %v822
  %952 = vst.msk [vmem:[%s2 + $0xe4] sm:$0xf] %vm894, %v823
  %953 = vst.msk [vmem:[%s2 + $0xe8] sm:$0xf] %vm894, %v824
  %954 = vst.msk [vmem:[%s2 + $0xec] sm:$0xf] %vm894, %v825
  %955 = vst.msk [vmem:[%s2 + $0xf0] sm:$0xf] %vm894, %v826
  %956 = vst.msk [vmem:[%s2 + $0xf4] sm:$0xf] %vm894, %v827
  %957 = vst.msk [vmem:[%s2 + $0xf8] sm:$0xf] %vm894, %v828
  %958 = vst.msk [vmem:[%s2 + $0xfc] sm:$0xf] %vm894, %v829
  // Predicated region
  $region10: #{multi_dilate_local_attention.4} parent=0 // pred_check
    _
  $region11: #{multi_dilate_local_attention.4} parent=0 // pred_check_branch
    %960 = sbr.rel (0) target = $region13
  $region12: #{multi_dilate_local_attention.4} parent=0 // pred_region
    _
  $region13: #{multi_dilate_local_attention.4} parent=0 // pred_fallthru
    _
  // Predicated region
  $region14: #{multi_dilate_local_attention.4} parent=0 // pred_check
    _
  $region15: #{multi_dilate_local_attention.4} parent=0 // pred_check_branch
    %962 = sbr.rel (0) target = $region17
  $region16: #{multi_dilate_local_attention.4} parent=0 // pred_region
    _
  $region17: #{multi_dilate_local_attention.4} parent=0 // pred_fallthru
    _

// kernel: multi_dilate_local_attention.6
$region0: #{multi_dilate_local_attention.6}
  #allocation0 [shape = 'u32[]', space=smem, size = 0x4, offset = 0x4, fixed_abs, tag = 'smem constant byte address 0x4 - core index']
  #allocation1 [shape = 'u32[144,128]{1,0:T(1,128)}', space=vmem, size = 0x12000, scoped, tag = 'internal scratch']
  #allocation2 [shape = 'f32[9,4,1,352]{3,2,1,0:T(1,128)}', space=vmem, size = 0xd800, scoped, tag = 'scratch operand']
  %s0 = inlined_call_operand.vmem [shape: bf16[2,4,4,352], index: 0, kind: input, shape index: {}]
  %s1 = inlined_call_operand.vmem [shape: bf16[2,4,4,506], index: 1, kind: input, shape index: {}]
  %s2 = inlined_call_operand.vmem [shape: bf16[2,4,4,506], index: 2, kind: input, shape index: {}]
  %s3 = inlined_call_operand.vmem [shape: bf16[2,4,4,352], index: 3, kind: output, shape index: {}]
  %s4 = sld [smem:[#allocation0]]
  $region45: #{multi_dilate_local_attention.6} parent=0
    _
  %s6 = ssub.s32 1, %s4
  %s7 = scalar_select 0, %s6, %s4
  loop: start=0, step=1, limit=4
  $region2: #{multi_dilate_local_attention.6} parent=0 // loop_pre_header
    _
  $region3: #{multi_dilate_local_attention.6} parent=0 // loop_header
    %s9 = sphi 0, %s13
    %p10 = scmp.ge.s32.totalorder %s9, 4
    %s19 = sphi 0, %s21
    %s22 = sphi 0, %s19
    %s23 = sphi 0, %s22
    %s39 = sphi 0, %s23
    %s45 = sphi 0, %s47
    %s48 = sphi 0, %s45
    %s49 = sphi 0, %s48
    %s65 = sphi 0, %s49
    %s71 = sphi 0, %s73
    %s74 = sphi 0, %s71
    %s75 = sphi 0, %s74
    %s91 = sphi 0, %s75
    %s97 = sphi 0, %s99
    %s100 = sphi 0, %s97
    %s101 = sphi 0, %s100
    %s117 = sphi 0, %s101
  $region4: #{multi_dilate_local_attention.6} parent=0 // loop_header_branch
    %12 = sbr.rel (%p10) target = $region8
  $region5: #{multi_dilate_local_attention.6} parent=0 // loop_body
    %s14 = ssub.s32 %s9, 1
    %s15 = ssub.s32 %s9, 2
    %s16 = sadd.s32 %s9, 1
    %s17 = ssub.s32 %s9, %s16
    %p18 = scmp.eq.s32.totalorder %s17, 0
    %s20 = sadd.s32 %s19, 1
    %s21 = scalar_select %p18, %s19, %s20
    %p24 = pneg %p18
    %p25 = scmp.eq.s32.totalorder %s9, 1
    %p26 = por %p24, %p25
    %p27 = scmp.ne.s32.totalorder %s19, %s22
    %p28 = scmp.eq.s32.totalorder %s9, 0
    %p29 = por %p27, %p28
    %p30 = scmp.ne.s32.totalorder %s19, %s22
    %p31 = scmp.eq.s32.totalorder %s14, 1
    %p32 = por %p30, %p31
    %p33 = scmp.ne.s32.totalorder %s22, %s23
    %p34 = scmp.eq.s32.totalorder %s14, 0
    %p35 = por %p33, %p34
    %p36 = scmp.ne.s32.totalorder %s22, %s23
    %p37 = scmp.eq.s32.totalorder %s15, 1
    %p38 = por %p36, %p37
    %p40 = scmp.ne.s32.totalorder %s23, %s39
    %p41 = scmp.eq.s32.totalorder %s15, 0
    %p42 = por %p40, %p41
    %s43 = ssub.s32 %s9, %s16
    %p44 = scmp.eq.s32.totalorder %s43, 0
    %s46 = sadd.s32 %s45, 1
    %s47 = scalar_select %p44, %s45, %s46
    %p50 = pneg %p44
    %p51 = scmp.eq.s32.totalorder %s9, 1
    %p52 = por %p50, %p51
    %p53 = scmp.ne.s32.totalorder %s45, %s48
    %p54 = scmp.eq.s32.totalorder %s9, 0
    %p55 = por %p53, %p54
    %p56 = scmp.ne.s32.totalorder %s45, %s48
    %p57 = scmp.eq.s32.totalorder %s14, 1
    %p58 = por %p56, %p57
    %p59 = scmp.ne.s32.totalorder %s48, %s49
    %p60 = scmp.eq.s32.totalorder %s14, 0
    %p61 = por %p59, %p60
    %p62 = scmp.ne.s32.totalorder %s48, %s49
    %p63 = scmp.eq.s32.totalorder %s15, 1
    %p64 = por %p62, %p63
    %p66 = scmp.ne.s32.totalorder %s49, %s65
    %p67 = scmp.eq.s32.totalorder %s15, 0
    %p68 = por %p66, %p67
    %s69 = ssub.s32 %s9, %s16
    %p70 = scmp.eq.s32.totalorder %s69, 0
    %s72 = sadd.s32 %s71, 1
    %s73 = scalar_select %p70, %s71, %s72
    %p76 = pneg %p70
    %p77 = scmp.eq.s32.totalorder %s9, 1
    %p78 = por %p76, %p77
    %p79 = scmp.ne.s32.totalorder %s71, %s74
    %p80 = scmp.eq.s32.totalorder %s9, 0
    %p81 = por %p79, %p80
    %p82 = scmp.ne.s32.totalorder %s71, %s74
    %p83 = scmp.eq.s32.totalorder %s14, 1
    %p84 = por %p82, %p83
    %p85 = scmp.ne.s32.totalorder %s74, %s75
    %p86 = scmp.eq.s32.totalorder %s14, 0
    %p87 = por %p85, %p86
    %p88 = scmp.ne.s32.totalorder %s74, %s75
    %p89 = scmp.eq.s32.totalorder %s15, 1
    %p90 = por %p88, %p89
    %p92 = scmp.ne.s32.totalorder %s75, %s91
    %p93 = scmp.eq.s32.totalorder %s15, 0
    %p94 = por %p92, %p93
    %s95 = ssub.s32 %s9, %s16
    %p96 = scmp.eq.s32.totalorder %s95, 0
    %s98 = sadd.s32 %s97, 1
    %s99 = scalar_select %p96, %s97, %s98
    %p102 = pneg %p96
    %p103 = scmp.eq.s32.totalorder %s9, 1
    %p104 = por %p102, %p103
    %p105 = scmp.ne.s32.totalorder %s97, %s100
    %p106 = scmp.eq.s32.totalorder %s9, 0
    %p107 = por %p105, %p106
    %p108 = scmp.ne.s32.totalorder %s97, %s100
    %p109 = scmp.eq.s32.totalorder %s14, 1
    %p110 = por %p108, %p109
    %p111 = scmp.ne.s32.totalorder %s100, %s101
    %p112 = scmp.eq.s32.totalorder %s14, 0
    %p113 = por %p111, %p112
    %p114 = scmp.ne.s32.totalorder %s100, %s101
    %p115 = scmp.eq.s32.totalorder %s15, 1
    %p116 = por %p114, %p115
    %p118 = scmp.ne.s32.totalorder %s101, %s117
    %p119 = scmp.eq.s32.totalorder %s15, 0
    %p120 = por %p118, %p119
    %p121 = scmp.le.s32.totalorder 1, %s9
    %p122 = scmp.lt.s32.totalorder %s9, 3
    %p123 = pnand %p121, %p122
    %p124 = pneg %p123
    // Predicated region
    $region9: #{multi_dilate_local_attention.6} parent=5 // pred_check
      _
    $region10: #{multi_dilate_local_attention.6} parent=5 // pred_check_branch
      %126 = sbr.rel (%p123) target = $region12
    $region11: #{multi_dilate_local_attention.6} parent=5 // pred_region
      %s127 = ssub.s32 %s9, 1
    $region12: #{multi_dilate_local_attention.6} parent=5 // pred_fallthru
      _
    %p128 = scmp.lt.s32.totalorder %s9, 2
    // Predicated region
    $region13: #{multi_dilate_local_attention.6} parent=5 // pred_check
      %p129 = pneg %p128
    $region14: #{multi_dilate_local_attention.6} parent=5 // pred_check_branch
      %131 = sbr.rel (%p129) target = $region16
    $region15: #{multi_dilate_local_attention.6} parent=5 // pred_region
      // Predicated region
      $region17: #{multi_dilate_local_attention.6} parent=15 // pred_check
        %p132 = pneg %p29
      $region18: #{multi_dilate_local_attention.6} parent=15 // pred_check_branch
        %134 = sbr.rel (%p132) target = $region20
      $region19: #{multi_dilate_local_attention.6} parent=15 // pred_region
        %p135 = scmp.lt.s32.totalorder %s9, 1
        %s136 = scalar_select %p135, %s9, 1
        %s137 = smul.addr %s136, 12
        %s138 = smul.addr %s137, 2
        %s139 = scalar_lea.vmem %s0, %s138
      $region20: #{multi_dilate_local_attention.6} parent=15 // pred_fallthru
        _
      // Predicated region
      $region21: #{multi_dilate_local_attention.6} parent=15 // pred_check
        %p140 = pneg %p55
      $region22: #{multi_dilate_local_attention.6} parent=15 // pred_check_branch
        %142 = sbr.rel (%p140) target = $region24
      $region23: #{multi_dilate_local_attention.6} parent=15 // pred_region
        %p143 = scmp.lt.s32.totalorder %s9, 1
        %s144 = scalar_select %p143, %s9, 1
        %s145 = smul.addr %s144, 16
        %s146 = smul.addr %s145, 2
        %s147 = scalar_lea.vmem %s1, %s146
      $region24: #{multi_dilate_local_attention.6} parent=15 // pred_fallthru
        _
      // Predicated region
      $region25: #{multi_dilate_local_attention.6} parent=15 // pred_check
        %p148 = pneg %p81
      $region26: #{multi_dilate_local_attention.6} parent=15 // pred_check_branch
        %150 = sbr.rel (%p148) target = $region28
      $region27: #{multi_dilate_local_attention.6} parent=15 // pred_region
        %p151 = scmp.lt.s32.totalorder %s9, 1
        %s152 = scalar_select %p151, %s9, 1
        %s153 = smul.addr %s152, 16
        %s154 = smul.addr %s153, 2
        %s155 = scalar_lea.vmem %s2, %s154
      $region28: #{multi_dilate_local_attention.6} parent=15 // pred_fallthru
        _
    $region16: #{multi_dilate_local_attention.6} parent=5 // pred_fallthru
      _
    %p156 = scmp.le.s32.totalorder 1, %s9
    %p157 = scmp.lt.s32.totalorder %s9, 3
    %p158 = pnand %p156, %p157
    %p159 = pneg %p158
    // Predicated region
    $region29: #{multi_dilate_local_attention.6} parent=5 // pred_check
      _
    $region30: #{multi_dilate_local_attention.6} parent=5 // pred_check_branch
      %161 = sbr.rel (%p158) target = $region32
    $region31: #{multi_dilate_local_attention.6} parent=5 // pred_region
      %s162 = ssub.s32 %s9, 1
      %p163 = scmp.lt.s32.totalorder %s14, 1
      %s164 = scalar_select %p163, %s14, 1
      %s165 = smul.addr %s164, 12
      %s166 = smul.addr %s165, 2
      %s167 = scalar_lea.vmem %s0, %s166
      %p168 = pneg %p35
      %p169 = pneg %p32
      %p170 = scmp.lt.s32.totalorder %s14, 1
      %s171 = scalar_select %p170, %s14, 1
      %s172 = smul.addr %s171, 16
      %s173 = smul.addr %s172, 2
      %s174 = scalar_lea.vmem %s1, %s173
      %p175 = pneg %p61
      %p176 = pneg %p58
      %p177 = scmp.lt.s32.totalorder %s14, 1
      %s178 = scalar_select %p177, %s14, 1
      %s179 = smul.addr %s178, 16
      %s180 = smul.addr %s179, 2
      %s181 = scalar_lea.vmem %s2, %s180
      %p182 = pneg %p87
      %p183 = pneg %p84
      %p184 = pneg %p113
      %p185 = pneg %p110
      %p186 = scmp.lt.s32.totalorder %s14, 1
      %s187 = scalar_select %p186, %s14, 1
      %s188 = smul.addr %s187, 12
      %s189 = smul.addr %s188, 2
      %s190 = scalar_lea.vmem %s3, %s189
      %p191 = scmp.lt.s32.totalorder %s14, 1
      %s192 = scalar_select %p191, %s14, 1
      %s193 = smul.addr %s192, 12
      %s194 = smul.addr %s193, 2
      %s195 = scalar_lea.vmem %s0, %s194
      %p196 = scmp.lt.s32.totalorder %s14, 1
      %s197 = scalar_select %p196, %s14, 1
      %s198 = smul.addr %s197, 16
      %s199 = smul.addr %s198, 2
      %s200 = scalar_lea.vmem %s1, %s199
      %p201 = scmp.lt.s32.totalorder %s14, 1
      %s202 = scalar_select %p201, %s14, 1
      %s203 = smul.addr %s202, 16
      %s204 = smul.addr %s203, 2
      %s205 = scalar_lea.vmem %s2, %s204
      %p206 = scmp.lt.s32.totalorder %s14, 1
      %s207 = scalar_select %p206, %s14, 1
      %s208 = smul.addr %s207, 12
      %s209 = smul.addr %s208, 2
      %s210 = scalar_lea.vmem %s3, %s209
      %v211 = vld [vmem:[%s195] sm:$0x3f]
      %v212 = vld [vmem:[%s195 + $0x6] sm:$0x3f]
      %v213 = vld [vmem:[%s195 + $0xc] sm:$0x3f]
      %v214 = vld [vmem:[%s195 + $0x12] sm:$0x3f]
      %v215 = vunpack.c.l.bf16 %v211
      %v216 = vunpack.c.h.bf16 %v211
      %v217 = vunpack.c.l.bf16 %v212
      %v218 = vunpack.c.h.bf16 %v212
      %v219 = vunpack.c.l.bf16 %v213
      %v220 = vunpack.c.h.bf16 %v213
      %v221 = vunpack.c.l.bf16 %v214
      %v222 = vunpack.c.h.bf16 %v214
      %v223 = vld [vmem:[%s200] sm:$0x3f]
      %v224 = vld [vmem:[%s200 + $0x8] sm:$0x3f]
      %v225 = vld [vmem:[%s200 + $0x10] sm:$0x3f]
      %v226 = vld [vmem:[%s200 + $0x18] sm:$0x3f]
      %v227 = vunpack.c.l.bf16 %v223
      %v228 = vunpack.c.h.bf16 %v223
      %v229 = vunpack.c.l.bf16 %v224
      %v230 = vunpack.c.h.bf16 %v224
      %v231 = vunpack.c.l.bf16 %v225
      %v232 = vunpack.c.h.bf16 %v225
      %v233 = vunpack.c.l.bf16 %v226
      %v234 = vunpack.c.h.bf16 %v226
      %v235 = vmul.f32 %v215, %v227
      %v236 = vmul.f32 %v216, %v228
      %v237 = vmul.f32 %v217, %v229
      %v238 = vmul.f32 %v218, %v230
      %v239 = vmul.f32 %v219, %v231
      %v240 = vmul.f32 %v220, %v232
      %v241 = vmul.f32 %v221, %v233
      %v242 = vmul.f32 %v222, %v234
      %v247 = vcombine.high %v235, %v235
      %v248 = vcombine.high %v237, %v237
      %v249 = vcombine.high %v239, %v239
      %v250 = vcombine.high %v241, %v241
      %vm255 = vcmask 1043456
      %v256 = vsel %vm255, %v235, 0.0
      %v257 = vrot.slane %v256, 4
      %v258 = vadd.f32 %v256, %v257
      %v259 = vrot.slane %v258, 2
      %v260 = vadd.f32 %v258, %v259
      %v261 = vrot.slane %v260, 1
      %v262 = vadd.f32 %v260, %v261
      %v263 = vsel %vm255, %v247, 0.0
      %v264 = vrot.slane %v263, 4
      %v265 = vadd.f32 %v263, %v264
      %v266 = vrot.slane %v265, 2
      %v267 = vadd.f32 %v265, %v266
      %v268 = vrot.slane %v267, 1
      %v269 = vadd.f32 %v267, %v268
      %vm270 = vcmask 781312
      %v271 = vsel %vm270, %v236, 0.0
      %v272 = vrot.slane %v271, 4
      %v273 = vadd.f32 %v271, %v272
      %v274 = vrot.slane %v273, 2
      %v275 = vadd.f32 %v273, %v274
      %v276 = vrot.slane %v275, 1
      %v277 = vadd.f32 %v275, %v276
      %v278 = vsel %vm255, %v237, 0.0
      %v279 = vrot.slane %v278, 4
      %v280 = vadd.f32 %v278, %v279
      %v281 = vrot.slane %v280, 2
      %v282 = vadd.f32 %v280, %v281
      %v283 = vrot.slane %v282, 1
      %v284 = vadd.f32 %v282, %v283
      %v285 = vsel %vm255, %v248, 0.0
      %v286 = vrot.slane %v285, 4
      %v287 = vadd.f32 %v285, %v286
      %v288 = vrot.slane %v287, 2
      %v289 = vadd.f32 %v287, %v288
      %v290 = vrot.slane %v289, 1
      %v291 = vadd.f32 %v289, %v290
      %v292 = vsel %vm270, %v238, 0.0
      %v293 = vrot.slane %v292, 4
      %v294 = vadd.f32 %v292, %v293
      %v295 = vrot.slane %v294, 2
      %v296 = vadd.f32 %v294, %v295
      %v297 = vrot.slane %v296, 1
      %v298 = vadd.f32 %v296, %v297
      %v299 = vsel %vm255, %v239, 0.0
      %v300 = vrot.slane %v299, 4
      %v301 = vadd.f32 %v299, %v300
      %v302 = vrot.slane %v301, 2
      %v303 = vadd.f32 %v301, %v302
      %v304 = vrot.slane %v303, 1
      %v305 = vadd.f32 %v303, %v304
      %v306 = vsel %vm255, %v249, 0.0
      %v307 = vrot.slane %v306, 4
      %v308 = vadd.f32 %v306, %v307
      %v309 = vrot.slane %v308, 2
      %v310 = vadd.f32 %v308, %v309
      %v311 = vrot.slane %v310, 1
      %v312 = vadd.f32 %v310, %v311
      %v313 = vsel %vm270, %v240, 0.0
      %v314 = vrot.slane %v313, 4
      %v315 = vadd.f32 %v313, %v314
      %v316 = vrot.slane %v315, 2
      %v317 = vadd.f32 %v315, %v316
      %v318 = vrot.slane %v317, 1
      %v319 = vadd.f32 %v317, %v318
      %v320 = vsel %vm255, %v241, 0.0
      %v321 = vrot.slane %v320, 4
      %v322 = vadd.f32 %v320, %v321
      %v323 = vrot.slane %v322, 2
      %v324 = vadd.f32 %v322, %v323
      %v325 = vrot.slane %v324, 1
      %v326 = vadd.f32 %v324, %v325
      %v327 = vsel %vm255, %v250, 0.0
      %v328 = vrot.slane %v327, 4
      %v329 = vadd.f32 %v327, %v328
      %v330 = vrot.slane %v329, 2
      %v331 = vadd.f32 %v329, %v330
      %v332 = vrot.slane %v331, 1
      %v333 = vadd.f32 %v331, %v332
      %v334 = vsel %vm270, %v242, 0.0
      %v335 = vrot.slane %v334, 4
      %v336 = vadd.f32 %v334, %v335
      %v337 = vrot.slane %v336, 2
      %v338 = vadd.f32 %v336, %v337
      %v339 = vrot.slane %v338, 1
      %v340 = vadd.f32 %v338, %v339
      %v353 = vcombine.low %v262, %v269
      %v355 = vunpack.c.l.s4 1966171168
      %v356 = vunpack.c.0.s8 %v355
      %v357 = vlaneseq
      %v358 = vshrl.u32 %v357, 7
      %v359 = vsub.s32 %v356, %v358
      %v360 = vrot.slane %v353, %v359
      %v362 = vunpack.c.l.s4 1966171168
      %v363 = vunpack.c.0.s8 %v362
      %v364 = vlaneseq
      %v365 = vshrl.u32 %v364, 7
      %v366 = vsub.s32 %v363, %v365
      %v367 = vrot.slane %v277, %v366
      %v368 = vcombine.low %v360, %v367
      %v370 = vunpack.c.l.s4 1966171168
      %v371 = vunpack.c.0.s8 %v370
      %v372 = vlaneseq
      %v373 = vshrl.u32 %v372, 7
      %v374 = vsub.s32 %v371, %v373
      %v375 = vrot.slane %v368, %v374
      %v376 = vcombine.low %v284, %v291
      %v378 = vunpack.c.l.s4 1966171168
      %v379 = vunpack.c.0.s8 %v378
      %v380 = vlaneseq
      %v381 = vshrl.u32 %v380, 7
      %v382 = vsub.s32 %v379, %v381
      %v383 = vrot.slane %v376, %v382
      %v385 = vunpack.c.l.s4 1966171168
      %v386 = vunpack.c.0.s8 %v385
      %v387 = vlaneseq
      %v388 = vshrl.u32 %v387, 7
      %v389 = vsub.s32 %v386, %v388
      %v390 = vrot.slane %v298, %v389
      %v391 = vcombine.low %v383, %v390
      %v393 = vunpack.c.l.s4 1966171168
      %v394 = vunpack.c.0.s8 %v393
      %v395 = vlaneseq
      %v396 = vshrl.u32 %v395, 7
      %v397 = vsub.s32 %v394, %v396
      %v398 = vrot.slane %v391, %v397
      %v399 = vcombine.low %v305, %v312
      %v401 = vunpack.c.l.s4 1966171168
      %v402 = vunpack.c.0.s8 %v401
      %v403 = vlaneseq
      %v404 = vshrl.u32 %v403, 7
      %v405 = vsub.s32 %v402, %v404
      %v406 = vrot.slane %v399, %v405
      %v408 = vunpack.c.l.s4 1966171168
      %v409 = vunpack.c.0.s8 %v408
      %v410 = vlaneseq
      %v411 = vshrl.u32 %v410, 7
      %v412 = vsub.s32 %v409, %v411
      %v413 = vrot.slane %v319, %v412
      %v414 = vcombine.low %v406, %v413
      %v416 = vunpack.c.l.s4 1966171168
      %v417 = vunpack.c.0.s8 %v416
      %v418 = vlaneseq
      %v419 = vshrl.u32 %v418, 7
      %v420 = vsub.s32 %v417, %v419
      %v421 = vrot.slane %v414, %v420
      %v422 = vcombine.low %v326, %v333
      %v424 = vunpack.c.l.s4 1966171168
      %v425 = vunpack.c.0.s8 %v424
      %v426 = vlaneseq
      %v427 = vshrl.u32 %v426, 7
      %v428 = vsub.s32 %v425, %v427
      %v429 = vrot.slane %v422, %v428
      %v431 = vunpack.c.l.s4 1966171168
      %v432 = vunpack.c.0.s8 %v431
      %v433 = vlaneseq
      %v434 = vshrl.u32 %v433, 7
      %v435 = vsub.s32 %v432, %v434
      %v436 = vrot.slane %v340, %v435
      %v437 = vcombine.low %v429, %v436
      %v439 = vunpack.c.l.s4 1966171168
      %v440 = vunpack.c.0.s8 %v439
      %v441 = vlaneseq
      %v442 = vshrl.u32 %v441, 7
      %v443 = vsub.s32 %v440, %v442
      %v444 = vrot.slane %v437, %v443
      %v449 = vlaneseq
      %vm450 = vcmp.ge.s32.totalorder %v449, 0
      %vm451 = vcmp.lt.s32.totalorder %v449, 352
      %vm452 = vmand %vm450, %vm451
      %453 = vst.msk [vmem:[#allocation2] sm:$0x7] %vm452, %v375
      %454 = vst.msk [vmem:[#allocation2 + $0x3] sm:$0x7] %vm452, %v398
      %455 = vst.msk [vmem:[#allocation2 + $0x6] sm:$0x7] %vm452, %v421
      %456 = vst.msk [vmem:[#allocation2 + $0x9] sm:$0x7] %vm452, %v444
      %v457 = vld [vmem:[%s200] sm:$0x3f]
      %v458 = vld [vmem:[%s200 + $0x8] sm:$0x3f]
      %v459 = vld [vmem:[%s200 + $0x10] sm:$0x3f]
      %v460 = vld [vmem:[%s200 + $0x18] sm:$0x3f]
      %v461 = vunpack.c.l.bf16 %v457
      %v462 = vunpack.c.h.bf16 %v457
      %v463 = vunpack.c.l.bf16 %v458
      %v464 = vunpack.c.h.bf16 %v458
      %v465 = vunpack.c.l.bf16 %v459
      %v466 = vunpack.c.h.bf16 %v459
      %v467 = vunpack.c.l.bf16 %v460
      %v468 = vunpack.c.h.bf16 %v460
      %477 = vrot.lane.b32.xlu0 %v461, 125
      %v478 = vpop.permute.xlu0 %477
      %479 = vrot.lane.b32.xlu0 %v462, 125
      %v480 = vpop.permute.xlu0 %479
      %481 = vrot.lane.b32.xlu0 %v463, 125
      %v482 = vpop.permute.xlu0 %481
      %483 = vrot.lane.b32.xlu0 %v464, 125
      %v484 = vpop.permute.xlu0 %483
      %485 = vrot.lane.b32.xlu0 %v465, 125
      %v486 = vpop.permute.xlu0 %485
      %487 = vrot.lane.b32.xlu0 %v466, 125
      %v488 = vpop.permute.xlu0 %487
      %489 = vrot.lane.b32.xlu0 %v467, 125
      %v490 = vpop.permute.xlu0 %489
      %491 = vrot.lane.b32.xlu0 %v468, 125
      %v492 = vpop.permute.xlu0 %491
      %v493 = vrot.slane %v478, 4
      %v494 = vrot.slane %v480, 4
      %v495 = vrot.slane %v482, 4
      %v496 = vrot.slane %v484, 4
      %v497 = vrot.slane %v486, 4
      %v498 = vrot.slane %v488, 4
      %v499 = vrot.slane %v490, 4
      %v500 = vrot.slane %v492, 4
      %v501 = vsel %vm255, %v493, %v494
      %vm502 = vcmask 1022976
      %v503 = vsel %vm502, %v478, %v501
      %v504 = vsel %vm255, %v495, %v496
      %v505 = vsel %vm502, %v482, %v504
      %v506 = vsel %vm255, %v497, %v498
      %v507 = vsel %vm502, %v486, %v506
      %v508 = vsel %vm255, %v499, %v500
      %v509 = vsel %vm502, %v490, %v508
      %v518 = vmul.f32 %v215, %v503
      %v519 = vmul.f32 %v216, %v480
      %v520 = vmul.f32 %v217, %v505
      %v521 = vmul.f32 %v218, %v484
      %v522 = vmul.f32 %v219, %v507
      %v523 = vmul.f32 %v220, %v488
      %v524 = vmul.f32 %v221, %v509
      %v525 = vmul.f32 %v222, %v492
      %v530 = vcombine.high %v518, %v518
      %v531 = vcombine.high %v520, %v520
      %v532 = vcombine.high %v522, %v522
      %v533 = vcombine.high %v524, %v524
      %v538 = vsel %vm255, %v518, 0.0
      %v539 = vrot.slane %v538, 4
      %v540 = vadd.f32 %v538, %v539
      %v541 = vrot.slane %v540, 2
      %v542 = vadd.f32 %v540, %v541
      %v543 = vrot.slane %v542, 1
      %v544 = vadd.f32 %v542, %v543
      %v545 = vsel %vm255, %v530, 0.0
      %v546 = vrot.slane %v545, 4
      %v547 = vadd.f32 %v545, %v546
      %v548 = vrot.slane %v547, 2
      %v549 = vadd.f32 %v547, %v548
      %v550 = vrot.slane %v549, 1
      %v551 = vadd.f32 %v549, %v550
      %v552 = vsel %vm270, %v519, 0.0
      %v553 = vrot.slane %v552, 4
      %v554 = vadd.f32 %v552, %v553
      %v555 = vrot.slane %v554, 2
      %v556 = vadd.f32 %v554, %v555
      %v557 = vrot.slane %v556, 1
      %v558 = vadd.f32 %v556, %v557
      %v559 = vsel %vm255, %v520, 0.0
      %v560 = vrot.slane %v559, 4
      %v561 = vadd.f32 %v559, %v560
      %v562 = vrot.slane %v561, 2
      %v563 = vadd.f32 %v561, %v562
      %v564 = vrot.slane %v563, 1
      %v565 = vadd.f32 %v563, %v564
      %v566 = vsel %vm255, %v531, 0.0
      %v567 = vrot.slane %v566, 4
      %v568 = vadd.f32 %v566, %v567
      %v569 = vrot.slane %v568, 2
      %v570 = vadd.f32 %v568, %v569
      %v571 = vrot.slane %v570, 1
      %v572 = vadd.f32 %v570, %v571
      %v573 = vsel %vm270, %v521, 0.0
      %v574 = vrot.slane %v573, 4
      %v575 = vadd.f32 %v573, %v574
      %v576 = vrot.slane %v575, 2
      %v577 = vadd.f32 %v575, %v576
      %v578 = vrot.slane %v577, 1
      %v579 = vadd.f32 %v577, %v578
      %v580 = vsel %vm255, %v522, 0.0
      %v581 = vrot.slane %v580, 4
      %v582 = vadd.f32 %v580, %v581
      %v583 = vrot.slane %v582, 2
      %v584 = vadd.f32 %v582, %v583
      %v585 = vrot.slane %v584, 1
      %v586 = vadd.f32 %v584, %v585
      %v587 = vsel %vm255, %v532, 0.0
      %v588 = vrot.slane %v587, 4
      %v589 = vadd.f32 %v587, %v588
      %v590 = vrot.slane %v589, 2
      %v591 = vadd.f32 %v589, %v590
      %v592 = vrot.slane %v591, 1
      %v593 = vadd.f32 %v591, %v592
      %v594 = vsel %vm270, %v523, 0.0
      %v595 = vrot.slane %v594, 4
      %v596 = vadd.f32 %v594, %v595
      %v597 = vrot.slane %v596, 2
      %v598 = vadd.f32 %v596, %v597
      %v599 = vrot.slane %v598, 1
      %v600 = vadd.f32 %v598, %v599
      %v601 = vsel %vm255, %v524, 0.0
      %v602 = vrot.slane %v601, 4
      %v603 = vadd.f32 %v601, %v602
      %v604 = vrot.slane %v603, 2
      %v605 = vadd.f32 %v603, %v604
      %v606 = vrot.slane %v605, 1
      %v607 = vadd.f32 %v605, %v606
      %v608 = vsel %vm255, %v533, 0.0
      %v609 = vrot.slane %v608, 4
      %v610 = vadd.f32 %v608, %v609
      %v611 = vrot.slane %v610, 2
      %v612 = vadd.f32 %v610, %v611
      %v613 = vrot.slane %v612, 1
      %v614 = vadd.f32 %v612, %v613
      %v615 = vsel %vm270, %v525, 0.0
      %v616 = vrot.slane %v615, 4
      %v617 = vadd.f32 %v615, %v616
      %v618 = vrot.slane %v617, 2
      %v619 = vadd.f32 %v617, %v618
      %v620 = vrot.slane %v619, 1
      %v621 = vadd.f32 %v619, %v620
      %v634 = vcombine.low %v544, %v551
      %v636 = vunpack.c.l.s4 1966171168
      %v637 = vunpack.c.0.s8 %v636
      %v638 = vlaneseq
      %v639 = vshrl.u32 %v638, 7
      %v640 = vsub.s32 %v637, %v639
      %v641 = vrot.slane %v634, %v640
      %v643 = vunpack.c.l.s4 1966171168
      %v644 = vunpack.c.0.s8 %v643
      %v645 = vlaneseq
      %v646 = vshrl.u32 %v645, 7
      %v647 = vsub.s32 %v644, %v646
      %v648 = vrot.slane %v558, %v647
      %v649 = vcombine.low %v641, %v648
      %v651 = vunpack.c.l.s4 1966171168
      %v652 = vunpack.c.0.s8 %v651
      %v653 = vlaneseq
      %v654 = vshrl.u32 %v653, 7
      %v655 = vsub.s32 %v652, %v654
      %v656 = vrot.slane %v649, %v655
      %v657 = vcombine.low %v565, %v572
      %v659 = vunpack.c.l.s4 1966171168
      %v660 = vunpack.c.0.s8 %v659
      %v661 = vlaneseq
      %v662 = vshrl.u32 %v661, 7
      %v663 = vsub.s32 %v660, %v662
      %v664 = vrot.slane %v657, %v663
      %v666 = vunpack.c.l.s4 1966171168
      %v667 = vunpack.c.0.s8 %v666
      %v668 = vlaneseq
      %v669 = vshrl.u32 %v668, 7
      %v670 = vsub.s32 %v667, %v669
      %v671 = vrot.slane %v579, %v670
      %v672 = vcombine.low %v664, %v671
      %v674 = vunpack.c.l.s4 1966171168
      %v675 = vunpack.c.0.s8 %v674
      %v676 = vlaneseq
      %v677 = vshrl.u32 %v676, 7
      %v678 = vsub.s32 %v675, %v677
      %v679 = vrot.slane %v672, %v678
      %v680 = vcombine.low %v586, %v593
      %v682 = vunpack.c.l.s4 1966171168
      %v683 = vunpack.c.0.s8 %v682
      %v684 = vlaneseq
      %v685 = vshrl.u32 %v684, 7
      %v686 = vsub.s32 %v683, %v685
      %v687 = vrot.slane %v680, %v686
      %v689 = vunpack.c.l.s4 1966171168
      %v690 = vunpack.c.0.s8 %v689
      %v691 = vlaneseq
      %v692 = vshrl.u32 %v691, 7
      %v693 = vsub.s32 %v690, %v692
      %v694 = vrot.slane %v600, %v693
      %v695 = vcombine.low %v687, %v694
      %v697 = vunpack.c.l.s4 1966171168
      %v698 = vunpack.c.0.s8 %v697
      %v699 = vlaneseq
      %v700 = vshrl.u32 %v699, 7
      %v701 = vsub.s32 %v698, %v700
      %v702 = vrot.slane %v695, %v701
      %v703 = vcombine.low %v607, %v614
      %v705 = vunpack.c.l.s4 1966171168
      %v706 = vunpack.c.0.s8 %v705
      %v707 = vlaneseq
      %v708 = vshrl.u32 %v707, 7
      %v709 = vsub.s32 %v706, %v708
      %v710 = vrot.slane %v703, %v709
      %v712 = vunpack.c.l.s4 1966171168
      %v713 = vunpack.c.0.s8 %v712
      %v714 = vlaneseq
      %v715 = vshrl.u32 %v714, 7
      %v716 = vsub.s32 %v713, %v715
      %v717 = vrot.slane %v621, %v716
      %v718 = vcombine.low %v710, %v717
      %v720 = vunpack.c.l.s4 1966171168
      %v721 = vunpack.c.0.s8 %v720
      %v722 = vlaneseq
      %v723 = vshrl.u32 %v722, 7
      %v724 = vsub.s32 %v721, %v723
      %v725 = vrot.slane %v718, %v724
      %s730 = scalar_lea.vmem [#allocation2], 12
      %731 = vst.msk [vmem:[%s730] sm:$0x7] %vm452, %v656
      %732 = vst.msk [vmem:[%s730 + $0x3] sm:$0x7] %vm452, %v679
      %733 = vst.msk [vmem:[%s730 + $0x6] sm:$0x7] %vm452, %v702
      %734 = vst.msk [vmem:[%s730 + $0x9] sm:$0x7] %vm452, %v725
      %v735 = vmax.f32 %v262, %v544
      %v736 = vmax.f32 %v269, %v551
      %v737 = vmax.f32 %v277, %v558
      %v738 = vmax.f32 %v284, %v565
      %v739 = vmax.f32 %v291, %v572
      %v740 = vmax.f32 %v298, %v579
      %v741 = vmax.f32 %v305, %v586
      %v742 = vmax.f32 %v312, %v593
      %v743 = vmax.f32 %v319, %v600
      %v744 = vmax.f32 %v326, %v607
      %v745 = vmax.f32 %v333, %v614
      %v746 = vmax.f32 %v340, %v621
      %v747 = vld [vmem:[%s200] sm:$0x3f]
      %v748 = vld [vmem:[%s200 + $0x8] sm:$0x3f]
      %v749 = vld [vmem:[%s200 + $0x10] sm:$0x3f]
      %v750 = vld [vmem:[%s200 + $0x18] sm:$0x3f]
      %v751 = vunpack.c.l.bf16 %v747
      %v752 = vunpack.c.h.bf16 %v747
      %v753 = vunpack.c.l.bf16 %v748
      %v754 = vunpack.c.h.bf16 %v748
      %v755 = vunpack.c.l.bf16 %v749
      %v756 = vunpack.c.h.bf16 %v749
      %v757 = vunpack.c.l.bf16 %v750
      %v758 = vunpack.c.h.bf16 %v750
      %767 = vrot.lane.b32.xlu0 %v751, 122
      %v768 = vpop.permute.xlu0 %767
      %769 = vrot.lane.b32.xlu0 %v752, 122
      %v770 = vpop.permute.xlu0 %769
      %771 = vrot.lane.b32.xlu0 %v753, 122
      %v772 = vpop.permute.xlu0 %771
      %773 = vrot.lane.b32.xlu0 %v754, 122
      %v774 = vpop.permute.xlu0 %773
      %775 = vrot.lane.b32.xlu0 %v755, 122
      %v776 = vpop.permute.xlu0 %775
      %777 = vrot.lane.b32.xlu0 %v756, 122
      %v778 = vpop.permute.xlu0 %777
      %779 = vrot.lane.b32.xlu0 %v757, 122
      %v780 = vpop.permute.xlu0 %779
      %781 = vrot.lane.b32.xlu0 %v758, 122
      %v782 = vpop.permute.xlu0 %781
      %v783 = vrot.slane %v768, 4
      %v784 = vrot.slane %v770, 4
      %v785 = vrot.slane %v772, 4
      %v786 = vrot.slane %v774, 4
      %v787 = vrot.slane %v776, 4
      %v788 = vrot.slane %v778, 4
      %v789 = vrot.slane %v780, 4
      %v790 = vrot.slane %v782, 4
      %v791 = vsel %vm255, %v783, %v784
      %vm792 = vcmask 998400
      %v793 = vsel %vm792, %v768, %v791
      %v794 = vsel %vm255, %v785, %v786
      %v795 = vsel %vm792, %v772, %v794
      %v796 = vsel %vm255, %v787, %v788
      %v797 = vsel %vm792, %v776, %v796
      %v798 = vsel %vm255, %v789, %v790
      %v799 = vsel %vm792, %v780, %v798
      %v808 = vmul.f32 %v215, %v793
      %v809 = vmul.f32 %v216, %v770
      %v810 = vmul.f32 %v217, %v795
      %v811 = vmul.f32 %v218, %v774
      %v812 = vmul.f32 %v219, %v797
      %v813 = vmul.f32 %v220, %v778
      %v814 = vmul.f32 %v221, %v799
      %v815 = vmul.f32 %v222, %v782
      %v820 = vcombine.high %v808, %v808
      %v821 = vcombine.high %v810, %v810
      %v822 = vcombine.high %v812, %v812
      %v823 = vcombine.high %v814, %v814
      %v828 = vsel %vm255, %v808, 0.0
      %v829 = vrot.slane %v828, 4
      %v830 = vadd.f32 %v828, %v829
      %v831 = vrot.slane %v830, 2
      %v832 = vadd.f32 %v830, %v831
      %v833 = vrot.slane %v832, 1
      %v834 = vadd.f32 %v832, %v833
      %v835 = vsel %vm255, %v820, 0.0
      %v836 = vrot.slane %v835, 4
      %v837 = vadd.f32 %v835, %v836
      %v838 = vrot.slane %v837, 2
      %v839 = vadd.f32 %v837, %v838
      %v840 = vrot.slane %v839, 1
      %v841 = vadd.f32 %v839, %v840
      %v842 = vsel %vm270, %v809, 0.0
      %v843 = vrot.slane %v842, 4
      %v844 = vadd.f32 %v842, %v843
      %v845 = vrot.slane %v844, 2
      %v846 = vadd.f32 %v844, %v845
      %v847 = vrot.slane %v846, 1
      %v848 = vadd.f32 %v846, %v847
      %v849 = vsel %vm255, %v810, 0.0
      %v850 = vrot.slane %v849, 4
      %v851 = vadd.f32 %v849, %v850
      %v852 = vrot.slane %v851, 2
      %v853 = vadd.f32 %v851, %v852
      %v854 = vrot.slane %v853, 1
      %v855 = vadd.f32 %v853, %v854
      %v856 = vsel %vm255, %v821, 0.0
      %v857 = vrot.slane %v856, 4
      %v858 = vadd.f32 %v856, %v857
      %v859 = vrot.slane %v858, 2
      %v860 = vadd.f32 %v858, %v859
      %v861 = vrot.slane %v860, 1
      %v862 = vadd.f32 %v860, %v861
      %v863 = vsel %vm270, %v811, 0.0
      %v864 = vrot.slane %v863, 4
      %v865 = vadd.f32 %v863, %v864
      %v866 = vrot.slane %v865, 2
      %v867 = vadd.f32 %v865, %v866
      %v868 = vrot.slane %v867, 1
      %v869 = vadd.f32 %v867, %v868
      %v870 = vsel %vm255, %v812, 0.0
      %v871 = vrot.slane %v870, 4
      %v872 = vadd.f32 %v870, %v871
      %v873 = vrot.slane %v872, 2
      %v874 = vadd.f32 %v872, %v873
      %v875 = vrot.slane %v874, 1
      %v876 = vadd.f32 %v874, %v875
      %v877 = vsel %vm255, %v822, 0.0
      %v878 = vrot.slane %v877, 4
      %v879 = vadd.f32 %v877, %v878
      %v880 = vrot.slane %v879, 2
      %v881 = vadd.f32 %v879, %v880
      %v882 = vrot.slane %v881, 1
      %v883 = vadd.f32 %v881, %v882
      %v884 = vsel %vm270, %v813, 0.0
      %v885 = vrot.slane %v884, 4
      %v886 = vadd.f32 %v884, %v885
      %v887 = vrot.slane %v886, 2
      %v888 = vadd.f32 %v886, %v887
      %v889 = vrot.slane %v888, 1
      %v890 = vadd.f32 %v888, %v889
      %v891 = vsel %vm255, %v814, 0.0
      %v892 = vrot.slane %v891, 4
      %v893 = vadd.f32 %v891, %v892
      %v894 = vrot.slane %v893, 2
      %v895 = vadd.f32 %v893, %v894
      %v896 = vrot.slane %v895, 1
      %v897 = vadd.f32 %v895, %v896
      %v898 = vsel %vm255, %v823, 0.0
      %v899 = vrot.slane %v898, 4
      %v900 = vadd.f32 %v898, %v899
      %v901 = vrot.slane %v900, 2
      %v902 = vadd.f32 %v900, %v901
      %v903 = vrot.slane %v902, 1
      %v904 = vadd.f32 %v902, %v903
      %v905 = vsel %vm270, %v815, 0.0
      %v906 = vrot.slane %v905, 4
      %v907 = vadd.f32 %v905, %v906
      %v908 = vrot.slane %v907, 2
      %v909 = vadd.f32 %v907, %v908
      %v910 = vrot.slane %v909, 1
      %v911 = vadd.f32 %v909, %v910
      %v924 = vcombine.low %v834, %v841
      %v926 = vunpack.c.l.s4 1966171168
      %v927 = vunpack.c.0.s8 %v926
      %v928 = vlaneseq
      %v929 = vshrl.u32 %v928, 7
      %v930 = vsub.s32 %v927, %v929
      %v931 = vrot.slane %v924, %v930
      %v933 = vunpack.c.l.s4 1966171168
      %v934 = vunpack.c.0.s8 %v933
      %v935 = vlaneseq
      %v936 = vshrl.u32 %v935, 7
      %v937 = vsub.s32 %v934, %v936
      %v938 = vrot.slane %v848, %v937
      %v939 = vcombine.low %v931, %v938
      %v941 = vunpack.c.l.s4 1966171168
      %v942 = vunpack.c.0.s8 %v941
      %v943 = vlaneseq
      %v944 = vshrl.u32 %v943, 7
      %v945 = vsub.s32 %v942, %v944
      %v946 = vrot.slane %v939, %v945
      %v947 = vcombine.low %v855, %v862
      %v949 = vunpack.c.l.s4 1966171168
      %v950 = vunpack.c.0.s8 %v949
      %v951 = vlaneseq
      %v952 = vshrl.u32 %v951, 7
      %v953 = vsub.s32 %v950, %v952
      %v954 = vrot.slane %v947, %v953
      %v956 = vunpack.c.l.s4 1966171168
      %v957 = vunpack.c.0.s8 %v956
      %v958 = vlaneseq
      %v959 = vshrl.u32 %v958, 7
      %v960 = vsub.s32 %v957, %v959
      %v961 = vrot.slane %v869, %v960
      %v962 = vcombine.low %v954, %v961
      %v964 = vunpack.c.l.s4 1966171168
      %v965 = vunpack.c.0.s8 %v964
      %v966 = vlaneseq
      %v967 = vshrl.u32 %v966, 7
      %v968 = vsub.s32 %v965, %v967
      %v969 = vrot.slane %v962, %v968
      %v970 = vcombine.low %v876, %v883
      %v972 = vunpack.c.l.s4 1966171168
      %v973 = vunpack.c.0.s8 %v972
      %v974 = vlaneseq
      %v975 = vshrl.u32 %v974, 7
      %v976 = vsub.s32 %v973, %v975
      %v977 = vrot.slane %v970, %v976
      %v979 = vunpack.c.l.s4 1966171168
      %v980 = vunpack.c.0.s8 %v979
      %v981 = vlaneseq
      %v982 = vshrl.u32 %v981, 7
      %v983 = vsub.s32 %v980, %v982
      %v984 = vrot.slane %v890, %v983
      %v985 = vcombine.low %v977, %v984
      %v987 = vunpack.c.l.s4 1966171168
      %v988 = vunpack.c.0.s8 %v987
      %v989 = vlaneseq
      %v990 = vshrl.u32 %v989, 7
      %v991 = vsub.s32 %v988, %v990
      %v992 = vrot.slane %v985, %v991
      %v993 = vcombine.low %v897, %v904
      %v995 = vunpack.c.l.s4 1966171168
      %v996 = vunpack.c.0.s8 %v995
      %v997 = vlaneseq
      %v998 = vshrl.u32 %v997, 7
      %v999 = vsub.s32 %v996, %v998
      %v1000 = vrot.slane %v993, %v999
      %v1002 = vunpack.c.l.s4 1966171168
      %v1003 = vunpack.c.0.s8 %v1002
      %v1004 = vlaneseq
      %v1005 = vshrl.u32 %v1004, 7
      %v1006 = vsub.s32 %v1003, %v1005
      %v1007 = vrot.slane %v911, %v1006
      %v1008 = vcombine.low %v1000, %v1007
      %v1010 = vunpack.c.l.s4 1966171168
      %v1011 = vunpack.c.0.s8 %v1010
      %v1012 = vlaneseq
      %v1013 = vshrl.u32 %v1012, 7
      %v1014 = vsub.s32 %v1011, %v1013
      %v1015 = vrot.slane %v1008, %v1014
      %s1020 = scalar_lea.vmem [#allocation2], 24
      %1021 = vst.msk [vmem:[%s1020] sm:$0x7] %vm452, %v946
      %1022 = vst.msk [vmem:[%s1020 + $0x3] sm:$0x7] %vm452, %v969
      %1023 = vst.msk [vmem:[%s1020 + $0x6] sm:$0x7] %vm452, %v992
      %1024 = vst.msk [vmem:[%s1020 + $0x9] sm:$0x7] %vm452, %v1015
      %v1025 = vmax.f32 %v735, %v834
      %v1026 = vmax.f32 %v736, %v841
      %v1027 = vmax.f32 %v737, %v848
      %v1028 = vmax.f32 %v738, %v855
      %v1029 = vmax.f32 %v739, %v862
      %v1030 = vmax.f32 %v740, %v869
      %v1031 = vmax.f32 %v741, %v876
      %v1032 = vmax.f32 %v742, %v883
      %v1033 = vmax.f32 %v743, %v890
      %v1034 = vmax.f32 %v744, %v897
      %v1035 = vmax.f32 %v745, %v904
      %v1036 = vmax.f32 %v746, %v911
      %v1037 = vld [vmem:[%s200] sm:$0xff]
      %v1038 = vld [vmem:[%s200 + $0x8] sm:$0xff]
      %v1039 = vld [vmem:[%s200 + $0x10] sm:$0xff]
      %v1040 = vld [vmem:[%s200 + $0x18] sm:$0xff]
      %v1041 = vunpack.c.l.bf16 %v1037
      %v1042 = vunpack.c.h.bf16 %v1037
      %v1043 = vunpack.c.l.bf16 %v1038
      %v1044 = vunpack.c.h.bf16 %v1038
      %v1045 = vunpack.c.l.bf16 %v1039
      %v1046 = vunpack.c.h.bf16 %v1039
      %v1047 = vunpack.c.l.bf16 %v1040
      %v1048 = vunpack.c.h.bf16 %v1040
      %1057 = vrot.lane.b32.xlu0 %v1041, 62
      %v1058 = vpop.permute.xlu0 %1057
      %1059 = vrot.lane.b32.xlu0 %v1042, 62
      %v1060 = vpop.permute.xlu0 %1059
      %1061 = vrot.lane.b32.xlu0 %v1043, 62
      %v1062 = vpop.permute.xlu0 %1061
      %1063 = vrot.lane.b32.xlu0 %v1044, 62
      %v1064 = vpop.permute.xlu0 %1063
      %1065 = vrot.lane.b32.xlu0 %v1045, 62
      %v1066 = vpop.permute.xlu0 %1065
      %1067 = vrot.lane.b32.xlu0 %v1046, 62
      %v1068 = vpop.permute.xlu0 %1067
      %1069 = vrot.lane.b32.xlu0 %v1047, 62
      %v1070 = vpop.permute.xlu0 %1069
      %1071 = vrot.lane.b32.xlu0 %v1048, 62
      %v1072 = vpop.permute.xlu0 %1071
      %v1073 = vrot.slane %v1058, 4
      %v1074 = vrot.slane %v1060, 4
      %v1075 = vrot.slane %v1062, 4
      %v1076 = vrot.slane %v1064, 4
      %v1077 = vrot.slane %v1066, 4
      %v1078 = vrot.slane %v1068, 4
      %v1079 = vrot.slane %v1070, 4
      %v1080 = vrot.slane %v1072, 4
      %v1081 = vsel %vm255, %v1073, %v1074
      %vm1082 = vcmask 506880
      %v1083 = vsel %vm1082, %v1058, %v1081
      %v1084 = vsel %vm1082, %v1060, %v1074
      %v1085 = vsel %vm255, %v1075, %v1076
      %v1086 = vsel %vm1082, %v1062, %v1085
      %v1087 = vsel %vm1082, %v1064, %v1076
      %v1088 = vsel %vm255, %v1077, %v1078
      %v1089 = vsel %vm1082, %v1066, %v1088
      %v1090 = vsel %vm1082, %v1068, %v1078
      %v1091 = vsel %vm255, %v1079, %v1080
      %v1092 = vsel %vm1082, %v1070, %v1091
      %v1093 = vsel %vm1082, %v1072, %v1080
      %v1102 = vmul.f32 %v215, %v1083
      %v1103 = vmul.f32 %v216, %v1084
      %v1104 = vmul.f32 %v217, %v1086
      %v1105 = vmul.f32 %v218, %v1087
      %v1106 = vmul.f32 %v219, %v1089
      %v1107 = vmul.f32 %v220, %v1090
      %v1108 = vmul.f32 %v221, %v1092
      %v1109 = vmul.f32 %v222, %v1093
      %v1114 = vcombine.high %v1102, %v1102
      %v1115 = vcombine.high %v1104, %v1104
      %v1116 = vcombine.high %v1106, %v1106
      %v1117 = vcombine.high %v1108, %v1108
      %v1122 = vsel %vm255, %v1102, 0.0
      %v1123 = vrot.slane %v1122, 4
      %v1124 = vadd.f32 %v1122, %v1123
      %v1125 = vrot.slane %v1124, 2
      %v1126 = vadd.f32 %v1124, %v1125
      %v1127 = vrot.slane %v1126, 1
      %v1128 = vadd.f32 %v1126, %v1127
      %v1129 = vsel %vm255, %v1114, 0.0
      %v1130 = vrot.slane %v1129, 4
      %v1131 = vadd.f32 %v1129, %v1130
      %v1132 = vrot.slane %v1131, 2
      %v1133 = vadd.f32 %v1131, %v1132
      %v1134 = vrot.slane %v1133, 1
      %v1135 = vadd.f32 %v1133, %v1134
      %v1136 = vsel %vm270, %v1103, 0.0
      %v1137 = vrot.slane %v1136, 4
      %v1138 = vadd.f32 %v1136, %v1137
      %v1139 = vrot.slane %v1138, 2
      %v1140 = vadd.f32 %v1138, %v1139
      %v1141 = vrot.slane %v1140, 1
      %v1142 = vadd.f32 %v1140, %v1141
      %v1143 = vsel %vm255, %v1104, 0.0
      %v1144 = vrot.slane %v1143, 4
      %v1145 = vadd.f32 %v1143, %v1144
      %v1146 = vrot.slane %v1145, 2
      %v1147 = vadd.f32 %v1145, %v1146
      %v1148 = vrot.slane %v1147, 1
      %v1149 = vadd.f32 %v1147, %v1148
      %v1150 = vsel %vm255, %v1115, 0.0
      %v1151 = vrot.slane %v1150, 4
      %v1152 = vadd.f32 %v1150, %v1151
      %v1153 = vrot.slane %v1152, 2
      %v1154 = vadd.f32 %v1152, %v1153
      %v1155 = vrot.slane %v1154, 1
      %v1156 = vadd.f32 %v1154, %v1155
      %v1157 = vsel %vm270, %v1105, 0.0
      %v1158 = vrot.slane %v1157, 4
      %v1159 = vadd.f32 %v1157, %v1158
      %v1160 = vrot.slane %v1159, 2
      %v1161 = vadd.f32 %v1159, %v1160
      %v1162 = vrot.slane %v1161, 1
      %v1163 = vadd.f32 %v1161, %v1162
      %v1164 = vsel %vm255, %v1106, 0.0
      %v1165 = vrot.slane %v1164, 4
      %v1166 = vadd.f32 %v1164, %v1165
      %v1167 = vrot.slane %v1166, 2
      %v1168 = vadd.f32 %v1166, %v1167
      %v1169 = vrot.slane %v1168, 1
      %v1170 = vadd.f32 %v1168, %v1169
      %v1171 = vsel %vm255, %v1116, 0.0
      %v1172 = vrot.slane %v1171, 4
      %v1173 = vadd.f32 %v1171, %v1172
      %v1174 = vrot.slane %v1173, 2
      %v1175 = vadd.f32 %v1173, %v1174
      %v1176 = vrot.slane %v1175, 1
      %v1177 = vadd.f32 %v1175, %v1176
      %v1178 = vsel %vm270, %v1107, 0.0
      %v1179 = vrot.slane %v1178, 4
      %v1180 = vadd.f32 %v1178, %v1179
      %v1181 = vrot.slane %v1180, 2
      %v1182 = vadd.f32 %v1180, %v1181
      %v1183 = vrot.slane %v1182, 1
      %v1184 = vadd.f32 %v1182, %v1183
      %v1185 = vsel %vm255, %v1108, 0.0
      %v1186 = vrot.slane %v1185, 4
      %v1187 = vadd.f32 %v1185, %v1186
      %v1188 = vrot.slane %v1187, 2
      %v1189 = vadd.f32 %v1187, %v1188
      %v1190 = vrot.slane %v1189, 1
      %v1191 = vadd.f32 %v1189, %v1190
      %v1192 = vsel %vm255, %v1117, 0.0
      %v1193 = vrot.slane %v1192, 4
      %v1194 = vadd.f32 %v1192, %v1193
      %v1195 = vrot.slane %v1194, 2
      %v1196 = vadd.f32 %v1194, %v1195
      %v1197 = vrot.slane %v1196, 1
      %v1198 = vadd.f32 %v1196, %v1197
      %v1199 = vsel %vm270, %v1109, 0.0
      %v1200 = vrot.slane %v1199, 4
      %v1201 = vadd.f32 %v1199, %v1200
      %v1202 = vrot.slane %v1201, 2
      %v1203 = vadd.f32 %v1201, %v1202
      %v1204 = vrot.slane %v1203, 1
      %v1205 = vadd.f32 %v1203, %v1204
      %v1218 = vcombine.low %v1128, %v1135
      %v1220 = vunpack.c.l.s4 1966171168
      %v1221 = vunpack.c.0.s8 %v1220
      %v1222 = vlaneseq
      %v1223 = vshrl.u32 %v1222, 7
      %v1224 = vsub.s32 %v1221, %v1223
      %v1225 = vrot.slane %v1218, %v1224
      %v1227 = vunpack.c.l.s4 1966171168
      %v1228 = vunpack.c.0.s8 %v1227
      %v1229 = vlaneseq
      %v1230 = vshrl.u32 %v1229, 7
      %v1231 = vsub.s32 %v1228, %v1230
      %v1232 = vrot.slane %v1142, %v1231
      %v1233 = vcombine.low %v1225, %v1232
      %v1235 = vunpack.c.l.s4 1966171168
      %v1236 = vunpack.c.0.s8 %v1235
      %v1237 = vlaneseq
      %v1238 = vshrl.u32 %v1237, 7
      %v1239 = vsub.s32 %v1236, %v1238
      %v1240 = vrot.slane %v1233, %v1239
      %v1241 = vcombine.low %v1149, %v1156
      %v1243 = vunpack.c.l.s4 1966171168
      %v1244 = vunpack.c.0.s8 %v1243
      %v1245 = vlaneseq
      %v1246 = vshrl.u32 %v1245, 7
      %v1247 = vsub.s32 %v1244, %v1246
      %v1248 = vrot.slane %v1241, %v1247
      %v1250 = vunpack.c.l.s4 1966171168
      %v1251 = vunpack.c.0.s8 %v1250
      %v1252 = vlaneseq
      %v1253 = vshrl.u32 %v1252, 7
      %v1254 = vsub.s32 %v1251, %v1253
      %v1255 = vrot.slane %v1163, %v1254
      %v1256 = vcombine.low %v1248, %v1255
      %v1258 = vunpack.c.l.s4 1966171168
      %v1259 = vunpack.c.0.s8 %v1258
      %v1260 = vlaneseq
      %v1261 = vshrl.u32 %v1260, 7
      %v1262 = vsub.s32 %v1259, %v1261
      %v1263 = vrot.slane %v1256, %v1262
      %v1264 = vcombine.low %v1170, %v1177
      %v1266 = vunpack.c.l.s4 1966171168
      %v1267 = vunpack.c.0.s8 %v1266
      %v1268 = vlaneseq
      %v1269 = vshrl.u32 %v1268, 7
      %v1270 = vsub.s32 %v1267, %v1269
      %v1271 = vrot.slane %v1264, %v1270
      %v1273 = vunpack.c.l.s4 1966171168
      %v1274 = vunpack.c.0.s8 %v1273
      %v1275 = vlaneseq
      %v1276 = vshrl.u32 %v1275, 7
      %v1277 = vsub.s32 %v1274, %v1276
      %v1278 = vrot.slane %v1184, %v1277
      %v1279 = vcombine.low %v1271, %v1278
      %v1281 = vunpack.c.l.s4 1966171168
      %v1282 = vunpack.c.0.s8 %v1281
      %v1283 = vlaneseq
      %v1284 = vshrl.u32 %v1283, 7
      %v1285 = vsub.s32 %v1282, %v1284
      %v1286 = vrot.slane %v1279, %v1285
      %v1287 = vcombine.low %v1191, %v1198
      %v1289 = vunpack.c.l.s4 1966171168
      %v1290 = vunpack.c.0.s8 %v1289
      %v1291 = vlaneseq
      %v1292 = vshrl.u32 %v1291, 7
      %v1293 = vsub.s32 %v1290, %v1292
      %v1294 = vrot.slane %v1287, %v1293
      %v1296 = vunpack.c.l.s4 1966171168
      %v1297 = vunpack.c.0.s8 %v1296
      %v1298 = vlaneseq
      %v1299 = vshrl.u32 %v1298, 7
      %v1300 = vsub.s32 %v1297, %v1299
      %v1301 = vrot.slane %v1205, %v1300
      %v1302 = vcombine.low %v1294, %v1301
      %v1304 = vunpack.c.l.s4 1966171168
      %v1305 = vunpack.c.0.s8 %v1304
      %v1306 = vlaneseq
      %v1307 = vshrl.u32 %v1306, 7
      %v1308 = vsub.s32 %v1305, %v1307
      %v1309 = vrot.slane %v1302, %v1308
      %s1314 = scalar_lea.vmem [#allocation2], 36
      %1315 = vst.msk [vmem:[%s1314] sm:$0x7] %vm452, %v1240
      %1316 = vst.msk [vmem:[%s1314 + $0x3] sm:$0x7] %vm452, %v1263
      %1317 = vst.msk [vmem:[%s1314 + $0x6] sm:$0x7] %vm452, %v1286
      %1318 = vst.msk [vmem:[%s1314 + $0x9] sm:$0x7] %vm452, %v1309
      %v1319 = vmax.f32 %v1025, %v1128
      %v1320 = vmax.f32 %v1026, %v1135
      %v1321 = vmax.f32 %v1027, %v1142
      %v1322 = vmax.f32 %v1028, %v1149
      %v1323 = vmax.f32 %v1029, %v1156
      %v1324 = vmax.f32 %v1030, %v1163
      %v1325 = vmax.f32 %v1031, %v1170
      %v1326 = vmax.f32 %v1032, %v1177
      %v1327 = vmax.f32 %v1033, %v1184
      %v1328 = vmax.f32 %v1034, %v1191
      %v1329 = vmax.f32 %v1035, %v1198
      %v1330 = vmax.f32 %v1036, %v1205
      %v1331 = vld [vmem:[%s200] sm:$0xff]
      %v1332 = vld [vmem:[%s200 + $0x8] sm:$0xff]
      %v1333 = vld [vmem:[%s200 + $0x10] sm:$0xff]
      %v1334 = vld [vmem:[%s200 + $0x18] sm:$0xff]
      %v1335 = vunpack.c.l.bf16 %v1331
      %v1336 = vunpack.c.h.bf16 %v1331
      %v1337 = vunpack.c.l.bf16 %v1332
      %v1338 = vunpack.c.h.bf16 %v1332
      %v1339 = vunpack.c.l.bf16 %v1333
      %v1340 = vunpack.c.h.bf16 %v1333
      %v1341 = vunpack.c.l.bf16 %v1334
      %v1342 = vunpack.c.h.bf16 %v1334
      %1351 = vrot.lane.b32.xlu0 %v1335, 59
      %v1352 = vpop.permute.xlu0 %1351
      %1353 = vrot.lane.b32.xlu0 %v1336, 59
      %v1354 = vpop.permute.xlu0 %1353
      %1355 = vrot.lane.b32.xlu0 %v1337, 59
      %v1356 = vpop.permute.xlu0 %1355
      %1357 = vrot.lane.b32.xlu0 %v1338, 59
      %v1358 = vpop.permute.xlu0 %1357
      %1359 = vrot.lane.b32.xlu0 %v1339, 59
      %v1360 = vpop.permute.xlu0 %1359
      %1361 = vrot.lane.b32.xlu0 %v1340, 59
      %v1362 = vpop.permute.xlu0 %1361
      %1363 = vrot.lane.b32.xlu0 %v1341, 59
      %v1364 = vpop.permute.xlu0 %1363
      %1365 = vrot.lane.b32.xlu0 %v1342, 59
      %v1366 = vpop.permute.xlu0 %1365
      %v1367 = vrot.slane %v1352, 4
      %v1368 = vrot.slane %v1354, 4
      %v1369 = vrot.slane %v1356, 4
      %v1370 = vrot.slane %v1358, 4
      %v1371 = vrot.slane %v1360, 4
      %v1372 = vrot.slane %v1362, 4
      %v1373 = vrot.slane %v1364, 4
      %v1374 = vrot.slane %v1366, 4
      %v1375 = vsel %vm255, %v1367, %v1368
      %vm1376 = vcmask 482304
      %v1377 = vsel %vm1376, %v1352, %v1375
      %v1378 = vsel %vm1376, %v1354, %v1368
      %v1379 = vsel %vm255, %v1369, %v1370
      %v1380 = vsel %vm1376, %v1356, %v1379
      %v1381 = vsel %vm1376, %v1358, %v1370
      %v1382 = vsel %vm255, %v1371, %v1372
      %v1383 = vsel %vm1376, %v1360, %v1382
      %v1384 = vsel %vm1376, %v1362, %v1372
      %v1385 = vsel %vm255, %v1373, %v1374
      %v1386 = vsel %vm1376, %v1364, %v1385
      %v1387 = vsel %vm1376, %v1366, %v1374
      %v1396 = vmul.f32 %v215, %v1377
      %v1397 = vmul.f32 %v216, %v1378
      %v1398 = vmul.f32 %v217, %v1380
      %v1399 = vmul.f32 %v218, %v1381
      %v1400 = vmul.f32 %v219, %v1383
      %v1401 = vmul.f32 %v220, %v1384
      %v1402 = vmul.f32 %v221, %v1386
      %v1403 = vmul.f32 %v222, %v1387
      %v1408 = vcombine.high %v1396, %v1396
      %v1409 = vcombine.high %v1398, %v1398
      %v1410 = vcombine.high %v1400, %v1400
      %v1411 = vcombine.high %v1402, %v1402
      %v1416 = vsel %vm255, %v1396, 0.0
      %v1417 = vrot.slane %v1416, 4
      %v1418 = vadd.f32 %v1416, %v1417
      %v1419 = vrot.slane %v1418, 2
      %v1420 = vadd.f32 %v1418, %v1419
      %v1421 = vrot.slane %v1420, 1
      %v1422 = vadd.f32 %v1420, %v1421
      %v1423 = vsel %vm255, %v1408, 0.0
      %v1424 = vrot.slane %v1423, 4
      %v1425 = vadd.f32 %v1423, %v1424
      %v1426 = vrot.slane %v1425, 2
      %v1427 = vadd.f32 %v1425, %v1426
      %v1428 = vrot.slane %v1427, 1
      %v1429 = vadd.f32 %v1427, %v1428
      %v1430 = vsel %vm270, %v1397, 0.0
      %v1431 = vrot.slane %v1430, 4
      %v1432 = vadd.f32 %v1430, %v1431
      %v1433 = vrot.slane %v1432, 2
      %v1434 = vadd.f32 %v1432, %v1433
      %v1435 = vrot.slane %v1434, 1
      %v1436 = vadd.f32 %v1434, %v1435
      %v1437 = vsel %vm255, %v1398, 0.0
      %v1438 = vrot.slane %v1437, 4
      %v1439 = vadd.f32 %v1437, %v1438
      %v1440 = vrot.slane %v1439, 2
      %v1441 = vadd.f32 %v1439, %v1440
      %v1442 = vrot.slane %v1441, 1
      %v1443 = vadd.f32 %v1441, %v1442
      %v1444 = vsel %vm255, %v1409, 0.0
      %v1445 = vrot.slane %v1444, 4
      %v1446 = vadd.f32 %v1444, %v1445
      %v1447 = vrot.slane %v1446, 2
      %v1448 = vadd.f32 %v1446, %v1447
      %v1449 = vrot.slane %v1448, 1
      %v1450 = vadd.f32 %v1448, %v1449
      %v1451 = vsel %vm270, %v1399, 0.0
      %v1452 = vrot.slane %v1451, 4
      %v1453 = vadd.f32 %v1451, %v1452
      %v1454 = vrot.slane %v1453, 2
      %v1455 = vadd.f32 %v1453, %v1454
      %v1456 = vrot.slane %v1455, 1
      %v1457 = vadd.f32 %v1455, %v1456
      %v1458 = vsel %vm255, %v1400, 0.0
      %v1459 = vrot.slane %v1458, 4
      %v1460 = vadd.f32 %v1458, %v1459
      %v1461 = vrot.slane %v1460, 2
      %v1462 = vadd.f32 %v1460, %v1461
      %v1463 = vrot.slane %v1462, 1
      %v1464 = vadd.f32 %v1462, %v1463
      %v1465 = vsel %vm255, %v1410, 0.0
      %v1466 = vrot.slane %v1465, 4
      %v1467 = vadd.f32 %v1465, %v1466
      %v1468 = vrot.slane %v1467, 2
      %v1469 = vadd.f32 %v1467, %v1468
      %v1470 = vrot.slane %v1469, 1
      %v1471 = vadd.f32 %v1469, %v1470
      %v1472 = vsel %vm270, %v1401, 0.0
      %v1473 = vrot.slane %v1472, 4
      %v1474 = vadd.f32 %v1472, %v1473
      %v1475 = vrot.slane %v1474, 2
      %v1476 = vadd.f32 %v1474, %v1475
      %v1477 = vrot.slane %v1476, 1
      %v1478 = vadd.f32 %v1476, %v1477
      %v1479 = vsel %vm255, %v1402, 0.0
      %v1480 = vrot.slane %v1479, 4
      %v1481 = vadd.f32 %v1479, %v1480
      %v1482 = vrot.slane %v1481, 2
      %v1483 = vadd.f32 %v1481, %v1482
      %v1484 = vrot.slane %v1483, 1
      %v1485 = vadd.f32 %v1483, %v1484
      %v1486 = vsel %vm255, %v1411, 0.0
      %v1487 = vrot.slane %v1486, 4
      %v1488 = vadd.f32 %v1486, %v1487
      %v1489 = vrot.slane %v1488, 2
      %v1490 = vadd.f32 %v1488, %v1489
      %v1491 = vrot.slane %v1490, 1
      %v1492 = vadd.f32 %v1490, %v1491
      %v1493 = vsel %vm270, %v1403, 0.0
      %v1494 = vrot.slane %v1493, 4
      %v1495 = vadd.f32 %v1493, %v1494
      %v1496 = vrot.slane %v1495, 2
      %v1497 = vadd.f32 %v1495, %v1496
      %v1498 = vrot.slane %v1497, 1
      %v1499 = vadd.f32 %v1497, %v1498
      %v1512 = vcombine.low %v1422, %v1429
      %v1514 = vunpack.c.l.s4 1966171168
      %v1515 = vunpack.c.0.s8 %v1514
      %v1516 = vlaneseq
      %v1517 = vshrl.u32 %v1516, 7
      %v1518 = vsub.s32 %v1515, %v1517
      %v1519 = vrot.slane %v1512, %v1518
      %v1521 = vunpack.c.l.s4 1966171168
      %v1522 = vunpack.c.0.s8 %v1521
      %v1523 = vlaneseq
      %v1524 = vshrl.u32 %v1523, 7
      %v1525 = vsub.s32 %v1522, %v1524
      %v1526 = vrot.slane %v1436, %v1525
      %v1527 = vcombine.low %v1519, %v1526
      %v1529 = vunpack.c.l.s4 1966171168
      %v1530 = vunpack.c.0.s8 %v1529
      %v1531 = vlaneseq
      %v1532 = vshrl.u32 %v1531, 7
      %v1533 = vsub.s32 %v1530, %v1532
      %v1534 = vrot.slane %v1527, %v1533
      %v1535 = vcombine.low %v1443, %v1450
      %v1537 = vunpack.c.l.s4 1966171168
      %v1538 = vunpack.c.0.s8 %v1537
      %v1539 = vlaneseq
      %v1540 = vshrl.u32 %v1539, 7
      %v1541 = vsub.s32 %v1538, %v1540
      %v1542 = vrot.slane %v1535, %v1541
      %v1544 = vunpack.c.l.s4 1966171168
      %v1545 = vunpack.c.0.s8 %v1544
      %v1546 = vlaneseq
      %v1547 = vshrl.u32 %v1546, 7
      %v1548 = vsub.s32 %v1545, %v1547
      %v1549 = vrot.slane %v1457, %v1548
      %v1550 = vcombine.low %v1542, %v1549
      %v1552 = vunpack.c.l.s4 1966171168
      %v1553 = vunpack.c.0.s8 %v1552
      %v1554 = vlaneseq
      %v1555 = vshrl.u32 %v1554, 7
      %v1556 = vsub.s32 %v1553, %v1555
      %v1557 = vrot.slane %v1550, %v1556
      %v1558 = vcombine.low %v1464, %v1471
      %v1560 = vunpack.c.l.s4 1966171168
      %v1561 = vunpack.c.0.s8 %v1560
      %v1562 = vlaneseq
      %v1563 = vshrl.u32 %v1562, 7
      %v1564 = vsub.s32 %v1561, %v1563
      %v1565 = vrot.slane %v1558, %v1564
      %v1567 = vunpack.c.l.s4 1966171168
      %v1568 = vunpack.c.0.s8 %v1567
      %v1569 = vlaneseq
      %v1570 = vshrl.u32 %v1569, 7
      %v1571 = vsub.s32 %v1568, %v1570
      %v1572 = vrot.slane %v1478, %v1571
      %v1573 = vcombine.low %v1565, %v1572
      %v1575 = vunpack.c.l.s4 1966171168
      %v1576 = vunpack.c.0.s8 %v1575
      %v1577 = vlaneseq
      %v1578 = vshrl.u32 %v1577, 7
      %v1579 = vsub.s32 %v1576, %v1578
      %v1580 = vrot.slane %v1573, %v1579
      %v1581 = vcombine.low %v1485, %v1492
      %v1583 = vunpack.c.l.s4 1966171168
      %v1584 = vunpack.c.0.s8 %v1583
      %v1585 = vlaneseq
      %v1586 = vshrl.u32 %v1585, 7
      %v1587 = vsub.s32 %v1584, %v1586
      %v1588 = vrot.slane %v1581, %v1587
      %v1590 = vunpack.c.l.s4 1966171168
      %v1591 = vunpack.c.0.s8 %v1590
      %v1592 = vlaneseq
      %v1593 = vshrl.u32 %v1592, 7
      %v1594 = vsub.s32 %v1591, %v1593
      %v1595 = vrot.slane %v1499, %v1594
      %v1596 = vcombine.low %v1588, %v1595
      %v1598 = vunpack.c.l.s4 1966171168
      %v1599 = vunpack.c.0.s8 %v1598
      %v1600 = vlaneseq
      %v1601 = vshrl.u32 %v1600, 7
      %v1602 = vsub.s32 %v1599, %v1601
      %v1603 = vrot.slane %v1596, %v1602
      %s1608 = scalar_lea.vmem [#allocation2], 48
      %1609 = vst.msk [vmem:[%s1608] sm:$0x7] %vm452, %v1534
      %1610 = vst.msk [vmem:[%s1608 + $0x3] sm:$0x7] %vm452, %v1557
      %1611 = vst.msk [vmem:[%s1608 + $0x6] sm:$0x7] %vm452, %v1580
      %1612 = vst.msk [vmem:[%s1608 + $0x9] sm:$0x7] %vm452, %v1603
      %v1613 = vmax.f32 %v1319, %v1422
      %v1614 = vmax.f32 %v1320, %v1429
      %v1615 = vmax.f32 %v1321, %v1436
      %v1616 = vmax.f32 %v1322, %v1443
      %v1617 = vmax.f32 %v1323, %v1450
      %v1618 = vmax.f32 %v1324, %v1457
      %v1619 = vmax.f32 %v1325, %v1464
      %v1620 = vmax.f32 %v1326, %v1471
      %v1621 = vmax.f32 %v1327, %v1478
      %v1622 = vmax.f32 %v1328, %v1485
      %v1623 = vmax.f32 %v1329, %v1492
      %v1624 = vmax.f32 %v1330, %v1499
      %v1625 = vld [vmem:[%s200] sm:$0xff]
      %v1626 = vld [vmem:[%s200 + $0x8] sm:$0xff]
      %v1627 = vld [vmem:[%s200 + $0x10] sm:$0xff]
      %v1628 = vld [vmem:[%s200 + $0x18] sm:$0xff]
      %v1629 = vunpack.c.l.bf16 %v1625
      %v1630 = vunpack.c.h.bf16 %v1625
      %v1631 = vunpack.c.l.bf16 %v1626
      %v1632 = vunpack.c.h.bf16 %v1626
      %v1633 = vunpack.c.l.bf16 %v1627
      %v1634 = vunpack.c.h.bf16 %v1627
      %v1635 = vunpack.c.l.bf16 %v1628
      %v1636 = vunpack.c.h.bf16 %v1628
      %1645 = vrot.lane.b32.xlu0 %v1629, 56
      %v1646 = vpop.permute.xlu0 %1645
      %1647 = vrot.lane.b32.xlu0 %v1630, 56
      %v1648 = vpop.permute.xlu0 %1647
      %1649 = vrot.lane.b32.xlu0 %v1631, 56
      %v1650 = vpop.permute.xlu0 %1649
      %1651 = vrot.lane.b32.xlu0 %v1632, 56
      %v1652 = vpop.permute.xlu0 %1651
      %1653 = vrot.lane.b32.xlu0 %v1633, 56
      %v1654 = vpop.permute.xlu0 %1653
      %1655 = vrot.lane.b32.xlu0 %v1634, 56
      %v1656 = vpop.permute.xlu0 %1655
      %1657 = vrot.lane.b32.xlu0 %v1635, 56
      %v1658 = vpop.permute.xlu0 %1657
      %1659 = vrot.lane.b32.xlu0 %v1636, 56
      %v1660 = vpop.permute.xlu0 %1659
      %v1661 = vrot.slane %v1646, 4
      %v1662 = vrot.slane %v1648, 4
      %v1663 = vrot.slane %v1650, 4
      %v1664 = vrot.slane %v1652, 4
      %v1665 = vrot.slane %v1654, 4
      %v1666 = vrot.slane %v1656, 4
      %v1667 = vrot.slane %v1658, 4
      %v1668 = vrot.slane %v1660, 4
      %v1669 = vsel %vm255, %v1661, %v1662
      %vm1670 = vcmask 457728
      %v1671 = vsel %vm1670, %v1646, %v1669
      %v1672 = vsel %vm1670, %v1648, %v1662
      %v1673 = vsel %vm255, %v1663, %v1664
      %v1674 = vsel %vm1670, %v1650, %v1673
      %v1675 = vsel %vm1670, %v1652, %v1664
      %v1676 = vsel %vm255, %v1665, %v1666
      %v1677 = vsel %vm1670, %v1654, %v1676
      %v1678 = vsel %vm1670, %v1656, %v1666
      %v1679 = vsel %vm255, %v1667, %v1668
      %v1680 = vsel %vm1670, %v1658, %v1679
      %v1681 = vsel %vm1670, %v1660, %v1668
      %v1690 = vmul.f32 %v215, %v1671
      %v1691 = vmul.f32 %v216, %v1672
      %v1692 = vmul.f32 %v217, %v1674
      %v1693 = vmul.f32 %v218, %v1675
      %v1694 = vmul.f32 %v219, %v1677
      %v1695 = vmul.f32 %v220, %v1678
      %v1696 = vmul.f32 %v221, %v1680
      %v1697 = vmul.f32 %v222, %v1681
      %v1702 = vcombine.high %v1690, %v1690
      %v1703 = vcombine.high %v1692, %v1692
      %v1704 = vcombine.high %v1694, %v1694
      %v1705 = vcombine.high %v1696, %v1696
      %v1710 = vsel %vm255, %v1690, 0.0
      %v1711 = vrot.slane %v1710, 4
      %v1712 = vadd.f32 %v1710, %v1711
      %v1713 = vrot.slane %v1712, 2
      %v1714 = vadd.f32 %v1712, %v1713
      %v1715 = vrot.slane %v1714, 1
      %v1716 = vadd.f32 %v1714, %v1715
      %v1717 = vsel %vm255, %v1702, 0.0
      %v1718 = vrot.slane %v1717, 4
      %v1719 = vadd.f32 %v1717, %v1718
      %v1720 = vrot.slane %v1719, 2
      %v1721 = vadd.f32 %v1719, %v1720
      %v1722 = vrot.slane %v1721, 1
      %v1723 = vadd.f32 %v1721, %v1722
      %v1724 = vsel %vm270, %v1691, 0.0
      %v1725 = vrot.slane %v1724, 4
      %v1726 = vadd.f32 %v1724, %v1725
      %v1727 = vrot.slane %v1726, 2
      %v1728 = vadd.f32 %v1726, %v1727
      %v1729 = vrot.slane %v1728, 1
      %v1730 = vadd.f32 %v1728, %v1729
      %v1731 = vsel %vm255, %v1692, 0.0
      %v1732 = vrot.slane %v1731, 4
      %v1733 = vadd.f32 %v1731, %v1732
      %v1734 = vrot.slane %v1733, 2
      %v1735 = vadd.f32 %v1733, %v1734
      %v1736 = vrot.slane %v1735, 1
      %v1737 = vadd.f32 %v1735, %v1736
      %v1738 = vsel %vm255, %v1703, 0.0
      %v1739 = vrot.slane %v1738, 4
      %v1740 = vadd.f32 %v1738, %v1739
      %v1741 = vrot.slane %v1740, 2
      %v1742 = vadd.f32 %v1740, %v1741
      %v1743 = vrot.slane %v1742, 1
      %v1744 = vadd.f32 %v1742, %v1743
      %v1745 = vsel %vm270, %v1693, 0.0
      %v1746 = vrot.slane %v1745, 4
      %v1747 = vadd.f32 %v1745, %v1746
      %v1748 = vrot.slane %v1747, 2
      %v1749 = vadd.f32 %v1747, %v1748
      %v1750 = vrot.slane %v1749, 1
      %v1751 = vadd.f32 %v1749, %v1750
      %v1752 = vsel %vm255, %v1694, 0.0
      %v1753 = vrot.slane %v1752, 4
      %v1754 = vadd.f32 %v1752, %v1753
      %v1755 = vrot.slane %v1754, 2
      %v1756 = vadd.f32 %v1754, %v1755
      %v1757 = vrot.slane %v1756, 1
      %v1758 = vadd.f32 %v1756, %v1757
      %v1759 = vsel %vm255, %v1704, 0.0
      %v1760 = vrot.slane %v1759, 4
      %v1761 = vadd.f32 %v1759, %v1760
      %v1762 = vrot.slane %v1761, 2
      %v1763 = vadd.f32 %v1761, %v1762
      %v1764 = vrot.slane %v1763, 1
      %v1765 = vadd.f32 %v1763, %v1764
      %v1766 = vsel %vm270, %v1695, 0.0
      %v1767 = vrot.slane %v1766, 4
      %v1768 = vadd.f32 %v1766, %v1767
      %v1769 = vrot.slane %v1768, 2
      %v1770 = vadd.f32 %v1768, %v1769
      %v1771 = vrot.slane %v1770, 1
      %v1772 = vadd.f32 %v1770, %v1771
      %v1773 = vsel %vm255, %v1696, 0.0
      %v1774 = vrot.slane %v1773, 4
      %v1775 = vadd.f32 %v1773, %v1774
      %v1776 = vrot.slane %v1775, 2
      %v1777 = vadd.f32 %v1775, %v1776
      %v1778 = vrot.slane %v1777, 1
      %v1779 = vadd.f32 %v1777, %v1778
      %v1780 = vsel %vm255, %v1705, 0.0
      %v1781 = vrot.slane %v1780, 4
      %v1782 = vadd.f32 %v1780, %v1781
      %v1783 = vrot.slane %v1782, 2
      %v1784 = vadd.f32 %v1782, %v1783
      %v1785 = vrot.slane %v1784, 1
      %v1786 = vadd.f32 %v1784, %v1785
      %v1787 = vsel %vm270, %v1697, 0.0
      %v1788 = vrot.slane %v1787, 4
      %v1789 = vadd.f32 %v1787, %v1788
      %v1790 = vrot.slane %v1789, 2
      %v1791 = vadd.f32 %v1789, %v1790
      %v1792 = vrot.slane %v1791, 1
      %v1793 = vadd.f32 %v1791, %v1792
      %v1806 = vcombine.low %v1716, %v1723
      %v1808 = vunpack.c.l.s4 1966171168
      %v1809 = vunpack.c.0.s8 %v1808
      %v1810 = vlaneseq
      %v1811 = vshrl.u32 %v1810, 7
      %v1812 = vsub.s32 %v1809, %v1811
      %v1813 = vrot.slane %v1806, %v1812
      %v1815 = vunpack.c.l.s4 1966171168
      %v1816 = vunpack.c.0.s8 %v1815
      %v1817 = vlaneseq
      %v1818 = vshrl.u32 %v1817, 7
      %v1819 = vsub.s32 %v1816, %v1818
      %v1820 = vrot.slane %v1730, %v1819
      %v1821 = vcombine.low %v1813, %v1820
      %v1823 = vunpack.c.l.s4 1966171168
      %v1824 = vunpack.c.0.s8 %v1823
      %v1825 = vlaneseq
      %v1826 = vshrl.u32 %v1825, 7
      %v1827 = vsub.s32 %v1824, %v1826
      %v1828 = vrot.slane %v1821, %v1827
      %v1829 = vcombine.low %v1737, %v1744
      %v1831 = vunpack.c.l.s4 1966171168
      %v1832 = vunpack.c.0.s8 %v1831
      %v1833 = vlaneseq
      %v1834 = vshrl.u32 %v1833, 7
      %v1835 = vsub.s32 %v1832, %v1834
      %v1836 = vrot.slane %v1829, %v1835
      %v1838 = vunpack.c.l.s4 1966171168
      %v1839 = vunpack.c.0.s8 %v1838
      %v1840 = vlaneseq
      %v1841 = vshrl.u32 %v1840, 7
      %v1842 = vsub.s32 %v1839, %v1841
      %v1843 = vrot.slane %v1751, %v1842
      %v1844 = vcombine.low %v1836, %v1843
      %v1846 = vunpack.c.l.s4 1966171168
      %v1847 = vunpack.c.0.s8 %v1846
      %v1848 = vlaneseq
      %v1849 = vshrl.u32 %v1848, 7
      %v1850 = vsub.s32 %v1847, %v1849
      %v1851 = vrot.slane %v1844, %v1850
      %v1852 = vcombine.low %v1758, %v1765
      %v1854 = vunpack.c.l.s4 1966171168
      %v1855 = vunpack.c.0.s8 %v1854
      %v1856 = vlaneseq
      %v1857 = vshrl.u32 %v1856, 7
      %v1858 = vsub.s32 %v1855, %v1857
      %v1859 = vrot.slane %v1852, %v1858
      %v1861 = vunpack.c.l.s4 1966171168
      %v1862 = vunpack.c.0.s8 %v1861
      %v1863 = vlaneseq
      %v1864 = vshrl.u32 %v1863, 7
      %v1865 = vsub.s32 %v1862, %v1864
      %v1866 = vrot.slane %v1772, %v1865
      %v1867 = vcombine.low %v1859, %v1866
      %v1869 = vunpack.c.l.s4 1966171168
      %v1870 = vunpack.c.0.s8 %v1869
      %v1871 = vlaneseq
      %v1872 = vshrl.u32 %v1871, 7
      %v1873 = vsub.s32 %v1870, %v1872
      %v1874 = vrot.slane %v1867, %v1873
      %v1875 = vcombine.low %v1779, %v1786
      %v1877 = vunpack.c.l.s4 1966171168
      %v1878 = vunpack.c.0.s8 %v1877
      %v1879 = vlaneseq
      %v1880 = vshrl.u32 %v1879, 7
      %v1881 = vsub.s32 %v1878, %v1880
      %v1882 = vrot.slane %v1875, %v1881
      %v1884 = vunpack.c.l.s4 1966171168
      %v1885 = vunpack.c.0.s8 %v1884
      %v1886 = vlaneseq
      %v1887 = vshrl.u32 %v1886, 7
      %v1888 = vsub.s32 %v1885, %v1887
      %v1889 = vrot.slane %v1793, %v1888
      %v1890 = vcombine.low %v1882, %v1889
      %v1892 = vunpack.c.l.s4 1966171168
      %v1893 = vunpack.c.0.s8 %v1892
      %v1894 = vlaneseq
      %v1895 = vshrl.u32 %v1894, 7
      %v1896 = vsub.s32 %v1893, %v1895
      %v1897 = vrot.slane %v1890, %v1896
      %s1902 = scalar_lea.vmem [#allocation2], 60
      %1903 = vst.msk [vmem:[%s1902] sm:$0x7] %vm452, %v1828
      %1904 = vst.msk [vmem:[%s1902 + $0x3] sm:$0x7] %vm452, %v1851
      %1905 = vst.msk [vmem:[%s1902 + $0x6] sm:$0x7] %vm452, %v1874
      %1906 = vst.msk [vmem:[%s1902 + $0x9] sm:$0x7] %vm452, %v1897
      %v1907 = vmax.f32 %v1613, %v1716
      %v1908 = vmax.f32 %v1614, %v1723
      %v1909 = vmax.f32 %v1615, %v1730
      %v1910 = vmax.f32 %v1616, %v1737
      %v1911 = vmax.f32 %v1617, %v1744
      %v1912 = vmax.f32 %v1618, %v1751
      %v1913 = vmax.f32 %v1619, %v1758
      %v1914 = vmax.f32 %v1620, %v1765
      %v1915 = vmax.f32 %v1621, %v1772
      %v1916 = vmax.f32 %v1622, %v1779
      %v1917 = vmax.f32 %v1623, %v1786
      %v1918 = vmax.f32 %v1624, %v1793
      %v1919 = vld [vmem:[%s200 + $0x2] sm:$0x3f]
      %v1920 = vld [vmem:[%s200 + $0xa] sm:$0x3f]
      %v1921 = vld [vmem:[%s200 + $0x12] sm:$0x3f]
      %v1922 = vld [vmem:[%s200 + $0x1a] sm:$0x3f]
      %v1923 = vunpack.c.l.bf16 %v1919
      %v1924 = vunpack.c.h.bf16 %v1919
      %v1925 = vunpack.c.l.bf16 %v1920
      %v1926 = vunpack.c.h.bf16 %v1920
      %v1927 = vunpack.c.l.bf16 %v1921
      %v1928 = vunpack.c.h.bf16 %v1921
      %v1929 = vunpack.c.l.bf16 %v1922
      %v1930 = vunpack.c.h.bf16 %v1922
      %1939 = vrot.lane.b32.xlu0 %v1923, 124
      %v1940 = vpop.permute.xlu0 %1939
      %1941 = vrot.lane.b32.xlu0 %v1924, 124
      %v1942 = vpop.permute.xlu0 %1941
      %1943 = vrot.lane.b32.xlu0 %v1925, 124
      %v1944 = vpop.permute.xlu0 %1943
      %1945 = vrot.lane.b32.xlu0 %v1926, 124
      %v1946 = vpop.permute.xlu0 %1945
      %1947 = vrot.lane.b32.xlu0 %v1927, 124
      %v1948 = vpop.permute.xlu0 %1947
      %1949 = vrot.lane.b32.xlu0 %v1928, 124
      %v1950 = vpop.permute.xlu0 %1949
      %1951 = vrot.lane.b32.xlu0 %v1929, 124
      %v1952 = vpop.permute.xlu0 %1951
      %1953 = vrot.lane.b32.xlu0 %v1930, 124
      %v1954 = vpop.permute.xlu0 %1953
      %v1955 = vrot.slane %v1940, 4
      %v1956 = vrot.slane %v1942, 4
      %v1957 = vrot.slane %v1944, 4
      %v1958 = vrot.slane %v1946, 4
      %v1959 = vrot.slane %v1948, 4
      %v1960 = vrot.slane %v1950, 4
      %v1961 = vrot.slane %v1952, 4
      %v1962 = vrot.slane %v1954, 4
      %v1963 = vsel %vm255, %v1955, %v1956
      %vm1964 = vcmask 1014784
      %v1965 = vsel %vm1964, %v1940, %v1963
      %v1966 = vsel %vm255, %v1957, %v1958
      %v1967 = vsel %vm1964, %v1944, %v1966
      %v1968 = vsel %vm255, %v1959, %v1960
      %v1969 = vsel %vm1964, %v1948, %v1968
      %v1970 = vsel %vm255, %v1961, %v1962
      %v1971 = vsel %vm1964, %v1952, %v1970
      %v1980 = vmul.f32 %v215, %v1965
      %v1981 = vmul.f32 %v216, %v1942
      %v1982 = vmul.f32 %v217, %v1967
      %v1983 = vmul.f32 %v218, %v1946
      %v1984 = vmul.f32 %v219, %v1969
      %v1985 = vmul.f32 %v220, %v1950
      %v1986 = vmul.f32 %v221, %v1971
      %v1987 = vmul.f32 %v222, %v1954
      %v1992 = vcombine.high %v1980, %v1980
      %v1993 = vcombine.high %v1982, %v1982
      %v1994 = vcombine.high %v1984, %v1984
      %v1995 = vcombine.high %v1986, %v1986
      %v2000 = vsel %vm255, %v1980, 0.0
      %v2001 = vrot.slane %v2000, 4
      %v2002 = vadd.f32 %v2000, %v2001
      %v2003 = vrot.slane %v2002, 2
      %v2004 = vadd.f32 %v2002, %v2003
      %v2005 = vrot.slane %v2004, 1
      %v2006 = vadd.f32 %v2004, %v2005
      %v2007 = vsel %vm255, %v1992, 0.0
      %v2008 = vrot.slane %v2007, 4
      %v2009 = vadd.f32 %v2007, %v2008
      %v2010 = vrot.slane %v2009, 2
      %v2011 = vadd.f32 %v2009, %v2010
      %v2012 = vrot.slane %v2011, 1
      %v2013 = vadd.f32 %v2011, %v2012
      %v2014 = vsel %vm270, %v1981, 0.0
      %v2015 = vrot.slane %v2014, 4
      %v2016 = vadd.f32 %v2014, %v2015
      %v2017 = vrot.slane %v2016, 2
      %v2018 = vadd.f32 %v2016, %v2017
      %v2019 = vrot.slane %v2018, 1
      %v2020 = vadd.f32 %v2018, %v2019
      %v2021 = vsel %vm255, %v1982, 0.0
      %v2022 = vrot.slane %v2021, 4
      %v2023 = vadd.f32 %v2021, %v2022
      %v2024 = vrot.slane %v2023, 2
      %v2025 = vadd.f32 %v2023, %v2024
      %v2026 = vrot.slane %v2025, 1
      %v2027 = vadd.f32 %v2025, %v2026
      %v2028 = vsel %vm255, %v1993, 0.0
      %v2029 = vrot.slane %v2028, 4
      %v2030 = vadd.f32 %v2028, %v2029
      %v2031 = vrot.slane %v2030, 2
      %v2032 = vadd.f32 %v2030, %v2031
      %v2033 = vrot.slane %v2032, 1
      %v2034 = vadd.f32 %v2032, %v2033
      %v2035 = vsel %vm270, %v1983, 0.0
      %v2036 = vrot.slane %v2035, 4
      %v2037 = vadd.f32 %v2035, %v2036
      %v2038 = vrot.slane %v2037, 2
      %v2039 = vadd.f32 %v2037, %v2038
      %v2040 = vrot.slane %v2039, 1
      %v2041 = vadd.f32 %v2039, %v2040
      %v2042 = vsel %vm255, %v1984, 0.0
      %v2043 = vrot.slane %v2042, 4
      %v2044 = vadd.f32 %v2042, %v2043
      %v2045 = vrot.slane %v2044, 2
      %v2046 = vadd.f32 %v2044, %v2045
      %v2047 = vrot.slane %v2046, 1
      %v2048 = vadd.f32 %v2046, %v2047
      %v2049 = vsel %vm255, %v1994, 0.0
      %v2050 = vrot.slane %v2049, 4
      %v2051 = vadd.f32 %v2049, %v2050
      %v2052 = vrot.slane %v2051, 2
      %v2053 = vadd.f32 %v2051, %v2052
      %v2054 = vrot.slane %v2053, 1
      %v2055 = vadd.f32 %v2053, %v2054
      %v2056 = vsel %vm270, %v1985, 0.0
      %v2057 = vrot.slane %v2056, 4
      %v2058 = vadd.f32 %v2056, %v2057
      %v2059 = vrot.slane %v2058, 2
      %v2060 = vadd.f32 %v2058, %v2059
      %v2061 = vrot.slane %v2060, 1
      %v2062 = vadd.f32 %v2060, %v2061
      %v2063 = vsel %vm255, %v1986, 0.0
      %v2064 = vrot.slane %v2063, 4
      %v2065 = vadd.f32 %v2063, %v2064
      %v2066 = vrot.slane %v2065, 2
      %v2067 = vadd.f32 %v2065, %v2066
      %v2068 = vrot.slane %v2067, 1
      %v2069 = vadd.f32 %v2067, %v2068
      %v2070 = vsel %vm255, %v1995, 0.0
      %v2071 = vrot.slane %v2070, 4
      %v2072 = vadd.f32 %v2070, %v2071
      %v2073 = vrot.slane %v2072, 2
      %v2074 = vadd.f32 %v2072, %v2073
      %v2075 = vrot.slane %v2074, 1
      %v2076 = vadd.f32 %v2074, %v2075
      %v2077 = vsel %vm270, %v1987, 0.0
      %v2078 = vrot.slane %v2077, 4
      %v2079 = vadd.f32 %v2077, %v2078
      %v2080 = vrot.slane %v2079, 2
      %v2081 = vadd.f32 %v2079, %v2080
      %v2082 = vrot.slane %v2081, 1
      %v2083 = vadd.f32 %v2081, %v2082
      %v2096 = vcombine.low %v2006, %v2013
      %v2098 = vunpack.c.l.s4 1966171168
      %v2099 = vunpack.c.0.s8 %v2098
      %v2100 = vlaneseq
      %v2101 = vshrl.u32 %v2100, 7
      %v2102 = vsub.s32 %v2099, %v2101
      %v2103 = vrot.slane %v2096, %v2102
      %v2105 = vunpack.c.l.s4 1966171168
      %v2106 = vunpack.c.0.s8 %v2105
      %v2107 = vlaneseq
      %v2108 = vshrl.u32 %v2107, 7
      %v2109 = vsub.s32 %v2106, %v2108
      %v2110 = vrot.slane %v2020, %v2109
      %v2111 = vcombine.low %v2103, %v2110
      %v2113 = vunpack.c.l.s4 1966171168
      %v2114 = vunpack.c.0.s8 %v2113
      %v2115 = vlaneseq
      %v2116 = vshrl.u32 %v2115, 7
      %v2117 = vsub.s32 %v2114, %v2116
      %v2118 = vrot.slane %v2111, %v2117
      %v2119 = vcombine.low %v2027, %v2034
      %v2121 = vunpack.c.l.s4 1966171168
      %v2122 = vunpack.c.0.s8 %v2121
      %v2123 = vlaneseq
      %v2124 = vshrl.u32 %v2123, 7
      %v2125 = vsub.s32 %v2122, %v2124
      %v2126 = vrot.slane %v2119, %v2125
      %v2128 = vunpack.c.l.s4 1966171168
      %v2129 = vunpack.c.0.s8 %v2128
      %v2130 = vlaneseq
      %v2131 = vshrl.u32 %v2130, 7
      %v2132 = vsub.s32 %v2129, %v2131
      %v2133 = vrot.slane %v2041, %v2132
      %v2134 = vcombine.low %v2126, %v2133
      %v2136 = vunpack.c.l.s4 1966171168
      %v2137 = vunpack.c.0.s8 %v2136
      %v2138 = vlaneseq
      %v2139 = vshrl.u32 %v2138, 7
      %v2140 = vsub.s32 %v2137, %v2139
      %v2141 = vrot.slane %v2134, %v2140
      %v2142 = vcombine.low %v2048, %v2055
      %v2144 = vunpack.c.l.s4 1966171168
      %v2145 = vunpack.c.0.s8 %v2144
      %v2146 = vlaneseq
      %v2147 = vshrl.u32 %v2146, 7
      %v2148 = vsub.s32 %v2145, %v2147
      %v2149 = vrot.slane %v2142, %v2148
      %v2151 = vunpack.c.l.s4 1966171168
      %v2152 = vunpack.c.0.s8 %v2151
      %v2153 = vlaneseq
      %v2154 = vshrl.u32 %v2153, 7
      %v2155 = vsub.s32 %v2152, %v2154
      %v2156 = vrot.slane %v2062, %v2155
      %v2157 = vcombine.low %v2149, %v2156
      %v2159 = vunpack.c.l.s4 1966171168
      %v2160 = vunpack.c.0.s8 %v2159
      %v2161 = vlaneseq
      %v2162 = vshrl.u32 %v2161, 7
      %v2163 = vsub.s32 %v2160, %v2162
      %v2164 = vrot.slane %v2157, %v2163
      %v2165 = vcombine.low %v2069, %v2076
      %v2167 = vunpack.c.l.s4 1966171168
      %v2168 = vunpack.c.0.s8 %v2167
      %v2169 = vlaneseq
      %v2170 = vshrl.u32 %v2169, 7
      %v2171 = vsub.s32 %v2168, %v2170
      %v2172 = vrot.slane %v2165, %v2171
      %v2174 = vunpack.c.l.s4 1966171168
      %v2175 = vunpack.c.0.s8 %v2174
      %v2176 = vlaneseq
      %v2177 = vshrl.u32 %v2176, 7
      %v2178 = vsub.s32 %v2175, %v2177
      %v2179 = vrot.slane %v2083, %v2178
      %v2180 = vcombine.low %v2172, %v2179
      %v2182 = vunpack.c.l.s4 1966171168
      %v2183 = vunpack.c.0.s8 %v2182
      %v2184 = vlaneseq
      %v2185 = vshrl.u32 %v2184, 7
      %v2186 = vsub.s32 %v2183, %v2185
      %v2187 = vrot.slane %v2180, %v2186
      %s2192 = scalar_lea.vmem [#allocation2], 72
      %2193 = vst.msk [vmem:[%s2192] sm:$0x7] %vm452, %v2118
      %2194 = vst.msk [vmem:[%s2192 + $0x3] sm:$0x7] %vm452, %v2141
      %2195 = vst.msk [vmem:[%s2192 + $0x6] sm:$0x7] %vm452, %v2164
      %2196 = vst.msk [vmem:[%s2192 + $0x9] sm:$0x7] %vm452, %v2187
      %v2197 = vmax.f32 %v1907, %v2006
      %v2198 = vmax.f32 %v1908, %v2013
      %v2199 = vmax.f32 %v1909, %v2020
      %v2200 = vmax.f32 %v1910, %v2027
      %v2201 = vmax.f32 %v1911, %v2034
      %v2202 = vmax.f32 %v1912, %v2041
      %v2203 = vmax.f32 %v1913, %v2048
      %v2204 = vmax.f32 %v1914, %v2055
      %v2205 = vmax.f32 %v1915, %v2062
      %v2206 = vmax.f32 %v1916, %v2069
      %v2207 = vmax.f32 %v1917, %v2076
      %v2208 = vmax.f32 %v1918, %v2083
      %v2209 = vld [vmem:[%s200 + $0x2] sm:$0x3f]
      %v2210 = vld [vmem:[%s200 + $0xa] sm:$0x3f]
      %v2211 = vld [vmem:[%s200 + $0x12] sm:$0x3f]
      %v2212 = vld [vmem:[%s200 + $0x1a] sm:$0x3f]
      %v2213 = vunpack.c.l.bf16 %v2209
      %v2214 = vunpack.c.h.bf16 %v2209
      %v2215 = vunpack.c.l.bf16 %v2210
      %v2216 = vunpack.c.h.bf16 %v2210
      %v2217 = vunpack.c.l.bf16 %v2211
      %v2218 = vunpack.c.h.bf16 %v2211
      %v2219 = vunpack.c.l.bf16 %v2212
      %v2220 = vunpack.c.h.bf16 %v2212
      %2229 = vrot.lane.b32.xlu0 %v2213, 121
      %v2230 = vpop.permute.xlu0 %2229
      %2231 = vrot.lane.b32.xlu0 %v2214, 121
      %v2232 = vpop.permute.xlu0 %2231
      %2233 = vrot.lane.b32.xlu0 %v2215, 121
      %v2234 = vpop.permute.xlu0 %2233
      %2235 = vrot.lane.b32.xlu0 %v2216, 121
      %v2236 = vpop.permute.xlu0 %2235
      %2237 = vrot.lane.b32.xlu0 %v2217, 121
      %v2238 = vpop.permute.xlu0 %2237
      %2239 = vrot.lane.b32.xlu0 %v2218, 121
      %v2240 = vpop.permute.xlu0 %2239
      %2241 = vrot.lane.b32.xlu0 %v2219, 121
      %v2242 = vpop.permute.xlu0 %2241
      %2243 = vrot.lane.b32.xlu0 %v2220, 121
      %v2244 = vpop.permute.xlu0 %2243
      %v2245 = vrot.slane %v2230, 4
      %v2246 = vrot.slane %v2232, 4
      %v2247 = vrot.slane %v2234, 4
      %v2248 = vrot.slane %v2236, 4
      %v2249 = vrot.slane %v2238, 4
      %v2250 = vrot.slane %v2240, 4
      %v2251 = vrot.slane %v2242, 4
      %v2252 = vrot.slane %v2244, 4
      %v2253 = vsel %vm255, %v2245, %v2246
      %vm2254 = vcmask 990208
      %v2255 = vsel %vm2254, %v2230, %v2253
      %v2256 = vsel %vm255, %v2247, %v2248
      %v2257 = vsel %vm2254, %v2234, %v2256
      %v2258 = vsel %vm255, %v2249, %v2250
      %v2259 = vsel %vm2254, %v2238, %v2258
      %v2260 = vsel %vm255, %v2251, %v2252
      %v2261 = vsel %vm2254, %v2242, %v2260
      %v2270 = vmul.f32 %v215, %v2255
      %v2271 = vmul.f32 %v216, %v2232
      %v2272 = vmul.f32 %v217, %v2257
      %v2273 = vmul.f32 %v218, %v2236
      %v2274 = vmul.f32 %v219, %v2259
      %v2275 = vmul.f32 %v220, %v2240
      %v2276 = vmul.f32 %v221, %v2261
      %v2277 = vmul.f32 %v222, %v2244
      %v2282 = vcombine.high %v2270, %v2270
      %v2283 = vcombine.high %v2272, %v2272
      %v2284 = vcombine.high %v2274, %v2274
      %v2285 = vcombine.high %v2276, %v2276
      %v2290 = vsel %vm255, %v2270, 0.0
      %v2291 = vrot.slane %v2290, 4
      %v2292 = vadd.f32 %v2290, %v2291
      %v2293 = vrot.slane %v2292, 2
      %v2294 = vadd.f32 %v2292, %v2293
      %v2295 = vrot.slane %v2294, 1
      %v2296 = vadd.f32 %v2294, %v2295
      %v2297 = vsel %vm255, %v2282, 0.0
      %v2298 = vrot.slane %v2297, 4
      %v2299 = vadd.f32 %v2297, %v2298
      %v2300 = vrot.slane %v2299, 2
      %v2301 = vadd.f32 %v2299, %v2300
      %v2302 = vrot.slane %v2301, 1
      %v2303 = vadd.f32 %v2301, %v2302
      %v2304 = vsel %vm270, %v2271, 0.0
      %v2305 = vrot.slane %v2304, 4
      %v2306 = vadd.f32 %v2304, %v2305
      %v2307 = vrot.slane %v2306, 2
      %v2308 = vadd.f32 %v2306, %v2307
      %v2309 = vrot.slane %v2308, 1
      %v2310 = vadd.f32 %v2308, %v2309
      %v2311 = vsel %vm255, %v2272, 0.0
      %v2312 = vrot.slane %v2311, 4
      %v2313 = vadd.f32 %v2311, %v2312
      %v2314 = vrot.slane %v2313, 2
      %v2315 = vadd.f32 %v2313, %v2314
      %v2316 = vrot.slane %v2315, 1
      %v2317 = vadd.f32 %v2315, %v2316
      %v2318 = vsel %vm255, %v2283, 0.0
      %v2319 = vrot.slane %v2318, 4
      %v2320 = vadd.f32 %v2318, %v2319
      %v2321 = vrot.slane %v2320, 2
      %v2322 = vadd.f32 %v2320, %v2321
      %v2323 = vrot.slane %v2322, 1
      %v2324 = vadd.f32 %v2322, %v2323
      %v2325 = vsel %vm270, %v2273, 0.0
      %v2326 = vrot.slane %v2325, 4
      %v2327 = vadd.f32 %v2325, %v2326
      %v2328 = vrot.slane %v2327, 2
      %v2329 = vadd.f32 %v2327, %v2328
      %v2330 = vrot.slane %v2329, 1
      %v2331 = vadd.f32 %v2329, %v2330
      %v2332 = vsel %vm255, %v2274, 0.0
      %v2333 = vrot.slane %v2332, 4
      %v2334 = vadd.f32 %v2332, %v2333
      %v2335 = vrot.slane %v2334, 2
      %v2336 = vadd.f32 %v2334, %v2335
      %v2337 = vrot.slane %v2336, 1
      %v2338 = vadd.f32 %v2336, %v2337
      %v2339 = vsel %vm255, %v2284, 0.0
      %v2340 = vrot.slane %v2339, 4
      %v2341 = vadd.f32 %v2339, %v2340
      %v2342 = vrot.slane %v2341, 2
      %v2343 = vadd.f32 %v2341, %v2342
      %v2344 = vrot.slane %v2343, 1
      %v2345 = vadd.f32 %v2343, %v2344
      %v2346 = vsel %vm270, %v2275, 0.0
      %v2347 = vrot.slane %v2346, 4
      %v2348 = vadd.f32 %v2346, %v2347
      %v2349 = vrot.slane %v2348, 2
      %v2350 = vadd.f32 %v2348, %v2349
      %v2351 = vrot.slane %v2350, 1
      %v2352 = vadd.f32 %v2350, %v2351
      %v2353 = vsel %vm255, %v2276, 0.0
      %v2354 = vrot.slane %v2353, 4
      %v2355 = vadd.f32 %v2353, %v2354
      %v2356 = vrot.slane %v2355, 2
      %v2357 = vadd.f32 %v2355, %v2356
      %v2358 = vrot.slane %v2357, 1
      %v2359 = vadd.f32 %v2357, %v2358
      %v2360 = vsel %vm255, %v2285, 0.0
      %v2361 = vrot.slane %v2360, 4
      %v2362 = vadd.f32 %v2360, %v2361
      %v2363 = vrot.slane %v2362, 2
      %v2364 = vadd.f32 %v2362, %v2363
      %v2365 = vrot.slane %v2364, 1
      %v2366 = vadd.f32 %v2364, %v2365
      %v2367 = vsel %vm270, %v2277, 0.0
      %v2368 = vrot.slane %v2367, 4
      %v2369 = vadd.f32 %v2367, %v2368
      %v2370 = vrot.slane %v2369, 2
      %v2371 = vadd.f32 %v2369, %v2370
      %v2372 = vrot.slane %v2371, 1
      %v2373 = vadd.f32 %v2371, %v2372
      %v2386 = vcombine.low %v2296, %v2303
      %v2388 = vunpack.c.l.s4 1966171168
      %v2389 = vunpack.c.0.s8 %v2388
      %v2390 = vlaneseq
      %v2391 = vshrl.u32 %v2390, 7
      %v2392 = vsub.s32 %v2389, %v2391
      %v2393 = vrot.slane %v2386, %v2392
      %v2395 = vunpack.c.l.s4 1966171168
      %v2396 = vunpack.c.0.s8 %v2395
      %v2397 = vlaneseq
      %v2398 = vshrl.u32 %v2397, 7
      %v2399 = vsub.s32 %v2396, %v2398
      %v2400 = vrot.slane %v2310, %v2399
      %v2401 = vcombine.low %v2393, %v2400
      %v2403 = vunpack.c.l.s4 1966171168
      %v2404 = vunpack.c.0.s8 %v2403
      %v2405 = vlaneseq
      %v2406 = vshrl.u32 %v2405, 7
      %v2407 = vsub.s32 %v2404, %v2406
      %v2408 = vrot.slane %v2401, %v2407
      %v2409 = vcombine.low %v2317, %v2324
      %v2411 = vunpack.c.l.s4 1966171168
      %v2412 = vunpack.c.0.s8 %v2411
      %v2413 = vlaneseq
      %v2414 = vshrl.u32 %v2413, 7
      %v2415 = vsub.s32 %v2412, %v2414
      %v2416 = vrot.slane %v2409, %v2415
      %v2418 = vunpack.c.l.s4 1966171168
      %v2419 = vunpack.c.0.s8 %v2418
      %v2420 = vlaneseq
      %v2421 = vshrl.u32 %v2420, 7
      %v2422 = vsub.s32 %v2419, %v2421
      %v2423 = vrot.slane %v2331, %v2422
      %v2424 = vcombine.low %v2416, %v2423
      %v2426 = vunpack.c.l.s4 1966171168
      %v2427 = vunpack.c.0.s8 %v2426
      %v2428 = vlaneseq
      %v2429 = vshrl.u32 %v2428, 7
      %v2430 = vsub.s32 %v2427, %v2429
      %v2431 = vrot.slane %v2424, %v2430
      %v2432 = vcombine.low %v2338, %v2345
      %v2434 = vunpack.c.l.s4 1966171168
      %v2435 = vunpack.c.0.s8 %v2434
      %v2436 = vlaneseq
      %v2437 = vshrl.u32 %v2436, 7
      %v2438 = vsub.s32 %v2435, %v2437
      %v2439 = vrot.slane %v2432, %v2438
      %v2441 = vunpack.c.l.s4 1966171168
      %v2442 = vunpack.c.0.s8 %v2441
      %v2443 = vlaneseq
      %v2444 = vshrl.u32 %v2443, 7
      %v2445 = vsub.s32 %v2442, %v2444
      %v2446 = vrot.slane %v2352, %v2445
      %v2447 = vcombine.low %v2439, %v2446
      %v2449 = vunpack.c.l.s4 1966171168
      %v2450 = vunpack.c.0.s8 %v2449
      %v2451 = vlaneseq
      %v2452 = vshrl.u32 %v2451, 7
      %v2453 = vsub.s32 %v2450, %v2452
      %v2454 = vrot.slane %v2447, %v2453
      %v2455 = vcombine.low %v2359, %v2366
      %v2457 = vunpack.c.l.s4 1966171168
      %v2458 = vunpack.c.0.s8 %v2457
      %v2459 = vlaneseq
      %v2460 = vshrl.u32 %v2459, 7
      %v2461 = vsub.s32 %v2458, %v2460
      %v2462 = vrot.slane %v2455, %v2461
      %v2464 = vunpack.c.l.s4 1966171168
      %v2465 = vunpack.c.0.s8 %v2464
      %v2466 = vlaneseq
      %v2467 = vshrl.u32 %v2466, 7
      %v2468 = vsub.s32 %v2465, %v2467
      %v2469 = vrot.slane %v2373, %v2468
      %v2470 = vcombine.low %v2462, %v2469
      %v2472 = vunpack.c.l.s4 1966171168
      %v2473 = vunpack.c.0.s8 %v2472
      %v2474 = vlaneseq
      %v2475 = vshrl.u32 %v2474, 7
      %v2476 = vsub.s32 %v2473, %v2475
      %v2477 = vrot.slane %v2470, %v2476
      %s2482 = scalar_lea.vmem [#allocation2], 84
      %2483 = vst.msk [vmem:[%s2482] sm:$0x7] %vm452, %v2408
      %2484 = vst.msk [vmem:[%s2482 + $0x3] sm:$0x7] %vm452, %v2431
      %2485 = vst.msk [vmem:[%s2482 + $0x6] sm:$0x7] %vm452, %v2454
      %2486 = vst.msk [vmem:[%s2482 + $0x9] sm:$0x7] %vm452, %v2477
      %v2487 = vmax.f32 %v2197, %v2296
      %v2488 = vmax.f32 %v2198, %v2303
      %v2489 = vmax.f32 %v2199, %v2310
      %v2490 = vmax.f32 %v2200, %v2317
      %v2491 = vmax.f32 %v2201, %v2324
      %v2492 = vmax.f32 %v2202, %v2331
      %v2493 = vmax.f32 %v2203, %v2338
      %v2494 = vmax.f32 %v2204, %v2345
      %v2495 = vmax.f32 %v2205, %v2352
      %v2496 = vmax.f32 %v2206, %v2359
      %v2497 = vmax.f32 %v2207, %v2366
      %v2498 = vmax.f32 %v2208, %v2373
      %v2499 = vld [vmem:[%s200 + $0x2] sm:$0x3f]
      %v2500 = vld [vmem:[%s200 + $0xa] sm:$0x3f]
      %v2501 = vld [vmem:[%s200 + $0x12] sm:$0x3f]
      %v2502 = vld [vmem:[%s200 + $0x1a] sm:$0x3f]
      %v2503 = vunpack.c.l.bf16 %v2499
      %v2504 = vunpack.c.h.bf16 %v2499
      %v2505 = vunpack.c.l.bf16 %v2500
      %v2506 = vunpack.c.h.bf16 %v2500
      %v2507 = vunpack.c.l.bf16 %v2501
      %v2508 = vunpack.c.h.bf16 %v2501
      %v2509 = vunpack.c.l.bf16 %v2502
      %v2510 = vunpack.c.h.bf16 %v2502
      %2519 = vrot.lane.b32.xlu0 %v2503, 118
      %v2520 = vpop.permute.xlu0 %2519
      %2521 = vrot.lane.b32.xlu0 %v2504, 118
      %v2522 = vpop.permute.xlu0 %2521
      %2523 = vrot.lane.b32.xlu0 %v2505, 118
      %v2524 = vpop.permute.xlu0 %2523
      %2525 = vrot.lane.b32.xlu0 %v2506, 118
      %v2526 = vpop.permute.xlu0 %2525
      %2527 = vrot.lane.b32.xlu0 %v2507, 118
      %v2528 = vpop.permute.xlu0 %2527
      %2529 = vrot.lane.b32.xlu0 %v2508, 118
      %v2530 = vpop.permute.xlu0 %2529
      %2531 = vrot.lane.b32.xlu0 %v2509, 118
      %v2532 = vpop.permute.xlu0 %2531
      %2533 = vrot.lane.b32.xlu0 %v2510, 118
      %v2534 = vpop.permute.xlu0 %2533
      %v2535 = vrot.slane %v2520, 4
      %v2536 = vrot.slane %v2522, 4
      %v2537 = vrot.slane %v2524, 4
      %v2538 = vrot.slane %v2526, 4
      %v2539 = vrot.slane %v2528, 4
      %v2540 = vrot.slane %v2530, 4
      %v2541 = vrot.slane %v2532, 4
      %v2542 = vrot.slane %v2534, 4
      %v2543 = vsel %vm255, %v2535, %v2536
      %vm2544 = vcmask 965632
      %v2545 = vsel %vm2544, %v2520, %v2543
      %v2546 = vsel %vm255, %v2537, %v2538
      %v2547 = vsel %vm2544, %v2524, %v2546
      %v2548 = vsel %vm255, %v2539, %v2540
      %v2549 = vsel %vm2544, %v2528, %v2548
      %v2550 = vsel %vm255, %v2541, %v2542
      %v2551 = vsel %vm2544, %v2532, %v2550
      %v2560 = vmul.f32 %v215, %v2545
      %v2561 = vmul.f32 %v216, %v2522
      %v2562 = vmul.f32 %v217, %v2547
      %v2563 = vmul.f32 %v218, %v2526
      %v2564 = vmul.f32 %v219, %v2549
      %v2565 = vmul.f32 %v220, %v2530
      %v2566 = vmul.f32 %v221, %v2551
      %v2567 = vmul.f32 %v222, %v2534
      %v2572 = vcombine.high %v2560, %v2560
      %v2573 = vcombine.high %v2562, %v2562
      %v2574 = vcombine.high %v2564, %v2564
      %v2575 = vcombine.high %v2566, %v2566
      %v2580 = vsel %vm255, %v2560, 0.0
      %v2581 = vrot.slane %v2580, 4
      %v2582 = vadd.f32 %v2580, %v2581
      %v2583 = vrot.slane %v2582, 2
      %v2584 = vadd.f32 %v2582, %v2583
      %v2585 = vrot.slane %v2584, 1
      %v2586 = vadd.f32 %v2584, %v2585
      %v2587 = vsel %vm255, %v2572, 0.0
      %v2588 = vrot.slane %v2587, 4
      %v2589 = vadd.f32 %v2587, %v2588
      %v2590 = vrot.slane %v2589, 2
      %v2591 = vadd.f32 %v2589, %v2590
      %v2592 = vrot.slane %v2591, 1
      %v2593 = vadd.f32 %v2591, %v2592
      %v2594 = vsel %vm270, %v2561, 0.0
      %v2595 = vrot.slane %v2594, 4
      %v2596 = vadd.f32 %v2594, %v2595
      %v2597 = vrot.slane %v2596, 2
      %v2598 = vadd.f32 %v2596, %v2597
      %v2599 = vrot.slane %v2598, 1
      %v2600 = vadd.f32 %v2598, %v2599
      %v2601 = vsel %vm255, %v2562, 0.0
      %v2602 = vrot.slane %v2601, 4
      %v2603 = vadd.f32 %v2601, %v2602
      %v2604 = vrot.slane %v2603, 2
      %v2605 = vadd.f32 %v2603, %v2604
      %v2606 = vrot.slane %v2605, 1
      %v2607 = vadd.f32 %v2605, %v2606
      %v2608 = vsel %vm255, %v2573, 0.0
      %v2609 = vrot.slane %v2608, 4
      %v2610 = vadd.f32 %v2608, %v2609
      %v2611 = vrot.slane %v2610, 2
      %v2612 = vadd.f32 %v2610, %v2611
      %v2613 = vrot.slane %v2612, 1
      %v2614 = vadd.f32 %v2612, %v2613
      %v2615 = vsel %vm270, %v2563, 0.0
      %v2616 = vrot.slane %v2615, 4
      %v2617 = vadd.f32 %v2615, %v2616
      %v2618 = vrot.slane %v2617, 2
      %v2619 = vadd.f32 %v2617, %v2618
      %v2620 = vrot.slane %v2619, 1
      %v2621 = vadd.f32 %v2619, %v2620
      %v2622 = vsel %vm255, %v2564, 0.0
      %v2623 = vrot.slane %v2622, 4
      %v2624 = vadd.f32 %v2622, %v2623
      %v2625 = vrot.slane %v2624, 2
      %v2626 = vadd.f32 %v2624, %v2625
      %v2627 = vrot.slane %v2626, 1
      %v2628 = vadd.f32 %v2626, %v2627
      %v2629 = vsel %vm255, %v2574, 0.0
      %v2630 = vrot.slane %v2629, 4
      %v2631 = vadd.f32 %v2629, %v2630
      %v2632 = vrot.slane %v2631, 2
      %v2633 = vadd.f32 %v2631, %v2632
      %v2634 = vrot.slane %v2633, 1
      %v2635 = vadd.f32 %v2633, %v2634
      %v2636 = vsel %vm270, %v2565, 0.0
      %v2637 = vrot.slane %v2636, 4
      %v2638 = vadd.f32 %v2636, %v2637
      %v2639 = vrot.slane %v2638, 2
      %v2640 = vadd.f32 %v2638, %v2639
      %v2641 = vrot.slane %v2640, 1
      %v2642 = vadd.f32 %v2640, %v2641
      %v2643 = vsel %vm255, %v2566, 0.0
      %v2644 = vrot.slane %v2643, 4
      %v2645 = vadd.f32 %v2643, %v2644
      %v2646 = vrot.slane %v2645, 2
      %v2647 = vadd.f32 %v2645, %v2646
      %v2648 = vrot.slane %v2647, 1
      %v2649 = vadd.f32 %v2647, %v2648
      %v2650 = vsel %vm255, %v2575, 0.0
      %v2651 = vrot.slane %v2650, 4
      %v2652 = vadd.f32 %v2650, %v2651
      %v2653 = vrot.slane %v2652, 2
      %v2654 = vadd.f32 %v2652, %v2653
      %v2655 = vrot.slane %v2654, 1
      %v2656 = vadd.f32 %v2654, %v2655
      %v2657 = vsel %vm270, %v2567, 0.0
      %v2658 = vrot.slane %v2657, 4
      %v2659 = vadd.f32 %v2657, %v2658
      %v2660 = vrot.slane %v2659, 2
      %v2661 = vadd.f32 %v2659, %v2660
      %v2662 = vrot.slane %v2661, 1
      %v2663 = vadd.f32 %v2661, %v2662
      %v2676 = vcombine.low %v2586, %v2593
      %v2678 = vunpack.c.l.s4 1966171168
      %v2679 = vunpack.c.0.s8 %v2678
      %v2680 = vlaneseq
      %v2681 = vshrl.u32 %v2680, 7
      %v2682 = vsub.s32 %v2679, %v2681
      %v2683 = vrot.slane %v2676, %v2682
      %v2685 = vunpack.c.l.s4 1966171168
      %v2686 = vunpack.c.0.s8 %v2685
      %v2687 = vlaneseq
      %v2688 = vshrl.u32 %v2687, 7
      %v2689 = vsub.s32 %v2686, %v2688
      %v2690 = vrot.slane %v2600, %v2689
      %v2691 = vcombine.low %v2683, %v2690
      %v2693 = vunpack.c.l.s4 1966171168
      %v2694 = vunpack.c.0.s8 %v2693
      %v2695 = vlaneseq
      %v2696 = vshrl.u32 %v2695, 7
      %v2697 = vsub.s32 %v2694, %v2696
      %v2698 = vrot.slane %v2691, %v2697
      %v2699 = vcombine.low %v2607, %v2614
      %v2701 = vunpack.c.l.s4 1966171168
      %v2702 = vunpack.c.0.s8 %v2701
      %v2703 = vlaneseq
      %v2704 = vshrl.u32 %v2703, 7
      %v2705 = vsub.s32 %v2702, %v2704
      %v2706 = vrot.slane %v2699, %v2705
      %v2708 = vunpack.c.l.s4 1966171168
      %v2709 = vunpack.c.0.s8 %v2708
      %v2710 = vlaneseq
      %v2711 = vshrl.u32 %v2710, 7
      %v2712 = vsub.s32 %v2709, %v2711
      %v2713 = vrot.slane %v2621, %v2712
      %v2714 = vcombine.low %v2706, %v2713
      %v2716 = vunpack.c.l.s4 1966171168
      %v2717 = vunpack.c.0.s8 %v2716
      %v2718 = vlaneseq
      %v2719 = vshrl.u32 %v2718, 7
      %v2720 = vsub.s32 %v2717, %v2719
      %v2721 = vrot.slane %v2714, %v2720
      %v2722 = vcombine.low %v2628, %v2635
      %v2724 = vunpack.c.l.s4 1966171168
      %v2725 = vunpack.c.0.s8 %v2724
      %v2726 = vlaneseq
      %v2727 = vshrl.u32 %v2726, 7
      %v2728 = vsub.s32 %v2725, %v2727
      %v2729 = vrot.slane %v2722, %v2728
      %v2731 = vunpack.c.l.s4 1966171168
      %v2732 = vunpack.c.0.s8 %v2731
      %v2733 = vlaneseq
      %v2734 = vshrl.u32 %v2733, 7
      %v2735 = vsub.s32 %v2732, %v2734
      %v2736 = vrot.slane %v2642, %v2735
      %v2737 = vcombine.low %v2729, %v2736
      %v2739 = vunpack.c.l.s4 1966171168
      %v2740 = vunpack.c.0.s8 %v2739
      %v2741 = vlaneseq
      %v2742 = vshrl.u32 %v2741, 7
      %v2743 = vsub.s32 %v2740, %v2742
      %v2744 = vrot.slane %v2737, %v2743
      %v2745 = vcombine.low %v2649, %v2656
      %v2747 = vunpack.c.l.s4 1966171168
      %v2748 = vunpack.c.0.s8 %v2747
      %v2749 = vlaneseq
      %v2750 = vshrl.u32 %v2749, 7
      %v2751 = vsub.s32 %v2748, %v2750
      %v2752 = vrot.slane %v2745, %v2751
      %v2754 = vunpack.c.l.s4 1966171168
      %v2755 = vunpack.c.0.s8 %v2754
      %v2756 = vlaneseq
      %v2757 = vshrl.u32 %v2756, 7
      %v2758 = vsub.s32 %v2755, %v2757
      %v2759 = vrot.slane %v2663, %v2758
      %v2760 = vcombine.low %v2752, %v2759
      %v2762 = vunpack.c.l.s4 1966171168
      %v2763 = vunpack.c.0.s8 %v2762
      %v2764 = vlaneseq
      %v2765 = vshrl.u32 %v2764, 7
      %v2766 = vsub.s32 %v2763, %v2765
      %v2767 = vrot.slane %v2760, %v2766
      %s2772 = scalar_lea.vmem [#allocation2], 96
      %2773 = vst.msk [vmem:[%s2772] sm:$0x7] %vm452, %v2698
      %2774 = vst.msk [vmem:[%s2772 + $0x3] sm:$0x7] %vm452, %v2721
      %2775 = vst.msk [vmem:[%s2772 + $0x6] sm:$0x7] %vm452, %v2744
      %2776 = vst.msk [vmem:[%s2772 + $0x9] sm:$0x7] %vm452, %v2767
      %v2777 = vmax.f32 %v2487, %v2586
      %v2778 = vmax.f32 %v2488, %v2593
      %v2779 = vmax.f32 %v2489, %v2600
      %v2780 = vmax.f32 %v2490, %v2607
      %v2781 = vmax.f32 %v2491, %v2614
      %v2782 = vmax.f32 %v2492, %v2621
      %v2783 = vmax.f32 %v2493, %v2628
      %v2784 = vmax.f32 %v2494, %v2635
      %v2785 = vmax.f32 %v2495, %v2642
      %v2786 = vmax.f32 %v2496, %v2649
      %v2787 = vmax.f32 %v2497, %v2656
      %v2788 = vmax.f32 %v2498, %v2663
      %v2789 = vld [vmem:[#allocation2] sm:$0x7]
      %v2790 = vld [vmem:[#allocation2 + $0x3] sm:$0x7]
      %v2791 = vld [vmem:[#allocation2 + $0x6] sm:$0x7]
      %v2792 = vld [vmem:[#allocation2 + $0x9] sm:$0x7]
      %v2805 = vcombine.low %v2777, %v2778
      %v2807 = vunpack.c.l.s4 1966171168
      %v2808 = vunpack.c.0.s8 %v2807
      %v2809 = vlaneseq
      %v2810 = vshrl.u32 %v2809, 7
      %v2811 = vsub.s32 %v2808, %v2810
      %v2812 = vrot.slane %v2805, %v2811
      %v2814 = vunpack.c.l.s4 1966171168
      %v2815 = vunpack.c.0.s8 %v2814
      %v2816 = vlaneseq
      %v2817 = vshrl.u32 %v2816, 7
      %v2818 = vsub.s32 %v2815, %v2817
      %v2819 = vrot.slane %v2779, %v2818
      %v2820 = vcombine.low %v2812, %v2819
      %v2822 = vunpack.c.l.s4 1966171168
      %v2823 = vunpack.c.0.s8 %v2822
      %v2824 = vlaneseq
      %v2825 = vshrl.u32 %v2824, 7
      %v2826 = vsub.s32 %v2823, %v2825
      %v2827 = vrot.slane %v2820, %v2826
      %v2828 = vcombine.low %v2780, %v2781
      %v2830 = vunpack.c.l.s4 1966171168
      %v2831 = vunpack.c.0.s8 %v2830
      %v2832 = vlaneseq
      %v2833 = vshrl.u32 %v2832, 7
      %v2834 = vsub.s32 %v2831, %v2833
      %v2835 = vrot.slane %v2828, %v2834
      %v2837 = vunpack.c.l.s4 1966171168
      %v2838 = vunpack.c.0.s8 %v2837
      %v2839 = vlaneseq
      %v2840 = vshrl.u32 %v2839, 7
      %v2841 = vsub.s32 %v2838, %v2840
      %v2842 = vrot.slane %v2782, %v2841
      %v2843 = vcombine.low %v2835, %v2842
      %v2845 = vunpack.c.l.s4 1966171168
      %v2846 = vunpack.c.0.s8 %v2845
      %v2847 = vlaneseq
      %v2848 = vshrl.u32 %v2847, 7
      %v2849 = vsub.s32 %v2846, %v2848
      %v2850 = vrot.slane %v2843, %v2849
      %v2851 = vcombine.low %v2783, %v2784
      %v2853 = vunpack.c.l.s4 1966171168
      %v2854 = vunpack.c.0.s8 %v2853
      %v2855 = vlaneseq
      %v2856 = vshrl.u32 %v2855, 7
      %v2857 = vsub.s32 %v2854, %v2856
      %v2858 = vrot.slane %v2851, %v2857
      %v2860 = vunpack.c.l.s4 1966171168
      %v2861 = vunpack.c.0.s8 %v2860
      %v2862 = vlaneseq
      %v2863 = vshrl.u32 %v2862, 7
      %v2864 = vsub.s32 %v2861, %v2863
      %v2865 = vrot.slane %v2785, %v2864
      %v2866 = vcombine.low %v2858, %v2865
      %v2868 = vunpack.c.l.s4 1966171168
      %v2869 = vunpack.c.0.s8 %v2868
      %v2870 = vlaneseq
      %v2871 = vshrl.u32 %v2870, 7
      %v2872 = vsub.s32 %v2869, %v2871
      %v2873 = vrot.slane %v2866, %v2872
      %v2874 = vcombine.low %v2786, %v2787
      %v2876 = vunpack.c.l.s4 1966171168
      %v2877 = vunpack.c.0.s8 %v2876
      %v2878 = vlaneseq
      %v2879 = vshrl.u32 %v2878, 7
      %v2880 = vsub.s32 %v2877, %v2879
      %v2881 = vrot.slane %v2874, %v2880
      %v2883 = vunpack.c.l.s4 1966171168
      %v2884 = vunpack.c.0.s8 %v2883
      %v2885 = vlaneseq
      %v2886 = vshrl.u32 %v2885, 7
      %v2887 = vsub.s32 %v2884, %v2886
      %v2888 = vrot.slane %v2788, %v2887
      %v2889 = vcombine.low %v2881, %v2888
      %v2891 = vunpack.c.l.s4 1966171168
      %v2892 = vunpack.c.0.s8 %v2891
      %v2893 = vlaneseq
      %v2894 = vshrl.u32 %v2893, 7
      %v2895 = vsub.s32 %v2892, %v2894
      %v2896 = vrot.slane %v2889, %v2895
      %v2901 = vsub.f32 %v2789, %v2827
      %v2902 = vsub.f32 %v2790, %v2850
      %v2903 = vsub.f32 %v2791, %v2873
      %v2904 = vsub.f32 %v2792, %v2896
      %v2905 = vmul.f32 %v2901, 1.442695
      %v2906 = vpow.pop %v2905
      %v2907 = vmul.f32 %v2902, 1.442695
      %v2908 = vpow.pop %v2907
      %v2909 = vmul.f32 %v2903, 1.442695
      %v2910 = vpow.pop %v2909
      %v2911 = vmul.f32 %v2904, 1.442695
      %v2912 = vpow.pop %v2911
      %v2913 = vadd.f32 %v2906, 0.0
      %v2914 = vadd.f32 %v2908, 0.0
      %v2915 = vadd.f32 %v2910, 0.0
      %v2916 = vadd.f32 %v2912, 0.0
      %v2917 = vld [vmem:[%s205] sm:$0x3f]
      %v2918 = vld [vmem:[%s205 + $0x8] sm:$0x3f]
      %v2919 = vld [vmem:[%s205 + $0x10] sm:$0x3f]
      %v2920 = vld [vmem:[%s205 + $0x18] sm:$0x3f]
      %v2921 = vunpack.c.l.bf16 %v2917
      %v2922 = vunpack.c.h.bf16 %v2917
      %v2923 = vunpack.c.l.bf16 %v2918
      %v2924 = vunpack.c.h.bf16 %v2918
      %v2925 = vunpack.c.l.bf16 %v2919
      %v2926 = vunpack.c.h.bf16 %v2919
      %v2927 = vunpack.c.l.bf16 %v2920
      %v2928 = vunpack.c.h.bf16 %v2920
      %v2933 = vlaneseq
      %v2934 = vshrl.u32 %v2933, 7
      %v2935 = vsub.s32 0, %v2934
      %v2936 = vrot.slane %v2906, %v2935
      %v2937 = vlaneseq
      %v2938 = vshrl.u32 %v2937, 7
      %v2939 = vsub.s32 1, %v2938
      %v2940 = vrot.slane %v2906, %v2939
      %v2941 = vlaneseq
      %v2942 = vshrl.u32 %v2941, 7
      %v2943 = vsub.s32 2, %v2942
      %v2944 = vrot.slane %v2906, %v2943
      %v2945 = vlaneseq
      %v2946 = vshrl.u32 %v2945, 7
      %v2947 = vsub.s32 0, %v2946
      %v2948 = vrot.slane %v2908, %v2947
      %v2949 = vlaneseq
      %v2950 = vshrl.u32 %v2949, 7
      %v2951 = vsub.s32 1, %v2950
      %v2952 = vrot.slane %v2908, %v2951
      %v2953 = vlaneseq
      %v2954 = vshrl.u32 %v2953, 7
      %v2955 = vsub.s32 2, %v2954
      %v2956 = vrot.slane %v2908, %v2955
      %v2957 = vlaneseq
      %v2958 = vshrl.u32 %v2957, 7
      %v2959 = vsub.s32 0, %v2958
      %v2960 = vrot.slane %v2910, %v2959
      %v2961 = vlaneseq
      %v2962 = vshrl.u32 %v2961, 7
      %v2963 = vsub.s32 1, %v2962
      %v2964 = vrot.slane %v2910, %v2963
      %v2965 = vlaneseq
      %v2966 = vshrl.u32 %v2965, 7
      %v2967 = vsub.s32 2, %v2966
      %v2968 = vrot.slane %v2910, %v2967
      %v2969 = vlaneseq
      %v2970 = vshrl.u32 %v2969, 7
      %v2971 = vsub.s32 0, %v2970
      %v2972 = vrot.slane %v2912, %v2971
      %v2973 = vlaneseq
      %v2974 = vshrl.u32 %v2973, 7
      %v2975 = vsub.s32 1, %v2974
      %v2976 = vrot.slane %v2912, %v2975
      %v2977 = vlaneseq
      %v2978 = vshrl.u32 %v2977, 7
      %v2979 = vsub.s32 2, %v2978
      %v2980 = vrot.slane %v2912, %v2979
      %v2997 = vcombine.high %v2921, %v2921
      %v2998 = vcombine.high %v2923, %v2923
      %v2999 = vcombine.high %v2925, %v2925
      %v3000 = vcombine.high %v2927, %v2927
      %v3005 = vmul.f32 %v2936, %v2921
      %v3006 = vmul.f32 %v2940, %v2997
      %v3007 = vmul.f32 %v2944, %v2922
      %v3008 = vmul.f32 %v2948, %v2923
      %v3009 = vmul.f32 %v2952, %v2998
      %v3010 = vmul.f32 %v2956, %v2924
      %v3011 = vmul.f32 %v2960, %v2925
      %v3012 = vmul.f32 %v2964, %v2999
      %v3013 = vmul.f32 %v2968, %v2926
      %v3014 = vmul.f32 %v2972, %v2927
      %v3015 = vmul.f32 %v2976, %v3000
      %v3016 = vmul.f32 %v2980, %v2928
      %v3017 = vadd.f32 %v3005, 0.0
      %v3018 = vadd.f32 %v3006, 0.0
      %v3019 = vadd.f32 %v3007, 0.0
      %v3020 = vadd.f32 %v3008, 0.0
      %v3021 = vadd.f32 %v3009, 0.0
      %v3022 = vadd.f32 %v3010, 0.0
      %v3023 = vadd.f32 %v3011, 0.0
      %v3024 = vadd.f32 %v3012, 0.0
      %v3025 = vadd.f32 %v3013, 0.0
      %v3026 = vadd.f32 %v3014, 0.0
      %v3027 = vadd.f32 %v3015, 0.0
      %v3028 = vadd.f32 %v3016, 0.0
      %v3029 = vld [vmem:[%s730] sm:$0x7]
      %v3030 = vld [vmem:[%s730 + $0x3] sm:$0x7]
      %v3031 = vld [vmem:[%s730 + $0x6] sm:$0x7]
      %v3032 = vld [vmem:[%s730 + $0x9] sm:$0x7]
      %v3033 = vsub.f32 %v3029, %v2827
      %v3034 = vsub.f32 %v3030, %v2850
      %v3035 = vsub.f32 %v3031, %v2873
      %v3036 = vsub.f32 %v3032, %v2896
      %v3037 = vmul.f32 %v3033, 1.442695
      %v3038 = vpow.pop %v3037
      %v3039 = vmul.f32 %v3034, 1.442695
      %v3040 = vpow.pop %v3039
      %v3041 = vmul.f32 %v3035, 1.442695
      %v3042 = vpow.pop %v3041
      %v3043 = vmul.f32 %v3036, 1.442695
      %v3044 = vpow.pop %v3043
      %v3045 = vadd.f32 %v2913, %v3038
      %v3046 = vadd.f32 %v2914, %v3040
      %v3047 = vadd.f32 %v2915, %v3042
      %v3048 = vadd.f32 %v2916, %v3044
      %v3053 = vlaneseq
      %v3054 = vshrl.u32 %v3053, 7
      %v3055 = vsub.s32 0, %v3054
      %v3056 = vrot.slane %v3038, %v3055
      %v3057 = vlaneseq
      %v3058 = vshrl.u32 %v3057, 7
      %v3059 = vsub.s32 1, %v3058
      %v3060 = vrot.slane %v3038, %v3059
      %v3061 = vlaneseq
      %v3062 = vshrl.u32 %v3061, 7
      %v3063 = vsub.s32 2, %v3062
      %v3064 = vrot.slane %v3038, %v3063
      %v3065 = vlaneseq
      %v3066 = vshrl.u32 %v3065, 7
      %v3067 = vsub.s32 0, %v3066
      %v3068 = vrot.slane %v3040, %v3067
      %v3069 = vlaneseq
      %v3070 = vshrl.u32 %v3069, 7
      %v3071 = vsub.s32 1, %v3070
      %v3072 = vrot.slane %v3040, %v3071
      %v3073 = vlaneseq
      %v3074 = vshrl.u32 %v3073, 7
      %v3075 = vsub.s32 2, %v3074
      %v3076 = vrot.slane %v3040, %v3075
      %v3077 = vlaneseq
      %v3078 = vshrl.u32 %v3077, 7
      %v3079 = vsub.s32 0, %v3078
      %v3080 = vrot.slane %v3042, %v3079
      %v3081 = vlaneseq
      %v3082 = vshrl.u32 %v3081, 7
      %v3083 = vsub.s32 1, %v3082
      %v3084 = vrot.slane %v3042, %v3083
      %v3085 = vlaneseq
      %v3086 = vshrl.u32 %v3085, 7
      %v3087 = vsub.s32 2, %v3086
      %v3088 = vrot.slane %v3042, %v3087
      %v3089 = vlaneseq
      %v3090 = vshrl.u32 %v3089, 7
      %v3091 = vsub.s32 0, %v3090
      %v3092 = vrot.slane %v3044, %v3091
      %v3093 = vlaneseq
      %v3094 = vshrl.u32 %v3093, 7
      %v3095 = vsub.s32 1, %v3094
      %v3096 = vrot.slane %v3044, %v3095
      %v3097 = vlaneseq
      %v3098 = vshrl.u32 %v3097, 7
      %v3099 = vsub.s32 2, %v3098
      %v3100 = vrot.slane %v3044, %v3099
      %3117 = vrot.lane.b32.xlu0 %v2921, 125
      %v3118 = vpop.permute.xlu0 %3117
      %3119 = vrot.lane.b32.xlu0 %v2997, 125
      %v3120 = vpop.permute.xlu0 %3119
      %3121 = vrot.lane.b32.xlu0 %v2922, 125
      %v3122 = vpop.permute.xlu0 %3121
      %3123 = vrot.lane.b32.xlu0 %v2923, 125
      %v3124 = vpop.permute.xlu0 %3123
      %3125 = vrot.lane.b32.xlu0 %v2998, 125
      %v3126 = vpop.permute.xlu0 %3125
      %3127 = vrot.lane.b32.xlu0 %v2924, 125
      %v3128 = vpop.permute.xlu0 %3127
      %3129 = vrot.lane.b32.xlu0 %v2925, 125
      %v3130 = vpop.permute.xlu0 %3129
      %3131 = vrot.lane.b32.xlu0 %v2999, 125
      %v3132 = vpop.permute.xlu0 %3131
      %3133 = vrot.lane.b32.xlu0 %v2926, 125
      %v3134 = vpop.permute.xlu0 %3133
      %3135 = vrot.lane.b32.xlu0 %v2927, 125
      %v3136 = vpop.permute.xlu0 %3135
      %3137 = vrot.lane.b32.xlu0 %v3000, 125
      %v3138 = vpop.permute.xlu0 %3137
      %3139 = vrot.lane.b32.xlu0 %v2928, 125
      %v3140 = vpop.permute.xlu0 %3139
      %v3141 = vsel %vm502, %v3118, %v3120
      %v3142 = vsel %vm502, %v3120, %v3122
      %v3143 = vsel %vm502, %v3124, %v3126
      %v3144 = vsel %vm502, %v3126, %v3128
      %v3145 = vsel %vm502, %v3130, %v3132
      %v3146 = vsel %vm502, %v3132, %v3134
      %v3147 = vsel %vm502, %v3136, %v3138
      %v3148 = vsel %vm502, %v3138, %v3140
      %v3161 = vmul.f32 %v3056, %v3141
      %v3162 = vmul.f32 %v3060, %v3142
      %v3163 = vmul.f32 %v3064, %v3122
      %v3164 = vmul.f32 %v3068, %v3143
      %v3165 = vmul.f32 %v3072, %v3144
      %v3166 = vmul.f32 %v3076, %v3128
      %v3167 = vmul.f32 %v3080, %v3145
      %v3168 = vmul.f32 %v3084, %v3146
      %v3169 = vmul.f32 %v3088, %v3134
      %v3170 = vmul.f32 %v3092, %v3147
      %v3171 = vmul.f32 %v3096, %v3148
      %v3172 = vmul.f32 %v3100, %v3140
      %v3173 = vadd.f32 %v3017, %v3161
      %v3174 = vadd.f32 %v3018, %v3162
      %v3175 = vadd.f32 %v3019, %v3163
      %v3176 = vadd.f32 %v3020, %v3164
      %v3177 = vadd.f32 %v3021, %v3165
      %v3178 = vadd.f32 %v3022, %v3166
      %v3179 = vadd.f32 %v3023, %v3167
      %v3180 = vadd.f32 %v3024, %v3168
      %v3181 = vadd.f32 %v3025, %v3169
      %v3182 = vadd.f32 %v3026, %v3170
      %v3183 = vadd.f32 %v3027, %v3171
      %v3184 = vadd.f32 %v3028, %v3172
      %v3185 = vld [vmem:[%s1020] sm:$0x7]
      %v3186 = vld [vmem:[%s1020 + $0x3] sm:$0x7]
      %v3187 = vld [vmem:[%s1020 + $0x6] sm:$0x7]
      %v3188 = vld [vmem:[%s1020 + $0x9] sm:$0x7]
      %v3189 = vsub.f32 %v3185, %v2827
      %v3190 = vsub.f32 %v3186, %v2850
      %v3191 = vsub.f32 %v3187, %v2873
      %v3192 = vsub.f32 %v3188, %v2896
      %v3193 = vmul.f32 %v3189, 1.442695
      %v3194 = vpow.pop %v3193
      %v3195 = vmul.f32 %v3190, 1.442695
      %v3196 = vpow.pop %v3195
      %v3197 = vmul.f32 %v3191, 1.442695
      %v3198 = vpow.pop %v3197
      %v3199 = vmul.f32 %v3192, 1.442695
      %v3200 = vpow.pop %v3199
      %v3201 = vadd.f32 %v3045, %v3194
      %v3202 = vadd.f32 %v3046, %v3196
      %v3203 = vadd.f32 %v3047, %v3198
      %v3204 = vadd.f32 %v3048, %v3200
      %v3209 = vlaneseq
      %v3210 = vshrl.u32 %v3209, 7
      %v3211 = vsub.s32 0, %v3210
      %v3212 = vrot.slane %v3194, %v3211
      %v3213 = vlaneseq
      %v3214 = vshrl.u32 %v3213, 7
      %v3215 = vsub.s32 1, %v3214
      %v3216 = vrot.slane %v3194, %v3215
      %v3217 = vlaneseq
      %v3218 = vshrl.u32 %v3217, 7
      %v3219 = vsub.s32 2, %v3218
      %v3220 = vrot.slane %v3194, %v3219
      %v3221 = vlaneseq
      %v3222 = vshrl.u32 %v3221, 7
      %v3223 = vsub.s32 0, %v3222
      %v3224 = vrot.slane %v3196, %v3223
      %v3225 = vlaneseq
      %v3226 = vshrl.u32 %v3225, 7
      %v3227 = vsub.s32 1, %v3226
      %v3228 = vrot.slane %v3196, %v3227
      %v3229 = vlaneseq
      %v3230 = vshrl.u32 %v3229, 7
      %v3231 = vsub.s32 2, %v3230
      %v3232 = vrot.slane %v3196, %v3231
      %v3233 = vlaneseq
      %v3234 = vshrl.u32 %v3233, 7
      %v3235 = vsub.s32 0, %v3234
      %v3236 = vrot.slane %v3198, %v3235
      %v3237 = vlaneseq
      %v3238 = vshrl.u32 %v3237, 7
      %v3239 = vsub.s32 1, %v3238
      %v3240 = vrot.slane %v3198, %v3239
      %v3241 = vlaneseq
      %v3242 = vshrl.u32 %v3241, 7
      %v3243 = vsub.s32 2, %v3242
      %v3244 = vrot.slane %v3198, %v3243
      %v3245 = vlaneseq
      %v3246 = vshrl.u32 %v3245, 7
      %v3247 = vsub.s32 0, %v3246
      %v3248 = vrot.slane %v3200, %v3247
      %v3249 = vlaneseq
      %v3250 = vshrl.u32 %v3249, 7
      %v3251 = vsub.s32 1, %v3250
      %v3252 = vrot.slane %v3200, %v3251
      %v3253 = vlaneseq
      %v3254 = vshrl.u32 %v3253, 7
      %v3255 = vsub.s32 2, %v3254
      %v3256 = vrot.slane %v3200, %v3255
      %3269 = vrot.lane.b32.xlu0 %v2921, 122
      %v3270 = vpop.permute.xlu0 %3269
      %3271 = vrot.lane.b32.xlu0 %v2997, 122
      %v3272 = vpop.permute.xlu0 %3271
      %3273 = vrot.lane.b32.xlu0 %v2922, 122
      %v3274 = vpop.permute.xlu0 %3273
      %3275 = vrot.lane.b32.xlu0 %v2923, 122
      %v3276 = vpop.permute.xlu0 %3275
      %3277 = vrot.lane.b32.xlu0 %v2998, 122
      %v3278 = vpop.permute.xlu0 %3277
      %3279 = vrot.lane.b32.xlu0 %v2924, 122
      %v3280 = vpop.permute.xlu0 %3279
      %3281 = vrot.lane.b32.xlu0 %v2925, 122
      %v3282 = vpop.permute.xlu0 %3281
      %3283 = vrot.lane.b32.xlu0 %v2999, 122
      %v3284 = vpop.permute.xlu0 %3283
      %3285 = vrot.lane.b32.xlu0 %v2926, 122
      %v3286 = vpop.permute.xlu0 %3285
      %3287 = vrot.lane.b32.xlu0 %v2927, 122
      %v3288 = vpop.permute.xlu0 %3287
      %3289 = vrot.lane.b32.xlu0 %v3000, 122
      %v3290 = vpop.permute.xlu0 %3289
      %3291 = vrot.lane.b32.xlu0 %v2928, 122
      %v3292 = vpop.permute.xlu0 %3291
      %v3293 = vsel %vm792, %v3270, %v3272
      %v3294 = vsel %vm792, %v3272, %v3274
      %v3295 = vsel %vm792, %v3276, %v3278
      %v3296 = vsel %vm792, %v3278, %v3280
      %v3297 = vsel %vm792, %v3282, %v3284
      %v3298 = vsel %vm792, %v3284, %v3286
      %v3299 = vsel %vm792, %v3288, %v3290
      %v3300 = vsel %vm792, %v3290, %v3292
      %v3313 = vmul.f32 %v3212, %v3293
      %v3314 = vmul.f32 %v3216, %v3294
      %v3315 = vmul.f32 %v3220, %v3274
      %v3316 = vmul.f32 %v3224, %v3295
      %v3317 = vmul.f32 %v3228, %v3296
      %v3318 = vmul.f32 %v3232, %v3280
      %v3319 = vmul.f32 %v3236, %v3297
      %v3320 = vmul.f32 %v3240, %v3298
      %v3321 = vmul.f32 %v3244, %v3286
      %v3322 = vmul.f32 %v3248, %v3299
      %v3323 = vmul.f32 %v3252, %v3300
      %v3324 = vmul.f32 %v3256, %v3292
      %v3325 = vadd.f32 %v3173, %v3313
      %v3326 = vadd.f32 %v3174, %v3314
      %v3327 = vadd.f32 %v3175, %v3315
      %v3328 = vadd.f32 %v3176, %v3316
      %v3329 = vadd.f32 %v3177, %v3317
      %v3330 = vadd.f32 %v3178, %v3318
      %v3331 = vadd.f32 %v3179, %v3319
      %v3332 = vadd.f32 %v3180, %v3320
      %v3333 = vadd.f32 %v3181, %v3321
      %v3334 = vadd.f32 %v3182, %v3322
      %v3335 = vadd.f32 %v3183, %v3323
      %v3336 = vadd.f32 %v3184, %v3324
      %v3337 = vld [vmem:[%s1314] sm:$0x7]
      %v3338 = vld [vmem:[%s1314 + $0x3] sm:$0x7]
      %v3339 = vld [vmem:[%s1314 + $0x6] sm:$0x7]
      %v3340 = vld [vmem:[%s1314 + $0x9] sm:$0x7]
      %v3341 = vsub.f32 %v3337, %v2827
      %v3342 = vsub.f32 %v3338, %v2850
      %v3343 = vsub.f32 %v3339, %v2873
      %v3344 = vsub.f32 %v3340, %v2896
      %v3345 = vmul.f32 %v3341, 1.442695
      %v3346 = vpow.pop %v3345
      %v3347 = vmul.f32 %v3342, 1.442695
      %v3348 = vpow.pop %v3347
      %v3349 = vmul.f32 %v3343, 1.442695
      %v3350 = vpow.pop %v3349
      %v3351 = vmul.f32 %v3344, 1.442695
      %v3352 = vpow.pop %v3351
      %v3353 = vadd.f32 %v3201, %v3346
      %v3354 = vadd.f32 %v3202, %v3348
      %v3355 = vadd.f32 %v3203, %v3350
      %v3356 = vadd.f32 %v3204, %v3352
      %v3357 = vld [vmem:[%s205] sm:$0xff]
      %v3358 = vld [vmem:[%s205 + $0x8] sm:$0xff]
      %v3359 = vld [vmem:[%s205 + $0x10] sm:$0xff]
      %v3360 = vld [vmem:[%s205 + $0x18] sm:$0xff]
      %v3361 = vunpack.c.l.bf16 %v3357
      %v3362 = vunpack.c.h.bf16 %v3357
      %v3363 = vunpack.c.l.bf16 %v3358
      %v3364 = vunpack.c.h.bf16 %v3358
      %v3365 = vunpack.c.l.bf16 %v3359
      %v3366 = vunpack.c.h.bf16 %v3359
      %v3367 = vunpack.c.l.bf16 %v3360
      %v3368 = vunpack.c.h.bf16 %v3360
      %v3373 = vlaneseq
      %v3374 = vshrl.u32 %v3373, 7
      %v3375 = vsub.s32 0, %v3374
      %v3376 = vrot.slane %v3346, %v3375
      %v3377 = vlaneseq
      %v3378 = vshrl.u32 %v3377, 7
      %v3379 = vsub.s32 1, %v3378
      %v3380 = vrot.slane %v3346, %v3379
      %v3381 = vlaneseq
      %v3382 = vshrl.u32 %v3381, 7
      %v3383 = vsub.s32 2, %v3382
      %v3384 = vrot.slane %v3346, %v3383
      %v3385 = vlaneseq
      %v3386 = vshrl.u32 %v3385, 7
      %v3387 = vsub.s32 0, %v3386
      %v3388 = vrot.slane %v3348, %v3387
      %v3389 = vlaneseq
      %v3390 = vshrl.u32 %v3389, 7
      %v3391 = vsub.s32 1, %v3390
      %v3392 = vrot.slane %v3348, %v3391
      %v3393 = vlaneseq
      %v3394 = vshrl.u32 %v3393, 7
      %v3395 = vsub.s32 2, %v3394
      %v3396 = vrot.slane %v3348, %v3395
      %v3397 = vlaneseq
      %v3398 = vshrl.u32 %v3397, 7
      %v3399 = vsub.s32 0, %v3398
      %v3400 = vrot.slane %v3350, %v3399
      %v3401 = vlaneseq
      %v3402 = vshrl.u32 %v3401, 7
      %v3403 = vsub.s32 1, %v3402
      %v3404 = vrot.slane %v3350, %v3403
      %v3405 = vlaneseq
      %v3406 = vshrl.u32 %v3405, 7
      %v3407 = vsub.s32 2, %v3406
      %v3408 = vrot.slane %v3350, %v3407
      %v3409 = vlaneseq
      %v3410 = vshrl.u32 %v3409, 7
      %v3411 = vsub.s32 0, %v3410
      %v3412 = vrot.slane %v3352, %v3411
      %v3413 = vlaneseq
      %v3414 = vshrl.u32 %v3413, 7
      %v3415 = vsub.s32 1, %v3414
      %v3416 = vrot.slane %v3352, %v3415
      %v3417 = vlaneseq
      %v3418 = vshrl.u32 %v3417, 7
      %v3419 = vsub.s32 2, %v3418
      %v3420 = vrot.slane %v3352, %v3419
      %v3441 = vcombine.high %v3361, %v3361
      %v3442 = vcombine.high %v3362, %v3362
      %v3443 = vcombine.high %v3363, %v3363
      %v3444 = vcombine.high %v3364, %v3364
      %v3445 = vcombine.high %v3365, %v3365
      %v3446 = vcombine.high %v3366, %v3366
      %v3447 = vcombine.high %v3367, %v3367
      %v3448 = vcombine.high %v3368, %v3368
      %3449 = vrot.lane.b32.xlu0 %v3361, 62
      %v3450 = vpop.permute.xlu0 %3449
      %3451 = vrot.lane.b32.xlu0 %v3441, 62
      %v3452 = vpop.permute.xlu0 %3451
      %3453 = vrot.lane.b32.xlu0 %v3362, 62
      %v3454 = vpop.permute.xlu0 %3453
      %3455 = vrot.lane.b32.xlu0 %v3442, 62
      %v3456 = vpop.permute.xlu0 %3455
      %3457 = vrot.lane.b32.xlu0 %v3363, 62
      %v3458 = vpop.permute.xlu0 %3457
      %3459 = vrot.lane.b32.xlu0 %v3443, 62
      %v3460 = vpop.permute.xlu0 %3459
      %3461 = vrot.lane.b32.xlu0 %v3364, 62
      %v3462 = vpop.permute.xlu0 %3461
      %3463 = vrot.lane.b32.xlu0 %v3444, 62
      %v3464 = vpop.permute.xlu0 %3463
      %3465 = vrot.lane.b32.xlu0 %v3365, 62
      %v3466 = vpop.permute.xlu0 %3465
      %3467 = vrot.lane.b32.xlu0 %v3445, 62
      %v3468 = vpop.permute.xlu0 %3467
      %3469 = vrot.lane.b32.xlu0 %v3366, 62
      %v3470 = vpop.permute.xlu0 %3469
      %3471 = vrot.lane.b32.xlu0 %v3446, 62
      %v3472 = vpop.permute.xlu0 %3471
      %3473 = vrot.lane.b32.xlu0 %v3367, 62
      %v3474 = vpop.permute.xlu0 %3473
      %3475 = vrot.lane.b32.xlu0 %v3447, 62
      %v3476 = vpop.permute.xlu0 %3475
      %3477 = vrot.lane.b32.xlu0 %v3368, 62
      %v3478 = vpop.permute.xlu0 %3477
      %3479 = vrot.lane.b32.xlu0 %v3448, 62
      %v3480 = vpop.permute.xlu0 %3479
      %v3481 = vsel %vm1082, %v3450, %v3452
      %v3482 = vsel %vm1082, %v3452, %v3454
      %v3483 = vsel %vm1082, %v3454, %v3456
      %v3484 = vsel %vm1082, %v3458, %v3460
      %v3485 = vsel %vm1082, %v3460, %v3462
      %v3486 = vsel %vm1082, %v3462, %v3464
      %v3487 = vsel %vm1082, %v3466, %v3468
      %v3488 = vsel %vm1082, %v3468, %v3470
      %v3489 = vsel %vm1082, %v3470, %v3472
      %v3490 = vsel %vm1082, %v3474, %v3476
      %v3491 = vsel %vm1082, %v3476, %v3478
      %v3492 = vsel %vm1082, %v3478, %v3480
      %v3505 = vmul.f32 %v3376, %v3481
      %v3506 = vmul.f32 %v3380, %v3482
      %v3507 = vmul.f32 %v3384, %v3483
      %v3508 = vmul.f32 %v3388, %v3484
      %v3509 = vmul.f32 %v3392, %v3485
      %v3510 = vmul.f32 %v3396, %v3486
      %v3511 = vmul.f32 %v3400, %v3487
      %v3512 = vmul.f32 %v3404, %v3488
      %v3513 = vmul.f32 %v3408, %v3489
      %v3514 = vmul.f32 %v3412, %v3490
      %v3515 = vmul.f32 %v3416, %v3491
      %v3516 = vmul.f32 %v3420, %v3492
      %v3517 = vadd.f32 %v3325, %v3505
      %v3518 = vadd.f32 %v3326, %v3506
      %v3519 = vadd.f32 %v3327, %v3507
      %v3520 = vadd.f32 %v3328, %v3508
      %v3521 = vadd.f32 %v3329, %v3509
      %v3522 = vadd.f32 %v3330, %v3510
      %v3523 = vadd.f32 %v3331, %v3511
      %v3524 = vadd.f32 %v3332, %v3512
      %v3525 = vadd.f32 %v3333, %v3513
      %v3526 = vadd.f32 %v3334, %v3514
      %v3527 = vadd.f32 %v3335, %v3515
      %v3528 = vadd.f32 %v3336, %v3516
      %v3529 = vld [vmem:[%s1608] sm:$0x7]
      %v3530 = vld [vmem:[%s1608 + $0x3] sm:$0x7]
      %v3531 = vld [vmem:[%s1608 + $0x6] sm:$0x7]
      %v3532 = vld [vmem:[%s1608 + $0x9] sm:$0x7]
      %v3533 = vsub.f32 %v3529, %v2827
      %v3534 = vsub.f32 %v3530, %v2850
      %v3535 = vsub.f32 %v3531, %v2873
      %v3536 = vsub.f32 %v3532, %v2896
      %v3537 = vmul.f32 %v3533, 1.442695
      %v3538 = vpow.pop %v3537
      %v3539 = vmul.f32 %v3534, 1.442695
      %v3540 = vpow.pop %v3539
      %v3541 = vmul.f32 %v3535, 1.442695
      %v3542 = vpow.pop %v3541
      %v3543 = vmul.f32 %v3536, 1.442695
      %v3544 = vpow.pop %v3543
      %v3545 = vadd.f32 %v3353, %v3538
      %v3546 = vadd.f32 %v3354, %v3540
      %v3547 = vadd.f32 %v3355, %v3542
      %v3548 = vadd.f32 %v3356, %v3544
      %v3553 = vlaneseq
      %v3554 = vshrl.u32 %v3553, 7
      %v3555 = vsub.s32 0, %v3554
      %v3556 = vrot.slane %v3538, %v3555
      %v3557 = vlaneseq
      %v3558 = vshrl.u32 %v3557, 7
      %v3559 = vsub.s32 1, %v3558
      %v3560 = vrot.slane %v3538, %v3559
      %v3561 = vlaneseq
      %v3562 = vshrl.u32 %v3561, 7
      %v3563 = vsub.s32 2, %v3562
      %v3564 = vrot.slane %v3538, %v3563
      %v3565 = vlaneseq
      %v3566 = vshrl.u32 %v3565, 7
      %v3567 = vsub.s32 0, %v3566
      %v3568 = vrot.slane %v3540, %v3567
      %v3569 = vlaneseq
      %v3570 = vshrl.u32 %v3569, 7
      %v3571 = vsub.s32 1, %v3570
      %v3572 = vrot.slane %v3540, %v3571
      %v3573 = vlaneseq
      %v3574 = vshrl.u32 %v3573, 7
      %v3575 = vsub.s32 2, %v3574
      %v3576 = vrot.slane %v3540, %v3575
      %v3577 = vlaneseq
      %v3578 = vshrl.u32 %v3577, 7
      %v3579 = vsub.s32 0, %v3578
      %v3580 = vrot.slane %v3542, %v3579
      %v3581 = vlaneseq
      %v3582 = vshrl.u32 %v3581, 7
      %v3583 = vsub.s32 1, %v3582
      %v3584 = vrot.slane %v3542, %v3583
      %v3585 = vlaneseq
      %v3586 = vshrl.u32 %v3585, 7
      %v3587 = vsub.s32 2, %v3586
      %v3588 = vrot.slane %v3542, %v3587
      %v3589 = vlaneseq
      %v3590 = vshrl.u32 %v3589, 7
      %v3591 = vsub.s32 0, %v3590
      %v3592 = vrot.slane %v3544, %v3591
      %v3593 = vlaneseq
      %v3594 = vshrl.u32 %v3593, 7
      %v3595 = vsub.s32 1, %v3594
      %v3596 = vrot.slane %v3544, %v3595
      %v3597 = vlaneseq
      %v3598 = vshrl.u32 %v3597, 7
      %v3599 = vsub.s32 2, %v3598
      %v3600 = vrot.slane %v3544, %v3599
      %3613 = vrot.lane.b32.xlu0 %v3361, 59
      %v3614 = vpop.permute.xlu0 %3613
      %3615 = vrot.lane.b32.xlu0 %v3441, 59
      %v3616 = vpop.permute.xlu0 %3615
      %3617 = vrot.lane.b32.xlu0 %v3362, 59
      %v3618 = vpop.permute.xlu0 %3617
      %3619 = vrot.lane.b32.xlu0 %v3442, 59
      %v3620 = vpop.permute.xlu0 %3619
      %3621 = vrot.lane.b32.xlu0 %v3363, 59
      %v3622 = vpop.permute.xlu0 %3621
      %3623 = vrot.lane.b32.xlu0 %v3443, 59
      %v3624 = vpop.permute.xlu0 %3623
      %3625 = vrot.lane.b32.xlu0 %v3364, 59
      %v3626 = vpop.permute.xlu0 %3625
      %3627 = vrot.lane.b32.xlu0 %v3444, 59
      %v3628 = vpop.permute.xlu0 %3627
      %3629 = vrot.lane.b32.xlu0 %v3365, 59
      %v3630 = vpop.permute.xlu0 %3629
      %3631 = vrot.lane.b32.xlu0 %v3445, 59
      %v3632 = vpop.permute.xlu0 %3631
      %3633 = vrot.lane.b32.xlu0 %v3366, 59
      %v3634 = vpop.permute.xlu0 %3633
      %3635 = vrot.lane.b32.xlu0 %v3446, 59
      %v3636 = vpop.permute.xlu0 %3635
      %3637 = vrot.lane.b32.xlu0 %v3367, 59
      %v3638 = vpop.permute.xlu0 %3637
      %3639 = vrot.lane.b32.xlu0 %v3447, 59
      %v3640 = vpop.permute.xlu0 %3639
      %3641 = vrot.lane.b32.xlu0 %v3368, 59
      %v3642 = vpop.permute.xlu0 %3641
      %3643 = vrot.lane.b32.xlu0 %v3448, 59
      %v3644 = vpop.permute.xlu0 %3643
      %v3645 = vsel %vm1376, %v3614, %v3616
      %v3646 = vsel %vm1376, %v3616, %v3618
      %v3647 = vsel %vm1376, %v3618, %v3620
      %v3648 = vsel %vm1376, %v3622, %v3624
      %v3649 = vsel %vm1376, %v3624, %v3626
      %v3650 = vsel %vm1376, %v3626, %v3628
      %v3651 = vsel %vm1376, %v3630, %v3632
      %v3652 = vsel %vm1376, %v3632, %v3634
      %v3653 = vsel %vm1376, %v3634, %v3636
      %v3654 = vsel %vm1376, %v3638, %v3640
      %v3655 = vsel %vm1376, %v3640, %v3642
      %v3656 = vsel %vm1376, %v3642, %v3644
      %v3669 = vmul.f32 %v3556, %v3645
      %v3670 = vmul.f32 %v3560, %v3646
      %v3671 = vmul.f32 %v3564, %v3647
      %v3672 = vmul.f32 %v3568, %v3648
      %v3673 = vmul.f32 %v3572, %v3649
      %v3674 = vmul.f32 %v3576, %v3650
      %v3675 = vmul.f32 %v3580, %v3651
      %v3676 = vmul.f32 %v3584, %v3652
      %v3677 = vmul.f32 %v3588, %v3653
      %v3678 = vmul.f32 %v3592, %v3654
      %v3679 = vmul.f32 %v3596, %v3655
      %v3680 = vmul.f32 %v3600, %v3656
      %v3681 = vadd.f32 %v3517, %v3669
      %v3682 = vadd.f32 %v3518, %v3670
      %v3683 = vadd.f32 %v3519, %v3671
      %v3684 = vadd.f32 %v3520, %v3672
      %v3685 = vadd.f32 %v3521, %v3673
      %v3686 = vadd.f32 %v3522, %v3674
      %v3687 = vadd.f32 %v3523, %v3675
      %v3688 = vadd.f32 %v3524, %v3676
      %v3689 = vadd.f32 %v3525, %v3677
      %v3690 = vadd.f32 %v3526, %v3678
      %v3691 = vadd.f32 %v3527, %v3679
      %v3692 = vadd.f32 %v3528, %v3680
      %v3693 = vld [vmem:[%s1902] sm:$0x7]
      %v3694 = vld [vmem:[%s1902 + $0x3] sm:$0x7]
      %v3695 = vld [vmem:[%s1902 + $0x6] sm:$0x7]
      %v3696 = vld [vmem:[%s1902 + $0x9] sm:$0x7]
      %v3697 = vsub.f32 %v3693, %v2827
      %v3698 = vsub.f32 %v3694, %v2850
      %v3699 = vsub.f32 %v3695, %v2873
      %v3700 = vsub.f32 %v3696, %v2896
      %v3701 = vmul.f32 %v3697, 1.442695
      %v3702 = vpow.pop %v3701
      %v3703 = vmul.f32 %v3698, 1.442695
      %v3704 = vpow.pop %v3703
      %v3705 = vmul.f32 %v3699, 1.442695
      %v3706 = vpow.pop %v3705
      %v3707 = vmul.f32 %v3700, 1.442695
      %v3708 = vpow.pop %v3707
      %v3709 = vadd.f32 %v3545, %v3702
      %v3710 = vadd.f32 %v3546, %v3704
      %v3711 = vadd.f32 %v3547, %v3706
      %v3712 = vadd.f32 %v3548, %v3708
      %v3717 = vlaneseq
      %v3718 = vshrl.u32 %v3717, 7
      %v3719 = vsub.s32 0, %v3718
      %v3720 = vrot.slane %v3702, %v3719
      %v3721 = vlaneseq
      %v3722 = vshrl.u32 %v3721, 7
      %v3723 = vsub.s32 1, %v3722
      %v3724 = vrot.slane %v3702, %v3723
      %v3725 = vlaneseq
      %v3726 = vshrl.u32 %v3725, 7
      %v3727 = vsub.s32 2, %v3726
      %v3728 = vrot.slane %v3702, %v3727
      %v3729 = vlaneseq
      %v3730 = vshrl.u32 %v3729, 7
      %v3731 = vsub.s32 0, %v3730
      %v3732 = vrot.slane %v3704, %v3731
      %v3733 = vlaneseq
      %v3734 = vshrl.u32 %v3733, 7
      %v3735 = vsub.s32 1, %v3734
      %v3736 = vrot.slane %v3704, %v3735
      %v3737 = vlaneseq
      %v3738 = vshrl.u32 %v3737, 7
      %v3739 = vsub.s32 2, %v3738
      %v3740 = vrot.slane %v3704, %v3739
      %v3741 = vlaneseq
      %v3742 = vshrl.u32 %v3741, 7
      %v3743 = vsub.s32 0, %v3742
      %v3744 = vrot.slane %v3706, %v3743
      %v3745 = vlaneseq
      %v3746 = vshrl.u32 %v3745, 7
      %v3747 = vsub.s32 1, %v3746
      %v3748 = vrot.slane %v3706, %v3747
      %v3749 = vlaneseq
      %v3750 = vshrl.u32 %v3749, 7
      %v3751 = vsub.s32 2, %v3750
      %v3752 = vrot.slane %v3706, %v3751
      %v3753 = vlaneseq
      %v3754 = vshrl.u32 %v3753, 7
      %v3755 = vsub.s32 0, %v3754
      %v3756 = vrot.slane %v3708, %v3755
      %v3757 = vlaneseq
      %v3758 = vshrl.u32 %v3757, 7
      %v3759 = vsub.s32 1, %v3758
      %v3760 = vrot.slane %v3708, %v3759
      %v3761 = vlaneseq
      %v3762 = vshrl.u32 %v3761, 7
      %v3763 = vsub.s32 2, %v3762
      %v3764 = vrot.slane %v3708, %v3763
      %3777 = vrot.lane.b32.xlu0 %v3361, 56
      %v3778 = vpop.permute.xlu0 %3777
      %3779 = vrot.lane.b32.xlu0 %v3441, 56
      %v3780 = vpop.permute.xlu0 %3779
      %3781 = vrot.lane.b32.xlu0 %v3362, 56
      %v3782 = vpop.permute.xlu0 %3781
      %3783 = vrot.lane.b32.xlu0 %v3442, 56
      %v3784 = vpop.permute.xlu0 %3783
      %3785 = vrot.lane.b32.xlu0 %v3363, 56
      %v3786 = vpop.permute.xlu0 %3785
      %3787 = vrot.lane.b32.xlu0 %v3443, 56
      %v3788 = vpop.permute.xlu0 %3787
      %3789 = vrot.lane.b32.xlu0 %v3364, 56
      %v3790 = vpop.permute.xlu0 %3789
      %3791 = vrot.lane.b32.xlu0 %v3444, 56
      %v3792 = vpop.permute.xlu0 %3791
      %3793 = vrot.lane.b32.xlu0 %v3365, 56
      %v3794 = vpop.permute.xlu0 %3793
      %3795 = vrot.lane.b32.xlu0 %v3445, 56
      %v3796 = vpop.permute.xlu0 %3795
      %3797 = vrot.lane.b32.xlu0 %v3366, 56
      %v3798 = vpop.permute.xlu0 %3797
      %3799 = vrot.lane.b32.xlu0 %v3446, 56
      %v3800 = vpop.permute.xlu0 %3799
      %3801 = vrot.lane.b32.xlu0 %v3367, 56
      %v3802 = vpop.permute.xlu0 %3801
      %3803 = vrot.lane.b32.xlu0 %v3447, 56
      %v3804 = vpop.permute.xlu0 %3803
      %3805 = vrot.lane.b32.xlu0 %v3368, 56
      %v3806 = vpop.permute.xlu0 %3805
      %3807 = vrot.lane.b32.xlu0 %v3448, 56
      %v3808 = vpop.permute.xlu0 %3807
      %v3809 = vsel %vm1670, %v3778, %v3780
      %v3810 = vsel %vm1670, %v3780, %v3782
      %v3811 = vsel %vm1670, %v3782, %v3784
      %v3812 = vsel %vm1670, %v3786, %v3788
      %v3813 = vsel %vm1670, %v3788, %v3790
      %v3814 = vsel %vm1670, %v3790, %v3792
      %v3815 = vsel %vm1670, %v3794, %v3796
      %v3816 = vsel %vm1670, %v3796, %v3798
      %v3817 = vsel %vm1670, %v3798, %v3800
      %v3818 = vsel %vm1670, %v3802, %v3804
      %v3819 = vsel %vm1670, %v3804, %v3806
      %v3820 = vsel %vm1670, %v3806, %v3808
      %v3833 = vmul.f32 %v3720, %v3809
      %v3834 = vmul.f32 %v3724, %v3810
      %v3835 = vmul.f32 %v3728, %v3811
      %v3836 = vmul.f32 %v3732, %v3812
      %v3837 = vmul.f32 %v3736, %v3813
      %v3838 = vmul.f32 %v3740, %v3814
      %v3839 = vmul.f32 %v3744, %v3815
      %v3840 = vmul.f32 %v3748, %v3816
      %v3841 = vmul.f32 %v3752, %v3817
      %v3842 = vmul.f32 %v3756, %v3818
      %v3843 = vmul.f32 %v3760, %v3819
      %v3844 = vmul.f32 %v3764, %v3820
      %v3845 = vadd.f32 %v3681, %v3833
      %v3846 = vadd.f32 %v3682, %v3834
      %v3847 = vadd.f32 %v3683, %v3835
      %v3848 = vadd.f32 %v3684, %v3836
      %v3849 = vadd.f32 %v3685, %v3837
      %v3850 = vadd.f32 %v3686, %v3838
      %v3851 = vadd.f32 %v3687, %v3839
      %v3852 = vadd.f32 %v3688, %v3840
      %v3853 = vadd.f32 %v3689, %v3841
      %v3854 = vadd.f32 %v3690, %v3842
      %v3855 = vadd.f32 %v3691, %v3843
      %v3856 = vadd.f32 %v3692, %v3844
      %v3857 = vld [vmem:[%s2192] sm:$0x7]
      %v3858 = vld [vmem:[%s2192 + $0x3] sm:$0x7]
      %v3859 = vld [vmem:[%s2192 + $0x6] sm:$0x7]
      %v3860 = vld [vmem:[%s2192 + $0x9] sm:$0x7]
      %v3861 = vsub.f32 %v3857, %v2827
      %v3862 = vsub.f32 %v3858, %v2850
      %v3863 = vsub.f32 %v3859, %v2873
      %v3864 = vsub.f32 %v3860, %v2896
      %v3865 = vmul.f32 %v3861, 1.442695
      %v3866 = vpow.pop %v3865
      %v3867 = vmul.f32 %v3862, 1.442695
      %v3868 = vpow.pop %v3867
      %v3869 = vmul.f32 %v3863, 1.442695
      %v3870 = vpow.pop %v3869
      %v3871 = vmul.f32 %v3864, 1.442695
      %v3872 = vpow.pop %v3871
      %v3873 = vadd.f32 %v3709, %v3866
      %v3874 = vadd.f32 %v3710, %v3868
      %v3875 = vadd.f32 %v3711, %v3870
      %v3876 = vadd.f32 %v3712, %v3872
      %v3877 = vld [vmem:[%s205 + $0x2] sm:$0x3f]
      %v3878 = vld [vmem:[%s205 + $0xa] sm:$0x3f]
      %v3879 = vld [vmem:[%s205 + $0x12] sm:$0x3f]
      %v3880 = vld [vmem:[%s205 + $0x1a] sm:$0x3f]
      %v3881 = vunpack.c.l.bf16 %v3877
      %v3882 = vunpack.c.h.bf16 %v3877
      %v3883 = vunpack.c.l.bf16 %v3878
      %v3884 = vunpack.c.h.bf16 %v3878
      %v3885 = vunpack.c.l.bf16 %v3879
      %v3886 = vunpack.c.h.bf16 %v3879
      %v3887 = vunpack.c.l.bf16 %v3880
      %v3888 = vunpack.c.h.bf16 %v3880
      %v3893 = vlaneseq
      %v3894 = vshrl.u32 %v3893, 7
      %v3895 = vsub.s32 0, %v3894
      %v3896 = vrot.slane %v3866, %v3895
      %v3897 = vlaneseq
      %v3898 = vshrl.u32 %v3897, 7
      %v3899 = vsub.s32 1, %v3898
      %v3900 = vrot.slane %v3866, %v3899
      %v3901 = vlaneseq
      %v3902 = vshrl.u32 %v3901, 7
      %v3903 = vsub.s32 2, %v3902
      %v3904 = vrot.slane %v3866, %v3903
      %v3905 = vlaneseq
      %v3906 = vshrl.u32 %v3905, 7
      %v3907 = vsub.s32 0, %v3906
      %v3908 = vrot.slane %v3868, %v3907
      %v3909 = vlaneseq
      %v3910 = vshrl.u32 %v3909, 7
      %v3911 = vsub.s32 1, %v3910
      %v3912 = vrot.slane %v3868, %v3911
      %v3913 = vlaneseq
      %v3914 = vshrl.u32 %v3913, 7
      %v3915 = vsub.s32 2, %v3914
      %v3916 = vrot.slane %v3868, %v3915
      %v3917 = vlaneseq
      %v3918 = vshrl.u32 %v3917, 7
      %v3919 = vsub.s32 0, %v3918
      %v3920 = vrot.slane %v3870, %v3919
      %v3921 = vlaneseq
      %v3922 = vshrl.u32 %v3921, 7
      %v3923 = vsub.s32 1, %v3922
      %v3924 = vrot.slane %v3870, %v3923
      %v3925 = vlaneseq
      %v3926 = vshrl.u32 %v3925, 7
      %v3927 = vsub.s32 2, %v3926
      %v3928 = vrot.slane %v3870, %v3927
      %v3929 = vlaneseq
      %v3930 = vshrl.u32 %v3929, 7
      %v3931 = vsub.s32 0, %v3930
      %v3932 = vrot.slane %v3872, %v3931
      %v3933 = vlaneseq
      %v3934 = vshrl.u32 %v3933, 7
      %v3935 = vsub.s32 1, %v3934
      %v3936 = vrot.slane %v3872, %v3935
      %v3937 = vlaneseq
      %v3938 = vshrl.u32 %v3937, 7
      %v3939 = vsub.s32 2, %v3938
      %v3940 = vrot.slane %v3872, %v3939
      %v3961 = vcombine.high %v3881, %v3881
      %v3962 = vcombine.high %v3883, %v3883
      %v3963 = vcombine.high %v3885, %v3885
      %v3964 = vcombine.high %v3887, %v3887
      %3965 = vrot.lane.b32.xlu0 %v3881, 124
      %v3966 = vpop.permute.xlu0 %3965
      %3967 = vrot.lane.b32.xlu0 %v3961, 124
      %v3968 = vpop.permute.xlu0 %3967
      %3969 = vrot.lane.b32.xlu0 %v3882, 124
      %v3970 = vpop.permute.xlu0 %3969
      %3971 = vrot.lane.b32.xlu0 %v3883, 124
      %v3972 = vpop.permute.xlu0 %3971
      %3973 = vrot.lane.b32.xlu0 %v3962, 124
      %v3974 = vpop.permute.xlu0 %3973
      %3975 = vrot.lane.b32.xlu0 %v3884, 124
      %v3976 = vpop.permute.xlu0 %3975
      %3977 = vrot.lane.b32.xlu0 %v3885, 124
      %v3978 = vpop.permute.xlu0 %3977
      %3979 = vrot.lane.b32.xlu0 %v3963, 124
      %v3980 = vpop.permute.xlu0 %3979
      %3981 = vrot.lane.b32.xlu0 %v3886, 124
      %v3982 = vpop.permute.xlu0 %3981
      %3983 = vrot.lane.b32.xlu0 %v3887, 124
      %v3984 = vpop.permute.xlu0 %3983
      %3985 = vrot.lane.b32.xlu0 %v3964, 124
      %v3986 = vpop.permute.xlu0 %3985
      %3987 = vrot.lane.b32.xlu0 %v3888, 124
      %v3988 = vpop.permute.xlu0 %3987
      %v3989 = vsel %vm1964, %v3966, %v3968
      %v3990 = vsel %vm1964, %v3968, %v3970
      %v3991 = vsel %vm1964, %v3972, %v3974
      %v3992 = vsel %vm1964, %v3974, %v3976
      %v3993 = vsel %vm1964, %v3978, %v3980
      %v3994 = vsel %vm1964, %v3980, %v3982
      %v3995 = vsel %vm1964, %v3984, %v3986
      %v3996 = vsel %vm1964, %v3986, %v3988
      %v4009 = vmul.f32 %v3896, %v3989
      %v4010 = vmul.f32 %v3900, %v3990
      %v4011 = vmul.f32 %v3904, %v3970
      %v4012 = vmul.f32 %v3908, %v3991
      %v4013 = vmul.f32 %v3912, %v3992
      %v4014 = vmul.f32 %v3916, %v3976
      %v4015 = vmul.f32 %v3920, %v3993
      %v4016 = vmul.f32 %v3924, %v3994
      %v4017 = vmul.f32 %v3928, %v3982
      %v4018 = vmul.f32 %v3932, %v3995
      %v4019 = vmul.f32 %v3936, %v3996
      %v4020 = vmul.f32 %v3940, %v3988
      %v4021 = vadd.f32 %v3845, %v4009
      %v4022 = vadd.f32 %v3846, %v4010
      %v4023 = vadd.f32 %v3847, %v4011
      %v4024 = vadd.f32 %v3848, %v4012
      %v4025 = vadd.f32 %v3849, %v4013
      %v4026 = vadd.f32 %v3850, %v4014
      %v4027 = vadd.f32 %v3851, %v4015
      %v4028 = vadd.f32 %v3852, %v4016
      %v4029 = vadd.f32 %v3853, %v4017
      %v4030 = vadd.f32 %v3854, %v4018
      %v4031 = vadd.f32 %v3855, %v4019
      %v4032 = vadd.f32 %v3856, %v4020
      %v4033 = vld [vmem:[%s2482] sm:$0x7]
      %v4034 = vld [vmem:[%s2482 + $0x3] sm:$0x7]
      %v4035 = vld [vmem:[%s2482 + $0x6] sm:$0x7]
      %v4036 = vld [vmem:[%s2482 + $0x9] sm:$0x7]
      %v4037 = vsub.f32 %v4033, %v2827
      %v4038 = vsub.f32 %v4034, %v2850
      %v4039 = vsub.f32 %v4035, %v2873
      %v4040 = vsub.f32 %v4036, %v2896
      %v4041 = vmul.f32 %v4037, 1.442695
      %v4042 = vpow.pop %v4041
      %v4043 = vmul.f32 %v4038, 1.442695
      %v4044 = vpow.pop %v4043
      %v4045 = vmul.f32 %v4039, 1.442695
      %v4046 = vpow.pop %v4045
      %v4047 = vmul.f32 %v4040, 1.442695
      %v4048 = vpow.pop %v4047
      %v4049 = vadd.f32 %v3873, %v4042
      %v4050 = vadd.f32 %v3874, %v4044
      %v4051 = vadd.f32 %v3875, %v4046
      %v4052 = vadd.f32 %v3876, %v4048
      %v4057 = vlaneseq
      %v4058 = vshrl.u32 %v4057, 7
      %v4059 = vsub.s32 0, %v4058
      %v4060 = vrot.slane %v4042, %v4059
      %v4061 = vlaneseq
      %v4062 = vshrl.u32 %v4061, 7
      %v4063 = vsub.s32 1, %v4062
      %v4064 = vrot.slane %v4042, %v4063
      %v4065 = vlaneseq
      %v4066 = vshrl.u32 %v4065, 7
      %v4067 = vsub.s32 2, %v4066
      %v4068 = vrot.slane %v4042, %v4067
      %v4069 = vlaneseq
      %v4070 = vshrl.u32 %v4069, 7
      %v4071 = vsub.s32 0, %v4070
      %v4072 = vrot.slane %v4044, %v4071
      %v4073 = vlaneseq
      %v4074 = vshrl.u32 %v4073, 7
      %v4075 = vsub.s32 1, %v4074
      %v4076 = vrot.slane %v4044, %v4075
      %v4077 = vlaneseq
      %v4078 = vshrl.u32 %v4077, 7
      %v4079 = vsub.s32 2, %v4078
      %v4080 = vrot.slane %v4044, %v4079
      %v4081 = vlaneseq
      %v4082 = vshrl.u32 %v4081, 7
      %v4083 = vsub.s32 0, %v4082
      %v4084 = vrot.slane %v4046, %v4083
      %v4085 = vlaneseq
      %v4086 = vshrl.u32 %v4085, 7
      %v4087 = vsub.s32 1, %v4086
      %v4088 = vrot.slane %v4046, %v4087
      %v4089 = vlaneseq
      %v4090 = vshrl.u32 %v4089, 7
      %v4091 = vsub.s32 2, %v4090
      %v4092 = vrot.slane %v4046, %v4091
      %v4093 = vlaneseq
      %v4094 = vshrl.u32 %v4093, 7
      %v4095 = vsub.s32 0, %v4094
      %v4096 = vrot.slane %v4048, %v4095
      %v4097 = vlaneseq
      %v4098 = vshrl.u32 %v4097, 7
      %v4099 = vsub.s32 1, %v4098
      %v4100 = vrot.slane %v4048, %v4099
      %v4101 = vlaneseq
      %v4102 = vshrl.u32 %v4101, 7
      %v4103 = vsub.s32 2, %v4102
      %v4104 = vrot.slane %v4048, %v4103
      %4117 = vrot.lane.b32.xlu0 %v3881, 121
      %v4118 = vpop.permute.xlu0 %4117
      %4119 = vrot.lane.b32.xlu0 %v3961, 121
      %v4120 = vpop.permute.xlu0 %4119
      %4121 = vrot.lane.b32.xlu0 %v3882, 121
      %v4122 = vpop.permute.xlu0 %4121
      %4123 = vrot.lane.b32.xlu0 %v3883, 121
      %v4124 = vpop.permute.xlu0 %4123
      %4125 = vrot.lane.b32.xlu0 %v3962, 121
      %v4126 = vpop.permute.xlu0 %4125
      %4127 = vrot.lane.b32.xlu0 %v3884, 121
      %v4128 = vpop.permute.xlu0 %4127
      %4129 = vrot.lane.b32.xlu0 %v3885, 121
      %v4130 = vpop.permute.xlu0 %4129
      %4131 = vrot.lane.b32.xlu0 %v3963, 121
      %v4132 = vpop.permute.xlu0 %4131
      %4133 = vrot.lane.b32.xlu0 %v3886, 121
      %v4134 = vpop.permute.xlu0 %4133
      %4135 = vrot.lane.b32.xlu0 %v3887, 121
      %v4136 = vpop.permute.xlu0 %4135
      %4137 = vrot.lane.b32.xlu0 %v3964, 121
      %v4138 = vpop.permute.xlu0 %4137
      %4139 = vrot.lane.b32.xlu0 %v3888, 121
      %v4140 = vpop.permute.xlu0 %4139
      %v4141 = vsel %vm2254, %v4118, %v4120
      %v4142 = vsel %vm2254, %v4120, %v4122
      %v4143 = vsel %vm2254, %v4124, %v4126
      %v4144 = vsel %vm2254, %v4126, %v4128
      %v4145 = vsel %vm2254, %v4130, %v4132
      %v4146 = vsel %vm2254, %v4132, %v4134
      %v4147 = vsel %vm2254, %v4136, %v4138
      %v4148 = vsel %vm2254, %v4138, %v4140
      %v4161 = vmul.f32 %v4060, %v4141
      %v4162 = vmul.f32 %v4064, %v4142
      %v4163 = vmul.f32 %v4068, %v4122
      %v4164 = vmul.f32 %v4072, %v4143
      %v4165 = vmul.f32 %v4076, %v4144
      %v4166 = vmul.f32 %v4080, %v4128
      %v4167 = vmul.f32 %v4084, %v4145
      %v4168 = vmul.f32 %v4088, %v4146
      %v4169 = vmul.f32 %v4092, %v4134
      %v4170 = vmul.f32 %v4096, %v4147
      %v4171 = vmul.f32 %v4100, %v4148
      %v4172 = vmul.f32 %v4104, %v4140
      %v4173 = vadd.f32 %v4021, %v4161
      %v4174 = vadd.f32 %v4022, %v4162
      %v4175 = vadd.f32 %v4023, %v4163
      %v4176 = vadd.f32 %v4024, %v4164
      %v4177 = vadd.f32 %v4025, %v4165
      %v4178 = vadd.f32 %v4026, %v4166
      %v4179 = vadd.f32 %v4027, %v4167
      %v4180 = vadd.f32 %v4028, %v4168
      %v4181 = vadd.f32 %v4029, %v4169
      %v4182 = vadd.f32 %v4030, %v4170
      %v4183 = vadd.f32 %v4031, %v4171
      %v4184 = vadd.f32 %v4032, %v4172
      %v4185 = vld [vmem:[%s2772] sm:$0x7]
      %v4186 = vld [vmem:[%s2772 + $0x3] sm:$0x7]
      %v4187 = vld [vmem:[%s2772 + $0x6] sm:$0x7]
      %v4188 = vld [vmem:[%s2772 + $0x9] sm:$0x7]
      %v4189 = vsub.f32 %v4185, %v2827
      %v4190 = vsub.f32 %v4186, %v2850
      %v4191 = vsub.f32 %v4187, %v2873
      %v4192 = vsub.f32 %v4188, %v2896
      %v4193 = vmul.f32 %v4189, 1.442695
      %v4194 = vpow.pop %v4193
      %v4195 = vmul.f32 %v4190, 1.442695
      %v4196 = vpow.pop %v4195
      %v4197 = vmul.f32 %v4191, 1.442695
      %v4198 = vpow.pop %v4197
      %v4199 = vmul.f32 %v4192, 1.442695
      %v4200 = vpow.pop %v4199
      %v4201 = vadd.f32 %v4049, %v4194
      %v4202 = vadd.f32 %v4050, %v4196
      %v4203 = vadd.f32 %v4051, %v4198
      %v4204 = vadd.f32 %v4052, %v4200
      %v4209 = vlaneseq
      %v4210 = vshrl.u32 %v4209, 7
      %v4211 = vsub.s32 0, %v4210
      %v4212 = vrot.slane %v4194, %v4211
      %v4213 = vlaneseq
      %v4214 = vshrl.u32 %v4213, 7
      %v4215 = vsub.s32 1, %v4214
      %v4216 = vrot.slane %v4194, %v4215
      %v4217 = vlaneseq
      %v4218 = vshrl.u32 %v4217, 7
      %v4219 = vsub.s32 2, %v4218
      %v4220 = vrot.slane %v4194, %v4219
      %v4221 = vlaneseq
      %v4222 = vshrl.u32 %v4221, 7
      %v4223 = vsub.s32 0, %v4222
      %v4224 = vrot.slane %v4196, %v4223
      %v4225 = vlaneseq
      %v4226 = vshrl.u32 %v4225, 7
      %v4227 = vsub.s32 1, %v4226
      %v4228 = vrot.slane %v4196, %v4227
      %v4229 = vlaneseq
      %v4230 = vshrl.u32 %v4229, 7
      %v4231 = vsub.s32 2, %v4230
      %v4232 = vrot.slane %v4196, %v4231
      %v4233 = vlaneseq
      %v4234 = vshrl.u32 %v4233, 7
      %v4235 = vsub.s32 0, %v4234
      %v4236 = vrot.slane %v4198, %v4235
      %v4237 = vlaneseq
      %v4238 = vshrl.u32 %v4237, 7
      %v4239 = vsub.s32 1, %v4238
      %v4240 = vrot.slane %v4198, %v4239
      %v4241 = vlaneseq
      %v4242 = vshrl.u32 %v4241, 7
      %v4243 = vsub.s32 2, %v4242
      %v4244 = vrot.slane %v4198, %v4243
      %v4245 = vlaneseq
      %v4246 = vshrl.u32 %v4245, 7
      %v4247 = vsub.s32 0, %v4246
      %v4248 = vrot.slane %v4200, %v4247
      %v4249 = vlaneseq
      %v4250 = vshrl.u32 %v4249, 7
      %v4251 = vsub.s32 1, %v4250
      %v4252 = vrot.slane %v4200, %v4251
      %v4253 = vlaneseq
      %v4254 = vshrl.u32 %v4253, 7
      %v4255 = vsub.s32 2, %v4254
      %v4256 = vrot.slane %v4200, %v4255
      %4269 = vrot.lane.b32.xlu0 %v3881, 118
      %v4270 = vpop.permute.xlu0 %4269
      %4271 = vrot.lane.b32.xlu0 %v3961, 118
      %v4272 = vpop.permute.xlu0 %4271
      %4273 = vrot.lane.b32.xlu0 %v3882, 118
      %v4274 = vpop.permute.xlu0 %4273
      %4275 = vrot.lane.b32.xlu0 %v3883, 118
      %v4276 = vpop.permute.xlu0 %4275
      %4277 = vrot.lane.b32.xlu0 %v3962, 118
      %v4278 = vpop.permute.xlu0 %4277
      %4279 = vrot.lane.b32.xlu0 %v3884, 118
      %v4280 = vpop.permute.xlu0 %4279
      %4281 = vrot.lane.b32.xlu0 %v3885, 118
      %v4282 = vpop.permute.xlu0 %4281
      %4283 = vrot.lane.b32.xlu0 %v3963, 118
      %v4284 = vpop.permute.xlu0 %4283
      %4285 = vrot.lane.b32.xlu0 %v3886, 118
      %v4286 = vpop.permute.xlu0 %4285
      %4287 = vrot.lane.b32.xlu0 %v3887, 118
      %v4288 = vpop.permute.xlu0 %4287
      %4289 = vrot.lane.b32.xlu0 %v3964, 118
      %v4290 = vpop.permute.xlu0 %4289
      %4291 = vrot.lane.b32.xlu0 %v3888, 118
      %v4292 = vpop.permute.xlu0 %4291
      %v4293 = vsel %vm2544, %v4270, %v4272
      %v4294 = vsel %vm2544, %v4272, %v4274
      %v4295 = vsel %vm2544, %v4276, %v4278
      %v4296 = vsel %vm2544, %v4278, %v4280
      %v4297 = vsel %vm2544, %v4282, %v4284
      %v4298 = vsel %vm2544, %v4284, %v4286
      %v4299 = vsel %vm2544, %v4288, %v4290
      %v4300 = vsel %vm2544, %v4290, %v4292
      %v4313 = vmul.f32 %v4212, %v4293
      %v4314 = vmul.f32 %v4216, %v4294
      %v4315 = vmul.f32 %v4220, %v4274
      %v4316 = vmul.f32 %v4224, %v4295
      %v4317 = vmul.f32 %v4228, %v4296
      %v4318 = vmul.f32 %v4232, %v4280
      %v4319 = vmul.f32 %v4236, %v4297
      %v4320 = vmul.f32 %v4240, %v4298
      %v4321 = vmul.f32 %v4244, %v4286
      %v4322 = vmul.f32 %v4248, %v4299
      %v4323 = vmul.f32 %v4252, %v4300
      %v4324 = vmul.f32 %v4256, %v4292
      %v4325 = vadd.f32 %v4173, %v4313
      %v4326 = vadd.f32 %v4174, %v4314
      %v4327 = vadd.f32 %v4175, %v4315
      %v4328 = vadd.f32 %v4176, %v4316
      %v4329 = vadd.f32 %v4177, %v4317
      %v4330 = vadd.f32 %v4178, %v4318
      %v4331 = vadd.f32 %v4179, %v4319
      %v4332 = vadd.f32 %v4180, %v4320
      %v4333 = vadd.f32 %v4181, %v4321
      %v4334 = vadd.f32 %v4182, %v4322
      %v4335 = vadd.f32 %v4183, %v4323
      %v4336 = vadd.f32 %v4184, %v4324
      %v4337 = vrcp.pop %v4201
      %v4338 = vrcp.pop %v4202
      %v4339 = vrcp.pop %v4203
      %v4340 = vrcp.pop %v4204
      %v4345 = vlaneseq
      %v4346 = vshrl.u32 %v4345, 7
      %v4347 = vsub.s32 0, %v4346
      %v4348 = vrot.slane %v4337, %v4347
      %v4349 = vlaneseq
      %v4350 = vshrl.u32 %v4349, 7
      %v4351 = vsub.s32 1, %v4350
      %v4352 = vrot.slane %v4337, %v4351
      %v4353 = vlaneseq
      %v4354 = vshrl.u32 %v4353, 7
      %v4355 = vsub.s32 2, %v4354
      %v4356 = vrot.slane %v4337, %v4355
      %v4357 = vlaneseq
      %v4358 = vshrl.u32 %v4357, 7
      %v4359 = vsub.s32 0, %v4358
      %v4360 = vrot.slane %v4338, %v4359
      %v4361 = vlaneseq
      %v4362 = vshrl.u32 %v4361, 7
      %v4363 = vsub.s32 1, %v4362
      %v4364 = vrot.slane %v4338, %v4363
      %v4365 = vlaneseq
      %v4366 = vshrl.u32 %v4365, 7
      %v4367 = vsub.s32 2, %v4366
      %v4368 = vrot.slane %v4338, %v4367
      %v4369 = vlaneseq
      %v4370 = vshrl.u32 %v4369, 7
      %v4371 = vsub.s32 0, %v4370
      %v4372 = vrot.slane %v4339, %v4371
      %v4373 = vlaneseq
      %v4374 = vshrl.u32 %v4373, 7
      %v4375 = vsub.s32 1, %v4374
      %v4376 = vrot.slane %v4339, %v4375
      %v4377 = vlaneseq
      %v4378 = vshrl.u32 %v4377, 7
      %v4379 = vsub.s32 2, %v4378
      %v4380 = vrot.slane %v4339, %v4379
      %v4381 = vlaneseq
      %v4382 = vshrl.u32 %v4381, 7
      %v4383 = vsub.s32 0, %v4382
      %v4384 = vrot.slane %v4340, %v4383
      %v4385 = vlaneseq
      %v4386 = vshrl.u32 %v4385, 7
      %v4387 = vsub.s32 1, %v4386
      %v4388 = vrot.slane %v4340, %v4387
      %v4389 = vlaneseq
      %v4390 = vshrl.u32 %v4389, 7
      %v4391 = vsub.s32 2, %v4390
      %v4392 = vrot.slane %v4340, %v4391
      %v4405 = vmul.f32 %v4325, %v4348
      %v4406 = vmul.f32 %v4326, %v4352
      %v4407 = vmul.f32 %v4327, %v4356
      %v4408 = vmul.f32 %v4328, %v4360
      %v4409 = vmul.f32 %v4329, %v4364
      %v4410 = vmul.f32 %v4330, %v4368
      %v4411 = vmul.f32 %v4331, %v4372
      %v4412 = vmul.f32 %v4332, %v4376
      %v4413 = vmul.f32 %v4333, %v4380
      %v4414 = vmul.f32 %v4334, %v4384
      %v4415 = vmul.f32 %v4335, %v4388
      %v4416 = vmul.f32 %v4336, %v4392
      %v4417 = vpack.c.bf16 %v4405, %v4405
      %v4418 = vpack.c.bf16 %v4406, %v4406
      %v4419 = vpack.c.bf16 %v4407, %v4407
      %v4420 = vpack.c.bf16 %v4408, %v4408
      %v4421 = vpack.c.bf16 %v4409, %v4409
      %v4422 = vpack.c.bf16 %v4410, %v4410
      %v4423 = vpack.c.bf16 %v4411, %v4411
      %v4424 = vpack.c.bf16 %v4412, %v4412
      %v4425 = vpack.c.bf16 %v4413, %v4413
      %v4426 = vpack.c.bf16 %v4414, %v4414
      %v4427 = vpack.c.bf16 %v4415, %v4415
      %v4428 = vpack.c.bf16 %v4416, %v4416
      %v4441 = vcombine.low %v4417, %v4418
      %v4443 = vunpack.c.l.s4 1983009808
      %v4444 = vunpack.c.0.s8 %v4443
      %v4445 = vlaneseq
      %v4446 = vshrl.u32 %v4445, 7
      %v4447 = vsub.s32 %v4444, %v4446
      %v4448 = vrot.slane %v4441, %v4447
      %v4450 = vunpack.c.l.s4 1983009808
      %v4451 = vunpack.c.0.s8 %v4450
      %v4452 = vlaneseq
      %v4453 = vshrl.u32 %v4452, 7
      %v4454 = vsub.s32 %v4451, %v4453
      %v4455 = vrot.slane %v4419, %v4454
      %v4456 = vcombine.low %v4448, %v4455
      %v4457 = vcombine.low %v4420, %v4421
      %v4459 = vunpack.c.l.s4 1983009808
      %v4460 = vunpack.c.0.s8 %v4459
      %v4461 = vlaneseq
      %v4462 = vshrl.u32 %v4461, 7
      %v4463 = vsub.s32 %v4460, %v4462
      %v4464 = vrot.slane %v4457, %v4463
      %v4466 = vunpack.c.l.s4 1983009808
      %v4467 = vunpack.c.0.s8 %v4466
      %v4468 = vlaneseq
      %v4469 = vshrl.u32 %v4468, 7
      %v4470 = vsub.s32 %v4467, %v4469
      %v4471 = vrot.slane %v4422, %v4470
      %v4472 = vcombine.low %v4464, %v4471
      %v4473 = vcombine.low %v4423, %v4424
      %v4475 = vunpack.c.l.s4 1983009808
      %v4476 = vunpack.c.0.s8 %v4475
      %v4477 = vlaneseq
      %v4478 = vshrl.u32 %v4477, 7
      %v4479 = vsub.s32 %v4476, %v4478
      %v4480 = vrot.slane %v4473, %v4479
      %v4482 = vunpack.c.l.s4 1983009808
      %v4483 = vunpack.c.0.s8 %v4482
      %v4484 = vlaneseq
      %v4485 = vshrl.u32 %v4484, 7
      %v4486 = vsub.s32 %v4483, %v4485
      %v4487 = vrot.slane %v4425, %v4486
      %v4488 = vcombine.low %v4480, %v4487
      %v4489 = vcombine.low %v4426, %v4427
      %v4491 = vunpack.c.l.s4 1983009808
      %v4492 = vunpack.c.0.s8 %v4491
      %v4493 = vlaneseq
      %v4494 = vshrl.u32 %v4493, 7
      %v4495 = vsub.s32 %v4492, %v4494
      %v4496 = vrot.slane %v4489, %v4495
      %v4498 = vunpack.c.l.s4 1983009808
      %v4499 = vunpack.c.0.s8 %v4498
      %v4500 = vlaneseq
      %v4501 = vshrl.u32 %v4500, 7
      %v4502 = vsub.s32 %v4499, %v4501
      %v4503 = vrot.slane %v4428, %v4502
      %v4504 = vcombine.low %v4496, %v4503
      %vm4509 = vcmask 1041408
      %vm4510 = vcmask 1043458
      %vm4511 = vmor %vm4510, %vm4509
      %vm4512 = vcmask 783364
      %vm4513 = vmor %vm4512, %vm4511
      %4514 = vst.msk [vmem:[%s210] sm:$0x3f] %vm4513, %v4456
      %4515 = vst.msk [vmem:[%s210 + $0x6] sm:$0x3f] %vm4513, %v4472
      %4516 = vst.msk [vmem:[%s210 + $0xc] sm:$0x3f] %vm4513, %v4488
      %4517 = vst.msk [vmem:[%s210 + $0x12] sm:$0x3f] %vm4513, %v4504
      %p4518 = scmp.lt.s32.totalorder %s14, 1
      %s4519 = scalar_select %p4518, %s14, 1
      %s4520 = smul.addr %s4519, 12
      %s4521 = smul.addr %s4520, 2
      %s4522 = scalar_lea.vmem %s3, %s4521
      // Predicated region
      $region33: #{multi_dilate_local_attention.6} parent=31 // pred_check
        %p4523 = pneg %p110
      $region34: #{multi_dilate_local_attention.6} parent=31 // pred_check_branch
        %4525 = sbr.rel (%p4523) target = $region36
      $region35: #{multi_dilate_local_attention.6} parent=31 // pred_region
        _
      $region36: #{multi_dilate_local_attention.6} parent=31 // pred_fallthru
        _
    $region32: #{multi_dilate_local_attention.6} parent=5 // pred_fallthru
      _
    %p4526 = scmp.le.s32.totalorder 2, %s9
    // Predicated region
    $region37: #{multi_dilate_local_attention.6} parent=5 // pred_check
      %p4527 = pneg %p4526
    $region38: #{multi_dilate_local_attention.6} parent=5 // pred_check_branch
      %4529 = sbr.rel (%p4527) target = $region40
    $region39: #{multi_dilate_local_attention.6} parent=5 // pred_region
      %s4530 = ssub.s32 %s9, 2
      // Predicated region
      $region41: #{multi_dilate_local_attention.6} parent=39 // pred_check
        %p4531 = pneg %p116
      $region42: #{multi_dilate_local_attention.6} parent=39 // pred_check_branch
        %4533 = sbr.rel (%p4531) target = $region44
      $region43: #{multi_dilate_local_attention.6} parent=39 // pred_region
        %p4534 = scmp.lt.s32.totalorder %s15, 1
        %s4535 = scalar_select %p4534, %s15, 1
        %s4536 = smul.addr %s4535, 12
        %s4537 = smul.addr %s4536, 2
        %s4538 = scalar_lea.vmem %s3, %s4537
      $region44: #{multi_dilate_local_attention.6} parent=39 // pred_fallthru
        _
    $region40: #{multi_dilate_local_attention.6} parent=5 // pred_fallthru
      _
  $region6: #{multi_dilate_local_attention.6} parent=0 // loop_footer
    %s13 = sadd.s32 1, %s9
  $region7: #{multi_dilate_local_attention.6} parent=0 // loop_footer_branch
    %8 = sbr.rel target = $region3
  $region8: #{multi_dilate_local_attention.6} parent=0 // loop_exit
    _

// kernel: multi_dilate_local_attention.5
$region0: #{multi_dilate_local_attention.5}
  #allocation0 [shape = 'u32[]', space=smem, size = 0x4, offset = 0x4, fixed_abs, tag = 'smem constant byte address 0x4 - core index']
  #allocation1 [shape = 'u32[144,128]{1,0:T(1,128)}', space=vmem, size = 0x12000, scoped, tag = 'internal scratch']
  #allocation2 [shape = 'f32[9,4,1,320]{3,2,1,0:T(1,128)}', space=vmem, size = 0xd800, scoped, tag = 'scratch operand']
  %s0 = inlined_call_operand.vmem [shape: bf16[2,4,4,320], index: 0, kind: input, shape index: {}]
  %s1 = inlined_call_operand.vmem [shape: bf16[2,4,4,420], index: 1, kind: input, shape index: {}]
  %s2 = inlined_call_operand.vmem [shape: bf16[2,4,4,420], index: 2, kind: input, shape index: {}]
  %s3 = inlined_call_operand.vmem [shape: bf16[2,4,4,320], index: 3, kind: output, shape index: {}]
  %s4 = sld [smem:[#allocation0]]
  $region45: #{multi_dilate_local_attention.5} parent=0
    _
  %s6 = ssub.s32 1, %s4
  %s7 = scalar_select 0, %s6, %s4
  loop: start=0, step=1, limit=4
  $region2: #{multi_dilate_local_attention.5} parent=0 // loop_pre_header
    _
  $region3: #{multi_dilate_local_attention.5} parent=0 // loop_header
    %s9 = sphi 0, %s13
    %p10 = scmp.ge.s32.totalorder %s9, 4
    %s19 = sphi 0, %s21
    %s22 = sphi 0, %s19
    %s23 = sphi 0, %s22
    %s39 = sphi 0, %s23
    %s45 = sphi 0, %s47
    %s48 = sphi 0, %s45
    %s49 = sphi 0, %s48
    %s65 = sphi 0, %s49
    %s71 = sphi 0, %s73
    %s74 = sphi 0, %s71
    %s75 = sphi 0, %s74
    %s91 = sphi 0, %s75
    %s97 = sphi 0, %s99
    %s100 = sphi 0, %s97
    %s101 = sphi 0, %s100
    %s117 = sphi 0, %s101
  $region4: #{multi_dilate_local_attention.5} parent=0 // loop_header_branch
    %12 = sbr.rel (%p10) target = $region8
  $region5: #{multi_dilate_local_attention.5} parent=0 // loop_body
    %s14 = ssub.s32 %s9, 1
    %s15 = ssub.s32 %s9, 2
    %s16 = sadd.s32 %s9, 1
    %s17 = ssub.s32 %s9, %s16
    %p18 = scmp.eq.s32.totalorder %s17, 0
    %s20 = sadd.s32 %s19, 1
    %s21 = scalar_select %p18, %s19, %s20
    %p24 = pneg %p18
    %p25 = scmp.eq.s32.totalorder %s9, 1
    %p26 = por %p24, %p25
    %p27 = scmp.ne.s32.totalorder %s19, %s22
    %p28 = scmp.eq.s32.totalorder %s9, 0
    %p29 = por %p27, %p28
    %p30 = scmp.ne.s32.totalorder %s19, %s22
    %p31 = scmp.eq.s32.totalorder %s14, 1
    %p32 = por %p30, %p31
    %p33 = scmp.ne.s32.totalorder %s22, %s23
    %p34 = scmp.eq.s32.totalorder %s14, 0
    %p35 = por %p33, %p34
    %p36 = scmp.ne.s32.totalorder %s22, %s23
    %p37 = scmp.eq.s32.totalorder %s15, 1
    %p38 = por %p36, %p37
    %p40 = scmp.ne.s32.totalorder %s23, %s39
    %p41 = scmp.eq.s32.totalorder %s15, 0
    %p42 = por %p40, %p41
    %s43 = ssub.s32 %s9, %s16
    %p44 = scmp.eq.s32.totalorder %s43, 0
    %s46 = sadd.s32 %s45, 1
    %s47 = scalar_select %p44, %s45, %s46
    %p50 = pneg %p44
    %p51 = scmp.eq.s32.totalorder %s9, 1
    %p52 = por %p50, %p51
    %p53 = scmp.ne.s32.totalorder %s45, %s48
    %p54 = scmp.eq.s32.totalorder %s9, 0
    %p55 = por %p53, %p54
    %p56 = scmp.ne.s32.totalorder %s45, %s48
    %p57 = scmp.eq.s32.totalorder %s14, 1
    %p58 = por %p56, %p57
    %p59 = scmp.ne.s32.totalorder %s48, %s49
    %p60 = scmp.eq.s32.totalorder %s14, 0
    %p61 = por %p59, %p60
    %p62 = scmp.ne.s32.totalorder %s48, %s49
    %p63 = scmp.eq.s32.totalorder %s15, 1
    %p64 = por %p62, %p63
    %p66 = scmp.ne.s32.totalorder %s49, %s65
    %p67 = scmp.eq.s32.totalorder %s15, 0
    %p68 = por %p66, %p67
    %s69 = ssub.s32 %s9, %s16
    %p70 = scmp.eq.s32.totalorder %s69, 0
    %s72 = sadd.s32 %s71, 1
    %s73 = scalar_select %p70, %s71, %s72
    %p76 = pneg %p70
    %p77 = scmp.eq.s32.totalorder %s9, 1
    %p78 = por %p76, %p77
    %p79 = scmp.ne.s32.totalorder %s71, %s74
    %p80 = scmp.eq.s32.totalorder %s9, 0
    %p81 = por %p79, %p80
    %p82 = scmp.ne.s32.totalorder %s71, %s74
    %p83 = scmp.eq.s32.totalorder %s14, 1
    %p84 = por %p82, %p83
    %p85 = scmp.ne.s32.totalorder %s74, %s75
    %p86 = scmp.eq.s32.totalorder %s14, 0
    %p87 = por %p85, %p86
    %p88 = scmp.ne.s32.totalorder %s74, %s75
    %p89 = scmp.eq.s32.totalorder %s15, 1
    %p90 = por %p88, %p89
    %p92 = scmp.ne.s32.totalorder %s75, %s91
    %p93 = scmp.eq.s32.totalorder %s15, 0
    %p94 = por %p92, %p93
    %s95 = ssub.s32 %s9, %s16
    %p96 = scmp.eq.s32.totalorder %s95, 0
    %s98 = sadd.s32 %s97, 1
    %s99 = scalar_select %p96, %s97, %s98
    %p102 = pneg %p96
    %p103 = scmp.eq.s32.totalorder %s9, 1
    %p104 = por %p102, %p103
    %p105 = scmp.ne.s32.totalorder %s97, %s100
    %p106 = scmp.eq.s32.totalorder %s9, 0
    %p107 = por %p105, %p106
    %p108 = scmp.ne.s32.totalorder %s97, %s100
    %p109 = scmp.eq.s32.totalorder %s14, 1
    %p110 = por %p108, %p109
    %p111 = scmp.ne.s32.totalorder %s100, %s101
    %p112 = scmp.eq.s32.totalorder %s14, 0
    %p113 = por %p111, %p112
    %p114 = scmp.ne.s32.totalorder %s100, %s101
    %p115 = scmp.eq.s32.totalorder %s15, 1
    %p116 = por %p114, %p115
    %p118 = scmp.ne.s32.totalorder %s101, %s117
    %p119 = scmp.eq.s32.totalorder %s15, 0
    %p120 = por %p118, %p119
    %p121 = scmp.le.s32.totalorder 1, %s9
    %p122 = scmp.lt.s32.totalorder %s9, 3
    %p123 = pnand %p121, %p122
    %p124 = pneg %p123
    // Predicated region
    $region9: #{multi_dilate_local_attention.5} parent=5 // pred_check
      _
    $region10: #{multi_dilate_local_attention.5} parent=5 // pred_check_branch
      %126 = sbr.rel (%p123) target = $region12
    $region11: #{multi_dilate_local_attention.5} parent=5 // pred_region
      %s127 = ssub.s32 %s9, 1
    $region12: #{multi_dilate_local_attention.5} parent=5 // pred_fallthru
      _
    %p128 = scmp.lt.s32.totalorder %s9, 2
    // Predicated region
    $region13: #{multi_dilate_local_attention.5} parent=5 // pred_check
      %p129 = pneg %p128
    $region14: #{multi_dilate_local_attention.5} parent=5 // pred_check_branch
      %131 = sbr.rel (%p129) target = $region16
    $region15: #{multi_dilate_local_attention.5} parent=5 // pred_region
      // Predicated region
      $region17: #{multi_dilate_local_attention.5} parent=15 // pred_check
        %p132 = pneg %p29
      $region18: #{multi_dilate_local_attention.5} parent=15 // pred_check_branch
        %134 = sbr.rel (%p132) target = $region20
      $region19: #{multi_dilate_local_attention.5} parent=15 // pred_region
        %p135 = scmp.lt.s32.totalorder %s9, 1
        %s136 = scalar_select %p135, %s9, 1
        %s137 = smul.addr %s136, 12
        %s138 = smul.addr %s137, 2
        %s139 = scalar_lea.vmem %s0, %s138
      $region20: #{multi_dilate_local_attention.5} parent=15 // pred_fallthru
        _
      // Predicated region
      $region21: #{multi_dilate_local_attention.5} parent=15 // pred_check
        %p140 = pneg %p55
      $region22: #{multi_dilate_local_attention.5} parent=15 // pred_check_branch
        %142 = sbr.rel (%p140) target = $region24
      $region23: #{multi_dilate_local_attention.5} parent=15 // pred_region
        %p143 = scmp.lt.s32.totalorder %s9, 1
        %s144 = scalar_select %p143, %s9, 1
        %s145 = smul.addr %s144, 16
        %s146 = smul.addr %s145, 2
        %s147 = scalar_lea.vmem %s1, %s146
      $region24: #{multi_dilate_local_attention.5} parent=15 // pred_fallthru
        _
      // Predicated region
      $region25: #{multi_dilate_local_attention.5} parent=15 // pred_check
        %p148 = pneg %p81
      $region26: #{multi_dilate_local_attention.5} parent=15 // pred_check_branch
        %150 = sbr.rel (%p148) target = $region28
      $region27: #{multi_dilate_local_attention.5} parent=15 // pred_region
        %p151 = scmp.lt.s32.totalorder %s9, 1
        %s152 = scalar_select %p151, %s9, 1
        %s153 = smul.addr %s152, 16
        %s154 = smul.addr %s153, 2
        %s155 = scalar_lea.vmem %s2, %s154
      $region28: #{multi_dilate_local_attention.5} parent=15 // pred_fallthru
        _
    $region16: #{multi_dilate_local_attention.5} parent=5 // pred_fallthru
      _
    %p156 = scmp.le.s32.totalorder 1, %s9
    %p157 = scmp.lt.s32.totalorder %s9, 3
    %p158 = pnand %p156, %p157
    %p159 = pneg %p158
    // Predicated region
    $region29: #{multi_dilate_local_attention.5} parent=5 // pred_check
      _
    $region30: #{multi_dilate_local_attention.5} parent=5 // pred_check_branch
      %161 = sbr.rel (%p158) target = $region32
    $region31: #{multi_dilate_local_attention.5} parent=5 // pred_region
      %s162 = ssub.s32 %s9, 1
      %p163 = scmp.lt.s32.totalorder %s14, 1
      %s164 = scalar_select %p163, %s14, 1
      %s165 = smul.addr %s164, 12
      %s166 = smul.addr %s165, 2
      %s167 = scalar_lea.vmem %s0, %s166
      %p168 = pneg %p35
      %p169 = pneg %p32
      %p170 = scmp.lt.s32.totalorder %s14, 1
      %s171 = scalar_select %p170, %s14, 1
      %s172 = smul.addr %s171, 16
      %s173 = smul.addr %s172, 2
      %s174 = scalar_lea.vmem %s1, %s173
      %p175 = pneg %p61
      %p176 = pneg %p58
      %p177 = scmp.lt.s32.totalorder %s14, 1
      %s178 = scalar_select %p177, %s14, 1
      %s179 = smul.addr %s178, 16
      %s180 = smul.addr %s179, 2
      %s181 = scalar_lea.vmem %s2, %s180
      %p182 = pneg %p87
      %p183 = pneg %p84
      %p184 = pneg %p113
      %p185 = pneg %p110
      %p186 = scmp.lt.s32.totalorder %s14, 1
      %s187 = scalar_select %p186, %s14, 1
      %s188 = smul.addr %s187, 12
      %s189 = smul.addr %s188, 2
      %s190 = scalar_lea.vmem %s3, %s189
      %p191 = scmp.lt.s32.totalorder %s14, 1
      %s192 = scalar_select %p191, %s14, 1
      %s193 = smul.addr %s192, 12
      %s194 = smul.addr %s193, 2
      %s195 = scalar_lea.vmem %s0, %s194
      %p196 = scmp.lt.s32.totalorder %s14, 1
      %s197 = scalar_select %p196, %s14, 1
      %s198 = smul.addr %s197, 16
      %s199 = smul.addr %s198, 2
      %s200 = scalar_lea.vmem %s1, %s199
      %p201 = scmp.lt.s32.totalorder %s14, 1
      %s202 = scalar_select %p201, %s14, 1
      %s203 = smul.addr %s202, 16
      %s204 = smul.addr %s203, 2
      %s205 = scalar_lea.vmem %s2, %s204
      %p206 = scmp.lt.s32.totalorder %s14, 1
      %s207 = scalar_select %p206, %s14, 1
      %s208 = smul.addr %s207, 12
      %s209 = smul.addr %s208, 2
      %s210 = scalar_lea.vmem %s3, %s209
      %v211 = vld [vmem:[%s195] sm:$0x3f]
      %v212 = vld [vmem:[%s195 + $0x6] sm:$0x3f]
      %v213 = vld [vmem:[%s195 + $0xc] sm:$0x3f]
      %v214 = vld [vmem:[%s195 + $0x12] sm:$0x3f]
      %v215 = vunpack.c.l.bf16 %v211
      %v216 = vunpack.c.h.bf16 %v211
      %v217 = vunpack.c.l.bf16 %v212
      %v218 = vunpack.c.h.bf16 %v212
      %v219 = vunpack.c.l.bf16 %v213
      %v220 = vunpack.c.h.bf16 %v213
      %v221 = vunpack.c.l.bf16 %v214
      %v222 = vunpack.c.h.bf16 %v214
      %v223 = vld [vmem:[%s200] sm:$0x3f]
      %v224 = vld [vmem:[%s200 + $0x8] sm:$0x3f]
      %v225 = vld [vmem:[%s200 + $0x10] sm:$0x3f]
      %v226 = vld [vmem:[%s200 + $0x18] sm:$0x3f]
      %v227 = vunpack.c.l.bf16 %v223
      %v228 = vunpack.c.h.bf16 %v223
      %v229 = vunpack.c.l.bf16 %v224
      %v230 = vunpack.c.h.bf16 %v224
      %v231 = vunpack.c.l.bf16 %v225
      %v232 = vunpack.c.h.bf16 %v225
      %v233 = vunpack.c.l.bf16 %v226
      %v234 = vunpack.c.h.bf16 %v226
      %v235 = vmul.f32 %v215, %v227
      %v236 = vmul.f32 %v216, %v228
      %v237 = vmul.f32 %v217, %v229
      %v238 = vmul.f32 %v218, %v230
      %v239 = vmul.f32 %v219, %v231
      %v240 = vmul.f32 %v220, %v232
      %v241 = vmul.f32 %v221, %v233
      %v242 = vmul.f32 %v222, %v234
      %v247 = vcombine.high %v235, %v235
      %v248 = vcombine.high %v237, %v237
      %v249 = vcombine.high %v239, %v239
      %v250 = vcombine.high %v241, %v241
      %vm255 = vcmask 1043456
      %v256 = vsel %vm255, %v235, 0.0
      %v257 = vrot.slane %v256, 4
      %v258 = vadd.f32 %v256, %v257
      %v259 = vrot.slane %v258, 2
      %v260 = vadd.f32 %v258, %v259
      %v261 = vrot.slane %v260, 1
      %v262 = vadd.f32 %v260, %v261
      %v263 = vsel %vm255, %v247, 0.0
      %v264 = vrot.slane %v263, 4
      %v265 = vadd.f32 %v263, %v264
      %v266 = vrot.slane %v265, 2
      %v267 = vadd.f32 %v265, %v266
      %v268 = vrot.slane %v267, 1
      %v269 = vadd.f32 %v267, %v268
      %vm270 = vcmask 519168
      %v271 = vsel %vm270, %v236, 0.0
      %v272 = vrot.slane %v271, 4
      %v273 = vadd.f32 %v271, %v272
      %v274 = vrot.slane %v273, 2
      %v275 = vadd.f32 %v273, %v274
      %v276 = vrot.slane %v275, 1
      %v277 = vadd.f32 %v275, %v276
      %v278 = vsel %vm255, %v237, 0.0
      %v279 = vrot.slane %v278, 4
      %v280 = vadd.f32 %v278, %v279
      %v281 = vrot.slane %v280, 2
      %v282 = vadd.f32 %v280, %v281
      %v283 = vrot.slane %v282, 1
      %v284 = vadd.f32 %v282, %v283
      %v285 = vsel %vm255, %v248, 0.0
      %v286 = vrot.slane %v285, 4
      %v287 = vadd.f32 %v285, %v286
      %v288 = vrot.slane %v287, 2
      %v289 = vadd.f32 %v287, %v288
      %v290 = vrot.slane %v289, 1
      %v291 = vadd.f32 %v289, %v290
      %v292 = vsel %vm270, %v238, 0.0
      %v293 = vrot.slane %v292, 4
      %v294 = vadd.f32 %v292, %v293
      %v295 = vrot.slane %v294, 2
      %v296 = vadd.f32 %v294, %v295
      %v297 = vrot.slane %v296, 1
      %v298 = vadd.f32 %v296, %v297
      %v299 = vsel %vm255, %v239, 0.0
      %v300 = vrot.slane %v299, 4
      %v301 = vadd.f32 %v299, %v300
      %v302 = vrot.slane %v301, 2
      %v303 = vadd.f32 %v301, %v302
      %v304 = vrot.slane %v303, 1
      %v305 = vadd.f32 %v303, %v304
      %v306 = vsel %vm255, %v249, 0.0
      %v307 = vrot.slane %v306, 4
      %v308 = vadd.f32 %v306, %v307
      %v309 = vrot.slane %v308, 2
      %v310 = vadd.f32 %v308, %v309
      %v311 = vrot.slane %v310, 1
      %v312 = vadd.f32 %v310, %v311
      %v313 = vsel %vm270, %v240, 0.0
      %v314 = vrot.slane %v313, 4
      %v315 = vadd.f32 %v313, %v314
      %v316 = vrot.slane %v315, 2
      %v317 = vadd.f32 %v315, %v316
      %v318 = vrot.slane %v317, 1
      %v319 = vadd.f32 %v317, %v318
      %v320 = vsel %vm255, %v241, 0.0
      %v321 = vrot.slane %v320, 4
      %v322 = vadd.f32 %v320, %v321
      %v323 = vrot.slane %v322, 2
      %v324 = vadd.f32 %v322, %v323
      %v325 = vrot.slane %v324, 1
      %v326 = vadd.f32 %v324, %v325
      %v327 = vsel %vm255, %v250, 0.0
      %v328 = vrot.slane %v327, 4
      %v329 = vadd.f32 %v327, %v328
      %v330 = vrot.slane %v329, 2
      %v331 = vadd.f32 %v329, %v330
      %v332 = vrot.slane %v331, 1
      %v333 = vadd.f32 %v331, %v332
      %v334 = vsel %vm270, %v242, 0.0
      %v335 = vrot.slane %v334, 4
      %v336 = vadd.f32 %v334, %v335
      %v337 = vrot.slane %v336, 2
      %v338 = vadd.f32 %v336, %v337
      %v339 = vrot.slane %v338, 1
      %v340 = vadd.f32 %v338, %v339
      %v353 = vcombine.low %v262, %v269
      %v355 = vunpack.c.l.s4 1966171168
      %v356 = vunpack.c.0.s8 %v355
      %v357 = vlaneseq
      %v358 = vshrl.u32 %v357, 7
      %v359 = vsub.s32 %v356, %v358
      %v360 = vrot.slane %v353, %v359
      %v362 = vunpack.c.l.s4 1966171168
      %v363 = vunpack.c.0.s8 %v362
      %v364 = vlaneseq
      %v365 = vshrl.u32 %v364, 7
      %v366 = vsub.s32 %v363, %v365
      %v367 = vrot.slane %v277, %v366
      %v368 = vcombine.low %v360, %v367
      %v370 = vunpack.c.l.s4 1966171168
      %v371 = vunpack.c.0.s8 %v370
      %v372 = vlaneseq
      %v373 = vshrl.u32 %v372, 7
      %v374 = vsub.s32 %v371, %v373
      %v375 = vrot.slane %v368, %v374
      %v376 = vcombine.low %v284, %v291
      %v378 = vunpack.c.l.s4 1966171168
      %v379 = vunpack.c.0.s8 %v378
      %v380 = vlaneseq
      %v381 = vshrl.u32 %v380, 7
      %v382 = vsub.s32 %v379, %v381
      %v383 = vrot.slane %v376, %v382
      %v385 = vunpack.c.l.s4 1966171168
      %v386 = vunpack.c.0.s8 %v385
      %v387 = vlaneseq
      %v388 = vshrl.u32 %v387, 7
      %v389 = vsub.s32 %v386, %v388
      %v390 = vrot.slane %v298, %v389
      %v391 = vcombine.low %v383, %v390
      %v393 = vunpack.c.l.s4 1966171168
      %v394 = vunpack.c.0.s8 %v393
      %v395 = vlaneseq
      %v396 = vshrl.u32 %v395, 7
      %v397 = vsub.s32 %v394, %v396
      %v398 = vrot.slane %v391, %v397
      %v399 = vcombine.low %v305, %v312
      %v401 = vunpack.c.l.s4 1966171168
      %v402 = vunpack.c.0.s8 %v401
      %v403 = vlaneseq
      %v404 = vshrl.u32 %v403, 7
      %v405 = vsub.s32 %v402, %v404
      %v406 = vrot.slane %v399, %v405
      %v408 = vunpack.c.l.s4 1966171168
      %v409 = vunpack.c.0.s8 %v408
      %v410 = vlaneseq
      %v411 = vshrl.u32 %v410, 7
      %v412 = vsub.s32 %v409, %v411
      %v413 = vrot.slane %v319, %v412
      %v414 = vcombine.low %v406, %v413
      %v416 = vunpack.c.l.s4 1966171168
      %v417 = vunpack.c.0.s8 %v416
      %v418 = vlaneseq
      %v419 = vshrl.u32 %v418, 7
      %v420 = vsub.s32 %v417, %v419
      %v421 = vrot.slane %v414, %v420
      %v422 = vcombine.low %v326, %v333
      %v424 = vunpack.c.l.s4 1966171168
      %v425 = vunpack.c.0.s8 %v424
      %v426 = vlaneseq
      %v427 = vshrl.u32 %v426, 7
      %v428 = vsub.s32 %v425, %v427
      %v429 = vrot.slane %v422, %v428
      %v431 = vunpack.c.l.s4 1966171168
      %v432 = vunpack.c.0.s8 %v431
      %v433 = vlaneseq
      %v434 = vshrl.u32 %v433, 7
      %v435 = vsub.s32 %v432, %v434
      %v436 = vrot.slane %v340, %v435
      %v437 = vcombine.low %v429, %v436
      %v439 = vunpack.c.l.s4 1966171168
      %v440 = vunpack.c.0.s8 %v439
      %v441 = vlaneseq
      %v442 = vshrl.u32 %v441, 7
      %v443 = vsub.s32 %v440, %v442
      %v444 = vrot.slane %v437, %v443
      %v449 = vlaneseq
      %vm450 = vcmp.ge.s32.totalorder %v449, 0
      %vm451 = vcmp.lt.s32.totalorder %v449, 320
      %vm452 = vmand %vm450, %vm451
      %453 = vst.msk [vmem:[#allocation2] sm:$0x7] %vm452, %v375
      %454 = vst.msk [vmem:[#allocation2 + $0x3] sm:$0x7] %vm452, %v398
      %455 = vst.msk [vmem:[#allocation2 + $0x6] sm:$0x7] %vm452, %v421
      %456 = vst.msk [vmem:[#allocation2 + $0x9] sm:$0x7] %vm452, %v444
      %v457 = vld [vmem:[%s200] sm:$0x3f]
      %v458 = vld [vmem:[%s200 + $0x8] sm:$0x3f]
      %v459 = vld [vmem:[%s200 + $0x10] sm:$0x3f]
      %v460 = vld [vmem:[%s200 + $0x18] sm:$0x3f]
      %v461 = vunpack.c.l.bf16 %v457
      %v462 = vunpack.c.h.bf16 %v457
      %v463 = vunpack.c.l.bf16 %v458
      %v464 = vunpack.c.h.bf16 %v458
      %v465 = vunpack.c.l.bf16 %v459
      %v466 = vunpack.c.h.bf16 %v459
      %v467 = vunpack.c.l.bf16 %v460
      %v468 = vunpack.c.h.bf16 %v460
      %477 = vrot.lane.b32.xlu0 %v461, 126
      %v478 = vpop.permute.xlu0 %477
      %479 = vrot.lane.b32.xlu0 %v462, 126
      %v480 = vpop.permute.xlu0 %479
      %481 = vrot.lane.b32.xlu0 %v463, 126
      %v482 = vpop.permute.xlu0 %481
      %483 = vrot.lane.b32.xlu0 %v464, 126
      %v484 = vpop.permute.xlu0 %483
      %485 = vrot.lane.b32.xlu0 %v465, 126
      %v486 = vpop.permute.xlu0 %485
      %487 = vrot.lane.b32.xlu0 %v466, 126
      %v488 = vpop.permute.xlu0 %487
      %489 = vrot.lane.b32.xlu0 %v467, 126
      %v490 = vpop.permute.xlu0 %489
      %491 = vrot.lane.b32.xlu0 %v468, 126
      %v492 = vpop.permute.xlu0 %491
      %v493 = vrot.slane %v478, 4
      %v494 = vrot.slane %v480, 4
      %v495 = vrot.slane %v482, 4
      %v496 = vrot.slane %v484, 4
      %v497 = vrot.slane %v486, 4
      %v498 = vrot.slane %v488, 4
      %v499 = vrot.slane %v490, 4
      %v500 = vrot.slane %v492, 4
      %v501 = vsel %vm255, %v493, %v494
      %vm502 = vcmask 1031168
      %v503 = vsel %vm502, %v478, %v501
      %v504 = vsel %vm255, %v495, %v496
      %v505 = vsel %vm502, %v482, %v504
      %v506 = vsel %vm255, %v497, %v498
      %v507 = vsel %vm502, %v486, %v506
      %v508 = vsel %vm255, %v499, %v500
      %v509 = vsel %vm502, %v490, %v508
      %v518 = vmul.f32 %v215, %v503
      %v519 = vmul.f32 %v216, %v480
      %v520 = vmul.f32 %v217, %v505
      %v521 = vmul.f32 %v218, %v484
      %v522 = vmul.f32 %v219, %v507
      %v523 = vmul.f32 %v220, %v488
      %v524 = vmul.f32 %v221, %v509
      %v525 = vmul.f32 %v222, %v492
      %v530 = vcombine.high %v518, %v518
      %v531 = vcombine.high %v520, %v520
      %v532 = vcombine.high %v522, %v522
      %v533 = vcombine.high %v524, %v524
      %v538 = vsel %vm255, %v518, 0.0
      %v539 = vrot.slane %v538, 4
      %v540 = vadd.f32 %v538, %v539
      %v541 = vrot.slane %v540, 2
      %v542 = vadd.f32 %v540, %v541
      %v543 = vrot.slane %v542, 1
      %v544 = vadd.f32 %v542, %v543
      %v545 = vsel %vm255, %v530, 0.0
      %v546 = vrot.slane %v545, 4
      %v547 = vadd.f32 %v545, %v546
      %v548 = vrot.slane %v547, 2
      %v549 = vadd.f32 %v547, %v548
      %v550 = vrot.slane %v549, 1
      %v551 = vadd.f32 %v549, %v550
      %v552 = vsel %vm270, %v519, 0.0
      %v553 = vrot.slane %v552, 4
      %v554 = vadd.f32 %v552, %v553
      %v555 = vrot.slane %v554, 2
      %v556 = vadd.f32 %v554, %v555
      %v557 = vrot.slane %v556, 1
      %v558 = vadd.f32 %v556, %v557
      %v559 = vsel %vm255, %v520, 0.0
      %v560 = vrot.slane %v559, 4
      %v561 = vadd.f32 %v559, %v560
      %v562 = vrot.slane %v561, 2
      %v563 = vadd.f32 %v561, %v562
      %v564 = vrot.slane %v563, 1
      %v565 = vadd.f32 %v563, %v564
      %v566 = vsel %vm255, %v531, 0.0
      %v567 = vrot.slane %v566, 4
      %v568 = vadd.f32 %v566, %v567
      %v569 = vrot.slane %v568, 2
      %v570 = vadd.f32 %v568, %v569
      %v571 = vrot.slane %v570, 1
      %v572 = vadd.f32 %v570, %v571
      %v573 = vsel %vm270, %v521, 0.0
      %v574 = vrot.slane %v573, 4
      %v575 = vadd.f32 %v573, %v574
      %v576 = vrot.slane %v575, 2
      %v577 = vadd.f32 %v575, %v576
      %v578 = vrot.slane %v577, 1
      %v579 = vadd.f32 %v577, %v578
      %v580 = vsel %vm255, %v522, 0.0
      %v581 = vrot.slane %v580, 4
      %v582 = vadd.f32 %v580, %v581
      %v583 = vrot.slane %v582, 2
      %v584 = vadd.f32 %v582, %v583
      %v585 = vrot.slane %v584, 1
      %v586 = vadd.f32 %v584, %v585
      %v587 = vsel %vm255, %v532, 0.0
      %v588 = vrot.slane %v587, 4
      %v589 = vadd.f32 %v587, %v588
      %v590 = vrot.slane %v589, 2
      %v591 = vadd.f32 %v589, %v590
      %v592 = vrot.slane %v591, 1
      %v593 = vadd.f32 %v591, %v592
      %v594 = vsel %vm270, %v523, 0.0
      %v595 = vrot.slane %v594, 4
      %v596 = vadd.f32 %v594, %v595
      %v597 = vrot.slane %v596, 2
      %v598 = vadd.f32 %v596, %v597
      %v599 = vrot.slane %v598, 1
      %v600 = vadd.f32 %v598, %v599
      %v601 = vsel %vm255, %v524, 0.0
      %v602 = vrot.slane %v601, 4
      %v603 = vadd.f32 %v601, %v602
      %v604 = vrot.slane %v603, 2
      %v605 = vadd.f32 %v603, %v604
      %v606 = vrot.slane %v605, 1
      %v607 = vadd.f32 %v605, %v606
      %v608 = vsel %vm255, %v533, 0.0
      %v609 = vrot.slane %v608, 4
      %v610 = vadd.f32 %v608, %v609
      %v611 = vrot.slane %v610, 2
      %v612 = vadd.f32 %v610, %v611
      %v613 = vrot.slane %v612, 1
      %v614 = vadd.f32 %v612, %v613
      %v615 = vsel %vm270, %v525, 0.0
      %v616 = vrot.slane %v615, 4
      %v617 = vadd.f32 %v615, %v616
      %v618 = vrot.slane %v617, 2
      %v619 = vadd.f32 %v617, %v618
      %v620 = vrot.slane %v619, 1
      %v621 = vadd.f32 %v619, %v620
      %v634 = vcombine.low %v544, %v551
      %v636 = vunpack.c.l.s4 1966171168
      %v637 = vunpack.c.0.s8 %v636
      %v638 = vlaneseq
      %v639 = vshrl.u32 %v638, 7
      %v640 = vsub.s32 %v637, %v639
      %v641 = vrot.slane %v634, %v640
      %v643 = vunpack.c.l.s4 1966171168
      %v644 = vunpack.c.0.s8 %v643
      %v645 = vlaneseq
      %v646 = vshrl.u32 %v645, 7
      %v647 = vsub.s32 %v644, %v646
      %v648 = vrot.slane %v558, %v647
      %v649 = vcombine.low %v641, %v648
      %v651 = vunpack.c.l.s4 1966171168
      %v652 = vunpack.c.0.s8 %v651
      %v653 = vlaneseq
      %v654 = vshrl.u32 %v653, 7
      %v655 = vsub.s32 %v652, %v654
      %v656 = vrot.slane %v649, %v655
      %v657 = vcombine.low %v565, %v572
      %v659 = vunpack.c.l.s4 1966171168
      %v660 = vunpack.c.0.s8 %v659
      %v661 = vlaneseq
      %v662 = vshrl.u32 %v661, 7
      %v663 = vsub.s32 %v660, %v662
      %v664 = vrot.slane %v657, %v663
      %v666 = vunpack.c.l.s4 1966171168
      %v667 = vunpack.c.0.s8 %v666
      %v668 = vlaneseq
      %v669 = vshrl.u32 %v668, 7
      %v670 = vsub.s32 %v667, %v669
      %v671 = vrot.slane %v579, %v670
      %v672 = vcombine.low %v664, %v671
      %v674 = vunpack.c.l.s4 1966171168
      %v675 = vunpack.c.0.s8 %v674
      %v676 = vlaneseq
      %v677 = vshrl.u32 %v676, 7
      %v678 = vsub.s32 %v675, %v677
      %v679 = vrot.slane %v672, %v678
      %v680 = vcombine.low %v586, %v593
      %v682 = vunpack.c.l.s4 1966171168
      %v683 = vunpack.c.0.s8 %v682
      %v684 = vlaneseq
      %v685 = vshrl.u32 %v684, 7
      %v686 = vsub.s32 %v683, %v685
      %v687 = vrot.slane %v680, %v686
      %v689 = vunpack.c.l.s4 1966171168
      %v690 = vunpack.c.0.s8 %v689
      %v691 = vlaneseq
      %v692 = vshrl.u32 %v691, 7
      %v693 = vsub.s32 %v690, %v692
      %v694 = vrot.slane %v600, %v693
      %v695 = vcombine.low %v687, %v694
      %v697 = vunpack.c.l.s4 1966171168
      %v698 = vunpack.c.0.s8 %v697
      %v699 = vlaneseq
      %v700 = vshrl.u32 %v699, 7
      %v701 = vsub.s32 %v698, %v700
      %v702 = vrot.slane %v695, %v701
      %v703 = vcombine.low %v607, %v614
      %v705 = vunpack.c.l.s4 1966171168
      %v706 = vunpack.c.0.s8 %v705
      %v707 = vlaneseq
      %v708 = vshrl.u32 %v707, 7
      %v709 = vsub.s32 %v706, %v708
      %v710 = vrot.slane %v703, %v709
      %v712 = vunpack.c.l.s4 1966171168
      %v713 = vunpack.c.0.s8 %v712
      %v714 = vlaneseq
      %v715 = vshrl.u32 %v714, 7
      %v716 = vsub.s32 %v713, %v715
      %v717 = vrot.slane %v621, %v716
      %v718 = vcombine.low %v710, %v717
      %v720 = vunpack.c.l.s4 1966171168
      %v721 = vunpack.c.0.s8 %v720
      %v722 = vlaneseq
      %v723 = vshrl.u32 %v722, 7
      %v724 = vsub.s32 %v721, %v723
      %v725 = vrot.slane %v718, %v724
      %s730 = scalar_lea.vmem [#allocation2], 12
      %731 = vst.msk [vmem:[%s730] sm:$0x7] %vm452, %v656
      %732 = vst.msk [vmem:[%s730 + $0x3] sm:$0x7] %vm452, %v679
      %733 = vst.msk [vmem:[%s730 + $0x6] sm:$0x7] %vm452, %v702
      %734 = vst.msk [vmem:[%s730 + $0x9] sm:$0x7] %vm452, %v725
      %v735 = vmax.f32 %v262, %v544
      %v736 = vmax.f32 %v269, %v551
      %v737 = vmax.f32 %v277, %v558
      %v738 = vmax.f32 %v284, %v565
      %v739 = vmax.f32 %v291, %v572
      %v740 = vmax.f32 %v298, %v579
      %v741 = vmax.f32 %v305, %v586
      %v742 = vmax.f32 %v312, %v593
      %v743 = vmax.f32 %v319, %v600
      %v744 = vmax.f32 %v326, %v607
      %v745 = vmax.f32 %v333, %v614
      %v746 = vmax.f32 %v340, %v621
      %v747 = vld [vmem:[%s200] sm:$0x3f]
      %v748 = vld [vmem:[%s200 + $0x8] sm:$0x3f]
      %v749 = vld [vmem:[%s200 + $0x10] sm:$0x3f]
      %v750 = vld [vmem:[%s200 + $0x18] sm:$0x3f]
      %v751 = vunpack.c.l.bf16 %v747
      %v752 = vunpack.c.h.bf16 %v747
      %v753 = vunpack.c.l.bf16 %v748
      %v754 = vunpack.c.h.bf16 %v748
      %v755 = vunpack.c.l.bf16 %v749
      %v756 = vunpack.c.h.bf16 %v749
      %v757 = vunpack.c.l.bf16 %v750
      %v758 = vunpack.c.h.bf16 %v750
      %767 = vrot.lane.b32.xlu0 %v751, 124
      %v768 = vpop.permute.xlu0 %767
      %769 = vrot.lane.b32.xlu0 %v752, 124
      %v770 = vpop.permute.xlu0 %769
      %771 = vrot.lane.b32.xlu0 %v753, 124
      %v772 = vpop.permute.xlu0 %771
      %773 = vrot.lane.b32.xlu0 %v754, 124
      %v774 = vpop.permute.xlu0 %773
      %775 = vrot.lane.b32.xlu0 %v755, 124
      %v776 = vpop.permute.xlu0 %775
      %777 = vrot.lane.b32.xlu0 %v756, 124
      %v778 = vpop.permute.xlu0 %777
      %779 = vrot.lane.b32.xlu0 %v757, 124
      %v780 = vpop.permute.xlu0 %779
      %781 = vrot.lane.b32.xlu0 %v758, 124
      %v782 = vpop.permute.xlu0 %781
      %v783 = vrot.slane %v768, 4
      %v784 = vrot.slane %v770, 4
      %v785 = vrot.slane %v772, 4
      %v786 = vrot.slane %v774, 4
      %v787 = vrot.slane %v776, 4
      %v788 = vrot.slane %v778, 4
      %v789 = vrot.slane %v780, 4
      %v790 = vrot.slane %v782, 4
      %v791 = vsel %vm255, %v783, %v784
      %vm792 = vcmask 1014784
      %v793 = vsel %vm792, %v768, %v791
      %v794 = vsel %vm255, %v785, %v786
      %v795 = vsel %vm792, %v772, %v794
      %v796 = vsel %vm255, %v787, %v788
      %v797 = vsel %vm792, %v776, %v796
      %v798 = vsel %vm255, %v789, %v790
      %v799 = vsel %vm792, %v780, %v798
      %v808 = vmul.f32 %v215, %v793
      %v809 = vmul.f32 %v216, %v770
      %v810 = vmul.f32 %v217, %v795
      %v811 = vmul.f32 %v218, %v774
      %v812 = vmul.f32 %v219, %v797
      %v813 = vmul.f32 %v220, %v778
      %v814 = vmul.f32 %v221, %v799
      %v815 = vmul.f32 %v222, %v782
      %v820 = vcombine.high %v808, %v808
      %v821 = vcombine.high %v810, %v810
      %v822 = vcombine.high %v812, %v812
      %v823 = vcombine.high %v814, %v814
      %v828 = vsel %vm255, %v808, 0.0
      %v829 = vrot.slane %v828, 4
      %v830 = vadd.f32 %v828, %v829
      %v831 = vrot.slane %v830, 2
      %v832 = vadd.f32 %v830, %v831
      %v833 = vrot.slane %v832, 1
      %v834 = vadd.f32 %v832, %v833
      %v835 = vsel %vm255, %v820, 0.0
      %v836 = vrot.slane %v835, 4
      %v837 = vadd.f32 %v835, %v836
      %v838 = vrot.slane %v837, 2
      %v839 = vadd.f32 %v837, %v838
      %v840 = vrot.slane %v839, 1
      %v841 = vadd.f32 %v839, %v840
      %v842 = vsel %vm270, %v809, 0.0
      %v843 = vrot.slane %v842, 4
      %v844 = vadd.f32 %v842, %v843
      %v845 = vrot.slane %v844, 2
      %v846 = vadd.f32 %v844, %v845
      %v847 = vrot.slane %v846, 1
      %v848 = vadd.f32 %v846, %v847
      %v849 = vsel %vm255, %v810, 0.0
      %v850 = vrot.slane %v849, 4
      %v851 = vadd.f32 %v849, %v850
      %v852 = vrot.slane %v851, 2
      %v853 = vadd.f32 %v851, %v852
      %v854 = vrot.slane %v853, 1
      %v855 = vadd.f32 %v853, %v854
      %v856 = vsel %vm255, %v821, 0.0
      %v857 = vrot.slane %v856, 4
      %v858 = vadd.f32 %v856, %v857
      %v859 = vrot.slane %v858, 2
      %v860 = vadd.f32 %v858, %v859
      %v861 = vrot.slane %v860, 1
      %v862 = vadd.f32 %v860, %v861
      %v863 = vsel %vm270, %v811, 0.0
      %v864 = vrot.slane %v863, 4
      %v865 = vadd.f32 %v863, %v864
      %v866 = vrot.slane %v865, 2
      %v867 = vadd.f32 %v865, %v866
      %v868 = vrot.slane %v867, 1
      %v869 = vadd.f32 %v867, %v868
      %v870 = vsel %vm255, %v812, 0.0
      %v871 = vrot.slane %v870, 4
      %v872 = vadd.f32 %v870, %v871
      %v873 = vrot.slane %v872, 2
      %v874 = vadd.f32 %v872, %v873
      %v875 = vrot.slane %v874, 1
      %v876 = vadd.f32 %v874, %v875
      %v877 = vsel %vm255, %v822, 0.0
      %v878 = vrot.slane %v877, 4
      %v879 = vadd.f32 %v877, %v878
      %v880 = vrot.slane %v879, 2
      %v881 = vadd.f32 %v879, %v880
      %v882 = vrot.slane %v881, 1
      %v883 = vadd.f32 %v881, %v882
      %v884 = vsel %vm270, %v813, 0.0
      %v885 = vrot.slane %v884, 4
      %v886 = vadd.f32 %v884, %v885
      %v887 = vrot.slane %v886, 2
      %v888 = vadd.f32 %v886, %v887
      %v889 = vrot.slane %v888, 1
      %v890 = vadd.f32 %v888, %v889
      %v891 = vsel %vm255, %v814, 0.0
      %v892 = vrot.slane %v891, 4
      %v893 = vadd.f32 %v891, %v892
      %v894 = vrot.slane %v893, 2
      %v895 = vadd.f32 %v893, %v894
      %v896 = vrot.slane %v895, 1
      %v897 = vadd.f32 %v895, %v896
      %v898 = vsel %vm255, %v823, 0.0
      %v899 = vrot.slane %v898, 4
      %v900 = vadd.f32 %v898, %v899
      %v901 = vrot.slane %v900, 2
      %v902 = vadd.f32 %v900, %v901
      %v903 = vrot.slane %v902, 1
      %v904 = vadd.f32 %v902, %v903
      %v905 = vsel %vm270, %v815, 0.0
      %v906 = vrot.slane %v905, 4
      %v907 = vadd.f32 %v905, %v906
      %v908 = vrot.slane %v907, 2
      %v909 = vadd.f32 %v907, %v908
      %v910 = vrot.slane %v909, 1
      %v911 = vadd.f32 %v909, %v910
      %v924 = vcombine.low %v834, %v841
      %v926 = vunpack.c.l.s4 1966171168
      %v927 = vunpack.c.0.s8 %v926
      %v928 = vlaneseq
      %v929 = vshrl.u32 %v928, 7
      %v930 = vsub.s32 %v927, %v929
      %v931 = vrot.slane %v924, %v930
      %v933 = vunpack.c.l.s4 1966171168
      %v934 = vunpack.c.0.s8 %v933
      %v935 = vlaneseq
      %v936 = vshrl.u32 %v935, 7
      %v937 = vsub.s32 %v934, %v936
      %v938 = vrot.slane %v848, %v937
      %v939 = vcombine.low %v931, %v938
      %v941 = vunpack.c.l.s4 1966171168
      %v942 = vunpack.c.0.s8 %v941
      %v943 = vlaneseq
      %v944 = vshrl.u32 %v943, 7
      %v945 = vsub.s32 %v942, %v944
      %v946 = vrot.slane %v939, %v945
      %v947 = vcombine.low %v855, %v862
      %v949 = vunpack.c.l.s4 1966171168
      %v950 = vunpack.c.0.s8 %v949
      %v951 = vlaneseq
      %v952 = vshrl.u32 %v951, 7
      %v953 = vsub.s32 %v950, %v952
      %v954 = vrot.slane %v947, %v953
      %v956 = vunpack.c.l.s4 1966171168
      %v957 = vunpack.c.0.s8 %v956
      %v958 = vlaneseq
      %v959 = vshrl.u32 %v958, 7
      %v960 = vsub.s32 %v957, %v959
      %v961 = vrot.slane %v869, %v960
      %v962 = vcombine.low %v954, %v961
      %v964 = vunpack.c.l.s4 1966171168
      %v965 = vunpack.c.0.s8 %v964
      %v966 = vlaneseq
      %v967 = vshrl.u32 %v966, 7
      %v968 = vsub.s32 %v965, %v967
      %v969 = vrot.slane %v962, %v968
      %v970 = vcombine.low %v876, %v883
      %v972 = vunpack.c.l.s4 1966171168
      %v973 = vunpack.c.0.s8 %v972
      %v974 = vlaneseq
      %v975 = vshrl.u32 %v974, 7
      %v976 = vsub.s32 %v973, %v975
      %v977 = vrot.slane %v970, %v976
      %v979 = vunpack.c.l.s4 1966171168
      %v980 = vunpack.c.0.s8 %v979
      %v981 = vlaneseq
      %v982 = vshrl.u32 %v981, 7
      %v983 = vsub.s32 %v980, %v982
      %v984 = vrot.slane %v890, %v983
      %v985 = vcombine.low %v977, %v984
      %v987 = vunpack.c.l.s4 1966171168
      %v988 = vunpack.c.0.s8 %v987
      %v989 = vlaneseq
      %v990 = vshrl.u32 %v989, 7
      %v991 = vsub.s32 %v988, %v990
      %v992 = vrot.slane %v985, %v991
      %v993 = vcombine.low %v897, %v904
      %v995 = vunpack.c.l.s4 1966171168
      %v996 = vunpack.c.0.s8 %v995
      %v997 = vlaneseq
      %v998 = vshrl.u32 %v997, 7
      %v999 = vsub.s32 %v996, %v998
      %v1000 = vrot.slane %v993, %v999
      %v1002 = vunpack.c.l.s4 1966171168
      %v1003 = vunpack.c.0.s8 %v1002
      %v1004 = vlaneseq
      %v1005 = vshrl.u32 %v1004, 7
      %v1006 = vsub.s32 %v1003, %v1005
      %v1007 = vrot.slane %v911, %v1006
      %v1008 = vcombine.low %v1000, %v1007
      %v1010 = vunpack.c.l.s4 1966171168
      %v1011 = vunpack.c.0.s8 %v1010
      %v1012 = vlaneseq
      %v1013 = vshrl.u32 %v1012, 7
      %v1014 = vsub.s32 %v1011, %v1013
      %v1015 = vrot.slane %v1008, %v1014
      %s1020 = scalar_lea.vmem [#allocation2], 24
      %1021 = vst.msk [vmem:[%s1020] sm:$0x7] %vm452, %v946
      %1022 = vst.msk [vmem:[%s1020 + $0x3] sm:$0x7] %vm452, %v969
      %1023 = vst.msk [vmem:[%s1020 + $0x6] sm:$0x7] %vm452, %v992
      %1024 = vst.msk [vmem:[%s1020 + $0x9] sm:$0x7] %vm452, %v1015
      %v1025 = vmax.f32 %v735, %v834
      %v1026 = vmax.f32 %v736, %v841
      %v1027 = vmax.f32 %v737, %v848
      %v1028 = vmax.f32 %v738, %v855
      %v1029 = vmax.f32 %v739, %v862
      %v1030 = vmax.f32 %v740, %v869
      %v1031 = vmax.f32 %v741, %v876
      %v1032 = vmax.f32 %v742, %v883
      %v1033 = vmax.f32 %v743, %v890
      %v1034 = vmax.f32 %v744, %v897
      %v1035 = vmax.f32 %v745, %v904
      %v1036 = vmax.f32 %v746, %v911
      %v1037 = vld [vmem:[%s200] sm:$0x3f]
      %v1038 = vld [vmem:[%s200 + $0x8] sm:$0x3f]
      %v1039 = vld [vmem:[%s200 + $0x10] sm:$0x3f]
      %v1040 = vld [vmem:[%s200 + $0x18] sm:$0x3f]
      %v1041 = vunpack.c.l.bf16 %v1037
      %v1042 = vunpack.c.h.bf16 %v1037
      %v1043 = vunpack.c.l.bf16 %v1038
      %v1044 = vunpack.c.h.bf16 %v1038
      %v1045 = vunpack.c.l.bf16 %v1039
      %v1046 = vunpack.c.h.bf16 %v1039
      %v1047 = vunpack.c.l.bf16 %v1040
      %v1048 = vunpack.c.h.bf16 %v1040
      %1057 = vrot.lane.b32.xlu0 %v1041, 88
      %v1058 = vpop.permute.xlu0 %1057
      %1059 = vrot.lane.b32.xlu0 %v1042, 88
      %v1060 = vpop.permute.xlu0 %1059
      %1061 = vrot.lane.b32.xlu0 %v1043, 88
      %v1062 = vpop.permute.xlu0 %1061
      %1063 = vrot.lane.b32.xlu0 %v1044, 88
      %v1064 = vpop.permute.xlu0 %1063
      %1065 = vrot.lane.b32.xlu0 %v1045, 88
      %v1066 = vpop.permute.xlu0 %1065
      %1067 = vrot.lane.b32.xlu0 %v1046, 88
      %v1068 = vpop.permute.xlu0 %1067
      %1069 = vrot.lane.b32.xlu0 %v1047, 88
      %v1070 = vpop.permute.xlu0 %1069
      %1071 = vrot.lane.b32.xlu0 %v1048, 88
      %v1072 = vpop.permute.xlu0 %1071
      %v1073 = vrot.slane %v1058, 4
      %v1074 = vrot.slane %v1060, 4
      %v1075 = vrot.slane %v1062, 4
      %v1076 = vrot.slane %v1064, 4
      %v1077 = vrot.slane %v1066, 4
      %v1078 = vrot.slane %v1068, 4
      %v1079 = vrot.slane %v1070, 4
      %v1080 = vrot.slane %v1072, 4
      %v1081 = vsel %vm255, %v1073, %v1074
      %vm1082 = vcmask 719872
      %v1083 = vsel %vm1082, %v1058, %v1081
      %v1084 = vsel %vm255, %v1075, %v1076
      %v1085 = vsel %vm1082, %v1062, %v1084
      %v1086 = vsel %vm255, %v1077, %v1078
      %v1087 = vsel %vm1082, %v1066, %v1086
      %v1088 = vsel %vm255, %v1079, %v1080
      %v1089 = vsel %vm1082, %v1070, %v1088
      %v1098 = vmul.f32 %v215, %v1083
      %v1099 = vmul.f32 %v216, %v1060
      %v1100 = vmul.f32 %v217, %v1085
      %v1101 = vmul.f32 %v218, %v1064
      %v1102 = vmul.f32 %v219, %v1087
      %v1103 = vmul.f32 %v220, %v1068
      %v1104 = vmul.f32 %v221, %v1089
      %v1105 = vmul.f32 %v222, %v1072
      %v1110 = vcombine.high %v1098, %v1098
      %v1111 = vcombine.high %v1100, %v1100
      %v1112 = vcombine.high %v1102, %v1102
      %v1113 = vcombine.high %v1104, %v1104
      %v1118 = vsel %vm255, %v1098, 0.0
      %v1119 = vrot.slane %v1118, 4
      %v1120 = vadd.f32 %v1118, %v1119
      %v1121 = vrot.slane %v1120, 2
      %v1122 = vadd.f32 %v1120, %v1121
      %v1123 = vrot.slane %v1122, 1
      %v1124 = vadd.f32 %v1122, %v1123
      %v1125 = vsel %vm255, %v1110, 0.0
      %v1126 = vrot.slane %v1125, 4
      %v1127 = vadd.f32 %v1125, %v1126
      %v1128 = vrot.slane %v1127, 2
      %v1129 = vadd.f32 %v1127, %v1128
      %v1130 = vrot.slane %v1129, 1
      %v1131 = vadd.f32 %v1129, %v1130
      %v1132 = vsel %vm270, %v1099, 0.0
      %v1133 = vrot.slane %v1132, 4
      %v1134 = vadd.f32 %v1132, %v1133
      %v1135 = vrot.slane %v1134, 2
      %v1136 = vadd.f32 %v1134, %v1135
      %v1137 = vrot.slane %v1136, 1
      %v1138 = vadd.f32 %v1136, %v1137
      %v1139 = vsel %vm255, %v1100, 0.0
      %v1140 = vrot.slane %v1139, 4
      %v1141 = vadd.f32 %v1139, %v1140
      %v1142 = vrot.slane %v1141, 2
      %v1143 = vadd.f32 %v1141, %v1142
      %v1144 = vrot.slane %v1143, 1
      %v1145 = vadd.f32 %v1143, %v1144
      %v1146 = vsel %vm255, %v1111, 0.0
      %v1147 = vrot.slane %v1146, 4
      %v1148 = vadd.f32 %v1146, %v1147
      %v1149 = vrot.slane %v1148, 2
      %v1150 = vadd.f32 %v1148, %v1149
      %v1151 = vrot.slane %v1150, 1
      %v1152 = vadd.f32 %v1150, %v1151
      %v1153 = vsel %vm270, %v1101, 0.0
      %v1154 = vrot.slane %v1153, 4
      %v1155 = vadd.f32 %v1153, %v1154
      %v1156 = vrot.slane %v1155, 2
      %v1157 = vadd.f32 %v1155, %v1156
      %v1158 = vrot.slane %v1157, 1
      %v1159 = vadd.f32 %v1157, %v1158
      %v1160 = vsel %vm255, %v1102, 0.0
      %v1161 = vrot.slane %v1160, 4
      %v1162 = vadd.f32 %v1160, %v1161
      %v1163 = vrot.slane %v1162, 2
      %v1164 = vadd.f32 %v1162, %v1163
      %v1165 = vrot.slane %v1164, 1
      %v1166 = vadd.f32 %v1164, %v1165
      %v1167 = vsel %vm255, %v1112, 0.0
      %v1168 = vrot.slane %v1167, 4
      %v1169 = vadd.f32 %v1167, %v1168
      %v1170 = vrot.slane %v1169, 2
      %v1171 = vadd.f32 %v1169, %v1170
      %v1172 = vrot.slane %v1171, 1
      %v1173 = vadd.f32 %v1171, %v1172
      %v1174 = vsel %vm270, %v1103, 0.0
      %v1175 = vrot.slane %v1174, 4
      %v1176 = vadd.f32 %v1174, %v1175
      %v1177 = vrot.slane %v1176, 2
      %v1178 = vadd.f32 %v1176, %v1177
      %v1179 = vrot.slane %v1178, 1
      %v1180 = vadd.f32 %v1178, %v1179
      %v1181 = vsel %vm255, %v1104, 0.0
      %v1182 = vrot.slane %v1181, 4
      %v1183 = vadd.f32 %v1181, %v1182
      %v1184 = vrot.slane %v1183, 2
      %v1185 = vadd.f32 %v1183, %v1184
      %v1186 = vrot.slane %v1185, 1
      %v1187 = vadd.f32 %v1185, %v1186
      %v1188 = vsel %vm255, %v1113, 0.0
      %v1189 = vrot.slane %v1188, 4
      %v1190 = vadd.f32 %v1188, %v1189
      %v1191 = vrot.slane %v1190, 2
      %v1192 = vadd.f32 %v1190, %v1191
      %v1193 = vrot.slane %v1192, 1
      %v1194 = vadd.f32 %v1192, %v1193
      %v1195 = vsel %vm270, %v1105, 0.0
      %v1196 = vrot.slane %v1195, 4
      %v1197 = vadd.f32 %v1195, %v1196
      %v1198 = vrot.slane %v1197, 2
      %v1199 = vadd.f32 %v1197, %v1198
      %v1200 = vrot.slane %v1199, 1
      %v1201 = vadd.f32 %v1199, %v1200
      %v1214 = vcombine.low %v1124, %v1131
      %v1216 = vunpack.c.l.s4 1966171168
      %v1217 = vunpack.c.0.s8 %v1216
      %v1218 = vlaneseq
      %v1219 = vshrl.u32 %v1218, 7
      %v1220 = vsub.s32 %v1217, %v1219
      %v1221 = vrot.slane %v1214, %v1220
      %v1223 = vunpack.c.l.s4 1966171168
      %v1224 = vunpack.c.0.s8 %v1223
      %v1225 = vlaneseq
      %v1226 = vshrl.u32 %v1225, 7
      %v1227 = vsub.s32 %v1224, %v1226
      %v1228 = vrot.slane %v1138, %v1227
      %v1229 = vcombine.low %v1221, %v1228
      %v1231 = vunpack.c.l.s4 1966171168
      %v1232 = vunpack.c.0.s8 %v1231
      %v1233 = vlaneseq
      %v1234 = vshrl.u32 %v1233, 7
      %v1235 = vsub.s32 %v1232, %v1234
      %v1236 = vrot.slane %v1229, %v1235
      %v1237 = vcombine.low %v1145, %v1152
      %v1239 = vunpack.c.l.s4 1966171168
      %v1240 = vunpack.c.0.s8 %v1239
      %v1241 = vlaneseq
      %v1242 = vshrl.u32 %v1241, 7
      %v1243 = vsub.s32 %v1240, %v1242
      %v1244 = vrot.slane %v1237, %v1243
      %v1246 = vunpack.c.l.s4 1966171168
      %v1247 = vunpack.c.0.s8 %v1246
      %v1248 = vlaneseq
      %v1249 = vshrl.u32 %v1248, 7
      %v1250 = vsub.s32 %v1247, %v1249
      %v1251 = vrot.slane %v1159, %v1250
      %v1252 = vcombine.low %v1244, %v1251
      %v1254 = vunpack.c.l.s4 1966171168
      %v1255 = vunpack.c.0.s8 %v1254
      %v1256 = vlaneseq
      %v1257 = vshrl.u32 %v1256, 7
      %v1258 = vsub.s32 %v1255, %v1257
      %v1259 = vrot.slane %v1252, %v1258
      %v1260 = vcombine.low %v1166, %v1173
      %v1262 = vunpack.c.l.s4 1966171168
      %v1263 = vunpack.c.0.s8 %v1262
      %v1264 = vlaneseq
      %v1265 = vshrl.u32 %v1264, 7
      %v1266 = vsub.s32 %v1263, %v1265
      %v1267 = vrot.slane %v1260, %v1266
      %v1269 = vunpack.c.l.s4 1966171168
      %v1270 = vunpack.c.0.s8 %v1269
      %v1271 = vlaneseq
      %v1272 = vshrl.u32 %v1271, 7
      %v1273 = vsub.s32 %v1270, %v1272
      %v1274 = vrot.slane %v1180, %v1273
      %v1275 = vcombine.low %v1267, %v1274
      %v1277 = vunpack.c.l.s4 1966171168
      %v1278 = vunpack.c.0.s8 %v1277
      %v1279 = vlaneseq
      %v1280 = vshrl.u32 %v1279, 7
      %v1281 = vsub.s32 %v1278, %v1280
      %v1282 = vrot.slane %v1275, %v1281
      %v1283 = vcombine.low %v1187, %v1194
      %v1285 = vunpack.c.l.s4 1966171168
      %v1286 = vunpack.c.0.s8 %v1285
      %v1287 = vlaneseq
      %v1288 = vshrl.u32 %v1287, 7
      %v1289 = vsub.s32 %v1286, %v1288
      %v1290 = vrot.slane %v1283, %v1289
      %v1292 = vunpack.c.l.s4 1966171168
      %v1293 = vunpack.c.0.s8 %v1292
      %v1294 = vlaneseq
      %v1295 = vshrl.u32 %v1294, 7
      %v1296 = vsub.s32 %v1293, %v1295
      %v1297 = vrot.slane %v1201, %v1296
      %v1298 = vcombine.low %v1290, %v1297
      %v1300 = vunpack.c.l.s4 1966171168
      %v1301 = vunpack.c.0.s8 %v1300
      %v1302 = vlaneseq
      %v1303 = vshrl.u32 %v1302, 7
      %v1304 = vsub.s32 %v1301, %v1303
      %v1305 = vrot.slane %v1298, %v1304
      %s1310 = scalar_lea.vmem [#allocation2], 36
      %1311 = vst.msk [vmem:[%s1310] sm:$0x7] %vm452, %v1236
      %1312 = vst.msk [vmem:[%s1310 + $0x3] sm:$0x7] %vm452, %v1259
      %1313 = vst.msk [vmem:[%s1310 + $0x6] sm:$0x7] %vm452, %v1282
      %1314 = vst.msk [vmem:[%s1310 + $0x9] sm:$0x7] %vm452, %v1305
      %v1315 = vmax.f32 %v1025, %v1124
      %v1316 = vmax.f32 %v1026, %v1131
      %v1317 = vmax.f32 %v1027, %v1138
      %v1318 = vmax.f32 %v1028, %v1145
      %v1319 = vmax.f32 %v1029, %v1152
      %v1320 = vmax.f32 %v1030, %v1159
      %v1321 = vmax.f32 %v1031, %v1166
      %v1322 = vmax.f32 %v1032, %v1173
      %v1323 = vmax.f32 %v1033, %v1180
      %v1324 = vmax.f32 %v1034, %v1187
      %v1325 = vmax.f32 %v1035, %v1194
      %v1326 = vmax.f32 %v1036, %v1201
      %v1327 = vld [vmem:[%s200] sm:$0x3f]
      %v1328 = vld [vmem:[%s200 + $0x8] sm:$0x3f]
      %v1329 = vld [vmem:[%s200 + $0x10] sm:$0x3f]
      %v1330 = vld [vmem:[%s200 + $0x18] sm:$0x3f]
      %v1331 = vunpack.c.l.bf16 %v1327
      %v1332 = vunpack.c.h.bf16 %v1327
      %v1333 = vunpack.c.l.bf16 %v1328
      %v1334 = vunpack.c.h.bf16 %v1328
      %v1335 = vunpack.c.l.bf16 %v1329
      %v1336 = vunpack.c.h.bf16 %v1329
      %v1337 = vunpack.c.l.bf16 %v1330
      %v1338 = vunpack.c.h.bf16 %v1330
      %1347 = vrot.lane.b32.xlu0 %v1331, 86
      %v1348 = vpop.permute.xlu0 %1347
      %1349 = vrot.lane.b32.xlu0 %v1332, 86
      %v1350 = vpop.permute.xlu0 %1349
      %1351 = vrot.lane.b32.xlu0 %v1333, 86
      %v1352 = vpop.permute.xlu0 %1351
      %1353 = vrot.lane.b32.xlu0 %v1334, 86
      %v1354 = vpop.permute.xlu0 %1353
      %1355 = vrot.lane.b32.xlu0 %v1335, 86
      %v1356 = vpop.permute.xlu0 %1355
      %1357 = vrot.lane.b32.xlu0 %v1336, 86
      %v1358 = vpop.permute.xlu0 %1357
      %1359 = vrot.lane.b32.xlu0 %v1337, 86
      %v1360 = vpop.permute.xlu0 %1359
      %1361 = vrot.lane.b32.xlu0 %v1338, 86
      %v1362 = vpop.permute.xlu0 %1361
      %v1363 = vrot.slane %v1348, 4
      %v1364 = vrot.slane %v1350, 4
      %v1365 = vrot.slane %v1352, 4
      %v1366 = vrot.slane %v1354, 4
      %v1367 = vrot.slane %v1356, 4
      %v1368 = vrot.slane %v1358, 4
      %v1369 = vrot.slane %v1360, 4
      %v1370 = vrot.slane %v1362, 4
      %v1371 = vsel %vm255, %v1363, %v1364
      %vm1372 = vcmask 703488
      %v1373 = vsel %vm1372, %v1348, %v1371
      %v1374 = vsel %vm255, %v1365, %v1366
      %v1375 = vsel %vm1372, %v1352, %v1374
      %v1376 = vsel %vm255, %v1367, %v1368
      %v1377 = vsel %vm1372, %v1356, %v1376
      %v1378 = vsel %vm255, %v1369, %v1370
      %v1379 = vsel %vm1372, %v1360, %v1378
      %v1388 = vmul.f32 %v215, %v1373
      %v1389 = vmul.f32 %v216, %v1350
      %v1390 = vmul.f32 %v217, %v1375
      %v1391 = vmul.f32 %v218, %v1354
      %v1392 = vmul.f32 %v219, %v1377
      %v1393 = vmul.f32 %v220, %v1358
      %v1394 = vmul.f32 %v221, %v1379
      %v1395 = vmul.f32 %v222, %v1362
      %v1400 = vcombine.high %v1388, %v1388
      %v1401 = vcombine.high %v1390, %v1390
      %v1402 = vcombine.high %v1392, %v1392
      %v1403 = vcombine.high %v1394, %v1394
      %v1408 = vsel %vm255, %v1388, 0.0
      %v1409 = vrot.slane %v1408, 4
      %v1410 = vadd.f32 %v1408, %v1409
      %v1411 = vrot.slane %v1410, 2
      %v1412 = vadd.f32 %v1410, %v1411
      %v1413 = vrot.slane %v1412, 1
      %v1414 = vadd.f32 %v1412, %v1413
      %v1415 = vsel %vm255, %v1400, 0.0
      %v1416 = vrot.slane %v1415, 4
      %v1417 = vadd.f32 %v1415, %v1416
      %v1418 = vrot.slane %v1417, 2
      %v1419 = vadd.f32 %v1417, %v1418
      %v1420 = vrot.slane %v1419, 1
      %v1421 = vadd.f32 %v1419, %v1420
      %v1422 = vsel %vm270, %v1389, 0.0
      %v1423 = vrot.slane %v1422, 4
      %v1424 = vadd.f32 %v1422, %v1423
      %v1425 = vrot.slane %v1424, 2
      %v1426 = vadd.f32 %v1424, %v1425
      %v1427 = vrot.slane %v1426, 1
      %v1428 = vadd.f32 %v1426, %v1427
      %v1429 = vsel %vm255, %v1390, 0.0
      %v1430 = vrot.slane %v1429, 4
      %v1431 = vadd.f32 %v1429, %v1430
      %v1432 = vrot.slane %v1431, 2
      %v1433 = vadd.f32 %v1431, %v1432
      %v1434 = vrot.slane %v1433, 1
      %v1435 = vadd.f32 %v1433, %v1434
      %v1436 = vsel %vm255, %v1401, 0.0
      %v1437 = vrot.slane %v1436, 4
      %v1438 = vadd.f32 %v1436, %v1437
      %v1439 = vrot.slane %v1438, 2
      %v1440 = vadd.f32 %v1438, %v1439
      %v1441 = vrot.slane %v1440, 1
      %v1442 = vadd.f32 %v1440, %v1441
      %v1443 = vsel %vm270, %v1391, 0.0
      %v1444 = vrot.slane %v1443, 4
      %v1445 = vadd.f32 %v1443, %v1444
      %v1446 = vrot.slane %v1445, 2
      %v1447 = vadd.f32 %v1445, %v1446
      %v1448 = vrot.slane %v1447, 1
      %v1449 = vadd.f32 %v1447, %v1448
      %v1450 = vsel %vm255, %v1392, 0.0
      %v1451 = vrot.slane %v1450, 4
      %v1452 = vadd.f32 %v1450, %v1451
      %v1453 = vrot.slane %v1452, 2
      %v1454 = vadd.f32 %v1452, %v1453
      %v1455 = vrot.slane %v1454, 1
      %v1456 = vadd.f32 %v1454, %v1455
      %v1457 = vsel %vm255, %v1402, 0.0
      %v1458 = vrot.slane %v1457, 4
      %v1459 = vadd.f32 %v1457, %v1458
      %v1460 = vrot.slane %v1459, 2
      %v1461 = vadd.f32 %v1459, %v1460
      %v1462 = vrot.slane %v1461, 1
      %v1463 = vadd.f32 %v1461, %v1462
      %v1464 = vsel %vm270, %v1393, 0.0
      %v1465 = vrot.slane %v1464, 4
      %v1466 = vadd.f32 %v1464, %v1465
      %v1467 = vrot.slane %v1466, 2
      %v1468 = vadd.f32 %v1466, %v1467
      %v1469 = vrot.slane %v1468, 1
      %v1470 = vadd.f32 %v1468, %v1469
      %v1471 = vsel %vm255, %v1394, 0.0
      %v1472 = vrot.slane %v1471, 4
      %v1473 = vadd.f32 %v1471, %v1472
      %v1474 = vrot.slane %v1473, 2
      %v1475 = vadd.f32 %v1473, %v1474
      %v1476 = vrot.slane %v1475, 1
      %v1477 = vadd.f32 %v1475, %v1476
      %v1478 = vsel %vm255, %v1403, 0.0
      %v1479 = vrot.slane %v1478, 4
      %v1480 = vadd.f32 %v1478, %v1479
      %v1481 = vrot.slane %v1480, 2
      %v1482 = vadd.f32 %v1480, %v1481
      %v1483 = vrot.slane %v1482, 1
      %v1484 = vadd.f32 %v1482, %v1483
      %v1485 = vsel %vm270, %v1395, 0.0
      %v1486 = vrot.slane %v1485, 4
      %v1487 = vadd.f32 %v1485, %v1486
      %v1488 = vrot.slane %v1487, 2
      %v1489 = vadd.f32 %v1487, %v1488
      %v1490 = vrot.slane %v1489, 1
      %v1491 = vadd.f32 %v1489, %v1490
      %v1504 = vcombine.low %v1414, %v1421
      %v1506 = vunpack.c.l.s4 1966171168
      %v1507 = vunpack.c.0.s8 %v1506
      %v1508 = vlaneseq
      %v1509 = vshrl.u32 %v1508, 7
      %v1510 = vsub.s32 %v1507, %v1509
      %v1511 = vrot.slane %v1504, %v1510
      %v1513 = vunpack.c.l.s4 1966171168
      %v1514 = vunpack.c.0.s8 %v1513
      %v1515 = vlaneseq
      %v1516 = vshrl.u32 %v1515, 7
      %v1517 = vsub.s32 %v1514, %v1516
      %v1518 = vrot.slane %v1428, %v1517
      %v1519 = vcombine.low %v1511, %v1518
      %v1521 = vunpack.c.l.s4 1966171168
      %v1522 = vunpack.c.0.s8 %v1521
      %v1523 = vlaneseq
      %v1524 = vshrl.u32 %v1523, 7
      %v1525 = vsub.s32 %v1522, %v1524
      %v1526 = vrot.slane %v1519, %v1525
      %v1527 = vcombine.low %v1435, %v1442
      %v1529 = vunpack.c.l.s4 1966171168
      %v1530 = vunpack.c.0.s8 %v1529
      %v1531 = vlaneseq
      %v1532 = vshrl.u32 %v1531, 7
      %v1533 = vsub.s32 %v1530, %v1532
      %v1534 = vrot.slane %v1527, %v1533
      %v1536 = vunpack.c.l.s4 1966171168
      %v1537 = vunpack.c.0.s8 %v1536
      %v1538 = vlaneseq
      %v1539 = vshrl.u32 %v1538, 7
      %v1540 = vsub.s32 %v1537, %v1539
      %v1541 = vrot.slane %v1449, %v1540
      %v1542 = vcombine.low %v1534, %v1541
      %v1544 = vunpack.c.l.s4 1966171168
      %v1545 = vunpack.c.0.s8 %v1544
      %v1546 = vlaneseq
      %v1547 = vshrl.u32 %v1546, 7
      %v1548 = vsub.s32 %v1545, %v1547
      %v1549 = vrot.slane %v1542, %v1548
      %v1550 = vcombine.low %v1456, %v1463
      %v1552 = vunpack.c.l.s4 1966171168
      %v1553 = vunpack.c.0.s8 %v1552
      %v1554 = vlaneseq
      %v1555 = vshrl.u32 %v1554, 7
      %v1556 = vsub.s32 %v1553, %v1555
      %v1557 = vrot.slane %v1550, %v1556
      %v1559 = vunpack.c.l.s4 1966171168
      %v1560 = vunpack.c.0.s8 %v1559
      %v1561 = vlaneseq
      %v1562 = vshrl.u32 %v1561, 7
      %v1563 = vsub.s32 %v1560, %v1562
      %v1564 = vrot.slane %v1470, %v1563
      %v1565 = vcombine.low %v1557, %v1564
      %v1567 = vunpack.c.l.s4 1966171168
      %v1568 = vunpack.c.0.s8 %v1567
      %v1569 = vlaneseq
      %v1570 = vshrl.u32 %v1569, 7
      %v1571 = vsub.s32 %v1568, %v1570
      %v1572 = vrot.slane %v1565, %v1571
      %v1573 = vcombine.low %v1477, %v1484
      %v1575 = vunpack.c.l.s4 1966171168
      %v1576 = vunpack.c.0.s8 %v1575
      %v1577 = vlaneseq
      %v1578 = vshrl.u32 %v1577, 7
      %v1579 = vsub.s32 %v1576, %v1578
      %v1580 = vrot.slane %v1573, %v1579
      %v1582 = vunpack.c.l.s4 1966171168
      %v1583 = vunpack.c.0.s8 %v1582
      %v1584 = vlaneseq
      %v1585 = vshrl.u32 %v1584, 7
      %v1586 = vsub.s32 %v1583, %v1585
      %v1587 = vrot.slane %v1491, %v1586
      %v1588 = vcombine.low %v1580, %v1587
      %v1590 = vunpack.c.l.s4 1966171168
      %v1591 = vunpack.c.0.s8 %v1590
      %v1592 = vlaneseq
      %v1593 = vshrl.u32 %v1592, 7
      %v1594 = vsub.s32 %v1591, %v1593
      %v1595 = vrot.slane %v1588, %v1594
      %s1600 = scalar_lea.vmem [#allocation2], 48
      %1601 = vst.msk [vmem:[%s1600] sm:$0x7] %vm452, %v1526
      %1602 = vst.msk [vmem:[%s1600 + $0x3] sm:$0x7] %vm452, %v1549
      %1603 = vst.msk [vmem:[%s1600 + $0x6] sm:$0x7] %vm452, %v1572
      %1604 = vst.msk [vmem:[%s1600 + $0x9] sm:$0x7] %vm452, %v1595
      %v1605 = vmax.f32 %v1315, %v1414
      %v1606 = vmax.f32 %v1316, %v1421
      %v1607 = vmax.f32 %v1317, %v1428
      %v1608 = vmax.f32 %v1318, %v1435
      %v1609 = vmax.f32 %v1319, %v1442
      %v1610 = vmax.f32 %v1320, %v1449
      %v1611 = vmax.f32 %v1321, %v1456
      %v1612 = vmax.f32 %v1322, %v1463
      %v1613 = vmax.f32 %v1323, %v1470
      %v1614 = vmax.f32 %v1324, %v1477
      %v1615 = vmax.f32 %v1325, %v1484
      %v1616 = vmax.f32 %v1326, %v1491
      %v1617 = vld [vmem:[%s200] sm:$0x3f]
      %v1618 = vld [vmem:[%s200 + $0x8] sm:$0x3f]
      %v1619 = vld [vmem:[%s200 + $0x10] sm:$0x3f]
      %v1620 = vld [vmem:[%s200 + $0x18] sm:$0x3f]
      %v1621 = vunpack.c.l.bf16 %v1617
      %v1622 = vunpack.c.h.bf16 %v1617
      %v1623 = vunpack.c.l.bf16 %v1618
      %v1624 = vunpack.c.h.bf16 %v1618
      %v1625 = vunpack.c.l.bf16 %v1619
      %v1626 = vunpack.c.h.bf16 %v1619
      %v1627 = vunpack.c.l.bf16 %v1620
      %v1628 = vunpack.c.h.bf16 %v1620
      %1637 = vrot.lane.b32.xlu0 %v1621, 84
      %v1638 = vpop.permute.xlu0 %1637
      %1639 = vrot.lane.b32.xlu0 %v1622, 84
      %v1640 = vpop.permute.xlu0 %1639
      %1641 = vrot.lane.b32.xlu0 %v1623, 84
      %v1642 = vpop.permute.xlu0 %1641
      %1643 = vrot.lane.b32.xlu0 %v1624, 84
      %v1644 = vpop.permute.xlu0 %1643
      %1645 = vrot.lane.b32.xlu0 %v1625, 84
      %v1646 = vpop.permute.xlu0 %1645
      %1647 = vrot.lane.b32.xlu0 %v1626, 84
      %v1648 = vpop.permute.xlu0 %1647
      %1649 = vrot.lane.b32.xlu0 %v1627, 84
      %v1650 = vpop.permute.xlu0 %1649
      %1651 = vrot.lane.b32.xlu0 %v1628, 84
      %v1652 = vpop.permute.xlu0 %1651
      %v1653 = vrot.slane %v1638, 4
      %v1654 = vrot.slane %v1640, 4
      %v1655 = vrot.slane %v1642, 4
      %v1656 = vrot.slane %v1644, 4
      %v1657 = vrot.slane %v1646, 4
      %v1658 = vrot.slane %v1648, 4
      %v1659 = vrot.slane %v1650, 4
      %v1660 = vrot.slane %v1652, 4
      %v1661 = vsel %vm255, %v1653, %v1654
      %vm1662 = vcmask 687104
      %v1663 = vsel %vm1662, %v1638, %v1661
      %v1664 = vsel %vm255, %v1655, %v1656
      %v1665 = vsel %vm1662, %v1642, %v1664
      %v1666 = vsel %vm255, %v1657, %v1658
      %v1667 = vsel %vm1662, %v1646, %v1666
      %v1668 = vsel %vm255, %v1659, %v1660
      %v1669 = vsel %vm1662, %v1650, %v1668
      %v1678 = vmul.f32 %v215, %v1663
      %v1679 = vmul.f32 %v216, %v1640
      %v1680 = vmul.f32 %v217, %v1665
      %v1681 = vmul.f32 %v218, %v1644
      %v1682 = vmul.f32 %v219, %v1667
      %v1683 = vmul.f32 %v220, %v1648
      %v1684 = vmul.f32 %v221, %v1669
      %v1685 = vmul.f32 %v222, %v1652
      %v1690 = vcombine.high %v1678, %v1678
      %v1691 = vcombine.high %v1680, %v1680
      %v1692 = vcombine.high %v1682, %v1682
      %v1693 = vcombine.high %v1684, %v1684
      %v1698 = vsel %vm255, %v1678, 0.0
      %v1699 = vrot.slane %v1698, 4
      %v1700 = vadd.f32 %v1698, %v1699
      %v1701 = vrot.slane %v1700, 2
      %v1702 = vadd.f32 %v1700, %v1701
      %v1703 = vrot.slane %v1702, 1
      %v1704 = vadd.f32 %v1702, %v1703
      %v1705 = vsel %vm255, %v1690, 0.0
      %v1706 = vrot.slane %v1705, 4
      %v1707 = vadd.f32 %v1705, %v1706
      %v1708 = vrot.slane %v1707, 2
      %v1709 = vadd.f32 %v1707, %v1708
      %v1710 = vrot.slane %v1709, 1
      %v1711 = vadd.f32 %v1709, %v1710
      %v1712 = vsel %vm270, %v1679, 0.0
      %v1713 = vrot.slane %v1712, 4
      %v1714 = vadd.f32 %v1712, %v1713
      %v1715 = vrot.slane %v1714, 2
      %v1716 = vadd.f32 %v1714, %v1715
      %v1717 = vrot.slane %v1716, 1
      %v1718 = vadd.f32 %v1716, %v1717
      %v1719 = vsel %vm255, %v1680, 0.0
      %v1720 = vrot.slane %v1719, 4
      %v1721 = vadd.f32 %v1719, %v1720
      %v1722 = vrot.slane %v1721, 2
      %v1723 = vadd.f32 %v1721, %v1722
      %v1724 = vrot.slane %v1723, 1
      %v1725 = vadd.f32 %v1723, %v1724
      %v1726 = vsel %vm255, %v1691, 0.0
      %v1727 = vrot.slane %v1726, 4
      %v1728 = vadd.f32 %v1726, %v1727
      %v1729 = vrot.slane %v1728, 2
      %v1730 = vadd.f32 %v1728, %v1729
      %v1731 = vrot.slane %v1730, 1
      %v1732 = vadd.f32 %v1730, %v1731
      %v1733 = vsel %vm270, %v1681, 0.0
      %v1734 = vrot.slane %v1733, 4
      %v1735 = vadd.f32 %v1733, %v1734
      %v1736 = vrot.slane %v1735, 2
      %v1737 = vadd.f32 %v1735, %v1736
      %v1738 = vrot.slane %v1737, 1
      %v1739 = vadd.f32 %v1737, %v1738
      %v1740 = vsel %vm255, %v1682, 0.0
      %v1741 = vrot.slane %v1740, 4
      %v1742 = vadd.f32 %v1740, %v1741
      %v1743 = vrot.slane %v1742, 2
      %v1744 = vadd.f32 %v1742, %v1743
      %v1745 = vrot.slane %v1744, 1
      %v1746 = vadd.f32 %v1744, %v1745
      %v1747 = vsel %vm255, %v1692, 0.0
      %v1748 = vrot.slane %v1747, 4
      %v1749 = vadd.f32 %v1747, %v1748
      %v1750 = vrot.slane %v1749, 2
      %v1751 = vadd.f32 %v1749, %v1750
      %v1752 = vrot.slane %v1751, 1
      %v1753 = vadd.f32 %v1751, %v1752
      %v1754 = vsel %vm270, %v1683, 0.0
      %v1755 = vrot.slane %v1754, 4
      %v1756 = vadd.f32 %v1754, %v1755
      %v1757 = vrot.slane %v1756, 2
      %v1758 = vadd.f32 %v1756, %v1757
      %v1759 = vrot.slane %v1758, 1
      %v1760 = vadd.f32 %v1758, %v1759
      %v1761 = vsel %vm255, %v1684, 0.0
      %v1762 = vrot.slane %v1761, 4
      %v1763 = vadd.f32 %v1761, %v1762
      %v1764 = vrot.slane %v1763, 2
      %v1765 = vadd.f32 %v1763, %v1764
      %v1766 = vrot.slane %v1765, 1
      %v1767 = vadd.f32 %v1765, %v1766
      %v1768 = vsel %vm255, %v1693, 0.0
      %v1769 = vrot.slane %v1768, 4
      %v1770 = vadd.f32 %v1768, %v1769
      %v1771 = vrot.slane %v1770, 2
      %v1772 = vadd.f32 %v1770, %v1771
      %v1773 = vrot.slane %v1772, 1
      %v1774 = vadd.f32 %v1772, %v1773
      %v1775 = vsel %vm270, %v1685, 0.0
      %v1776 = vrot.slane %v1775, 4
      %v1777 = vadd.f32 %v1775, %v1776
      %v1778 = vrot.slane %v1777, 2
      %v1779 = vadd.f32 %v1777, %v1778
      %v1780 = vrot.slane %v1779, 1
      %v1781 = vadd.f32 %v1779, %v1780
      %v1794 = vcombine.low %v1704, %v1711
      %v1796 = vunpack.c.l.s4 1966171168
      %v1797 = vunpack.c.0.s8 %v1796
      %v1798 = vlaneseq
      %v1799 = vshrl.u32 %v1798, 7
      %v1800 = vsub.s32 %v1797, %v1799
      %v1801 = vrot.slane %v1794, %v1800
      %v1803 = vunpack.c.l.s4 1966171168
      %v1804 = vunpack.c.0.s8 %v1803
      %v1805 = vlaneseq
      %v1806 = vshrl.u32 %v1805, 7
      %v1807 = vsub.s32 %v1804, %v1806
      %v1808 = vrot.slane %v1718, %v1807
      %v1809 = vcombine.low %v1801, %v1808
      %v1811 = vunpack.c.l.s4 1966171168
      %v1812 = vunpack.c.0.s8 %v1811
      %v1813 = vlaneseq
      %v1814 = vshrl.u32 %v1813, 7
      %v1815 = vsub.s32 %v1812, %v1814
      %v1816 = vrot.slane %v1809, %v1815
      %v1817 = vcombine.low %v1725, %v1732
      %v1819 = vunpack.c.l.s4 1966171168
      %v1820 = vunpack.c.0.s8 %v1819
      %v1821 = vlaneseq
      %v1822 = vshrl.u32 %v1821, 7
      %v1823 = vsub.s32 %v1820, %v1822
      %v1824 = vrot.slane %v1817, %v1823
      %v1826 = vunpack.c.l.s4 1966171168
      %v1827 = vunpack.c.0.s8 %v1826
      %v1828 = vlaneseq
      %v1829 = vshrl.u32 %v1828, 7
      %v1830 = vsub.s32 %v1827, %v1829
      %v1831 = vrot.slane %v1739, %v1830
      %v1832 = vcombine.low %v1824, %v1831
      %v1834 = vunpack.c.l.s4 1966171168
      %v1835 = vunpack.c.0.s8 %v1834
      %v1836 = vlaneseq
      %v1837 = vshrl.u32 %v1836, 7
      %v1838 = vsub.s32 %v1835, %v1837
      %v1839 = vrot.slane %v1832, %v1838
      %v1840 = vcombine.low %v1746, %v1753
      %v1842 = vunpack.c.l.s4 1966171168
      %v1843 = vunpack.c.0.s8 %v1842
      %v1844 = vlaneseq
      %v1845 = vshrl.u32 %v1844, 7
      %v1846 = vsub.s32 %v1843, %v1845
      %v1847 = vrot.slane %v1840, %v1846
      %v1849 = vunpack.c.l.s4 1966171168
      %v1850 = vunpack.c.0.s8 %v1849
      %v1851 = vlaneseq
      %v1852 = vshrl.u32 %v1851, 7
      %v1853 = vsub.s32 %v1850, %v1852
      %v1854 = vrot.slane %v1760, %v1853
      %v1855 = vcombine.low %v1847, %v1854
      %v1857 = vunpack.c.l.s4 1966171168
      %v1858 = vunpack.c.0.s8 %v1857
      %v1859 = vlaneseq
      %v1860 = vshrl.u32 %v1859, 7
      %v1861 = vsub.s32 %v1858, %v1860
      %v1862 = vrot.slane %v1855, %v1861
      %v1863 = vcombine.low %v1767, %v1774
      %v1865 = vunpack.c.l.s4 1966171168
      %v1866 = vunpack.c.0.s8 %v1865
      %v1867 = vlaneseq
      %v1868 = vshrl.u32 %v1867, 7
      %v1869 = vsub.s32 %v1866, %v1868
      %v1870 = vrot.slane %v1863, %v1869
      %v1872 = vunpack.c.l.s4 1966171168
      %v1873 = vunpack.c.0.s8 %v1872
      %v1874 = vlaneseq
      %v1875 = vshrl.u32 %v1874, 7
      %v1876 = vsub.s32 %v1873, %v1875
      %v1877 = vrot.slane %v1781, %v1876
      %v1878 = vcombine.low %v1870, %v1877
      %v1880 = vunpack.c.l.s4 1966171168
      %v1881 = vunpack.c.0.s8 %v1880
      %v1882 = vlaneseq
      %v1883 = vshrl.u32 %v1882, 7
      %v1884 = vsub.s32 %v1881, %v1883
      %v1885 = vrot.slane %v1878, %v1884
      %s1890 = scalar_lea.vmem [#allocation2], 60
      %1891 = vst.msk [vmem:[%s1890] sm:$0x7] %vm452, %v1816
      %1892 = vst.msk [vmem:[%s1890 + $0x3] sm:$0x7] %vm452, %v1839
      %1893 = vst.msk [vmem:[%s1890 + $0x6] sm:$0x7] %vm452, %v1862
      %1894 = vst.msk [vmem:[%s1890 + $0x9] sm:$0x7] %vm452, %v1885
      %v1895 = vmax.f32 %v1605, %v1704
      %v1896 = vmax.f32 %v1606, %v1711
      %v1897 = vmax.f32 %v1607, %v1718
      %v1898 = vmax.f32 %v1608, %v1725
      %v1899 = vmax.f32 %v1609, %v1732
      %v1900 = vmax.f32 %v1610, %v1739
      %v1901 = vmax.f32 %v1611, %v1746
      %v1902 = vmax.f32 %v1612, %v1753
      %v1903 = vmax.f32 %v1613, %v1760
      %v1904 = vmax.f32 %v1614, %v1767
      %v1905 = vmax.f32 %v1615, %v1774
      %v1906 = vmax.f32 %v1616, %v1781
      %v1907 = vld [vmem:[%s200] sm:$0xff]
      %v1908 = vld [vmem:[%s200 + $0x8] sm:$0xff]
      %v1909 = vld [vmem:[%s200 + $0x10] sm:$0xff]
      %v1910 = vld [vmem:[%s200 + $0x18] sm:$0xff]
      %v1911 = vunpack.c.l.bf16 %v1907
      %v1912 = vunpack.c.h.bf16 %v1907
      %v1913 = vunpack.c.l.bf16 %v1908
      %v1914 = vunpack.c.h.bf16 %v1908
      %v1915 = vunpack.c.l.bf16 %v1909
      %v1916 = vunpack.c.h.bf16 %v1909
      %v1917 = vunpack.c.l.bf16 %v1910
      %v1918 = vunpack.c.h.bf16 %v1910
      %1927 = vrot.lane.b32.xlu0 %v1911, 48
      %v1928 = vpop.permute.xlu0 %1927
      %1929 = vrot.lane.b32.xlu0 %v1912, 48
      %v1930 = vpop.permute.xlu0 %1929
      %1931 = vrot.lane.b32.xlu0 %v1913, 48
      %v1932 = vpop.permute.xlu0 %1931
      %1933 = vrot.lane.b32.xlu0 %v1914, 48
      %v1934 = vpop.permute.xlu0 %1933
      %1935 = vrot.lane.b32.xlu0 %v1915, 48
      %v1936 = vpop.permute.xlu0 %1935
      %1937 = vrot.lane.b32.xlu0 %v1916, 48
      %v1938 = vpop.permute.xlu0 %1937
      %1939 = vrot.lane.b32.xlu0 %v1917, 48
      %v1940 = vpop.permute.xlu0 %1939
      %1941 = vrot.lane.b32.xlu0 %v1918, 48
      %v1942 = vpop.permute.xlu0 %1941
      %v1943 = vrot.slane %v1928, 4
      %v1944 = vrot.slane %v1930, 4
      %v1945 = vrot.slane %v1932, 4
      %v1946 = vrot.slane %v1934, 4
      %v1947 = vrot.slane %v1936, 4
      %v1948 = vrot.slane %v1938, 4
      %v1949 = vrot.slane %v1940, 4
      %v1950 = vrot.slane %v1942, 4
      %v1951 = vsel %vm255, %v1943, %v1944
      %vm1952 = vcmask 392192
      %v1953 = vsel %vm1952, %v1928, %v1951
      %v1954 = vsel %vm1952, %v1930, %v1944
      %v1955 = vsel %vm255, %v1945, %v1946
      %v1956 = vsel %vm1952, %v1932, %v1955
      %v1957 = vsel %vm1952, %v1934, %v1946
      %v1958 = vsel %vm255, %v1947, %v1948
      %v1959 = vsel %vm1952, %v1936, %v1958
      %v1960 = vsel %vm1952, %v1938, %v1948
      %v1961 = vsel %vm255, %v1949, %v1950
      %v1962 = vsel %vm1952, %v1940, %v1961
      %v1963 = vsel %vm1952, %v1942, %v1950
      %v1972 = vmul.f32 %v215, %v1953
      %v1973 = vmul.f32 %v216, %v1954
      %v1974 = vmul.f32 %v217, %v1956
      %v1975 = vmul.f32 %v218, %v1957
      %v1976 = vmul.f32 %v219, %v1959
      %v1977 = vmul.f32 %v220, %v1960
      %v1978 = vmul.f32 %v221, %v1962
      %v1979 = vmul.f32 %v222, %v1963
      %v1984 = vcombine.high %v1972, %v1972
      %v1985 = vcombine.high %v1974, %v1974
      %v1986 = vcombine.high %v1976, %v1976
      %v1987 = vcombine.high %v1978, %v1978
      %v1992 = vsel %vm255, %v1972, 0.0
      %v1993 = vrot.slane %v1992, 4
      %v1994 = vadd.f32 %v1992, %v1993
      %v1995 = vrot.slane %v1994, 2
      %v1996 = vadd.f32 %v1994, %v1995
      %v1997 = vrot.slane %v1996, 1
      %v1998 = vadd.f32 %v1996, %v1997
      %v1999 = vsel %vm255, %v1984, 0.0
      %v2000 = vrot.slane %v1999, 4
      %v2001 = vadd.f32 %v1999, %v2000
      %v2002 = vrot.slane %v2001, 2
      %v2003 = vadd.f32 %v2001, %v2002
      %v2004 = vrot.slane %v2003, 1
      %v2005 = vadd.f32 %v2003, %v2004
      %v2006 = vsel %vm270, %v1973, 0.0
      %v2007 = vrot.slane %v2006, 4
      %v2008 = vadd.f32 %v2006, %v2007
      %v2009 = vrot.slane %v2008, 2
      %v2010 = vadd.f32 %v2008, %v2009
      %v2011 = vrot.slane %v2010, 1
      %v2012 = vadd.f32 %v2010, %v2011
      %v2013 = vsel %vm255, %v1974, 0.0
      %v2014 = vrot.slane %v2013, 4
      %v2015 = vadd.f32 %v2013, %v2014
      %v2016 = vrot.slane %v2015, 2
      %v2017 = vadd.f32 %v2015, %v2016
      %v2018 = vrot.slane %v2017, 1
      %v2019 = vadd.f32 %v2017, %v2018
      %v2020 = vsel %vm255, %v1985, 0.0
      %v2021 = vrot.slane %v2020, 4
      %v2022 = vadd.f32 %v2020, %v2021
      %v2023 = vrot.slane %v2022, 2
      %v2024 = vadd.f32 %v2022, %v2023
      %v2025 = vrot.slane %v2024, 1
      %v2026 = vadd.f32 %v2024, %v2025
      %v2027 = vsel %vm270, %v1975, 0.0
      %v2028 = vrot.slane %v2027, 4
      %v2029 = vadd.f32 %v2027, %v2028
      %v2030 = vrot.slane %v2029, 2
      %v2031 = vadd.f32 %v2029, %v2030
      %v2032 = vrot.slane %v2031, 1
      %v2033 = vadd.f32 %v2031, %v2032
      %v2034 = vsel %vm255, %v1976, 0.0
      %v2035 = vrot.slane %v2034, 4
      %v2036 = vadd.f32 %v2034, %v2035
      %v2037 = vrot.slane %v2036, 2
      %v2038 = vadd.f32 %v2036, %v2037
      %v2039 = vrot.slane %v2038, 1
      %v2040 = vadd.f32 %v2038, %v2039
      %v2041 = vsel %vm255, %v1986, 0.0
      %v2042 = vrot.slane %v2041, 4
      %v2043 = vadd.f32 %v2041, %v2042
      %v2044 = vrot.slane %v2043, 2
      %v2045 = vadd.f32 %v2043, %v2044
      %v2046 = vrot.slane %v2045, 1
      %v2047 = vadd.f32 %v2045, %v2046
      %v2048 = vsel %vm270, %v1977, 0.0
      %v2049 = vrot.slane %v2048, 4
      %v2050 = vadd.f32 %v2048, %v2049
      %v2051 = vrot.slane %v2050, 2
      %v2052 = vadd.f32 %v2050, %v2051
      %v2053 = vrot.slane %v2052, 1
      %v2054 = vadd.f32 %v2052, %v2053
      %v2055 = vsel %vm255, %v1978, 0.0
      %v2056 = vrot.slane %v2055, 4
      %v2057 = vadd.f32 %v2055, %v2056
      %v2058 = vrot.slane %v2057, 2
      %v2059 = vadd.f32 %v2057, %v2058
      %v2060 = vrot.slane %v2059, 1
      %v2061 = vadd.f32 %v2059, %v2060
      %v2062 = vsel %vm255, %v1987, 0.0
      %v2063 = vrot.slane %v2062, 4
      %v2064 = vadd.f32 %v2062, %v2063
      %v2065 = vrot.slane %v2064, 2
      %v2066 = vadd.f32 %v2064, %v2065
      %v2067 = vrot.slane %v2066, 1
      %v2068 = vadd.f32 %v2066, %v2067
      %v2069 = vsel %vm270, %v1979, 0.0
      %v2070 = vrot.slane %v2069, 4
      %v2071 = vadd.f32 %v2069, %v2070
      %v2072 = vrot.slane %v2071, 2
      %v2073 = vadd.f32 %v2071, %v2072
      %v2074 = vrot.slane %v2073, 1
      %v2075 = vadd.f32 %v2073, %v2074
      %v2088 = vcombine.low %v1998, %v2005
      %v2090 = vunpack.c.l.s4 1966171168
      %v2091 = vunpack.c.0.s8 %v2090
      %v2092 = vlaneseq
      %v2093 = vshrl.u32 %v2092, 7
      %v2094 = vsub.s32 %v2091, %v2093
      %v2095 = vrot.slane %v2088, %v2094
      %v2097 = vunpack.c.l.s4 1966171168
      %v2098 = vunpack.c.0.s8 %v2097
      %v2099 = vlaneseq
      %v2100 = vshrl.u32 %v2099, 7
      %v2101 = vsub.s32 %v2098, %v2100
      %v2102 = vrot.slane %v2012, %v2101
      %v2103 = vcombine.low %v2095, %v2102
      %v2105 = vunpack.c.l.s4 1966171168
      %v2106 = vunpack.c.0.s8 %v2105
      %v2107 = vlaneseq
      %v2108 = vshrl.u32 %v2107, 7
      %v2109 = vsub.s32 %v2106, %v2108
      %v2110 = vrot.slane %v2103, %v2109
      %v2111 = vcombine.low %v2019, %v2026
      %v2113 = vunpack.c.l.s4 1966171168
      %v2114 = vunpack.c.0.s8 %v2113
      %v2115 = vlaneseq
      %v2116 = vshrl.u32 %v2115, 7
      %v2117 = vsub.s32 %v2114, %v2116
      %v2118 = vrot.slane %v2111, %v2117
      %v2120 = vunpack.c.l.s4 1966171168
      %v2121 = vunpack.c.0.s8 %v2120
      %v2122 = vlaneseq
      %v2123 = vshrl.u32 %v2122, 7
      %v2124 = vsub.s32 %v2121, %v2123
      %v2125 = vrot.slane %v2033, %v2124
      %v2126 = vcombine.low %v2118, %v2125
      %v2128 = vunpack.c.l.s4 1966171168
      %v2129 = vunpack.c.0.s8 %v2128
      %v2130 = vlaneseq
      %v2131 = vshrl.u32 %v2130, 7
      %v2132 = vsub.s32 %v2129, %v2131
      %v2133 = vrot.slane %v2126, %v2132
      %v2134 = vcombine.low %v2040, %v2047
      %v2136 = vunpack.c.l.s4 1966171168
      %v2137 = vunpack.c.0.s8 %v2136
      %v2138 = vlaneseq
      %v2139 = vshrl.u32 %v2138, 7
      %v2140 = vsub.s32 %v2137, %v2139
      %v2141 = vrot.slane %v2134, %v2140
      %v2143 = vunpack.c.l.s4 1966171168
      %v2144 = vunpack.c.0.s8 %v2143
      %v2145 = vlaneseq
      %v2146 = vshrl.u32 %v2145, 7
      %v2147 = vsub.s32 %v2144, %v2146
      %v2148 = vrot.slane %v2054, %v2147
      %v2149 = vcombine.low %v2141, %v2148
      %v2151 = vunpack.c.l.s4 1966171168
      %v2152 = vunpack.c.0.s8 %v2151
      %v2153 = vlaneseq
      %v2154 = vshrl.u32 %v2153, 7
      %v2155 = vsub.s32 %v2152, %v2154
      %v2156 = vrot.slane %v2149, %v2155
      %v2157 = vcombine.low %v2061, %v2068
      %v2159 = vunpack.c.l.s4 1966171168
      %v2160 = vunpack.c.0.s8 %v2159
      %v2161 = vlaneseq
      %v2162 = vshrl.u32 %v2161, 7
      %v2163 = vsub.s32 %v2160, %v2162
      %v2164 = vrot.slane %v2157, %v2163
      %v2166 = vunpack.c.l.s4 1966171168
      %v2167 = vunpack.c.0.s8 %v2166
      %v2168 = vlaneseq
      %v2169 = vshrl.u32 %v2168, 7
      %v2170 = vsub.s32 %v2167, %v2169
      %v2171 = vrot.slane %v2075, %v2170
      %v2172 = vcombine.low %v2164, %v2171
      %v2174 = vunpack.c.l.s4 1966171168
      %v2175 = vunpack.c.0.s8 %v2174
      %v2176 = vlaneseq
      %v2177 = vshrl.u32 %v2176, 7
      %v2178 = vsub.s32 %v2175, %v2177
      %v2179 = vrot.slane %v2172, %v2178
      %s2184 = scalar_lea.vmem [#allocation2], 72
      %2185 = vst.msk [vmem:[%s2184] sm:$0x7] %vm452, %v2110
      %2186 = vst.msk [vmem:[%s2184 + $0x3] sm:$0x7] %vm452, %v2133
      %2187 = vst.msk [vmem:[%s2184 + $0x6] sm:$0x7] %vm452, %v2156
      %2188 = vst.msk [vmem:[%s2184 + $0x9] sm:$0x7] %vm452, %v2179
      %v2189 = vmax.f32 %v1895, %v1998
      %v2190 = vmax.f32 %v1896, %v2005
      %v2191 = vmax.f32 %v1897, %v2012
      %v2192 = vmax.f32 %v1898, %v2019
      %v2193 = vmax.f32 %v1899, %v2026
      %v2194 = vmax.f32 %v1900, %v2033
      %v2195 = vmax.f32 %v1901, %v2040
      %v2196 = vmax.f32 %v1902, %v2047
      %v2197 = vmax.f32 %v1903, %v2054
      %v2198 = vmax.f32 %v1904, %v2061
      %v2199 = vmax.f32 %v1905, %v2068
      %v2200 = vmax.f32 %v1906, %v2075
      %v2201 = vld [vmem:[%s200] sm:$0xff]
      %v2202 = vld [vmem:[%s200 + $0x8] sm:$0xff]
      %v2203 = vld [vmem:[%s200 + $0x10] sm:$0xff]
      %v2204 = vld [vmem:[%s200 + $0x18] sm:$0xff]
      %v2205 = vunpack.c.l.bf16 %v2201
      %v2206 = vunpack.c.h.bf16 %v2201
      %v2207 = vunpack.c.l.bf16 %v2202
      %v2208 = vunpack.c.h.bf16 %v2202
      %v2209 = vunpack.c.l.bf16 %v2203
      %v2210 = vunpack.c.h.bf16 %v2203
      %v2211 = vunpack.c.l.bf16 %v2204
      %v2212 = vunpack.c.h.bf16 %v2204
      %2221 = vrot.lane.b32.xlu0 %v2205, 46
      %v2222 = vpop.permute.xlu0 %2221
      %2223 = vrot.lane.b32.xlu0 %v2206, 46
      %v2224 = vpop.permute.xlu0 %2223
      %2225 = vrot.lane.b32.xlu0 %v2207, 46
      %v2226 = vpop.permute.xlu0 %2225
      %2227 = vrot.lane.b32.xlu0 %v2208, 46
      %v2228 = vpop.permute.xlu0 %2227
      %2229 = vrot.lane.b32.xlu0 %v2209, 46
      %v2230 = vpop.permute.xlu0 %2229
      %2231 = vrot.lane.b32.xlu0 %v2210, 46
      %v2232 = vpop.permute.xlu0 %2231
      %2233 = vrot.lane.b32.xlu0 %v2211, 46
      %v2234 = vpop.permute.xlu0 %2233
      %2235 = vrot.lane.b32.xlu0 %v2212, 46
      %v2236 = vpop.permute.xlu0 %2235
      %v2237 = vrot.slane %v2222, 4
      %v2238 = vrot.slane %v2224, 4
      %v2239 = vrot.slane %v2226, 4
      %v2240 = vrot.slane %v2228, 4
      %v2241 = vrot.slane %v2230, 4
      %v2242 = vrot.slane %v2232, 4
      %v2243 = vrot.slane %v2234, 4
      %v2244 = vrot.slane %v2236, 4
      %v2245 = vsel %vm255, %v2237, %v2238
      %vm2246 = vcmask 375808
      %v2247 = vsel %vm2246, %v2222, %v2245
      %v2248 = vsel %vm2246, %v2224, %v2238
      %v2249 = vsel %vm255, %v2239, %v2240
      %v2250 = vsel %vm2246, %v2226, %v2249
      %v2251 = vsel %vm2246, %v2228, %v2240
      %v2252 = vsel %vm255, %v2241, %v2242
      %v2253 = vsel %vm2246, %v2230, %v2252
      %v2254 = vsel %vm2246, %v2232, %v2242
      %v2255 = vsel %vm255, %v2243, %v2244
      %v2256 = vsel %vm2246, %v2234, %v2255
      %v2257 = vsel %vm2246, %v2236, %v2244
      %v2266 = vmul.f32 %v215, %v2247
      %v2267 = vmul.f32 %v216, %v2248
      %v2268 = vmul.f32 %v217, %v2250
      %v2269 = vmul.f32 %v218, %v2251
      %v2270 = vmul.f32 %v219, %v2253
      %v2271 = vmul.f32 %v220, %v2254
      %v2272 = vmul.f32 %v221, %v2256
      %v2273 = vmul.f32 %v222, %v2257
      %v2278 = vcombine.high %v2266, %v2266
      %v2279 = vcombine.high %v2268, %v2268
      %v2280 = vcombine.high %v2270, %v2270
      %v2281 = vcombine.high %v2272, %v2272
      %v2286 = vsel %vm255, %v2266, 0.0
      %v2287 = vrot.slane %v2286, 4
      %v2288 = vadd.f32 %v2286, %v2287
      %v2289 = vrot.slane %v2288, 2
      %v2290 = vadd.f32 %v2288, %v2289
      %v2291 = vrot.slane %v2290, 1
      %v2292 = vadd.f32 %v2290, %v2291
      %v2293 = vsel %vm255, %v2278, 0.0
      %v2294 = vrot.slane %v2293, 4
      %v2295 = vadd.f32 %v2293, %v2294
      %v2296 = vrot.slane %v2295, 2
      %v2297 = vadd.f32 %v2295, %v2296
      %v2298 = vrot.slane %v2297, 1
      %v2299 = vadd.f32 %v2297, %v2298
      %v2300 = vsel %vm270, %v2267, 0.0
      %v2301 = vrot.slane %v2300, 4
      %v2302 = vadd.f32 %v2300, %v2301
      %v2303 = vrot.slane %v2302, 2
      %v2304 = vadd.f32 %v2302, %v2303
      %v2305 = vrot.slane %v2304, 1
      %v2306 = vadd.f32 %v2304, %v2305
      %v2307 = vsel %vm255, %v2268, 0.0
      %v2308 = vrot.slane %v2307, 4
      %v2309 = vadd.f32 %v2307, %v2308
      %v2310 = vrot.slane %v2309, 2
      %v2311 = vadd.f32 %v2309, %v2310
      %v2312 = vrot.slane %v2311, 1
      %v2313 = vadd.f32 %v2311, %v2312
      %v2314 = vsel %vm255, %v2279, 0.0
      %v2315 = vrot.slane %v2314, 4
      %v2316 = vadd.f32 %v2314, %v2315
      %v2317 = vrot.slane %v2316, 2
      %v2318 = vadd.f32 %v2316, %v2317
      %v2319 = vrot.slane %v2318, 1
      %v2320 = vadd.f32 %v2318, %v2319
      %v2321 = vsel %vm270, %v2269, 0.0
      %v2322 = vrot.slane %v2321, 4
      %v2323 = vadd.f32 %v2321, %v2322
      %v2324 = vrot.slane %v2323, 2
      %v2325 = vadd.f32 %v2323, %v2324
      %v2326 = vrot.slane %v2325, 1
      %v2327 = vadd.f32 %v2325, %v2326
      %v2328 = vsel %vm255, %v2270, 0.0
      %v2329 = vrot.slane %v2328, 4
      %v2330 = vadd.f32 %v2328, %v2329
      %v2331 = vrot.slane %v2330, 2
      %v2332 = vadd.f32 %v2330, %v2331
      %v2333 = vrot.slane %v2332, 1
      %v2334 = vadd.f32 %v2332, %v2333
      %v2335 = vsel %vm255, %v2280, 0.0
      %v2336 = vrot.slane %v2335, 4
      %v2337 = vadd.f32 %v2335, %v2336
      %v2338 = vrot.slane %v2337, 2
      %v2339 = vadd.f32 %v2337, %v2338
      %v2340 = vrot.slane %v2339, 1
      %v2341 = vadd.f32 %v2339, %v2340
      %v2342 = vsel %vm270, %v2271, 0.0
      %v2343 = vrot.slane %v2342, 4
      %v2344 = vadd.f32 %v2342, %v2343
      %v2345 = vrot.slane %v2344, 2
      %v2346 = vadd.f32 %v2344, %v2345
      %v2347 = vrot.slane %v2346, 1
      %v2348 = vadd.f32 %v2346, %v2347
      %v2349 = vsel %vm255, %v2272, 0.0
      %v2350 = vrot.slane %v2349, 4
      %v2351 = vadd.f32 %v2349, %v2350
      %v2352 = vrot.slane %v2351, 2
      %v2353 = vadd.f32 %v2351, %v2352
      %v2354 = vrot.slane %v2353, 1
      %v2355 = vadd.f32 %v2353, %v2354
      %v2356 = vsel %vm255, %v2281, 0.0
      %v2357 = vrot.slane %v2356, 4
      %v2358 = vadd.f32 %v2356, %v2357
      %v2359 = vrot.slane %v2358, 2
      %v2360 = vadd.f32 %v2358, %v2359
      %v2361 = vrot.slane %v2360, 1
      %v2362 = vadd.f32 %v2360, %v2361
      %v2363 = vsel %vm270, %v2273, 0.0
      %v2364 = vrot.slane %v2363, 4
      %v2365 = vadd.f32 %v2363, %v2364
      %v2366 = vrot.slane %v2365, 2
      %v2367 = vadd.f32 %v2365, %v2366
      %v2368 = vrot.slane %v2367, 1
      %v2369 = vadd.f32 %v2367, %v2368
      %v2382 = vcombine.low %v2292, %v2299
      %v2384 = vunpack.c.l.s4 1966171168
      %v2385 = vunpack.c.0.s8 %v2384
      %v2386 = vlaneseq
      %v2387 = vshrl.u32 %v2386, 7
      %v2388 = vsub.s32 %v2385, %v2387
      %v2389 = vrot.slane %v2382, %v2388
      %v2391 = vunpack.c.l.s4 1966171168
      %v2392 = vunpack.c.0.s8 %v2391
      %v2393 = vlaneseq
      %v2394 = vshrl.u32 %v2393, 7
      %v2395 = vsub.s32 %v2392, %v2394
      %v2396 = vrot.slane %v2306, %v2395
      %v2397 = vcombine.low %v2389, %v2396
      %v2399 = vunpack.c.l.s4 1966171168
      %v2400 = vunpack.c.0.s8 %v2399
      %v2401 = vlaneseq
      %v2402 = vshrl.u32 %v2401, 7
      %v2403 = vsub.s32 %v2400, %v2402
      %v2404 = vrot.slane %v2397, %v2403
      %v2405 = vcombine.low %v2313, %v2320
      %v2407 = vunpack.c.l.s4 1966171168
      %v2408 = vunpack.c.0.s8 %v2407
      %v2409 = vlaneseq
      %v2410 = vshrl.u32 %v2409, 7
      %v2411 = vsub.s32 %v2408, %v2410
      %v2412 = vrot.slane %v2405, %v2411
      %v2414 = vunpack.c.l.s4 1966171168
      %v2415 = vunpack.c.0.s8 %v2414
      %v2416 = vlaneseq
      %v2417 = vshrl.u32 %v2416, 7
      %v2418 = vsub.s32 %v2415, %v2417
      %v2419 = vrot.slane %v2327, %v2418
      %v2420 = vcombine.low %v2412, %v2419
      %v2422 = vunpack.c.l.s4 1966171168
      %v2423 = vunpack.c.0.s8 %v2422
      %v2424 = vlaneseq
      %v2425 = vshrl.u32 %v2424, 7
      %v2426 = vsub.s32 %v2423, %v2425
      %v2427 = vrot.slane %v2420, %v2426
      %v2428 = vcombine.low %v2334, %v2341
      %v2430 = vunpack.c.l.s4 1966171168
      %v2431 = vunpack.c.0.s8 %v2430
      %v2432 = vlaneseq
      %v2433 = vshrl.u32 %v2432, 7
      %v2434 = vsub.s32 %v2431, %v2433
      %v2435 = vrot.slane %v2428, %v2434
      %v2437 = vunpack.c.l.s4 1966171168
      %v2438 = vunpack.c.0.s8 %v2437
      %v2439 = vlaneseq
      %v2440 = vshrl.u32 %v2439, 7
      %v2441 = vsub.s32 %v2438, %v2440
      %v2442 = vrot.slane %v2348, %v2441
      %v2443 = vcombine.low %v2435, %v2442
      %v2445 = vunpack.c.l.s4 1966171168
      %v2446 = vunpack.c.0.s8 %v2445
      %v2447 = vlaneseq
      %v2448 = vshrl.u32 %v2447, 7
      %v2449 = vsub.s32 %v2446, %v2448
      %v2450 = vrot.slane %v2443, %v2449
      %v2451 = vcombine.low %v2355, %v2362
      %v2453 = vunpack.c.l.s4 1966171168
      %v2454 = vunpack.c.0.s8 %v2453
      %v2455 = vlaneseq
      %v2456 = vshrl.u32 %v2455, 7
      %v2457 = vsub.s32 %v2454, %v2456
      %v2458 = vrot.slane %v2451, %v2457
      %v2460 = vunpack.c.l.s4 1966171168
      %v2461 = vunpack.c.0.s8 %v2460
      %v2462 = vlaneseq
      %v2463 = vshrl.u32 %v2462, 7
      %v2464 = vsub.s32 %v2461, %v2463
      %v2465 = vrot.slane %v2369, %v2464
      %v2466 = vcombine.low %v2458, %v2465
      %v2468 = vunpack.c.l.s4 1966171168
      %v2469 = vunpack.c.0.s8 %v2468
      %v2470 = vlaneseq
      %v2471 = vshrl.u32 %v2470, 7
      %v2472 = vsub.s32 %v2469, %v2471
      %v2473 = vrot.slane %v2466, %v2472
      %s2478 = scalar_lea.vmem [#allocation2], 84
      %2479 = vst.msk [vmem:[%s2478] sm:$0x7] %vm452, %v2404
      %2480 = vst.msk [vmem:[%s2478 + $0x3] sm:$0x7] %vm452, %v2427
      %2481 = vst.msk [vmem:[%s2478 + $0x6] sm:$0x7] %vm452, %v2450
      %2482 = vst.msk [vmem:[%s2478 + $0x9] sm:$0x7] %vm452, %v2473
      %v2483 = vmax.f32 %v2189, %v2292
      %v2484 = vmax.f32 %v2190, %v2299
      %v2485 = vmax.f32 %v2191, %v2306
      %v2486 = vmax.f32 %v2192, %v2313
      %v2487 = vmax.f32 %v2193, %v2320
      %v2488 = vmax.f32 %v2194, %v2327
      %v2489 = vmax.f32 %v2195, %v2334
      %v2490 = vmax.f32 %v2196, %v2341
      %v2491 = vmax.f32 %v2197, %v2348
      %v2492 = vmax.f32 %v2198, %v2355
      %v2493 = vmax.f32 %v2199, %v2362
      %v2494 = vmax.f32 %v2200, %v2369
      %v2495 = vld [vmem:[%s200] sm:$0xff]
      %v2496 = vld [vmem:[%s200 + $0x8] sm:$0xff]
      %v2497 = vld [vmem:[%s200 + $0x10] sm:$0xff]
      %v2498 = vld [vmem:[%s200 + $0x18] sm:$0xff]
      %v2499 = vunpack.c.l.bf16 %v2495
      %v2500 = vunpack.c.h.bf16 %v2495
      %v2501 = vunpack.c.l.bf16 %v2496
      %v2502 = vunpack.c.h.bf16 %v2496
      %v2503 = vunpack.c.l.bf16 %v2497
      %v2504 = vunpack.c.h.bf16 %v2497
      %v2505 = vunpack.c.l.bf16 %v2498
      %v2506 = vunpack.c.h.bf16 %v2498
      %2515 = vrot.lane.b32.xlu0 %v2499, 44
      %v2516 = vpop.permute.xlu0 %2515
      %2517 = vrot.lane.b32.xlu0 %v2500, 44
      %v2518 = vpop.permute.xlu0 %2517
      %2519 = vrot.lane.b32.xlu0 %v2501, 44
      %v2520 = vpop.permute.xlu0 %2519
      %2521 = vrot.lane.b32.xlu0 %v2502, 44
      %v2522 = vpop.permute.xlu0 %2521
      %2523 = vrot.lane.b32.xlu0 %v2503, 44
      %v2524 = vpop.permute.xlu0 %2523
      %2525 = vrot.lane.b32.xlu0 %v2504, 44
      %v2526 = vpop.permute.xlu0 %2525
      %2527 = vrot.lane.b32.xlu0 %v2505, 44
      %v2528 = vpop.permute.xlu0 %2527
      %2529 = vrot.lane.b32.xlu0 %v2506, 44
      %v2530 = vpop.permute.xlu0 %2529
      %v2531 = vrot.slane %v2516, 4
      %v2532 = vrot.slane %v2518, 4
      %v2533 = vrot.slane %v2520, 4
      %v2534 = vrot.slane %v2522, 4
      %v2535 = vrot.slane %v2524, 4
      %v2536 = vrot.slane %v2526, 4
      %v2537 = vrot.slane %v2528, 4
      %v2538 = vrot.slane %v2530, 4
      %v2539 = vsel %vm255, %v2531, %v2532
      %vm2540 = vcmask 359424
      %v2541 = vsel %vm2540, %v2516, %v2539
      %v2542 = vsel %vm2540, %v2518, %v2532
      %v2543 = vsel %vm255, %v2533, %v2534
      %v2544 = vsel %vm2540, %v2520, %v2543
      %v2545 = vsel %vm2540, %v2522, %v2534
      %v2546 = vsel %vm255, %v2535, %v2536
      %v2547 = vsel %vm2540, %v2524, %v2546
      %v2548 = vsel %vm2540, %v2526, %v2536
      %v2549 = vsel %vm255, %v2537, %v2538
      %v2550 = vsel %vm2540, %v2528, %v2549
      %v2551 = vsel %vm2540, %v2530, %v2538
      %v2560 = vmul.f32 %v215, %v2541
      %v2561 = vmul.f32 %v216, %v2542
      %v2562 = vmul.f32 %v217, %v2544
      %v2563 = vmul.f32 %v218, %v2545
      %v2564 = vmul.f32 %v219, %v2547
      %v2565 = vmul.f32 %v220, %v2548
      %v2566 = vmul.f32 %v221, %v2550
      %v2567 = vmul.f32 %v222, %v2551
      %v2572 = vcombine.high %v2560, %v2560
      %v2573 = vcombine.high %v2562, %v2562
      %v2574 = vcombine.high %v2564, %v2564
      %v2575 = vcombine.high %v2566, %v2566
      %v2580 = vsel %vm255, %v2560, 0.0
      %v2581 = vrot.slane %v2580, 4
      %v2582 = vadd.f32 %v2580, %v2581
      %v2583 = vrot.slane %v2582, 2
      %v2584 = vadd.f32 %v2582, %v2583
      %v2585 = vrot.slane %v2584, 1
      %v2586 = vadd.f32 %v2584, %v2585
      %v2587 = vsel %vm255, %v2572, 0.0
      %v2588 = vrot.slane %v2587, 4
      %v2589 = vadd.f32 %v2587, %v2588
      %v2590 = vrot.slane %v2589, 2
      %v2591 = vadd.f32 %v2589, %v2590
      %v2592 = vrot.slane %v2591, 1
      %v2593 = vadd.f32 %v2591, %v2592
      %v2594 = vsel %vm270, %v2561, 0.0
      %v2595 = vrot.slane %v2594, 4
      %v2596 = vadd.f32 %v2594, %v2595
      %v2597 = vrot.slane %v2596, 2
      %v2598 = vadd.f32 %v2596, %v2597
      %v2599 = vrot.slane %v2598, 1
      %v2600 = vadd.f32 %v2598, %v2599
      %v2601 = vsel %vm255, %v2562, 0.0
      %v2602 = vrot.slane %v2601, 4
      %v2603 = vadd.f32 %v2601, %v2602
      %v2604 = vrot.slane %v2603, 2
      %v2605 = vadd.f32 %v2603, %v2604
      %v2606 = vrot.slane %v2605, 1
      %v2607 = vadd.f32 %v2605, %v2606
      %v2608 = vsel %vm255, %v2573, 0.0
      %v2609 = vrot.slane %v2608, 4
      %v2610 = vadd.f32 %v2608, %v2609
      %v2611 = vrot.slane %v2610, 2
      %v2612 = vadd.f32 %v2610, %v2611
      %v2613 = vrot.slane %v2612, 1
      %v2614 = vadd.f32 %v2612, %v2613
      %v2615 = vsel %vm270, %v2563, 0.0
      %v2616 = vrot.slane %v2615, 4
      %v2617 = vadd.f32 %v2615, %v2616
      %v2618 = vrot.slane %v2617, 2
      %v2619 = vadd.f32 %v2617, %v2618
      %v2620 = vrot.slane %v2619, 1
      %v2621 = vadd.f32 %v2619, %v2620
      %v2622 = vsel %vm255, %v2564, 0.0
      %v2623 = vrot.slane %v2622, 4
      %v2624 = vadd.f32 %v2622, %v2623
      %v2625 = vrot.slane %v2624, 2
      %v2626 = vadd.f32 %v2624, %v2625
      %v2627 = vrot.slane %v2626, 1
      %v2628 = vadd.f32 %v2626, %v2627
      %v2629 = vsel %vm255, %v2574, 0.0
      %v2630 = vrot.slane %v2629, 4
      %v2631 = vadd.f32 %v2629, %v2630
      %v2632 = vrot.slane %v2631, 2
      %v2633 = vadd.f32 %v2631, %v2632
      %v2634 = vrot.slane %v2633, 1
      %v2635 = vadd.f32 %v2633, %v2634
      %v2636 = vsel %vm270, %v2565, 0.0
      %v2637 = vrot.slane %v2636, 4
      %v2638 = vadd.f32 %v2636, %v2637
      %v2639 = vrot.slane %v2638, 2
      %v2640 = vadd.f32 %v2638, %v2639
      %v2641 = vrot.slane %v2640, 1
      %v2642 = vadd.f32 %v2640, %v2641
      %v2643 = vsel %vm255, %v2566, 0.0
      %v2644 = vrot.slane %v2643, 4
      %v2645 = vadd.f32 %v2643, %v2644
      %v2646 = vrot.slane %v2645, 2
      %v2647 = vadd.f32 %v2645, %v2646
      %v2648 = vrot.slane %v2647, 1
      %v2649 = vadd.f32 %v2647, %v2648
      %v2650 = vsel %vm255, %v2575, 0.0
      %v2651 = vrot.slane %v2650, 4
      %v2652 = vadd.f32 %v2650, %v2651
      %v2653 = vrot.slane %v2652, 2
      %v2654 = vadd.f32 %v2652, %v2653
      %v2655 = vrot.slane %v2654, 1
      %v2656 = vadd.f32 %v2654, %v2655
      %v2657 = vsel %vm270, %v2567, 0.0
      %v2658 = vrot.slane %v2657, 4
      %v2659 = vadd.f32 %v2657, %v2658
      %v2660 = vrot.slane %v2659, 2
      %v2661 = vadd.f32 %v2659, %v2660
      %v2662 = vrot.slane %v2661, 1
      %v2663 = vadd.f32 %v2661, %v2662
      %v2676 = vcombine.low %v2586, %v2593
      %v2678 = vunpack.c.l.s4 1966171168
      %v2679 = vunpack.c.0.s8 %v2678
      %v2680 = vlaneseq
      %v2681 = vshrl.u32 %v2680, 7
      %v2682 = vsub.s32 %v2679, %v2681
      %v2683 = vrot.slane %v2676, %v2682
      %v2685 = vunpack.c.l.s4 1966171168
      %v2686 = vunpack.c.0.s8 %v2685
      %v2687 = vlaneseq
      %v2688 = vshrl.u32 %v2687, 7
      %v2689 = vsub.s32 %v2686, %v2688
      %v2690 = vrot.slane %v2600, %v2689
      %v2691 = vcombine.low %v2683, %v2690
      %v2693 = vunpack.c.l.s4 1966171168
      %v2694 = vunpack.c.0.s8 %v2693
      %v2695 = vlaneseq
      %v2696 = vshrl.u32 %v2695, 7
      %v2697 = vsub.s32 %v2694, %v2696
      %v2698 = vrot.slane %v2691, %v2697
      %v2699 = vcombine.low %v2607, %v2614
      %v2701 = vunpack.c.l.s4 1966171168
      %v2702 = vunpack.c.0.s8 %v2701
      %v2703 = vlaneseq
      %v2704 = vshrl.u32 %v2703, 7
      %v2705 = vsub.s32 %v2702, %v2704
      %v2706 = vrot.slane %v2699, %v2705
      %v2708 = vunpack.c.l.s4 1966171168
      %v2709 = vunpack.c.0.s8 %v2708
      %v2710 = vlaneseq
      %v2711 = vshrl.u32 %v2710, 7
      %v2712 = vsub.s32 %v2709, %v2711
      %v2713 = vrot.slane %v2621, %v2712
      %v2714 = vcombine.low %v2706, %v2713
      %v2716 = vunpack.c.l.s4 1966171168
      %v2717 = vunpack.c.0.s8 %v2716
      %v2718 = vlaneseq
      %v2719 = vshrl.u32 %v2718, 7
      %v2720 = vsub.s32 %v2717, %v2719
      %v2721 = vrot.slane %v2714, %v2720
      %v2722 = vcombine.low %v2628, %v2635
      %v2724 = vunpack.c.l.s4 1966171168
      %v2725 = vunpack.c.0.s8 %v2724
      %v2726 = vlaneseq
      %v2727 = vshrl.u32 %v2726, 7
      %v2728 = vsub.s32 %v2725, %v2727
      %v2729 = vrot.slane %v2722, %v2728
      %v2731 = vunpack.c.l.s4 1966171168
      %v2732 = vunpack.c.0.s8 %v2731
      %v2733 = vlaneseq
      %v2734 = vshrl.u32 %v2733, 7
      %v2735 = vsub.s32 %v2732, %v2734
      %v2736 = vrot.slane %v2642, %v2735
      %v2737 = vcombine.low %v2729, %v2736
      %v2739 = vunpack.c.l.s4 1966171168
      %v2740 = vunpack.c.0.s8 %v2739
      %v2741 = vlaneseq
      %v2742 = vshrl.u32 %v2741, 7
      %v2743 = vsub.s32 %v2740, %v2742
      %v2744 = vrot.slane %v2737, %v2743
      %v2745 = vcombine.low %v2649, %v2656
      %v2747 = vunpack.c.l.s4 1966171168
      %v2748 = vunpack.c.0.s8 %v2747
      %v2749 = vlaneseq
      %v2750 = vshrl.u32 %v2749, 7
      %v2751 = vsub.s32 %v2748, %v2750
      %v2752 = vrot.slane %v2745, %v2751
      %v2754 = vunpack.c.l.s4 1966171168
      %v2755 = vunpack.c.0.s8 %v2754
      %v2756 = vlaneseq
      %v2757 = vshrl.u32 %v2756, 7
      %v2758 = vsub.s32 %v2755, %v2757
      %v2759 = vrot.slane %v2663, %v2758
      %v2760 = vcombine.low %v2752, %v2759
      %v2762 = vunpack.c.l.s4 1966171168
      %v2763 = vunpack.c.0.s8 %v2762
      %v2764 = vlaneseq
      %v2765 = vshrl.u32 %v2764, 7
      %v2766 = vsub.s32 %v2763, %v2765
      %v2767 = vrot.slane %v2760, %v2766
      %s2772 = scalar_lea.vmem [#allocation2], 96
      %2773 = vst.msk [vmem:[%s2772] sm:$0x7] %vm452, %v2698
      %2774 = vst.msk [vmem:[%s2772 + $0x3] sm:$0x7] %vm452, %v2721
      %2775 = vst.msk [vmem:[%s2772 + $0x6] sm:$0x7] %vm452, %v2744
      %2776 = vst.msk [vmem:[%s2772 + $0x9] sm:$0x7] %vm452, %v2767
      %v2777 = vmax.f32 %v2483, %v2586
      %v2778 = vmax.f32 %v2484, %v2593
      %v2779 = vmax.f32 %v2485, %v2600
      %v2780 = vmax.f32 %v2486, %v2607
      %v2781 = vmax.f32 %v2487, %v2614
      %v2782 = vmax.f32 %v2488, %v2621
      %v2783 = vmax.f32 %v2489, %v2628
      %v2784 = vmax.f32 %v2490, %v2635
      %v2785 = vmax.f32 %v2491, %v2642
      %v2786 = vmax.f32 %v2492, %v2649
      %v2787 = vmax.f32 %v2493, %v2656
      %v2788 = vmax.f32 %v2494, %v2663
      %v2789 = vld [vmem:[#allocation2] sm:$0x7]
      %v2790 = vld [vmem:[#allocation2 + $0x3] sm:$0x7]
      %v2791 = vld [vmem:[#allocation2 + $0x6] sm:$0x7]
      %v2792 = vld [vmem:[#allocation2 + $0x9] sm:$0x7]
      %v2805 = vcombine.low %v2777, %v2778
      %v2807 = vunpack.c.l.s4 1966171168
      %v2808 = vunpack.c.0.s8 %v2807
      %v2809 = vlaneseq
      %v2810 = vshrl.u32 %v2809, 7
      %v2811 = vsub.s32 %v2808, %v2810
      %v2812 = vrot.slane %v2805, %v2811
      %v2814 = vunpack.c.l.s4 1966171168
      %v2815 = vunpack.c.0.s8 %v2814
      %v2816 = vlaneseq
      %v2817 = vshrl.u32 %v2816, 7
      %v2818 = vsub.s32 %v2815, %v2817
      %v2819 = vrot.slane %v2779, %v2818
      %v2820 = vcombine.low %v2812, %v2819
      %v2822 = vunpack.c.l.s4 1966171168
      %v2823 = vunpack.c.0.s8 %v2822
      %v2824 = vlaneseq
      %v2825 = vshrl.u32 %v2824, 7
      %v2826 = vsub.s32 %v2823, %v2825
      %v2827 = vrot.slane %v2820, %v2826
      %v2828 = vcombine.low %v2780, %v2781
      %v2830 = vunpack.c.l.s4 1966171168
      %v2831 = vunpack.c.0.s8 %v2830
      %v2832 = vlaneseq
      %v2833 = vshrl.u32 %v2832, 7
      %v2834 = vsub.s32 %v2831, %v2833
      %v2835 = vrot.slane %v2828, %v2834
      %v2837 = vunpack.c.l.s4 1966171168
      %v2838 = vunpack.c.0.s8 %v2837
      %v2839 = vlaneseq
      %v2840 = vshrl.u32 %v2839, 7
      %v2841 = vsub.s32 %v2838, %v2840
      %v2842 = vrot.slane %v2782, %v2841
      %v2843 = vcombine.low %v2835, %v2842
      %v2845 = vunpack.c.l.s4 1966171168
      %v2846 = vunpack.c.0.s8 %v2845
      %v2847 = vlaneseq
      %v2848 = vshrl.u32 %v2847, 7
      %v2849 = vsub.s32 %v2846, %v2848
      %v2850 = vrot.slane %v2843, %v2849
      %v2851 = vcombine.low %v2783, %v2784
      %v2853 = vunpack.c.l.s4 1966171168
      %v2854 = vunpack.c.0.s8 %v2853
      %v2855 = vlaneseq
      %v2856 = vshrl.u32 %v2855, 7
      %v2857 = vsub.s32 %v2854, %v2856
      %v2858 = vrot.slane %v2851, %v2857
      %v2860 = vunpack.c.l.s4 1966171168
      %v2861 = vunpack.c.0.s8 %v2860
      %v2862 = vlaneseq
      %v2863 = vshrl.u32 %v2862, 7
      %v2864 = vsub.s32 %v2861, %v2863
      %v2865 = vrot.slane %v2785, %v2864
      %v2866 = vcombine.low %v2858, %v2865
      %v2868 = vunpack.c.l.s4 1966171168
      %v2869 = vunpack.c.0.s8 %v2868
      %v2870 = vlaneseq
      %v2871 = vshrl.u32 %v2870, 7
      %v2872 = vsub.s32 %v2869, %v2871
      %v2873 = vrot.slane %v2866, %v2872
      %v2874 = vcombine.low %v2786, %v2787
      %v2876 = vunpack.c.l.s4 1966171168
      %v2877 = vunpack.c.0.s8 %v2876
      %v2878 = vlaneseq
      %v2879 = vshrl.u32 %v2878, 7
      %v2880 = vsub.s32 %v2877, %v2879
      %v2881 = vrot.slane %v2874, %v2880
      %v2883 = vunpack.c.l.s4 1966171168
      %v2884 = vunpack.c.0.s8 %v2883
      %v2885 = vlaneseq
      %v2886 = vshrl.u32 %v2885, 7
      %v2887 = vsub.s32 %v2884, %v2886
      %v2888 = vrot.slane %v2788, %v2887
      %v2889 = vcombine.low %v2881, %v2888
      %v2891 = vunpack.c.l.s4 1966171168
      %v2892 = vunpack.c.0.s8 %v2891
      %v2893 = vlaneseq
      %v2894 = vshrl.u32 %v2893, 7
      %v2895 = vsub.s32 %v2892, %v2894
      %v2896 = vrot.slane %v2889, %v2895
      %v2901 = vsub.f32 %v2789, %v2827
      %v2902 = vsub.f32 %v2790, %v2850
      %v2903 = vsub.f32 %v2791, %v2873
      %v2904 = vsub.f32 %v2792, %v2896
      %v2905 = vmul.f32 %v2901, 1.442695
      %v2906 = vpow.pop %v2905
      %v2907 = vmul.f32 %v2902, 1.442695
      %v2908 = vpow.pop %v2907
      %v2909 = vmul.f32 %v2903, 1.442695
      %v2910 = vpow.pop %v2909
      %v2911 = vmul.f32 %v2904, 1.442695
      %v2912 = vpow.pop %v2911
      %v2913 = vadd.f32 %v2906, 0.0
      %v2914 = vadd.f32 %v2908, 0.0
      %v2915 = vadd.f32 %v2910, 0.0
      %v2916 = vadd.f32 %v2912, 0.0
      %v2917 = vld [vmem:[%s205] sm:$0x3f]
      %v2918 = vld [vmem:[%s205 + $0x8] sm:$0x3f]
      %v2919 = vld [vmem:[%s205 + $0x10] sm:$0x3f]
      %v2920 = vld [vmem:[%s205 + $0x18] sm:$0x3f]
      %v2921 = vunpack.c.l.bf16 %v2917
      %v2922 = vunpack.c.h.bf16 %v2917
      %v2923 = vunpack.c.l.bf16 %v2918
      %v2924 = vunpack.c.h.bf16 %v2918
      %v2925 = vunpack.c.l.bf16 %v2919
      %v2926 = vunpack.c.h.bf16 %v2919
      %v2927 = vunpack.c.l.bf16 %v2920
      %v2928 = vunpack.c.h.bf16 %v2920
      %v2933 = vlaneseq
      %v2934 = vshrl.u32 %v2933, 7
      %v2935 = vsub.s32 0, %v2934
      %v2936 = vrot.slane %v2906, %v2935
      %v2937 = vlaneseq
      %v2938 = vshrl.u32 %v2937, 7
      %v2939 = vsub.s32 1, %v2938
      %v2940 = vrot.slane %v2906, %v2939
      %v2941 = vlaneseq
      %v2942 = vshrl.u32 %v2941, 7
      %v2943 = vsub.s32 2, %v2942
      %v2944 = vrot.slane %v2906, %v2943
      %v2945 = vlaneseq
      %v2946 = vshrl.u32 %v2945, 7
      %v2947 = vsub.s32 0, %v2946
      %v2948 = vrot.slane %v2908, %v2947
      %v2949 = vlaneseq
      %v2950 = vshrl.u32 %v2949, 7
      %v2951 = vsub.s32 1, %v2950
      %v2952 = vrot.slane %v2908, %v2951
      %v2953 = vlaneseq
      %v2954 = vshrl.u32 %v2953, 7
      %v2955 = vsub.s32 2, %v2954
      %v2956 = vrot.slane %v2908, %v2955
      %v2957 = vlaneseq
      %v2958 = vshrl.u32 %v2957, 7
      %v2959 = vsub.s32 0, %v2958
      %v2960 = vrot.slane %v2910, %v2959
      %v2961 = vlaneseq
      %v2962 = vshrl.u32 %v2961, 7
      %v2963 = vsub.s32 1, %v2962
      %v2964 = vrot.slane %v2910, %v2963
      %v2965 = vlaneseq
      %v2966 = vshrl.u32 %v2965, 7
      %v2967 = vsub.s32 2, %v2966
      %v2968 = vrot.slane %v2910, %v2967
      %v2969 = vlaneseq
      %v2970 = vshrl.u32 %v2969, 7
      %v2971 = vsub.s32 0, %v2970
      %v2972 = vrot.slane %v2912, %v2971
      %v2973 = vlaneseq
      %v2974 = vshrl.u32 %v2973, 7
      %v2975 = vsub.s32 1, %v2974
      %v2976 = vrot.slane %v2912, %v2975
      %v2977 = vlaneseq
      %v2978 = vshrl.u32 %v2977, 7
      %v2979 = vsub.s32 2, %v2978
      %v2980 = vrot.slane %v2912, %v2979
      %v2997 = vcombine.high %v2921, %v2921
      %v2998 = vcombine.high %v2923, %v2923
      %v2999 = vcombine.high %v2925, %v2925
      %v3000 = vcombine.high %v2927, %v2927
      %v3005 = vmul.f32 %v2936, %v2921
      %v3006 = vmul.f32 %v2940, %v2997
      %v3007 = vmul.f32 %v2944, %v2922
      %v3008 = vmul.f32 %v2948, %v2923
      %v3009 = vmul.f32 %v2952, %v2998
      %v3010 = vmul.f32 %v2956, %v2924
      %v3011 = vmul.f32 %v2960, %v2925
      %v3012 = vmul.f32 %v2964, %v2999
      %v3013 = vmul.f32 %v2968, %v2926
      %v3014 = vmul.f32 %v2972, %v2927
      %v3015 = vmul.f32 %v2976, %v3000
      %v3016 = vmul.f32 %v2980, %v2928
      %v3017 = vadd.f32 %v3005, 0.0
      %v3018 = vadd.f32 %v3006, 0.0
      %v3019 = vadd.f32 %v3007, 0.0
      %v3020 = vadd.f32 %v3008, 0.0
      %v3021 = vadd.f32 %v3009, 0.0
      %v3022 = vadd.f32 %v3010, 0.0
      %v3023 = vadd.f32 %v3011, 0.0
      %v3024 = vadd.f32 %v3012, 0.0
      %v3025 = vadd.f32 %v3013, 0.0
      %v3026 = vadd.f32 %v3014, 0.0
      %v3027 = vadd.f32 %v3015, 0.0
      %v3028 = vadd.f32 %v3016, 0.0
      %v3029 = vld [vmem:[%s730] sm:$0x7]
      %v3030 = vld [vmem:[%s730 + $0x3] sm:$0x7]
      %v3031 = vld [vmem:[%s730 + $0x6] sm:$0x7]
      %v3032 = vld [vmem:[%s730 + $0x9] sm:$0x7]
      %v3033 = vsub.f32 %v3029, %v2827
      %v3034 = vsub.f32 %v3030, %v2850
      %v3035 = vsub.f32 %v3031, %v2873
      %v3036 = vsub.f32 %v3032, %v2896
      %v3037 = vmul.f32 %v3033, 1.442695
      %v3038 = vpow.pop %v3037
      %v3039 = vmul.f32 %v3034, 1.442695
      %v3040 = vpow.pop %v3039
      %v3041 = vmul.f32 %v3035, 1.442695
      %v3042 = vpow.pop %v3041
      %v3043 = vmul.f32 %v3036, 1.442695
      %v3044 = vpow.pop %v3043
      %v3045 = vadd.f32 %v2913, %v3038
      %v3046 = vadd.f32 %v2914, %v3040
      %v3047 = vadd.f32 %v2915, %v3042
      %v3048 = vadd.f32 %v2916, %v3044
      %v3053 = vlaneseq
      %v3054 = vshrl.u32 %v3053, 7
      %v3055 = vsub.s32 0, %v3054
      %v3056 = vrot.slane %v3038, %v3055
      %v3057 = vlaneseq
      %v3058 = vshrl.u32 %v3057, 7
      %v3059 = vsub.s32 1, %v3058
      %v3060 = vrot.slane %v3038, %v3059
      %v3061 = vlaneseq
      %v3062 = vshrl.u32 %v3061, 7
      %v3063 = vsub.s32 2, %v3062
      %v3064 = vrot.slane %v3038, %v3063
      %v3065 = vlaneseq
      %v3066 = vshrl.u32 %v3065, 7
      %v3067 = vsub.s32 0, %v3066
      %v3068 = vrot.slane %v3040, %v3067
      %v3069 = vlaneseq
      %v3070 = vshrl.u32 %v3069, 7
      %v3071 = vsub.s32 1, %v3070
      %v3072 = vrot.slane %v3040, %v3071
      %v3073 = vlaneseq
      %v3074 = vshrl.u32 %v3073, 7
      %v3075 = vsub.s32 2, %v3074
      %v3076 = vrot.slane %v3040, %v3075
      %v3077 = vlaneseq
      %v3078 = vshrl.u32 %v3077, 7
      %v3079 = vsub.s32 0, %v3078
      %v3080 = vrot.slane %v3042, %v3079
      %v3081 = vlaneseq
      %v3082 = vshrl.u32 %v3081, 7
      %v3083 = vsub.s32 1, %v3082
      %v3084 = vrot.slane %v3042, %v3083
      %v3085 = vlaneseq
      %v3086 = vshrl.u32 %v3085, 7
      %v3087 = vsub.s32 2, %v3086
      %v3088 = vrot.slane %v3042, %v3087
      %v3089 = vlaneseq
      %v3090 = vshrl.u32 %v3089, 7
      %v3091 = vsub.s32 0, %v3090
      %v3092 = vrot.slane %v3044, %v3091
      %v3093 = vlaneseq
      %v3094 = vshrl.u32 %v3093, 7
      %v3095 = vsub.s32 1, %v3094
      %v3096 = vrot.slane %v3044, %v3095
      %v3097 = vlaneseq
      %v3098 = vshrl.u32 %v3097, 7
      %v3099 = vsub.s32 2, %v3098
      %v3100 = vrot.slane %v3044, %v3099
      %3117 = vrot.lane.b32.xlu0 %v2921, 126
      %v3118 = vpop.permute.xlu0 %3117
      %3119 = vrot.lane.b32.xlu0 %v2997, 126
      %v3120 = vpop.permute.xlu0 %3119
      %3121 = vrot.lane.b32.xlu0 %v2922, 126
      %v3122 = vpop.permute.xlu0 %3121
      %3123 = vrot.lane.b32.xlu0 %v2923, 126
      %v3124 = vpop.permute.xlu0 %3123
      %3125 = vrot.lane.b32.xlu0 %v2998, 126
      %v3126 = vpop.permute.xlu0 %3125
      %3127 = vrot.lane.b32.xlu0 %v2924, 126
      %v3128 = vpop.permute.xlu0 %3127
      %3129 = vrot.lane.b32.xlu0 %v2925, 126
      %v3130 = vpop.permute.xlu0 %3129
      %3131 = vrot.lane.b32.xlu0 %v2999, 126
      %v3132 = vpop.permute.xlu0 %3131
      %3133 = vrot.lane.b32.xlu0 %v2926, 126
      %v3134 = vpop.permute.xlu0 %3133
      %3135 = vrot.lane.b32.xlu0 %v2927, 126
      %v3136 = vpop.permute.xlu0 %3135
      %3137 = vrot.lane.b32.xlu0 %v3000, 126
      %v3138 = vpop.permute.xlu0 %3137
      %3139 = vrot.lane.b32.xlu0 %v2928, 126
      %v3140 = vpop.permute.xlu0 %3139
      %v3141 = vsel %vm502, %v3118, %v3120
      %v3142 = vsel %vm502, %v3120, %v3122
      %v3143 = vsel %vm502, %v3124, %v3126
      %v3144 = vsel %vm502, %v3126, %v3128
      %v3145 = vsel %vm502, %v3130, %v3132
      %v3146 = vsel %vm502, %v3132, %v3134
      %v3147 = vsel %vm502, %v3136, %v3138
      %v3148 = vsel %vm502, %v3138, %v3140
      %v3161 = vmul.f32 %v3056, %v3141
      %v3162 = vmul.f32 %v3060, %v3142
      %v3163 = vmul.f32 %v3064, %v3122
      %v3164 = vmul.f32 %v3068, %v3143
      %v3165 = vmul.f32 %v3072, %v3144
      %v3166 = vmul.f32 %v3076, %v3128
      %v3167 = vmul.f32 %v3080, %v3145
      %v3168 = vmul.f32 %v3084, %v3146
      %v3169 = vmul.f32 %v3088, %v3134
      %v3170 = vmul.f32 %v3092, %v3147
      %v3171 = vmul.f32 %v3096, %v3148
      %v3172 = vmul.f32 %v3100, %v3140
      %v3173 = vadd.f32 %v3017, %v3161
      %v3174 = vadd.f32 %v3018, %v3162
      %v3175 = vadd.f32 %v3019, %v3163
      %v3176 = vadd.f32 %v3020, %v3164
      %v3177 = vadd.f32 %v3021, %v3165
      %v3178 = vadd.f32 %v3022, %v3166
      %v3179 = vadd.f32 %v3023, %v3167
      %v3180 = vadd.f32 %v3024, %v3168
      %v3181 = vadd.f32 %v3025, %v3169
      %v3182 = vadd.f32 %v3026, %v3170
      %v3183 = vadd.f32 %v3027, %v3171
      %v3184 = vadd.f32 %v3028, %v3172
      %v3185 = vld [vmem:[%s1020] sm:$0x7]
      %v3186 = vld [vmem:[%s1020 + $0x3] sm:$0x7]
      %v3187 = vld [vmem:[%s1020 + $0x6] sm:$0x7]
      %v3188 = vld [vmem:[%s1020 + $0x9] sm:$0x7]
      %v3189 = vsub.f32 %v3185, %v2827
      %v3190 = vsub.f32 %v3186, %v2850
      %v3191 = vsub.f32 %v3187, %v2873
      %v3192 = vsub.f32 %v3188, %v2896
      %v3193 = vmul.f32 %v3189, 1.442695
      %v3194 = vpow.pop %v3193
      %v3195 = vmul.f32 %v3190, 1.442695
      %v3196 = vpow.pop %v3195
      %v3197 = vmul.f32 %v3191, 1.442695
      %v3198 = vpow.pop %v3197
      %v3199 = vmul.f32 %v3192, 1.442695
      %v3200 = vpow.pop %v3199
      %v3201 = vadd.f32 %v3045, %v3194
      %v3202 = vadd.f32 %v3046, %v3196
      %v3203 = vadd.f32 %v3047, %v3198
      %v3204 = vadd.f32 %v3048, %v3200
      %v3209 = vlaneseq
      %v3210 = vshrl.u32 %v3209, 7
      %v3211 = vsub.s32 0, %v3210
      %v3212 = vrot.slane %v3194, %v3211
      %v3213 = vlaneseq
      %v3214 = vshrl.u32 %v3213, 7
      %v3215 = vsub.s32 1, %v3214
      %v3216 = vrot.slane %v3194, %v3215
      %v3217 = vlaneseq
      %v3218 = vshrl.u32 %v3217, 7
      %v3219 = vsub.s32 2, %v3218
      %v3220 = vrot.slane %v3194, %v3219
      %v3221 = vlaneseq
      %v3222 = vshrl.u32 %v3221, 7
      %v3223 = vsub.s32 0, %v3222
      %v3224 = vrot.slane %v3196, %v3223
      %v3225 = vlaneseq
      %v3226 = vshrl.u32 %v3225, 7
      %v3227 = vsub.s32 1, %v3226
      %v3228 = vrot.slane %v3196, %v3227
      %v3229 = vlaneseq
      %v3230 = vshrl.u32 %v3229, 7
      %v3231 = vsub.s32 2, %v3230
      %v3232 = vrot.slane %v3196, %v3231
      %v3233 = vlaneseq
      %v3234 = vshrl.u32 %v3233, 7
      %v3235 = vsub.s32 0, %v3234
      %v3236 = vrot.slane %v3198, %v3235
      %v3237 = vlaneseq
      %v3238 = vshrl.u32 %v3237, 7
      %v3239 = vsub.s32 1, %v3238
      %v3240 = vrot.slane %v3198, %v3239
      %v3241 = vlaneseq
      %v3242 = vshrl.u32 %v3241, 7
      %v3243 = vsub.s32 2, %v3242
      %v3244 = vrot.slane %v3198, %v3243
      %v3245 = vlaneseq
      %v3246 = vshrl.u32 %v3245, 7
      %v3247 = vsub.s32 0, %v3246
      %v3248 = vrot.slane %v3200, %v3247
      %v3249 = vlaneseq
      %v3250 = vshrl.u32 %v3249, 7
      %v3251 = vsub.s32 1, %v3250
      %v3252 = vrot.slane %v3200, %v3251
      %v3253 = vlaneseq
      %v3254 = vshrl.u32 %v3253, 7
      %v3255 = vsub.s32 2, %v3254
      %v3256 = vrot.slane %v3200, %v3255
      %3269 = vrot.lane.b32.xlu0 %v2921, 124
      %v3270 = vpop.permute.xlu0 %3269
      %3271 = vrot.lane.b32.xlu0 %v2997, 124
      %v3272 = vpop.permute.xlu0 %3271
      %3273 = vrot.lane.b32.xlu0 %v2922, 124
      %v3274 = vpop.permute.xlu0 %3273
      %3275 = vrot.lane.b32.xlu0 %v2923, 124
      %v3276 = vpop.permute.xlu0 %3275
      %3277 = vrot.lane.b32.xlu0 %v2998, 124
      %v3278 = vpop.permute.xlu0 %3277
      %3279 = vrot.lane.b32.xlu0 %v2924, 124
      %v3280 = vpop.permute.xlu0 %3279
      %3281 = vrot.lane.b32.xlu0 %v2925, 124
      %v3282 = vpop.permute.xlu0 %3281
      %3283 = vrot.lane.b32.xlu0 %v2999, 124
      %v3284 = vpop.permute.xlu0 %3283
      %3285 = vrot.lane.b32.xlu0 %v2926, 124
      %v3286 = vpop.permute.xlu0 %3285
      %3287 = vrot.lane.b32.xlu0 %v2927, 124
      %v3288 = vpop.permute.xlu0 %3287
      %3289 = vrot.lane.b32.xlu0 %v3000, 124
      %v3290 = vpop.permute.xlu0 %3289
      %3291 = vrot.lane.b32.xlu0 %v2928, 124
      %v3292 = vpop.permute.xlu0 %3291
      %v3293 = vsel %vm792, %v3270, %v3272
      %v3294 = vsel %vm792, %v3272, %v3274
      %v3295 = vsel %vm792, %v3276, %v3278
      %v3296 = vsel %vm792, %v3278, %v3280
      %v3297 = vsel %vm792, %v3282, %v3284
      %v3298 = vsel %vm792, %v3284, %v3286
      %v3299 = vsel %vm792, %v3288, %v3290
      %v3300 = vsel %vm792, %v3290, %v3292
      %v3313 = vmul.f32 %v3212, %v3293
      %v3314 = vmul.f32 %v3216, %v3294
      %v3315 = vmul.f32 %v3220, %v3274
      %v3316 = vmul.f32 %v3224, %v3295
      %v3317 = vmul.f32 %v3228, %v3296
      %v3318 = vmul.f32 %v3232, %v3280
      %v3319 = vmul.f32 %v3236, %v3297
      %v3320 = vmul.f32 %v3240, %v3298
      %v3321 = vmul.f32 %v3244, %v3286
      %v3322 = vmul.f32 %v3248, %v3299
      %v3323 = vmul.f32 %v3252, %v3300
      %v3324 = vmul.f32 %v3256, %v3292
      %v3325 = vadd.f32 %v3173, %v3313
      %v3326 = vadd.f32 %v3174, %v3314
      %v3327 = vadd.f32 %v3175, %v3315
      %v3328 = vadd.f32 %v3176, %v3316
      %v3329 = vadd.f32 %v3177, %v3317
      %v3330 = vadd.f32 %v3178, %v3318
      %v3331 = vadd.f32 %v3179, %v3319
      %v3332 = vadd.f32 %v3180, %v3320
      %v3333 = vadd.f32 %v3181, %v3321
      %v3334 = vadd.f32 %v3182, %v3322
      %v3335 = vadd.f32 %v3183, %v3323
      %v3336 = vadd.f32 %v3184, %v3324
      %v3337 = vld [vmem:[%s1310] sm:$0x7]
      %v3338 = vld [vmem:[%s1310 + $0x3] sm:$0x7]
      %v3339 = vld [vmem:[%s1310 + $0x6] sm:$0x7]
      %v3340 = vld [vmem:[%s1310 + $0x9] sm:$0x7]
      %v3341 = vsub.f32 %v3337, %v2827
      %v3342 = vsub.f32 %v3338, %v2850
      %v3343 = vsub.f32 %v3339, %v2873
      %v3344 = vsub.f32 %v3340, %v2896
      %v3345 = vmul.f32 %v3341, 1.442695
      %v3346 = vpow.pop %v3345
      %v3347 = vmul.f32 %v3342, 1.442695
      %v3348 = vpow.pop %v3347
      %v3349 = vmul.f32 %v3343, 1.442695
      %v3350 = vpow.pop %v3349
      %v3351 = vmul.f32 %v3344, 1.442695
      %v3352 = vpow.pop %v3351
      %v3353 = vadd.f32 %v3201, %v3346
      %v3354 = vadd.f32 %v3202, %v3348
      %v3355 = vadd.f32 %v3203, %v3350
      %v3356 = vadd.f32 %v3204, %v3352
      %v3361 = vlaneseq
      %v3362 = vshrl.u32 %v3361, 7
      %v3363 = vsub.s32 0, %v3362
      %v3364 = vrot.slane %v3346, %v3363
      %v3365 = vlaneseq
      %v3366 = vshrl.u32 %v3365, 7
      %v3367 = vsub.s32 1, %v3366
      %v3368 = vrot.slane %v3346, %v3367
      %v3369 = vlaneseq
      %v3370 = vshrl.u32 %v3369, 7
      %v3371 = vsub.s32 2, %v3370
      %v3372 = vrot.slane %v3346, %v3371
      %v3373 = vlaneseq
      %v3374 = vshrl.u32 %v3373, 7
      %v3375 = vsub.s32 0, %v3374
      %v3376 = vrot.slane %v3348, %v3375
      %v3377 = vlaneseq
      %v3378 = vshrl.u32 %v3377, 7
      %v3379 = vsub.s32 1, %v3378
      %v3380 = vrot.slane %v3348, %v3379
      %v3381 = vlaneseq
      %v3382 = vshrl.u32 %v3381, 7
      %v3383 = vsub.s32 2, %v3382
      %v3384 = vrot.slane %v3348, %v3383
      %v3385 = vlaneseq
      %v3386 = vshrl.u32 %v3385, 7
      %v3387 = vsub.s32 0, %v3386
      %v3388 = vrot.slane %v3350, %v3387
      %v3389 = vlaneseq
      %v3390 = vshrl.u32 %v3389, 7
      %v3391 = vsub.s32 1, %v3390
      %v3392 = vrot.slane %v3350, %v3391
      %v3393 = vlaneseq
      %v3394 = vshrl.u32 %v3393, 7
      %v3395 = vsub.s32 2, %v3394
      %v3396 = vrot.slane %v3350, %v3395
      %v3397 = vlaneseq
      %v3398 = vshrl.u32 %v3397, 7
      %v3399 = vsub.s32 0, %v3398
      %v3400 = vrot.slane %v3352, %v3399
      %v3401 = vlaneseq
      %v3402 = vshrl.u32 %v3401, 7
      %v3403 = vsub.s32 1, %v3402
      %v3404 = vrot.slane %v3352, %v3403
      %v3405 = vlaneseq
      %v3406 = vshrl.u32 %v3405, 7
      %v3407 = vsub.s32 2, %v3406
      %v3408 = vrot.slane %v3352, %v3407
      %3421 = vrot.lane.b32.xlu0 %v2921, 88
      %v3422 = vpop.permute.xlu0 %3421
      %3423 = vrot.lane.b32.xlu0 %v2997, 88
      %v3424 = vpop.permute.xlu0 %3423
      %3425 = vrot.lane.b32.xlu0 %v2922, 88
      %v3426 = vpop.permute.xlu0 %3425
      %3427 = vrot.lane.b32.xlu0 %v2923, 88
      %v3428 = vpop.permute.xlu0 %3427
      %3429 = vrot.lane.b32.xlu0 %v2998, 88
      %v3430 = vpop.permute.xlu0 %3429
      %3431 = vrot.lane.b32.xlu0 %v2924, 88
      %v3432 = vpop.permute.xlu0 %3431
      %3433 = vrot.lane.b32.xlu0 %v2925, 88
      %v3434 = vpop.permute.xlu0 %3433
      %3435 = vrot.lane.b32.xlu0 %v2999, 88
      %v3436 = vpop.permute.xlu0 %3435
      %3437 = vrot.lane.b32.xlu0 %v2926, 88
      %v3438 = vpop.permute.xlu0 %3437
      %3439 = vrot.lane.b32.xlu0 %v2927, 88
      %v3440 = vpop.permute.xlu0 %3439
      %3441 = vrot.lane.b32.xlu0 %v3000, 88
      %v3442 = vpop.permute.xlu0 %3441
      %3443 = vrot.lane.b32.xlu0 %v2928, 88
      %v3444 = vpop.permute.xlu0 %3443
      %v3445 = vsel %vm1082, %v3422, %v3424
      %v3446 = vsel %vm1082, %v3424, %v3426
      %v3447 = vsel %vm1082, %v3428, %v3430
      %v3448 = vsel %vm1082, %v3430, %v3432
      %v3449 = vsel %vm1082, %v3434, %v3436
      %v3450 = vsel %vm1082, %v3436, %v3438
      %v3451 = vsel %vm1082, %v3440, %v3442
      %v3452 = vsel %vm1082, %v3442, %v3444
      %v3465 = vmul.f32 %v3364, %v3445
      %v3466 = vmul.f32 %v3368, %v3446
      %v3467 = vmul.f32 %v3372, %v3426
      %v3468 = vmul.f32 %v3376, %v3447
      %v3469 = vmul.f32 %v3380, %v3448
      %v3470 = vmul.f32 %v3384, %v3432
      %v3471 = vmul.f32 %v3388, %v3449
      %v3472 = vmul.f32 %v3392, %v3450
      %v3473 = vmul.f32 %v3396, %v3438
      %v3474 = vmul.f32 %v3400, %v3451
      %v3475 = vmul.f32 %v3404, %v3452
      %v3476 = vmul.f32 %v3408, %v3444
      %v3477 = vadd.f32 %v3325, %v3465
      %v3478 = vadd.f32 %v3326, %v3466
      %v3479 = vadd.f32 %v3327, %v3467
      %v3480 = vadd.f32 %v3328, %v3468
      %v3481 = vadd.f32 %v3329, %v3469
      %v3482 = vadd.f32 %v3330, %v3470
      %v3483 = vadd.f32 %v3331, %v3471
      %v3484 = vadd.f32 %v3332, %v3472
      %v3485 = vadd.f32 %v3333, %v3473
      %v3486 = vadd.f32 %v3334, %v3474
      %v3487 = vadd.f32 %v3335, %v3475
      %v3488 = vadd.f32 %v3336, %v3476
      %v3489 = vld [vmem:[%s1600] sm:$0x7]
      %v3490 = vld [vmem:[%s1600 + $0x3] sm:$0x7]
      %v3491 = vld [vmem:[%s1600 + $0x6] sm:$0x7]
      %v3492 = vld [vmem:[%s1600 + $0x9] sm:$0x7]
      %v3493 = vsub.f32 %v3489, %v2827
      %v3494 = vsub.f32 %v3490, %v2850
      %v3495 = vsub.f32 %v3491, %v2873
      %v3496 = vsub.f32 %v3492, %v2896
      %v3497 = vmul.f32 %v3493, 1.442695
      %v3498 = vpow.pop %v3497
      %v3499 = vmul.f32 %v3494, 1.442695
      %v3500 = vpow.pop %v3499
      %v3501 = vmul.f32 %v3495, 1.442695
      %v3502 = vpow.pop %v3501
      %v3503 = vmul.f32 %v3496, 1.442695
      %v3504 = vpow.pop %v3503
      %v3505 = vadd.f32 %v3353, %v3498
      %v3506 = vadd.f32 %v3354, %v3500
      %v3507 = vadd.f32 %v3355, %v3502
      %v3508 = vadd.f32 %v3356, %v3504
      %v3513 = vlaneseq
      %v3514 = vshrl.u32 %v3513, 7
      %v3515 = vsub.s32 0, %v3514
      %v3516 = vrot.slane %v3498, %v3515
      %v3517 = vlaneseq
      %v3518 = vshrl.u32 %v3517, 7
      %v3519 = vsub.s32 1, %v3518
      %v3520 = vrot.slane %v3498, %v3519
      %v3521 = vlaneseq
      %v3522 = vshrl.u32 %v3521, 7
      %v3523 = vsub.s32 2, %v3522
      %v3524 = vrot.slane %v3498, %v3523
      %v3525 = vlaneseq
      %v3526 = vshrl.u32 %v3525, 7
      %v3527 = vsub.s32 0, %v3526
      %v3528 = vrot.slane %v3500, %v3527
      %v3529 = vlaneseq
      %v3530 = vshrl.u32 %v3529, 7
      %v3531 = vsub.s32 1, %v3530
      %v3532 = vrot.slane %v3500, %v3531
      %v3533 = vlaneseq
      %v3534 = vshrl.u32 %v3533, 7
      %v3535 = vsub.s32 2, %v3534
      %v3536 = vrot.slane %v3500, %v3535
      %v3537 = vlaneseq
      %v3538 = vshrl.u32 %v3537, 7
      %v3539 = vsub.s32 0, %v3538
      %v3540 = vrot.slane %v3502, %v3539
      %v3541 = vlaneseq
      %v3542 = vshrl.u32 %v3541, 7
      %v3543 = vsub.s32 1, %v3542
      %v3544 = vrot.slane %v3502, %v3543
      %v3545 = vlaneseq
      %v3546 = vshrl.u32 %v3545, 7
      %v3547 = vsub.s32 2, %v3546
      %v3548 = vrot.slane %v3502, %v3547
      %v3549 = vlaneseq
      %v3550 = vshrl.u32 %v3549, 7
      %v3551 = vsub.s32 0, %v3550
      %v3552 = vrot.slane %v3504, %v3551
      %v3553 = vlaneseq
      %v3554 = vshrl.u32 %v3553, 7
      %v3555 = vsub.s32 1, %v3554
      %v3556 = vrot.slane %v3504, %v3555
      %v3557 = vlaneseq
      %v3558 = vshrl.u32 %v3557, 7
      %v3559 = vsub.s32 2, %v3558
      %v3560 = vrot.slane %v3504, %v3559
      %3573 = vrot.lane.b32.xlu0 %v2921, 86
      %v3574 = vpop.permute.xlu0 %3573
      %3575 = vrot.lane.b32.xlu0 %v2997, 86
      %v3576 = vpop.permute.xlu0 %3575
      %3577 = vrot.lane.b32.xlu0 %v2922, 86
      %v3578 = vpop.permute.xlu0 %3577
      %3579 = vrot.lane.b32.xlu0 %v2923, 86
      %v3580 = vpop.permute.xlu0 %3579
      %3581 = vrot.lane.b32.xlu0 %v2998, 86
      %v3582 = vpop.permute.xlu0 %3581
      %3583 = vrot.lane.b32.xlu0 %v2924, 86
      %v3584 = vpop.permute.xlu0 %3583
      %3585 = vrot.lane.b32.xlu0 %v2925, 86
      %v3586 = vpop.permute.xlu0 %3585
      %3587 = vrot.lane.b32.xlu0 %v2999, 86
      %v3588 = vpop.permute.xlu0 %3587
      %3589 = vrot.lane.b32.xlu0 %v2926, 86
      %v3590 = vpop.permute.xlu0 %3589
      %3591 = vrot.lane.b32.xlu0 %v2927, 86
      %v3592 = vpop.permute.xlu0 %3591
      %3593 = vrot.lane.b32.xlu0 %v3000, 86
      %v3594 = vpop.permute.xlu0 %3593
      %3595 = vrot.lane.b32.xlu0 %v2928, 86
      %v3596 = vpop.permute.xlu0 %3595
      %v3597 = vsel %vm1372, %v3574, %v3576
      %v3598 = vsel %vm1372, %v3576, %v3578
      %v3599 = vsel %vm1372, %v3580, %v3582
      %v3600 = vsel %vm1372, %v3582, %v3584
      %v3601 = vsel %vm1372, %v3586, %v3588
      %v3602 = vsel %vm1372, %v3588, %v3590
      %v3603 = vsel %vm1372, %v3592, %v3594
      %v3604 = vsel %vm1372, %v3594, %v3596
      %v3617 = vmul.f32 %v3516, %v3597
      %v3618 = vmul.f32 %v3520, %v3598
      %v3619 = vmul.f32 %v3524, %v3578
      %v3620 = vmul.f32 %v3528, %v3599
      %v3621 = vmul.f32 %v3532, %v3600
      %v3622 = vmul.f32 %v3536, %v3584
      %v3623 = vmul.f32 %v3540, %v3601
      %v3624 = vmul.f32 %v3544, %v3602
      %v3625 = vmul.f32 %v3548, %v3590
      %v3626 = vmul.f32 %v3552, %v3603
      %v3627 = vmul.f32 %v3556, %v3604
      %v3628 = vmul.f32 %v3560, %v3596
      %v3629 = vadd.f32 %v3477, %v3617
      %v3630 = vadd.f32 %v3478, %v3618
      %v3631 = vadd.f32 %v3479, %v3619
      %v3632 = vadd.f32 %v3480, %v3620
      %v3633 = vadd.f32 %v3481, %v3621
      %v3634 = vadd.f32 %v3482, %v3622
      %v3635 = vadd.f32 %v3483, %v3623
      %v3636 = vadd.f32 %v3484, %v3624
      %v3637 = vadd.f32 %v3485, %v3625
      %v3638 = vadd.f32 %v3486, %v3626
      %v3639 = vadd.f32 %v3487, %v3627
      %v3640 = vadd.f32 %v3488, %v3628
      %v3641 = vld [vmem:[%s1890] sm:$0x7]
      %v3642 = vld [vmem:[%s1890 + $0x3] sm:$0x7]
      %v3643 = vld [vmem:[%s1890 + $0x6] sm:$0x7]
      %v3644 = vld [vmem:[%s1890 + $0x9] sm:$0x7]
      %v3645 = vsub.f32 %v3641, %v2827
      %v3646 = vsub.f32 %v3642, %v2850
      %v3647 = vsub.f32 %v3643, %v2873
      %v3648 = vsub.f32 %v3644, %v2896
      %v3649 = vmul.f32 %v3645, 1.442695
      %v3650 = vpow.pop %v3649
      %v3651 = vmul.f32 %v3646, 1.442695
      %v3652 = vpow.pop %v3651
      %v3653 = vmul.f32 %v3647, 1.442695
      %v3654 = vpow.pop %v3653
      %v3655 = vmul.f32 %v3648, 1.442695
      %v3656 = vpow.pop %v3655
      %v3657 = vadd.f32 %v3505, %v3650
      %v3658 = vadd.f32 %v3506, %v3652
      %v3659 = vadd.f32 %v3507, %v3654
      %v3660 = vadd.f32 %v3508, %v3656
      %v3665 = vlaneseq
      %v3666 = vshrl.u32 %v3665, 7
      %v3667 = vsub.s32 0, %v3666
      %v3668 = vrot.slane %v3650, %v3667
      %v3669 = vlaneseq
      %v3670 = vshrl.u32 %v3669, 7
      %v3671 = vsub.s32 1, %v3670
      %v3672 = vrot.slane %v3650, %v3671
      %v3673 = vlaneseq
      %v3674 = vshrl.u32 %v3673, 7
      %v3675 = vsub.s32 2, %v3674
      %v3676 = vrot.slane %v3650, %v3675
      %v3677 = vlaneseq
      %v3678 = vshrl.u32 %v3677, 7
      %v3679 = vsub.s32 0, %v3678
      %v3680 = vrot.slane %v3652, %v3679
      %v3681 = vlaneseq
      %v3682 = vshrl.u32 %v3681, 7
      %v3683 = vsub.s32 1, %v3682
      %v3684 = vrot.slane %v3652, %v3683
      %v3685 = vlaneseq
      %v3686 = vshrl.u32 %v3685, 7
      %v3687 = vsub.s32 2, %v3686
      %v3688 = vrot.slane %v3652, %v3687
      %v3689 = vlaneseq
      %v3690 = vshrl.u32 %v3689, 7
      %v3691 = vsub.s32 0, %v3690
      %v3692 = vrot.slane %v3654, %v3691
      %v3693 = vlaneseq
      %v3694 = vshrl.u32 %v3693, 7
      %v3695 = vsub.s32 1, %v3694
      %v3696 = vrot.slane %v3654, %v3695
      %v3697 = vlaneseq
      %v3698 = vshrl.u32 %v3697, 7
      %v3699 = vsub.s32 2, %v3698
      %v3700 = vrot.slane %v3654, %v3699
      %v3701 = vlaneseq
      %v3702 = vshrl.u32 %v3701, 7
      %v3703 = vsub.s32 0, %v3702
      %v3704 = vrot.slane %v3656, %v3703
      %v3705 = vlaneseq
      %v3706 = vshrl.u32 %v3705, 7
      %v3707 = vsub.s32 1, %v3706
      %v3708 = vrot.slane %v3656, %v3707
      %v3709 = vlaneseq
      %v3710 = vshrl.u32 %v3709, 7
      %v3711 = vsub.s32 2, %v3710
      %v3712 = vrot.slane %v3656, %v3711
      %3725 = vrot.lane.b32.xlu0 %v2921, 84
      %v3726 = vpop.permute.xlu0 %3725
      %3727 = vrot.lane.b32.xlu0 %v2997, 84
      %v3728 = vpop.permute.xlu0 %3727
      %3729 = vrot.lane.b32.xlu0 %v2922, 84
      %v3730 = vpop.permute.xlu0 %3729
      %3731 = vrot.lane.b32.xlu0 %v2923, 84
      %v3732 = vpop.permute.xlu0 %3731
      %3733 = vrot.lane.b32.xlu0 %v2998, 84
      %v3734 = vpop.permute.xlu0 %3733
      %3735 = vrot.lane.b32.xlu0 %v2924, 84
      %v3736 = vpop.permute.xlu0 %3735
      %3737 = vrot.lane.b32.xlu0 %v2925, 84
      %v3738 = vpop.permute.xlu0 %3737
      %3739 = vrot.lane.b32.xlu0 %v2999, 84
      %v3740 = vpop.permute.xlu0 %3739
      %3741 = vrot.lane.b32.xlu0 %v2926, 84
      %v3742 = vpop.permute.xlu0 %3741
      %3743 = vrot.lane.b32.xlu0 %v2927, 84
      %v3744 = vpop.permute.xlu0 %3743
      %3745 = vrot.lane.b32.xlu0 %v3000, 84
      %v3746 = vpop.permute.xlu0 %3745
      %3747 = vrot.lane.b32.xlu0 %v2928, 84
      %v3748 = vpop.permute.xlu0 %3747
      %v3749 = vsel %vm1662, %v3726, %v3728
      %v3750 = vsel %vm1662, %v3728, %v3730
      %v3751 = vsel %vm1662, %v3732, %v3734
      %v3752 = vsel %vm1662, %v3734, %v3736
      %v3753 = vsel %vm1662, %v3738, %v3740
      %v3754 = vsel %vm1662, %v3740, %v3742
      %v3755 = vsel %vm1662, %v3744, %v3746
      %v3756 = vsel %vm1662, %v3746, %v3748
      %v3769 = vmul.f32 %v3668, %v3749
      %v3770 = vmul.f32 %v3672, %v3750
      %v3771 = vmul.f32 %v3676, %v3730
      %v3772 = vmul.f32 %v3680, %v3751
      %v3773 = vmul.f32 %v3684, %v3752
      %v3774 = vmul.f32 %v3688, %v3736
      %v3775 = vmul.f32 %v3692, %v3753
      %v3776 = vmul.f32 %v3696, %v3754
      %v3777 = vmul.f32 %v3700, %v3742
      %v3778 = vmul.f32 %v3704, %v3755
      %v3779 = vmul.f32 %v3708, %v3756
      %v3780 = vmul.f32 %v3712, %v3748
      %v3781 = vadd.f32 %v3629, %v3769
      %v3782 = vadd.f32 %v3630, %v3770
      %v3783 = vadd.f32 %v3631, %v3771
      %v3784 = vadd.f32 %v3632, %v3772
      %v3785 = vadd.f32 %v3633, %v3773
      %v3786 = vadd.f32 %v3634, %v3774
      %v3787 = vadd.f32 %v3635, %v3775
      %v3788 = vadd.f32 %v3636, %v3776
      %v3789 = vadd.f32 %v3637, %v3777
      %v3790 = vadd.f32 %v3638, %v3778
      %v3791 = vadd.f32 %v3639, %v3779
      %v3792 = vadd.f32 %v3640, %v3780
      %v3793 = vld [vmem:[%s2184] sm:$0x7]
      %v3794 = vld [vmem:[%s2184 + $0x3] sm:$0x7]
      %v3795 = vld [vmem:[%s2184 + $0x6] sm:$0x7]
      %v3796 = vld [vmem:[%s2184 + $0x9] sm:$0x7]
      %v3797 = vsub.f32 %v3793, %v2827
      %v3798 = vsub.f32 %v3794, %v2850
      %v3799 = vsub.f32 %v3795, %v2873
      %v3800 = vsub.f32 %v3796, %v2896
      %v3801 = vmul.f32 %v3797, 1.442695
      %v3802 = vpow.pop %v3801
      %v3803 = vmul.f32 %v3798, 1.442695
      %v3804 = vpow.pop %v3803
      %v3805 = vmul.f32 %v3799, 1.442695
      %v3806 = vpow.pop %v3805
      %v3807 = vmul.f32 %v3800, 1.442695
      %v3808 = vpow.pop %v3807
      %v3809 = vadd.f32 %v3657, %v3802
      %v3810 = vadd.f32 %v3658, %v3804
      %v3811 = vadd.f32 %v3659, %v3806
      %v3812 = vadd.f32 %v3660, %v3808
      %v3813 = vld [vmem:[%s205] sm:$0xff]
      %v3814 = vld [vmem:[%s205 + $0x8] sm:$0xff]
      %v3815 = vld [vmem:[%s205 + $0x10] sm:$0xff]
      %v3816 = vld [vmem:[%s205 + $0x18] sm:$0xff]
      %v3817 = vunpack.c.l.bf16 %v3813
      %v3818 = vunpack.c.h.bf16 %v3813
      %v3819 = vunpack.c.l.bf16 %v3814
      %v3820 = vunpack.c.h.bf16 %v3814
      %v3821 = vunpack.c.l.bf16 %v3815
      %v3822 = vunpack.c.h.bf16 %v3815
      %v3823 = vunpack.c.l.bf16 %v3816
      %v3824 = vunpack.c.h.bf16 %v3816
      %v3829 = vlaneseq
      %v3830 = vshrl.u32 %v3829, 7
      %v3831 = vsub.s32 0, %v3830
      %v3832 = vrot.slane %v3802, %v3831
      %v3833 = vlaneseq
      %v3834 = vshrl.u32 %v3833, 7
      %v3835 = vsub.s32 1, %v3834
      %v3836 = vrot.slane %v3802, %v3835
      %v3837 = vlaneseq
      %v3838 = vshrl.u32 %v3837, 7
      %v3839 = vsub.s32 2, %v3838
      %v3840 = vrot.slane %v3802, %v3839
      %v3841 = vlaneseq
      %v3842 = vshrl.u32 %v3841, 7
      %v3843 = vsub.s32 0, %v3842
      %v3844 = vrot.slane %v3804, %v3843
      %v3845 = vlaneseq
      %v3846 = vshrl.u32 %v3845, 7
      %v3847 = vsub.s32 1, %v3846
      %v3848 = vrot.slane %v3804, %v3847
      %v3849 = vlaneseq
      %v3850 = vshrl.u32 %v3849, 7
      %v3851 = vsub.s32 2, %v3850
      %v3852 = vrot.slane %v3804, %v3851
      %v3853 = vlaneseq
      %v3854 = vshrl.u32 %v3853, 7
      %v3855 = vsub.s32 0, %v3854
      %v3856 = vrot.slane %v3806, %v3855
      %v3857 = vlaneseq
      %v3858 = vshrl.u32 %v3857, 7
      %v3859 = vsub.s32 1, %v3858
      %v3860 = vrot.slane %v3806, %v3859
      %v3861 = vlaneseq
      %v3862 = vshrl.u32 %v3861, 7
      %v3863 = vsub.s32 2, %v3862
      %v3864 = vrot.slane %v3806, %v3863
      %v3865 = vlaneseq
      %v3866 = vshrl.u32 %v3865, 7
      %v3867 = vsub.s32 0, %v3866
      %v3868 = vrot.slane %v3808, %v3867
      %v3869 = vlaneseq
      %v3870 = vshrl.u32 %v3869, 7
      %v3871 = vsub.s32 1, %v3870
      %v3872 = vrot.slane %v3808, %v3871
      %v3873 = vlaneseq
      %v3874 = vshrl.u32 %v3873, 7
      %v3875 = vsub.s32 2, %v3874
      %v3876 = vrot.slane %v3808, %v3875
      %v3897 = vcombine.high %v3817, %v3817
      %v3898 = vcombine.high %v3818, %v3818
      %v3899 = vcombine.high %v3819, %v3819
      %v3900 = vcombine.high %v3820, %v3820
      %v3901 = vcombine.high %v3821, %v3821
      %v3902 = vcombine.high %v3822, %v3822
      %v3903 = vcombine.high %v3823, %v3823
      %v3904 = vcombine.high %v3824, %v3824
      %3905 = vrot.lane.b32.xlu0 %v3817, 48
      %v3906 = vpop.permute.xlu0 %3905
      %3907 = vrot.lane.b32.xlu0 %v3897, 48
      %v3908 = vpop.permute.xlu0 %3907
      %3909 = vrot.lane.b32.xlu0 %v3818, 48
      %v3910 = vpop.permute.xlu0 %3909
      %3911 = vrot.lane.b32.xlu0 %v3898, 48
      %v3912 = vpop.permute.xlu0 %3911
      %3913 = vrot.lane.b32.xlu0 %v3819, 48
      %v3914 = vpop.permute.xlu0 %3913
      %3915 = vrot.lane.b32.xlu0 %v3899, 48
      %v3916 = vpop.permute.xlu0 %3915
      %3917 = vrot.lane.b32.xlu0 %v3820, 48
      %v3918 = vpop.permute.xlu0 %3917
      %3919 = vrot.lane.b32.xlu0 %v3900, 48
      %v3920 = vpop.permute.xlu0 %3919
      %3921 = vrot.lane.b32.xlu0 %v3821, 48
      %v3922 = vpop.permute.xlu0 %3921
      %3923 = vrot.lane.b32.xlu0 %v3901, 48
      %v3924 = vpop.permute.xlu0 %3923
      %3925 = vrot.lane.b32.xlu0 %v3822, 48
      %v3926 = vpop.permute.xlu0 %3925
      %3927 = vrot.lane.b32.xlu0 %v3902, 48
      %v3928 = vpop.permute.xlu0 %3927
      %3929 = vrot.lane.b32.xlu0 %v3823, 48
      %v3930 = vpop.permute.xlu0 %3929
      %3931 = vrot.lane.b32.xlu0 %v3903, 48
      %v3932 = vpop.permute.xlu0 %3931
      %3933 = vrot.lane.b32.xlu0 %v3824, 48
      %v3934 = vpop.permute.xlu0 %3933
      %3935 = vrot.lane.b32.xlu0 %v3904, 48
      %v3936 = vpop.permute.xlu0 %3935
      %v3937 = vsel %vm1952, %v3906, %v3908
      %v3938 = vsel %vm1952, %v3908, %v3910
      %v3939 = vsel %vm1952, %v3910, %v3912
      %v3940 = vsel %vm1952, %v3914, %v3916
      %v3941 = vsel %vm1952, %v3916, %v3918
      %v3942 = vsel %vm1952, %v3918, %v3920
      %v3943 = vsel %vm1952, %v3922, %v3924
      %v3944 = vsel %vm1952, %v3924, %v3926
      %v3945 = vsel %vm1952, %v3926, %v3928
      %v3946 = vsel %vm1952, %v3930, %v3932
      %v3947 = vsel %vm1952, %v3932, %v3934
      %v3948 = vsel %vm1952, %v3934, %v3936
      %v3961 = vmul.f32 %v3832, %v3937
      %v3962 = vmul.f32 %v3836, %v3938
      %v3963 = vmul.f32 %v3840, %v3939
      %v3964 = vmul.f32 %v3844, %v3940
      %v3965 = vmul.f32 %v3848, %v3941
      %v3966 = vmul.f32 %v3852, %v3942
      %v3967 = vmul.f32 %v3856, %v3943
      %v3968 = vmul.f32 %v3860, %v3944
      %v3969 = vmul.f32 %v3864, %v3945
      %v3970 = vmul.f32 %v3868, %v3946
      %v3971 = vmul.f32 %v3872, %v3947
      %v3972 = vmul.f32 %v3876, %v3948
      %v3973 = vadd.f32 %v3781, %v3961
      %v3974 = vadd.f32 %v3782, %v3962
      %v3975 = vadd.f32 %v3783, %v3963
      %v3976 = vadd.f32 %v3784, %v3964
      %v3977 = vadd.f32 %v3785, %v3965
      %v3978 = vadd.f32 %v3786, %v3966
      %v3979 = vadd.f32 %v3787, %v3967
      %v3980 = vadd.f32 %v3788, %v3968
      %v3981 = vadd.f32 %v3789, %v3969
      %v3982 = vadd.f32 %v3790, %v3970
      %v3983 = vadd.f32 %v3791, %v3971
      %v3984 = vadd.f32 %v3792, %v3972
      %v3985 = vld [vmem:[%s2478] sm:$0x7]
      %v3986 = vld [vmem:[%s2478 + $0x3] sm:$0x7]
      %v3987 = vld [vmem:[%s2478 + $0x6] sm:$0x7]
      %v3988 = vld [vmem:[%s2478 + $0x9] sm:$0x7]
      %v3989 = vsub.f32 %v3985, %v2827
      %v3990 = vsub.f32 %v3986, %v2850
      %v3991 = vsub.f32 %v3987, %v2873
      %v3992 = vsub.f32 %v3988, %v2896
      %v3993 = vmul.f32 %v3989, 1.442695
      %v3994 = vpow.pop %v3993
      %v3995 = vmul.f32 %v3990, 1.442695
      %v3996 = vpow.pop %v3995
      %v3997 = vmul.f32 %v3991, 1.442695
      %v3998 = vpow.pop %v3997
      %v3999 = vmul.f32 %v3992, 1.442695
      %v4000 = vpow.pop %v3999
      %v4001 = vadd.f32 %v3809, %v3994
      %v4002 = vadd.f32 %v3810, %v3996
      %v4003 = vadd.f32 %v3811, %v3998
      %v4004 = vadd.f32 %v3812, %v4000
      %v4009 = vlaneseq
      %v4010 = vshrl.u32 %v4009, 7
      %v4011 = vsub.s32 0, %v4010
      %v4012 = vrot.slane %v3994, %v4011
      %v4013 = vlaneseq
      %v4014 = vshrl.u32 %v4013, 7
      %v4015 = vsub.s32 1, %v4014
      %v4016 = vrot.slane %v3994, %v4015
      %v4017 = vlaneseq
      %v4018 = vshrl.u32 %v4017, 7
      %v4019 = vsub.s32 2, %v4018
      %v4020 = vrot.slane %v3994, %v4019
      %v4021 = vlaneseq
      %v4022 = vshrl.u32 %v4021, 7
      %v4023 = vsub.s32 0, %v4022
      %v4024 = vrot.slane %v3996, %v4023
      %v4025 = vlaneseq
      %v4026 = vshrl.u32 %v4025, 7
      %v4027 = vsub.s32 1, %v4026
      %v4028 = vrot.slane %v3996, %v4027
      %v4029 = vlaneseq
      %v4030 = vshrl.u32 %v4029, 7
      %v4031 = vsub.s32 2, %v4030
      %v4032 = vrot.slane %v3996, %v4031
      %v4033 = vlaneseq
      %v4034 = vshrl.u32 %v4033, 7
      %v4035 = vsub.s32 0, %v4034
      %v4036 = vrot.slane %v3998, %v4035
      %v4037 = vlaneseq
      %v4038 = vshrl.u32 %v4037, 7
      %v4039 = vsub.s32 1, %v4038
      %v4040 = vrot.slane %v3998, %v4039
      %v4041 = vlaneseq
      %v4042 = vshrl.u32 %v4041, 7
      %v4043 = vsub.s32 2, %v4042
      %v4044 = vrot.slane %v3998, %v4043
      %v4045 = vlaneseq
      %v4046 = vshrl.u32 %v4045, 7
      %v4047 = vsub.s32 0, %v4046
      %v4048 = vrot.slane %v4000, %v4047
      %v4049 = vlaneseq
      %v4050 = vshrl.u32 %v4049, 7
      %v4051 = vsub.s32 1, %v4050
      %v4052 = vrot.slane %v4000, %v4051
      %v4053 = vlaneseq
      %v4054 = vshrl.u32 %v4053, 7
      %v4055 = vsub.s32 2, %v4054
      %v4056 = vrot.slane %v4000, %v4055
      %4069 = vrot.lane.b32.xlu0 %v3817, 46
      %v4070 = vpop.permute.xlu0 %4069
      %4071 = vrot.lane.b32.xlu0 %v3897, 46
      %v4072 = vpop.permute.xlu0 %4071
      %4073 = vrot.lane.b32.xlu0 %v3818, 46
      %v4074 = vpop.permute.xlu0 %4073
      %4075 = vrot.lane.b32.xlu0 %v3898, 46
      %v4076 = vpop.permute.xlu0 %4075
      %4077 = vrot.lane.b32.xlu0 %v3819, 46
      %v4078 = vpop.permute.xlu0 %4077
      %4079 = vrot.lane.b32.xlu0 %v3899, 46
      %v4080 = vpop.permute.xlu0 %4079
      %4081 = vrot.lane.b32.xlu0 %v3820, 46
      %v4082 = vpop.permute.xlu0 %4081
      %4083 = vrot.lane.b32.xlu0 %v3900, 46
      %v4084 = vpop.permute.xlu0 %4083
      %4085 = vrot.lane.b32.xlu0 %v3821, 46
      %v4086 = vpop.permute.xlu0 %4085
      %4087 = vrot.lane.b32.xlu0 %v3901, 46
      %v4088 = vpop.permute.xlu0 %4087
      %4089 = vrot.lane.b32.xlu0 %v3822, 46
      %v4090 = vpop.permute.xlu0 %4089
      %4091 = vrot.lane.b32.xlu0 %v3902, 46
      %v4092 = vpop.permute.xlu0 %4091
      %4093 = vrot.lane.b32.xlu0 %v3823, 46
      %v4094 = vpop.permute.xlu0 %4093
      %4095 = vrot.lane.b32.xlu0 %v3903, 46
      %v4096 = vpop.permute.xlu0 %4095
      %4097 = vrot.lane.b32.xlu0 %v3824, 46
      %v4098 = vpop.permute.xlu0 %4097
      %4099 = vrot.lane.b32.xlu0 %v3904, 46
      %v4100 = vpop.permute.xlu0 %4099
      %v4101 = vsel %vm2246, %v4070, %v4072
      %v4102 = vsel %vm2246, %v4072, %v4074
      %v4103 = vsel %vm2246, %v4074, %v4076
      %v4104 = vsel %vm2246, %v4078, %v4080
      %v4105 = vsel %vm2246, %v4080, %v4082
      %v4106 = vsel %vm2246, %v4082, %v4084
      %v4107 = vsel %vm2246, %v4086, %v4088
      %v4108 = vsel %vm2246, %v4088, %v4090
      %v4109 = vsel %vm2246, %v4090, %v4092
      %v4110 = vsel %vm2246, %v4094, %v4096
      %v4111 = vsel %vm2246, %v4096, %v4098
      %v4112 = vsel %vm2246, %v4098, %v4100
      %v4125 = vmul.f32 %v4012, %v4101
      %v4126 = vmul.f32 %v4016, %v4102
      %v4127 = vmul.f32 %v4020, %v4103
      %v4128 = vmul.f32 %v4024, %v4104
      %v4129 = vmul.f32 %v4028, %v4105
      %v4130 = vmul.f32 %v4032, %v4106
      %v4131 = vmul.f32 %v4036, %v4107
      %v4132 = vmul.f32 %v4040, %v4108
      %v4133 = vmul.f32 %v4044, %v4109
      %v4134 = vmul.f32 %v4048, %v4110
      %v4135 = vmul.f32 %v4052, %v4111
      %v4136 = vmul.f32 %v4056, %v4112
      %v4137 = vadd.f32 %v3973, %v4125
      %v4138 = vadd.f32 %v3974, %v4126
      %v4139 = vadd.f32 %v3975, %v4127
      %v4140 = vadd.f32 %v3976, %v4128
      %v4141 = vadd.f32 %v3977, %v4129
      %v4142 = vadd.f32 %v3978, %v4130
      %v4143 = vadd.f32 %v3979, %v4131
      %v4144 = vadd.f32 %v3980, %v4132
      %v4145 = vadd.f32 %v3981, %v4133
      %v4146 = vadd.f32 %v3982, %v4134
      %v4147 = vadd.f32 %v3983, %v4135
      %v4148 = vadd.f32 %v3984, %v4136
      %v4149 = vld [vmem:[%s2772] sm:$0x7]
      %v4150 = vld [vmem:[%s2772 + $0x3] sm:$0x7]
      %v4151 = vld [vmem:[%s2772 + $0x6] sm:$0x7]
      %v4152 = vld [vmem:[%s2772 + $0x9] sm:$0x7]
      %v4153 = vsub.f32 %v4149, %v2827
      %v4154 = vsub.f32 %v4150, %v2850
      %v4155 = vsub.f32 %v4151, %v2873
      %v4156 = vsub.f32 %v4152, %v2896
      %v4157 = vmul.f32 %v4153, 1.442695
      %v4158 = vpow.pop %v4157
      %v4159 = vmul.f32 %v4154, 1.442695
      %v4160 = vpow.pop %v4159
      %v4161 = vmul.f32 %v4155, 1.442695
      %v4162 = vpow.pop %v4161
      %v4163 = vmul.f32 %v4156, 1.442695
      %v4164 = vpow.pop %v4163
      %v4165 = vadd.f32 %v4001, %v4158
      %v4166 = vadd.f32 %v4002, %v4160
      %v4167 = vadd.f32 %v4003, %v4162
      %v4168 = vadd.f32 %v4004, %v4164
      %v4173 = vlaneseq
      %v4174 = vshrl.u32 %v4173, 7
      %v4175 = vsub.s32 0, %v4174
      %v4176 = vrot.slane %v4158, %v4175
      %v4177 = vlaneseq
      %v4178 = vshrl.u32 %v4177, 7
      %v4179 = vsub.s32 1, %v4178
      %v4180 = vrot.slane %v4158, %v4179
      %v4181 = vlaneseq
      %v4182 = vshrl.u32 %v4181, 7
      %v4183 = vsub.s32 2, %v4182
      %v4184 = vrot.slane %v4158, %v4183
      %v4185 = vlaneseq
      %v4186 = vshrl.u32 %v4185, 7
      %v4187 = vsub.s32 0, %v4186
      %v4188 = vrot.slane %v4160, %v4187
      %v4189 = vlaneseq
      %v4190 = vshrl.u32 %v4189, 7
      %v4191 = vsub.s32 1, %v4190
      %v4192 = vrot.slane %v4160, %v4191
      %v4193 = vlaneseq
      %v4194 = vshrl.u32 %v4193, 7
      %v4195 = vsub.s32 2, %v4194
      %v4196 = vrot.slane %v4160, %v4195
      %v4197 = vlaneseq
      %v4198 = vshrl.u32 %v4197, 7
      %v4199 = vsub.s32 0, %v4198
      %v4200 = vrot.slane %v4162, %v4199
      %v4201 = vlaneseq
      %v4202 = vshrl.u32 %v4201, 7
      %v4203 = vsub.s32 1, %v4202
      %v4204 = vrot.slane %v4162, %v4203
      %v4205 = vlaneseq
      %v4206 = vshrl.u32 %v4205, 7
      %v4207 = vsub.s32 2, %v4206
      %v4208 = vrot.slane %v4162, %v4207
      %v4209 = vlaneseq
      %v4210 = vshrl.u32 %v4209, 7
      %v4211 = vsub.s32 0, %v4210
      %v4212 = vrot.slane %v4164, %v4211
      %v4213 = vlaneseq
      %v4214 = vshrl.u32 %v4213, 7
      %v4215 = vsub.s32 1, %v4214
      %v4216 = vrot.slane %v4164, %v4215
      %v4217 = vlaneseq
      %v4218 = vshrl.u32 %v4217, 7
      %v4219 = vsub.s32 2, %v4218
      %v4220 = vrot.slane %v4164, %v4219
      %4233 = vrot.lane.b32.xlu0 %v3817, 44
      %v4234 = vpop.permute.xlu0 %4233
      %4235 = vrot.lane.b32.xlu0 %v3897, 44
      %v4236 = vpop.permute.xlu0 %4235
      %4237 = vrot.lane.b32.xlu0 %v3818, 44
      %v4238 = vpop.permute.xlu0 %4237
      %4239 = vrot.lane.b32.xlu0 %v3898, 44
      %v4240 = vpop.permute.xlu0 %4239
      %4241 = vrot.lane.b32.xlu0 %v3819, 44
      %v4242 = vpop.permute.xlu0 %4241
      %4243 = vrot.lane.b32.xlu0 %v3899, 44
      %v4244 = vpop.permute.xlu0 %4243
      %4245 = vrot.lane.b32.xlu0 %v3820, 44
      %v4246 = vpop.permute.xlu0 %4245
      %4247 = vrot.lane.b32.xlu0 %v3900, 44
      %v4248 = vpop.permute.xlu0 %4247
      %4249 = vrot.lane.b32.xlu0 %v3821, 44
      %v4250 = vpop.permute.xlu0 %4249
      %4251 = vrot.lane.b32.xlu0 %v3901, 44
      %v4252 = vpop.permute.xlu0 %4251
      %4253 = vrot.lane.b32.xlu0 %v3822, 44
      %v4254 = vpop.permute.xlu0 %4253
      %4255 = vrot.lane.b32.xlu0 %v3902, 44
      %v4256 = vpop.permute.xlu0 %4255
      %4257 = vrot.lane.b32.xlu0 %v3823, 44
      %v4258 = vpop.permute.xlu0 %4257
      %4259 = vrot.lane.b32.xlu0 %v3903, 44
      %v4260 = vpop.permute.xlu0 %4259
      %4261 = vrot.lane.b32.xlu0 %v3824, 44
      %v4262 = vpop.permute.xlu0 %4261
      %4263 = vrot.lane.b32.xlu0 %v3904, 44
      %v4264 = vpop.permute.xlu0 %4263
      %v4265 = vsel %vm2540, %v4234, %v4236
      %v4266 = vsel %vm2540, %v4236, %v4238
      %v4267 = vsel %vm2540, %v4238, %v4240
      %v4268 = vsel %vm2540, %v4242, %v4244
      %v4269 = vsel %vm2540, %v4244, %v4246
      %v4270 = vsel %vm2540, %v4246, %v4248
      %v4271 = vsel %vm2540, %v4250, %v4252
      %v4272 = vsel %vm2540, %v4252, %v4254
      %v4273 = vsel %vm2540, %v4254, %v4256
      %v4274 = vsel %vm2540, %v4258, %v4260
      %v4275 = vsel %vm2540, %v4260, %v4262
      %v4276 = vsel %vm2540, %v4262, %v4264
      %v4289 = vmul.f32 %v4176, %v4265
      %v4290 = vmul.f32 %v4180, %v4266
      %v4291 = vmul.f32 %v4184, %v4267
      %v4292 = vmul.f32 %v4188, %v4268
      %v4293 = vmul.f32 %v4192, %v4269
      %v4294 = vmul.f32 %v4196, %v4270
      %v4295 = vmul.f32 %v4200, %v4271
      %v4296 = vmul.f32 %v4204, %v4272
      %v4297 = vmul.f32 %v4208, %v4273
      %v4298 = vmul.f32 %v4212, %v4274
      %v4299 = vmul.f32 %v4216, %v4275
      %v4300 = vmul.f32 %v4220, %v4276
      %v4301 = vadd.f32 %v4137, %v4289
      %v4302 = vadd.f32 %v4138, %v4290
      %v4303 = vadd.f32 %v4139, %v4291
      %v4304 = vadd.f32 %v4140, %v4292
      %v4305 = vadd.f32 %v4141, %v4293
      %v4306 = vadd.f32 %v4142, %v4294
      %v4307 = vadd.f32 %v4143, %v4295
      %v4308 = vadd.f32 %v4144, %v4296
      %v4309 = vadd.f32 %v4145, %v4297
      %v4310 = vadd.f32 %v4146, %v4298
      %v4311 = vadd.f32 %v4147, %v4299
      %v4312 = vadd.f32 %v4148, %v4300
      %v4313 = vrcp.pop %v4165
      %v4314 = vrcp.pop %v4166
      %v4315 = vrcp.pop %v4167
      %v4316 = vrcp.pop %v4168
      %v4321 = vlaneseq
      %v4322 = vshrl.u32 %v4321, 7
      %v4323 = vsub.s32 0, %v4322
      %v4324 = vrot.slane %v4313, %v4323
      %v4325 = vlaneseq
      %v4326 = vshrl.u32 %v4325, 7
      %v4327 = vsub.s32 1, %v4326
      %v4328 = vrot.slane %v4313, %v4327
      %v4329 = vlaneseq
      %v4330 = vshrl.u32 %v4329, 7
      %v4331 = vsub.s32 2, %v4330
      %v4332 = vrot.slane %v4313, %v4331
      %v4333 = vlaneseq
      %v4334 = vshrl.u32 %v4333, 7
      %v4335 = vsub.s32 0, %v4334
      %v4336 = vrot.slane %v4314, %v4335
      %v4337 = vlaneseq
      %v4338 = vshrl.u32 %v4337, 7
      %v4339 = vsub.s32 1, %v4338
      %v4340 = vrot.slane %v4314, %v4339
      %v4341 = vlaneseq
      %v4342 = vshrl.u32 %v4341, 7
      %v4343 = vsub.s32 2, %v4342
      %v4344 = vrot.slane %v4314, %v4343
      %v4345 = vlaneseq
      %v4346 = vshrl.u32 %v4345, 7
      %v4347 = vsub.s32 0, %v4346
      %v4348 = vrot.slane %v4315, %v4347
      %v4349 = vlaneseq
      %v4350 = vshrl.u32 %v4349, 7
      %v4351 = vsub.s32 1, %v4350
      %v4352 = vrot.slane %v4315, %v4351
      %v4353 = vlaneseq
      %v4354 = vshrl.u32 %v4353, 7
      %v4355 = vsub.s32 2, %v4354
      %v4356 = vrot.slane %v4315, %v4355
      %v4357 = vlaneseq
      %v4358 = vshrl.u32 %v4357, 7
      %v4359 = vsub.s32 0, %v4358
      %v4360 = vrot.slane %v4316, %v4359
      %v4361 = vlaneseq
      %v4362 = vshrl.u32 %v4361, 7
      %v4363 = vsub.s32 1, %v4362
      %v4364 = vrot.slane %v4316, %v4363
      %v4365 = vlaneseq
      %v4366 = vshrl.u32 %v4365, 7
      %v4367 = vsub.s32 2, %v4366
      %v4368 = vrot.slane %v4316, %v4367
      %v4381 = vmul.f32 %v4301, %v4324
      %v4382 = vmul.f32 %v4302, %v4328
      %v4383 = vmul.f32 %v4303, %v4332
      %v4384 = vmul.f32 %v4304, %v4336
      %v4385 = vmul.f32 %v4305, %v4340
      %v4386 = vmul.f32 %v4306, %v4344
      %v4387 = vmul.f32 %v4307, %v4348
      %v4388 = vmul.f32 %v4308, %v4352
      %v4389 = vmul.f32 %v4309, %v4356
      %v4390 = vmul.f32 %v4310, %v4360
      %v4391 = vmul.f32 %v4311, %v4364
      %v4392 = vmul.f32 %v4312, %v4368
      %v4393 = vpack.c.bf16 %v4381, %v4381
      %v4394 = vpack.c.bf16 %v4382, %v4382
      %v4395 = vpack.c.bf16 %v4383, %v4383
      %v4396 = vpack.c.bf16 %v4384, %v4384
      %v4397 = vpack.c.bf16 %v4385, %v4385
      %v4398 = vpack.c.bf16 %v4386, %v4386
      %v4399 = vpack.c.bf16 %v4387, %v4387
      %v4400 = vpack.c.bf16 %v4388, %v4388
      %v4401 = vpack.c.bf16 %v4389, %v4389
      %v4402 = vpack.c.bf16 %v4390, %v4390
      %v4403 = vpack.c.bf16 %v4391, %v4391
      %v4404 = vpack.c.bf16 %v4392, %v4392
      %v4417 = vcombine.low %v4393, %v4394
      %v4419 = vunpack.c.l.s4 1983009808
      %v4420 = vunpack.c.0.s8 %v4419
      %v4421 = vlaneseq
      %v4422 = vshrl.u32 %v4421, 7
      %v4423 = vsub.s32 %v4420, %v4422
      %v4424 = vrot.slane %v4417, %v4423
      %v4426 = vunpack.c.l.s4 1983009808
      %v4427 = vunpack.c.0.s8 %v4426
      %v4428 = vlaneseq
      %v4429 = vshrl.u32 %v4428, 7
      %v4430 = vsub.s32 %v4427, %v4429
      %v4431 = vrot.slane %v4395, %v4430
      %v4432 = vcombine.low %v4424, %v4431
      %v4433 = vcombine.low %v4396, %v4397
      %v4435 = vunpack.c.l.s4 1983009808
      %v4436 = vunpack.c.0.s8 %v4435
      %v4437 = vlaneseq
      %v4438 = vshrl.u32 %v4437, 7
      %v4439 = vsub.s32 %v4436, %v4438
      %v4440 = vrot.slane %v4433, %v4439
      %v4442 = vunpack.c.l.s4 1983009808
      %v4443 = vunpack.c.0.s8 %v4442
      %v4444 = vlaneseq
      %v4445 = vshrl.u32 %v4444, 7
      %v4446 = vsub.s32 %v4443, %v4445
      %v4447 = vrot.slane %v4398, %v4446
      %v4448 = vcombine.low %v4440, %v4447
      %v4449 = vcombine.low %v4399, %v4400
      %v4451 = vunpack.c.l.s4 1983009808
      %v4452 = vunpack.c.0.s8 %v4451
      %v4453 = vlaneseq
      %v4454 = vshrl.u32 %v4453, 7
      %v4455 = vsub.s32 %v4452, %v4454
      %v4456 = vrot.slane %v4449, %v4455
      %v4458 = vunpack.c.l.s4 1983009808
      %v4459 = vunpack.c.0.s8 %v4458
      %v4460 = vlaneseq
      %v4461 = vshrl.u32 %v4460, 7
      %v4462 = vsub.s32 %v4459, %v4461
      %v4463 = vrot.slane %v4401, %v4462
      %v4464 = vcombine.low %v4456, %v4463
      %v4465 = vcombine.low %v4402, %v4403
      %v4467 = vunpack.c.l.s4 1983009808
      %v4468 = vunpack.c.0.s8 %v4467
      %v4469 = vlaneseq
      %v4470 = vshrl.u32 %v4469, 7
      %v4471 = vsub.s32 %v4468, %v4470
      %v4472 = vrot.slane %v4465, %v4471
      %v4474 = vunpack.c.l.s4 1983009808
      %v4475 = vunpack.c.0.s8 %v4474
      %v4476 = vlaneseq
      %v4477 = vshrl.u32 %v4476, 7
      %v4478 = vsub.s32 %v4475, %v4477
      %v4479 = vrot.slane %v4404, %v4478
      %v4480 = vcombine.low %v4472, %v4479
      %vm4485 = vcmask 1041408
      %vm4486 = vcmask 1043458
      %vm4487 = vmor %vm4486, %vm4485
      %vm4488 = vcmask 521220
      %vm4489 = vmor %vm4488, %vm4487
      %4490 = vst.msk [vmem:[%s210] sm:$0x3f] %vm4489, %v4432
      %4491 = vst.msk [vmem:[%s210 + $0x6] sm:$0x3f] %vm4489, %v4448
      %4492 = vst.msk [vmem:[%s210 + $0xc] sm:$0x3f] %vm4489, %v4464
      %4493 = vst.msk [vmem:[%s210 + $0x12] sm:$0x3f] %vm4489, %v4480
      %p4494 = scmp.lt.s32.totalorder %s14, 1
      %s4495 = scalar_select %p4494, %s14, 1
      %s4496 = smul.addr %s4495, 12
      %s4497 = smul.addr %s4496, 2
      %s4498 = scalar_lea.vmem %s3, %s4497
      // Predicated region
      $region33: #{multi_dilate_local_attention.5} parent=31 // pred_check
        %p4499 = pneg %p110
      $region34: #{multi_dilate_local_attention.5} parent=31 // pred_check_branch
        %4501 = sbr.rel (%p4499) target = $region36
      $region35: #{multi_dilate_local_attention.5} parent=31 // pred_region
        _
      $region36: #{multi_dilate_local_attention.5} parent=31 // pred_fallthru
        _
    $region32: #{multi_dilate_local_attention.5} parent=5 // pred_fallthru
      _
    %p4502 = scmp.le.s32.totalorder 2, %s9
    // Predicated region
    $region37: #{multi_dilate_local_attention.5} parent=5 // pred_check
      %p4503 = pneg %p4502
    $region38: #{multi_dilate_local_attention.5} parent=5 // pred_check_branch
      %4505 = sbr.rel (%p4503) target = $region40
    $region39: #{multi_dilate_local_attention.5} parent=5 // pred_region
      %s4506 = ssub.s32 %s9, 2
      // Predicated region
      $region41: #{multi_dilate_local_attention.5} parent=39 // pred_check
        %p4507 = pneg %p116
      $region42: #{multi_dilate_local_attention.5} parent=39 // pred_check_branch
        %4509 = sbr.rel (%p4507) target = $region44
      $region43: #{multi_dilate_local_attention.5} parent=39 // pred_region
        %p4510 = scmp.lt.s32.totalorder %s15, 1
        %s4511 = scalar_select %p4510, %s15, 1
        %s4512 = smul.addr %s4511, 12
        %s4513 = smul.addr %s4512, 2
        %s4514 = scalar_lea.vmem %s3, %s4513
      $region44: #{multi_dilate_local_attention.5} parent=39 // pred_fallthru
        _
    $region40: #{multi_dilate_local_attention.5} parent=5 // pred_fallthru
      _
  $region6: #{multi_dilate_local_attention.5} parent=0 // loop_footer
    %s13 = sadd.s32 1, %s9
  $region7: #{multi_dilate_local_attention.5} parent=0 // loop_footer_branch
    %8 = sbr.rel target = $region3
  $region8: #{multi_dilate_local_attention.5} parent=0 // loop_exit
    _

// kernel: multi_dilate_local_attention.7
$region0: #{multi_dilate_local_attention.7}
  #allocation0 [shape = 'u32[]', space=smem, size = 0x4, offset = 0x4, fixed_abs, tag = 'smem constant byte address 0x4 - core index']
  #allocation1 [shape = 'u32[144,128]{1,0:T(1,128)}', space=vmem, size = 0x12000, scoped, tag = 'internal scratch']
  %s0 = inlined_call_operand.vmem [shape: bf16[512,32], index: 0, kind: input, shape index: {}]
  %s1 = inlined_call_operand.vmem [shape: bf16[32,32], index: 1, kind: input, shape index: {}]
  %s2 = inlined_call_operand.vmem [shape: f32[1,32], index: 2, kind: input, shape index: {}]
  %s3 = inlined_call_operand.hbm [shape: f32[512,32], index: 3, kind: output, shape index: {}]
  %s4 = sld [smem:[#allocation0]]
  $region22: #{multi_dilate_local_attention.7} parent=0
    _
  %s6 = ssub.s32 1, %s4
  %s7 = scalar_select 0, %s6, %s4
  $region1: #{multi_dilate_local_attention.7} parent=0
    #allocation2 [shape = 'u8[262144]{0}', space=vmem, size = 0x40000, scoped, tag = 'output window, operand 0, single buffered']
    #allocation3 [shape = 's32[1]{0}', space=sflag, size = 0x4, scoped, tag = 'scoped memory for multi_dilate_local_attention.7']
    %8 = vsyncpa [#allocation3], 0
    // Predicated region
    $region2: #{multi_dilate_local_attention.7} parent=1 // pred_check
      _
    $region3: #{multi_dilate_local_attention.7} parent=1 // pred_check_branch
      %10 = sbr.rel (0) target = $region5
    $region4: #{multi_dilate_local_attention.7} parent=1 // pred_region
      _
    $region5: #{multi_dilate_local_attention.7} parent=1 // pred_fallthru
      _
    // Predicated region
    $region6: #{multi_dilate_local_attention.7} parent=1 // pred_check
      _
    $region7: #{multi_dilate_local_attention.7} parent=1 // pred_check_branch
      %12 = sbr.rel (0) target = $region9
    $region8: #{multi_dilate_local_attention.7} parent=1 // pred_region
      _
    $region9: #{multi_dilate_local_attention.7} parent=1 // pred_fallthru
      _
    // Predicated region
    $region10: #{multi_dilate_local_attention.7} parent=1 // pred_check
      _
    $region11: #{multi_dilate_local_attention.7} parent=1 // pred_check_branch
      %14 = sbr.rel (0) target = $region13
    $region12: #{multi_dilate_local_attention.7} parent=1 // pred_region
      _
    $region13: #{multi_dilate_local_attention.7} parent=1 // pred_fallthru
      _
    %v16 = vld [vmem:[%s0] sm:$0xf]
    %v17 = vld [vmem:[%s0 + $0x4] sm:$0xf]
    %v18 = vld [vmem:[%s0 + $0x8] sm:$0xf]
    %v19 = vld [vmem:[%s0 + $0xc] sm:$0xf]
    %v20 = vld [vmem:[%s0 + $0x10] sm:$0xf]
    %v21 = vld [vmem:[%s0 + $0x14] sm:$0xf]
    %v22 = vld [vmem:[%s0 + $0x18] sm:$0xf]
    %v23 = vld [vmem:[%s0 + $0x1c] sm:$0xf]
    %v24 = vld [vmem:[%s0 + $0x20] sm:$0xf]
    %v25 = vld [vmem:[%s0 + $0x24] sm:$0xf]
    %v26 = vld [vmem:[%s0 + $0x28] sm:$0xf]
    %v27 = vld [vmem:[%s0 + $0x2c] sm:$0xf]
    %v28 = vld [vmem:[%s0 + $0x30] sm:$0xf]
    %v29 = vld [vmem:[%s0 + $0x34] sm:$0xf]
    %v30 = vld [vmem:[%s0 + $0x38] sm:$0xf]
    %v31 = vld [vmem:[%s0 + $0x3c] sm:$0xf]
    %v32 = vld [vmem:[%s0 + $0x40] sm:$0xf]
    %v33 = vld [vmem:[%s0 + $0x44] sm:$0xf]
    %v34 = vld [vmem:[%s0 + $0x48] sm:$0xf]
    %v35 = vld [vmem:[%s0 + $0x4c] sm:$0xf]
    %v36 = vld [vmem:[%s0 + $0x50] sm:$0xf]
    %v37 = vld [vmem:[%s0 + $0x54] sm:$0xf]
    %v38 = vld [vmem:[%s0 + $0x58] sm:$0xf]
    %v39 = vld [vmem:[%s0 + $0x5c] sm:$0xf]
    %v40 = vld [vmem:[%s0 + $0x60] sm:$0xf]
    %v41 = vld [vmem:[%s0 + $0x64] sm:$0xf]
    %v42 = vld [vmem:[%s0 + $0x68] sm:$0xf]
    %v43 = vld [vmem:[%s0 + $0x6c] sm:$0xf]
    %v44 = vld [vmem:[%s0 + $0x70] sm:$0xf]
    %v45 = vld [vmem:[%s0 + $0x74] sm:$0xf]
    %v46 = vld [vmem:[%s0 + $0x78] sm:$0xf]
    %v47 = vld [vmem:[%s0 + $0x7c] sm:$0xf]
    %v48 = vld [vmem:[%s0 + $0x80] sm:$0xf]
    %v49 = vld [vmem:[%s0 + $0x84] sm:$0xf]
    %v50 = vld [vmem:[%s0 + $0x88] sm:$0xf]
    %v51 = vld [vmem:[%s0 + $0x8c] sm:$0xf]
    %v52 = vld [vmem:[%s0 + $0x90] sm:$0xf]
    %v53 = vld [vmem:[%s0 + $0x94] sm:$0xf]
    %v54 = vld [vmem:[%s0 + $0x98] sm:$0xf]
    %v55 = vld [vmem:[%s0 + $0x9c] sm:$0xf]
    %v56 = vld [vmem:[%s0 + $0xa0] sm:$0xf]
    %v57 = vld [vmem:[%s0 + $0xa4] sm:$0xf]
    %v58 = vld [vmem:[%s0 + $0xa8] sm:$0xf]
    %v59 = vld [vmem:[%s0 + $0xac] sm:$0xf]
    %v60 = vld [vmem:[%s0 + $0xb0] sm:$0xf]
    %v61 = vld [vmem:[%s0 + $0xb4] sm:$0xf]
    %v62 = vld [vmem:[%s0 + $0xb8] sm:$0xf]
    %v63 = vld [vmem:[%s0 + $0xbc] sm:$0xf]
    %v64 = vld [vmem:[%s0 + $0xc0] sm:$0xf]
    %v65 = vld [vmem:[%s0 + $0xc4] sm:$0xf]
    %v66 = vld [vmem:[%s0 + $0xc8] sm:$0xf]
    %v67 = vld [vmem:[%s0 + $0xcc] sm:$0xf]
    %v68 = vld [vmem:[%s0 + $0xd0] sm:$0xf]
    %v69 = vld [vmem:[%s0 + $0xd4] sm:$0xf]
    %v70 = vld [vmem:[%s0 + $0xd8] sm:$0xf]
    %v71 = vld [vmem:[%s0 + $0xdc] sm:$0xf]
    %v72 = vld [vmem:[%s0 + $0xe0] sm:$0xf]
    %v73 = vld [vmem:[%s0 + $0xe4] sm:$0xf]
    %v74 = vld [vmem:[%s0 + $0xe8] sm:$0xf]
    %v75 = vld [vmem:[%s0 + $0xec] sm:$0xf]
    %v76 = vld [vmem:[%s0 + $0xf0] sm:$0xf]
    %v77 = vld [vmem:[%s0 + $0xf4] sm:$0xf]
    %v78 = vld [vmem:[%s0 + $0xf8] sm:$0xf]
    %v79 = vld [vmem:[%s0 + $0xfc] sm:$0xf]
    %v80 = vld [vmem:[%s1] sm:$0xf]
    %v81 = vld [vmem:[%s1 + $0x4] sm:$0xf]
    %v82 = vld [vmem:[%s1 + $0x8] sm:$0xf]
    %v83 = vld [vmem:[%s1 + $0xc] sm:$0xf]
    %v84 = vld [vmem:[%s2] sm:$0x1]
    %v86 = vlaneseq
    %v87 = vshrl.u32 %v86, 7
    %v88 = vsub.s32 0, %v87
    %v89 = vrot.slane %v84, %v88
    %v155 = vunpack.c.l.b16 %v16
    %v156 = vunpack.c.l.b16 %v17
    %v157 = vunpack.c.l.b16 %v18
    %v158 = vunpack.c.l.b16 %v19
    %v159 = vunpack.c.l.b16 %v20
    %v160 = vunpack.c.l.b16 %v21
    %v161 = vunpack.c.l.b16 %v22
    %v162 = vunpack.c.l.b16 %v23
    %v163 = vunpack.c.l.b16 %v24
    %v164 = vunpack.c.l.b16 %v25
    %v165 = vunpack.c.l.b16 %v26
    %v166 = vunpack.c.l.b16 %v27
    %v167 = vunpack.c.l.b16 %v28
    %v168 = vunpack.c.l.b16 %v29
    %v169 = vunpack.c.l.b16 %v30
    %v170 = vunpack.c.l.b16 %v31
    %v171 = vunpack.c.l.b16 %v32
    %v172 = vunpack.c.l.b16 %v33
    %v173 = vunpack.c.l.b16 %v34
    %v174 = vunpack.c.l.b16 %v35
    %v175 = vunpack.c.l.b16 %v36
    %v176 = vunpack.c.l.b16 %v37
    %v177 = vunpack.c.l.b16 %v38
    %v178 = vunpack.c.l.b16 %v39
    %v179 = vunpack.c.l.b16 %v40
    %v180 = vunpack.c.l.b16 %v41
    %v181 = vunpack.c.l.b16 %v42
    %v182 = vunpack.c.l.b16 %v43
    %v183 = vunpack.c.l.b16 %v44
    %v184 = vunpack.c.l.b16 %v45
    %v185 = vunpack.c.l.b16 %v46
    %v186 = vunpack.c.l.b16 %v47
    %v187 = vunpack.c.l.b16 %v48
    %v188 = vunpack.c.l.b16 %v49
    %v189 = vunpack.c.l.b16 %v50
    %v190 = vunpack.c.l.b16 %v51
    %v191 = vunpack.c.l.b16 %v52
    %v192 = vunpack.c.l.b16 %v53
    %v193 = vunpack.c.l.b16 %v54
    %v194 = vunpack.c.l.b16 %v55
    %v195 = vunpack.c.l.b16 %v56
    %v196 = vunpack.c.l.b16 %v57
    %v197 = vunpack.c.l.b16 %v58
    %v198 = vunpack.c.l.b16 %v59
    %v199 = vunpack.c.l.b16 %v60
    %v200 = vunpack.c.l.b16 %v61
    %v201 = vunpack.c.l.b16 %v62
    %v202 = vunpack.c.l.b16 %v63
    %v203 = vunpack.c.l.b16 %v64
    %v204 = vunpack.c.l.b16 %v65
    %v205 = vunpack.c.l.b16 %v66
    %v206 = vunpack.c.l.b16 %v67
    %v207 = vunpack.c.l.b16 %v68
    %v208 = vunpack.c.l.b16 %v69
    %v209 = vunpack.c.l.b16 %v70
    %v210 = vunpack.c.l.b16 %v71
    %v211 = vunpack.c.l.b16 %v72
    %v212 = vunpack.c.l.b16 %v73
    %v213 = vunpack.c.l.b16 %v74
    %v214 = vunpack.c.l.b16 %v75
    %v215 = vunpack.c.l.b16 %v76
    %v216 = vunpack.c.l.b16 %v77
    %v217 = vunpack.c.l.b16 %v78
    %v218 = vunpack.c.l.b16 %v79
    %v219 = vpack.c.b16 %v156, %v155
    %v220 = vpack.c.b16 %v158, %v157
    %v221 = vpack.c.b16 %v160, %v159
    %v222 = vpack.c.b16 %v162, %v161
    %v223 = vpack.c.b16 %v164, %v163
    %v224 = vpack.c.b16 %v166, %v165
    %v225 = vpack.c.b16 %v168, %v167
    %v226 = vpack.c.b16 %v170, %v169
    %v227 = vpack.c.b16 %v172, %v171
    %v228 = vpack.c.b16 %v174, %v173
    %v229 = vpack.c.b16 %v176, %v175
    %v230 = vpack.c.b16 %v178, %v177
    %v231 = vpack.c.b16 %v180, %v179
    %v232 = vpack.c.b16 %v182, %v181
    %v233 = vpack.c.b16 %v184, %v183
    %v234 = vpack.c.b16 %v186, %v185
    %v235 = vpack.c.b16 %v188, %v187
    %v236 = vpack.c.b16 %v190, %v189
    %v237 = vpack.c.b16 %v192, %v191
    %v238 = vpack.c.b16 %v194, %v193
    %v239 = vpack.c.b16 %v196, %v195
    %v240 = vpack.c.b16 %v198, %v197
    %v241 = vpack.c.b16 %v200, %v199
    %v242 = vpack.c.b16 %v202, %v201
    %v243 = vpack.c.b16 %v204, %v203
    %v244 = vpack.c.b16 %v206, %v205
    %v245 = vpack.c.b16 %v208, %v207
    %v246 = vpack.c.b16 %v210, %v209
    %v247 = vpack.c.b16 %v212, %v211
    %v248 = vpack.c.b16 %v214, %v213
    %v249 = vpack.c.b16 %v216, %v215
    %v250 = vpack.c.b16 %v218, %v217
    %v255 = vunpack.c.l.b16 %v80
    %v256 = vunpack.c.l.b16 %v81
    %v257 = vunpack.c.l.b16 %v82
    %v258 = vunpack.c.l.b16 %v83
    %v259 = vpack.c.b16 %v256, %v255
    %v260 = vpack.c.b16 %v258, %v257
    %vm263 = vcmask 261120
    %v265 = vsel %vm263, %v219, 0
    %v268 = vsel %vm263, %v220, 0
    %v271 = vsel %vm263, %v221, 0
    %v274 = vsel %vm263, %v222, 0
    %v277 = vsel %vm263, %v223, 0
    %v280 = vsel %vm263, %v224, 0
    %v283 = vsel %vm263, %v225, 0
    %v286 = vsel %vm263, %v226, 0
    %v289 = vsel %vm263, %v227, 0
    %v292 = vsel %vm263, %v228, 0
    %v295 = vsel %vm263, %v229, 0
    %v298 = vsel %vm263, %v230, 0
    %v301 = vsel %vm263, %v231, 0
    %v304 = vsel %vm263, %v232, 0
    %v307 = vsel %vm263, %v233, 0
    %v310 = vsel %vm263, %v234, 0
    %v313 = vsel %vm263, %v235, 0
    %v316 = vsel %vm263, %v236, 0
    %v319 = vsel %vm263, %v237, 0
    %v322 = vsel %vm263, %v238, 0
    %v325 = vsel %vm263, %v239, 0
    %v328 = vsel %vm263, %v240, 0
    %v331 = vsel %vm263, %v241, 0
    %v334 = vsel %vm263, %v242, 0
    %v337 = vsel %vm263, %v243, 0
    %v340 = vsel %vm263, %v244, 0
    %v343 = vsel %vm263, %v245, 0
    %v346 = vsel %vm263, %v246, 0
    %v349 = vsel %vm263, %v247, 0
    %v352 = vsel %vm263, %v248, 0
    %v355 = vsel %vm263, %v249, 0
    %v358 = vsel %vm263, %v250, 0
    %360 = vmatprep.subr.bf16.mxu0 0
    %361 = vmatpush1.bf16.msra.mxu0 0
    %362 = vmatprep.subr.bf16.mxu0 0
    %363 = vmatpush1.bf16.msra.mxu0 0
    %364 = vmatprep.subr.bf16.mxu0 0
    %365 = vmatpush1.bf16.msra.mxu0 0
    %366 = vmatprep.subr.bf16.mxu0 0
    %367 = vmatpush1.bf16.msra.mxu0 0
    %368 = vmatprep.subr.bf16.mxu0 0
    %369 = vmatpush1.bf16.msra.mxu0 0
    %370 = vmatprep.subr.bf16.mxu0 0
    %371 = vmatpush1.bf16.msra.mxu0 0
    %372 = vmatprep.subr.bf16.mxu0 0
    %373 = vmatpush1.bf16.msra.mxu0 %v260
    %374 = vmatprep.subr.bf16.mxu0 0
    %375 = vmatpush1.bf16.msra.mxu0 %v259
    %376 = vmatprep.subr.bf16.mxu0 0
    %377 = vmatpush2.bf16.msra.mxu0 0
    %378 = vmatprep.subr.bf16.mxu0 0
    %379 = vmatpush2.bf16.msra.mxu0 0
    %380 = vmatprep.subr.bf16.mxu0 0
    %381 = vmatpush2.bf16.msra.mxu0 0
    %382 = vmatprep.subr.bf16.mxu0 0
    %383 = vmatpush2.bf16.msra.mxu0 0
    %384 = vmatprep.subr.bf16.mxu0 0
    %385 = vmatpush2.bf16.msra.mxu0 0
    %386 = vmatprep.subr.bf16.mxu0 0
    %387 = vmatpush2.bf16.msra.mxu0 0
    %388 = vmatprep.subr.bf16.mxu0 0
    %389 = vmatpush2.bf16.msra.mxu0 0
    %390 = vmatprep.subr.bf16.mxu0 0
    %391 = vmatpush2.bf16.msra.mxu0 0
    %392 = vmatprep.mubr.bf16.mxu0 0
    %393 = vmatmul.mubr.bf16.gmra.mxu0 %v265
    %v394 = vpop.f32.mrf.mxu0
    %v395 = vadd.f32 %v89, %v394
    %v396 = vpop.f32.mrf.mxu0
    %v397 = vpop.f32.mrf.mxu0
    %v398 = vadd.f32 %v89, %v397
    %v399 = vpop.f32.mrf.mxu0
    %400 = vmatprep.mubr.bf16.mxu0 0
    %401 = vmatmul.mubr.bf16.gmra.mxu0 %v268
    %v402 = vpop.f32.mrf.mxu0
    %v403 = vadd.f32 %v89, %v402
    %v404 = vpop.f32.mrf.mxu0
    %v405 = vpop.f32.mrf.mxu0
    %v406 = vadd.f32 %v89, %v405
    %v407 = vpop.f32.mrf.mxu0
    %408 = vmatprep.mubr.bf16.mxu0 0
    %409 = vmatmul.mubr.bf16.gmra.mxu0 %v271
    %v410 = vpop.f32.mrf.mxu0
    %v411 = vadd.f32 %v89, %v410
    %v412 = vpop.f32.mrf.mxu0
    %v413 = vpop.f32.mrf.mxu0
    %v414 = vadd.f32 %v89, %v413
    %v415 = vpop.f32.mrf.mxu0
    %416 = vmatprep.mubr.bf16.mxu0 0
    %417 = vmatmul.mubr.bf16.gmra.mxu0 %v274
    %v418 = vpop.f32.mrf.mxu0
    %v419 = vadd.f32 %v89, %v418
    %v420 = vpop.f32.mrf.mxu0
    %v421 = vpop.f32.mrf.mxu0
    %v422 = vadd.f32 %v89, %v421
    %v423 = vpop.f32.mrf.mxu0
    %424 = vmatprep.mubr.bf16.mxu0 0
    %425 = vmatmul.mubr.bf16.gmra.mxu0 %v277
    %v426 = vpop.f32.mrf.mxu0
    %v427 = vadd.f32 %v89, %v426
    %v428 = vpop.f32.mrf.mxu0
    %v429 = vpop.f32.mrf.mxu0
    %v430 = vadd.f32 %v89, %v429
    %v431 = vpop.f32.mrf.mxu0
    %432 = vmatprep.mubr.bf16.mxu0 0
    %433 = vmatmul.mubr.bf16.gmra.mxu0 %v280
    %v434 = vpop.f32.mrf.mxu0
    %v435 = vadd.f32 %v89, %v434
    %v436 = vpop.f32.mrf.mxu0
    %v437 = vpop.f32.mrf.mxu0
    %v438 = vadd.f32 %v89, %v437
    %v439 = vpop.f32.mrf.mxu0
    %440 = vmatprep.mubr.bf16.mxu0 0
    %441 = vmatmul.mubr.bf16.gmra.mxu0 %v283
    %v442 = vpop.f32.mrf.mxu0
    %v443 = vadd.f32 %v89, %v442
    %v444 = vpop.f32.mrf.mxu0
    %v445 = vpop.f32.mrf.mxu0
    %v446 = vadd.f32 %v89, %v445
    %v447 = vpop.f32.mrf.mxu0
    %448 = vmatprep.mubr.bf16.mxu0 0
    %449 = vmatmul.mubr.bf16.gmra.mxu0 %v286
    %v450 = vpop.f32.mrf.mxu0
    %v451 = vadd.f32 %v89, %v450
    %v452 = vpop.f32.mrf.mxu0
    %v453 = vpop.f32.mrf.mxu0
    %v454 = vadd.f32 %v89, %v453
    %v455 = vpop.f32.mrf.mxu0
    %456 = vmatprep.mubr.bf16.mxu0 0
    %457 = vmatmul.mubr.bf16.gmra.mxu0 %v289
    %v458 = vpop.f32.mrf.mxu0
    %v459 = vadd.f32 %v89, %v458
    %v460 = vpop.f32.mrf.mxu0
    %v461 = vpop.f32.mrf.mxu0
    %v462 = vadd.f32 %v89, %v461
    %v463 = vpop.f32.mrf.mxu0
    %464 = vmatprep.mubr.bf16.mxu0 0
    %465 = vmatmul.mubr.bf16.gmra.mxu0 %v292
    %v466 = vpop.f32.mrf.mxu0
    %v467 = vadd.f32 %v89, %v466
    %v468 = vpop.f32.mrf.mxu0
    %v469 = vpop.f32.mrf.mxu0
    %v470 = vadd.f32 %v89, %v469
    %v471 = vpop.f32.mrf.mxu0
    %472 = vmatprep.mubr.bf16.mxu0 0
    %473 = vmatmul.mubr.bf16.gmra.mxu0 %v295
    %v474 = vpop.f32.mrf.mxu0
    %v475 = vadd.f32 %v89, %v474
    %v476 = vpop.f32.mrf.mxu0
    %v477 = vpop.f32.mrf.mxu0
    %v478 = vadd.f32 %v89, %v477
    %v479 = vpop.f32.mrf.mxu0
    %480 = vmatprep.mubr.bf16.mxu0 0
    %481 = vmatmul.mubr.bf16.gmra.mxu0 %v298
    %v482 = vpop.f32.mrf.mxu0
    %v483 = vadd.f32 %v89, %v482
    %v484 = vpop.f32.mrf.mxu0
    %v485 = vpop.f32.mrf.mxu0
    %v486 = vadd.f32 %v89, %v485
    %v487 = vpop.f32.mrf.mxu0
    %488 = vmatprep.mubr.bf16.mxu0 0
    %489 = vmatmul.mubr.bf16.gmra.mxu0 %v301
    %v490 = vpop.f32.mrf.mxu0
    %v491 = vadd.f32 %v89, %v490
    %v492 = vpop.f32.mrf.mxu0
    %v493 = vpop.f32.mrf.mxu0
    %v494 = vadd.f32 %v89, %v493
    %v495 = vpop.f32.mrf.mxu0
    %496 = vmatprep.mubr.bf16.mxu0 0
    %497 = vmatmul.mubr.bf16.gmra.mxu0 %v304
    %v498 = vpop.f32.mrf.mxu0
    %v499 = vadd.f32 %v89, %v498
    %v500 = vpop.f32.mrf.mxu0
    %v501 = vpop.f32.mrf.mxu0
    %v502 = vadd.f32 %v89, %v501
    %v503 = vpop.f32.mrf.mxu0
    %504 = vmatprep.mubr.bf16.mxu0 0
    %505 = vmatmul.mubr.bf16.gmra.mxu0 %v307
    %v506 = vpop.f32.mrf.mxu0
    %v507 = vadd.f32 %v89, %v506
    %v508 = vpop.f32.mrf.mxu0
    %v509 = vpop.f32.mrf.mxu0
    %v510 = vadd.f32 %v89, %v509
    %v511 = vpop.f32.mrf.mxu0
    %512 = vmatprep.mubr.bf16.mxu0 0
    %513 = vmatmul.mubr.bf16.gmra.mxu0 %v310
    %v514 = vpop.f32.mrf.mxu0
    %v515 = vadd.f32 %v89, %v514
    %v516 = vpop.f32.mrf.mxu0
    %v517 = vpop.f32.mrf.mxu0
    %v518 = vadd.f32 %v89, %v517
    %v519 = vpop.f32.mrf.mxu0
    %520 = vmatprep.mubr.bf16.mxu0 0
    %521 = vmatmul.mubr.bf16.gmra.mxu0 %v313
    %v522 = vpop.f32.mrf.mxu0
    %v523 = vadd.f32 %v89, %v522
    %v524 = vpop.f32.mrf.mxu0
    %v525 = vpop.f32.mrf.mxu0
    %v526 = vadd.f32 %v89, %v525
    %v527 = vpop.f32.mrf.mxu0
    %528 = vmatprep.mubr.bf16.mxu0 0
    %529 = vmatmul.mubr.bf16.gmra.mxu0 %v316
    %v530 = vpop.f32.mrf.mxu0
    %v531 = vadd.f32 %v89, %v530
    %v532 = vpop.f32.mrf.mxu0
    %v533 = vpop.f32.mrf.mxu0
    %v534 = vadd.f32 %v89, %v533
    %v535 = vpop.f32.mrf.mxu0
    %536 = vmatprep.mubr.bf16.mxu0 0
    %537 = vmatmul.mubr.bf16.gmra.mxu0 %v319
    %v538 = vpop.f32.mrf.mxu0
    %v539 = vadd.f32 %v89, %v538
    %v540 = vpop.f32.mrf.mxu0
    %v541 = vpop.f32.mrf.mxu0
    %v542 = vadd.f32 %v89, %v541
    %v543 = vpop.f32.mrf.mxu0
    %544 = vmatprep.mubr.bf16.mxu0 0
    %545 = vmatmul.mubr.bf16.gmra.mxu0 %v322
    %v546 = vpop.f32.mrf.mxu0
    %v547 = vadd.f32 %v89, %v546
    %v548 = vpop.f32.mrf.mxu0
    %v549 = vpop.f32.mrf.mxu0
    %v550 = vadd.f32 %v89, %v549
    %v551 = vpop.f32.mrf.mxu0
    %552 = vmatprep.mubr.bf16.mxu0 0
    %553 = vmatmul.mubr.bf16.gmra.mxu0 %v325
    %v554 = vpop.f32.mrf.mxu0
    %v555 = vadd.f32 %v89, %v554
    %v556 = vpop.f32.mrf.mxu0
    %v557 = vpop.f32.mrf.mxu0
    %v558 = vadd.f32 %v89, %v557
    %v559 = vpop.f32.mrf.mxu0
    %560 = vmatprep.mubr.bf16.mxu0 0
    %561 = vmatmul.mubr.bf16.gmra.mxu0 %v328
    %v562 = vpop.f32.mrf.mxu0
    %v563 = vadd.f32 %v89, %v562
    %v564 = vpop.f32.mrf.mxu0
    %v565 = vpop.f32.mrf.mxu0
    %v566 = vadd.f32 %v89, %v565
    %v567 = vpop.f32.mrf.mxu0
    %568 = vmatprep.mubr.bf16.mxu0 0
    %569 = vmatmul.mubr.bf16.gmra.mxu0 %v331
    %v570 = vpop.f32.mrf.mxu0
    %v571 = vadd.f32 %v89, %v570
    %v572 = vpop.f32.mrf.mxu0
    %v573 = vpop.f32.mrf.mxu0
    %v574 = vadd.f32 %v89, %v573
    %v575 = vpop.f32.mrf.mxu0
    %576 = vmatprep.mubr.bf16.mxu0 0
    %577 = vmatmul.mubr.bf16.gmra.mxu0 %v334
    %v578 = vpop.f32.mrf.mxu0
    %v579 = vadd.f32 %v89, %v578
    %v580 = vpop.f32.mrf.mxu0
    %v581 = vpop.f32.mrf.mxu0
    %v582 = vadd.f32 %v89, %v581
    %v583 = vpop.f32.mrf.mxu0
    %584 = vmatprep.mubr.bf16.mxu0 0
    %585 = vmatmul.mubr.bf16.gmra.mxu0 %v337
    %v586 = vpop.f32.mrf.mxu0
    %v587 = vadd.f32 %v89, %v586
    %v588 = vpop.f32.mrf.mxu0
    %v589 = vpop.f32.mrf.mxu0
    %v590 = vadd.f32 %v89, %v589
    %v591 = vpop.f32.mrf.mxu0
    %592 = vmatprep.mubr.bf16.mxu0 0
    %593 = vmatmul.mubr.bf16.gmra.mxu0 %v340
    %v594 = vpop.f32.mrf.mxu0
    %v595 = vadd.f32 %v89, %v594
    %v596 = vpop.f32.mrf.mxu0
    %v597 = vpop.f32.mrf.mxu0
    %v598 = vadd.f32 %v89, %v597
    %v599 = vpop.f32.mrf.mxu0
    %600 = vmatprep.mubr.bf16.mxu0 0
    %601 = vmatmul.mubr.bf16.gmra.mxu0 %v343
    %v602 = vpop.f32.mrf.mxu0
    %v603 = vadd.f32 %v89, %v602
    %v604 = vpop.f32.mrf.mxu0
    %v605 = vpop.f32.mrf.mxu0
    %v606 = vadd.f32 %v89, %v605
    %v607 = vpop.f32.mrf.mxu0
    %608 = vmatprep.mubr.bf16.mxu0 0
    %609 = vmatmul.mubr.bf16.gmra.mxu0 %v346
    %v610 = vpop.f32.mrf.mxu0
    %v611 = vadd.f32 %v89, %v610
    %v612 = vpop.f32.mrf.mxu0
    %v613 = vpop.f32.mrf.mxu0
    %v614 = vadd.f32 %v89, %v613
    %v615 = vpop.f32.mrf.mxu0
    %616 = vmatprep.mubr.bf16.mxu0 0
    %617 = vmatmul.mubr.bf16.gmra.mxu0 %v349
    %v618 = vpop.f32.mrf.mxu0
    %v619 = vadd.f32 %v89, %v618
    %v620 = vpop.f32.mrf.mxu0
    %v621 = vpop.f32.mrf.mxu0
    %v622 = vadd.f32 %v89, %v621
    %v623 = vpop.f32.mrf.mxu0
    %624 = vmatprep.mubr.bf16.mxu0 0
    %625 = vmatmul.mubr.bf16.gmra.mxu0 %v352
    %v626 = vpop.f32.mrf.mxu0
    %v627 = vadd.f32 %v89, %v626
    %v628 = vpop.f32.mrf.mxu0
    %v629 = vpop.f32.mrf.mxu0
    %v630 = vadd.f32 %v89, %v629
    %v631 = vpop.f32.mrf.mxu0
    %632 = vmatprep.mubr.bf16.mxu0 0
    %633 = vmatmul.mubr.bf16.gmra.mxu0 %v355
    %v634 = vpop.f32.mrf.mxu0
    %v635 = vadd.f32 %v89, %v634
    %v636 = vpop.f32.mrf.mxu0
    %v637 = vpop.f32.mrf.mxu0
    %v638 = vadd.f32 %v89, %v637
    %v639 = vpop.f32.mrf.mxu0
    %640 = vmatprep.mubr.bf16.mxu0 0
    %641 = vmatmul.mubr.bf16.gmra.mxu0 %v358
    %v642 = vpop.f32.mrf.mxu0
    %v643 = vadd.f32 %v89, %v642
    %v644 = vpop.f32.mrf.mxu0
    %v645 = vpop.f32.mrf.mxu0
    %v646 = vadd.f32 %v89, %v645
    %v647 = vpop.f32.mrf.mxu0
    %648 = vdwg.mxu0
    %649 = vst.msk [vmem:[#allocation2] sm:$0xff] %vm263, %v395
    %650 = vst.msk [vmem:[#allocation2 + $0x8] sm:$0xff] %vm263, %v398
    %651 = vst.msk [vmem:[#allocation2 + $0x10] sm:$0xff] %vm263, %v403
    %652 = vst.msk [vmem:[#allocation2 + $0x18] sm:$0xff] %vm263, %v406
    %653 = vst.msk [vmem:[#allocation2 + $0x20] sm:$0xff] %vm263, %v411
    %654 = vst.msk [vmem:[#allocation2 + $0x28] sm:$0xff] %vm263, %v414
    %655 = vst.msk [vmem:[#allocation2 + $0x30] sm:$0xff] %vm263, %v419
    %656 = vst.msk [vmem:[#allocation2 + $0x38] sm:$0xff] %vm263, %v422
    %657 = vst.msk [vmem:[#allocation2 + $0x40] sm:$0xff] %vm263, %v427
    %658 = vst.msk [vmem:[#allocation2 + $0x48] sm:$0xff] %vm263, %v430
    %659 = vst.msk [vmem:[#allocation2 + $0x50] sm:$0xff] %vm263, %v435
    %660 = vst.msk [vmem:[#allocation2 + $0x58] sm:$0xff] %vm263, %v438
    %661 = vst.msk [vmem:[#allocation2 + $0x60] sm:$0xff] %vm263, %v443
    %662 = vst.msk [vmem:[#allocation2 + $0x68] sm:$0xff] %vm263, %v446
    %663 = vst.msk [vmem:[#allocation2 + $0x70] sm:$0xff] %vm263, %v451
    %664 = vst.msk [vmem:[#allocation2 + $0x78] sm:$0xff] %vm263, %v454
    %665 = vst.msk [vmem:[#allocation2 + $0x80] sm:$0xff] %vm263, %v459
    %666 = vst.msk [vmem:[#allocation2 + $0x88] sm:$0xff] %vm263, %v462
    %667 = vst.msk [vmem:[#allocation2 + $0x90] sm:$0xff] %vm263, %v467
    %668 = vst.msk [vmem:[#allocation2 + $0x98] sm:$0xff] %vm263, %v470
    %669 = vst.msk [vmem:[#allocation2 + $0xa0] sm:$0xff] %vm263, %v475
    %670 = vst.msk [vmem:[#allocation2 + $0xa8] sm:$0xff] %vm263, %v478
    %671 = vst.msk [vmem:[#allocation2 + $0xb0] sm:$0xff] %vm263, %v483
    %672 = vst.msk [vmem:[#allocation2 + $0xb8] sm:$0xff] %vm263, %v486
    %673 = vst.msk [vmem:[#allocation2 + $0xc0] sm:$0xff] %vm263, %v491
    %674 = vst.msk [vmem:[#allocation2 + $0xc8] sm:$0xff] %vm263, %v494
    %675 = vst.msk [vmem:[#allocation2 + $0xd0] sm:$0xff] %vm263, %v499
    %676 = vst.msk [vmem:[#allocation2 + $0xd8] sm:$0xff] %vm263, %v502
    %677 = vst.msk [vmem:[#allocation2 + $0xe0] sm:$0xff] %vm263, %v507
    %678 = vst.msk [vmem:[#allocation2 + $0xe8] sm:$0xff] %vm263, %v510
    %679 = vst.msk [vmem:[#allocation2 + $0xf0] sm:$0xff] %vm263, %v515
    %680 = vst.msk [vmem:[#allocation2 + $0xf8] sm:$0xff] %vm263, %v518
    %681 = vst.msk [vmem:[#allocation2 + $0x100] sm:$0xff] %vm263, %v523
    %682 = vst.msk [vmem:[#allocation2 + $0x108] sm:$0xff] %vm263, %v526
    %683 = vst.msk [vmem:[#allocation2 + $0x110] sm:$0xff] %vm263, %v531
    %684 = vst.msk [vmem:[#allocation2 + $0x118] sm:$0xff] %vm263, %v534
    %685 = vst.msk [vmem:[#allocation2 + $0x120] sm:$0xff] %vm263, %v539
    %686 = vst.msk [vmem:[#allocation2 + $0x128] sm:$0xff] %vm263, %v542
    %687 = vst.msk [vmem:[#allocation2 + $0x130] sm:$0xff] %vm263, %v547
    %688 = vst.msk [vmem:[#allocation2 + $0x138] sm:$0xff] %vm263, %v550
    %689 = vst.msk [vmem:[#allocation2 + $0x140] sm:$0xff] %vm263, %v555
    %690 = vst.msk [vmem:[#allocation2 + $0x148] sm:$0xff] %vm263, %v558
    %691 = vst.msk [vmem:[#allocation2 + $0x150] sm:$0xff] %vm263, %v563
    %692 = vst.msk [vmem:[#allocation2 + $0x158] sm:$0xff] %vm263, %v566
    %693 = vst.msk [vmem:[#allocation2 + $0x160] sm:$0xff] %vm263, %v571
    %694 = vst.msk [vmem:[#allocation2 + $0x168] sm:$0xff] %vm263, %v574
    %695 = vst.msk [vmem:[#allocation2 + $0x170] sm:$0xff] %vm263, %v579
    %696 = vst.msk [vmem:[#allocation2 + $0x178] sm:$0xff] %vm263, %v582
    %697 = vst.msk [vmem:[#allocation2 + $0x180] sm:$0xff] %vm263, %v587
    %698 = vst.msk [vmem:[#allocation2 + $0x188] sm:$0xff] %vm263, %v590
    %699 = vst.msk [vmem:[#allocation2 + $0x190] sm:$0xff] %vm263, %v595
    %700 = vst.msk [vmem:[#allocation2 + $0x198] sm:$0xff] %vm263, %v598
    %701 = vst.msk [vmem:[#allocation2 + $0x1a0] sm:$0xff] %vm263, %v603
    %702 = vst.msk [vmem:[#allocation2 + $0x1a8] sm:$0xff] %vm263, %v606
    %703 = vst.msk [vmem:[#allocation2 + $0x1b0] sm:$0xff] %vm263, %v611
    %704 = vst.msk [vmem:[#allocation2 + $0x1b8] sm:$0xff] %vm263, %v614
    %705 = vst.msk [vmem:[#allocation2 + $0x1c0] sm:$0xff] %vm263, %v619
    %706 = vst.msk [vmem:[#allocation2 + $0x1c8] sm:$0xff] %vm263, %v622
    %707 = vst.msk [vmem:[#allocation2 + $0x1d0] sm:$0xff] %vm263, %v627
    %708 = vst.msk [vmem:[#allocation2 + $0x1d8] sm:$0xff] %vm263, %v630
    %709 = vst.msk [vmem:[#allocation2 + $0x1e0] sm:$0xff] %vm263, %v635
    %710 = vst.msk [vmem:[#allocation2 + $0x1e8] sm:$0xff] %vm263, %v638
    %711 = vst.msk [vmem:[#allocation2 + $0x1f0] sm:$0xff] %vm263, %v643
    %712 = vst.msk [vmem:[#allocation2 + $0x1f8] sm:$0xff] %vm263, %v646
    // Predicated region
    $region14: #{multi_dilate_local_attention.7} parent=1 // pred_check
      _
    $region15: #{multi_dilate_local_attention.7} parent=1 // pred_check_branch
      %714 = sbr.rel (0) target = $region17
    $region16: #{multi_dilate_local_attention.7} parent=1 // pred_region
      %s716 = ssub.s32 8192, 8192
      %717 = vsyncadd [#allocation3], %s716
      %s718 = sshll.u32 [#allocation2], 4
      %s719 = int_to_ptr.vmem [resolvable:$true] %s718
      %724 = dma.vmem_to_hbm [thread:$0]  %s719, 8192, %s3, [#allocation3], 128, 128, 8
    $region17: #{multi_dilate_local_attention.7} parent=1 // pred_fallthru
      _
    // Predicated region
    $region18: #{multi_dilate_local_attention.7} parent=1 // pred_check
      _
    $region19: #{multi_dilate_local_attention.7} parent=1 // pred_check_branch
      %726 = sbr.rel (0) target = $region21
    $region20: #{multi_dilate_local_attention.7} parent=1 // pred_region
      %727 = dma.done [#allocation3], 8192
    $region21: #{multi_dilate_local_attention.7} parent=1 // pred_fallthru
      _
    %728 = vsyncpa [#allocation3], 1

</llo_original>
